<compile_context>
chip_gen: v7x
topology: tpu7x:2x2x1
jax: 0.10.0
libtpu: 0.0.40
codegen_flags: <defaults>
</compile_context>

<pallas_src>
import jax
import jax.numpy as jnp
import numpy as np
from jax.experimental import pallas as pl
from jax.experimental.pallas import tpu as pltpu

EPS_BN = 1e-5      # nn.BatchNorm2d default eps
EPS_NORM = 1e-12   # F.normalize default eps
VCOLS = 8          # view columns: 0 = k view, 1 = q view, 2..7 zero padding
                   # (keeps every matmul operand dimension >= 8)


def _vmem():
    # whole-array block resident in VMEM (everything here is a few MB total)
    return pl.BlockSpec(memory_space=pltpu.MemorySpace.VMEM)


# ---------------------------------------------------------------------------
# Pallas kernel: fused encoder (both views) + contrastive scoring epilogue
# ---------------------------------------------------------------------------
def _bn_relu_vec(y, s_ref, e_ref, gamma_ref, beta_ref):
    # y: (N, VCOLS) conv output in flattened (batch, spatial, channel) vec
    # form, one column per view.  BatchNorm2d training-mode batch stats
    # (biased var) per (channel, view) via channel-indicator matmuls, then
    # a single fused scale/shift pass and ReLU.
    mean = jnp.dot(s_ref[...], y, preferred_element_type=jnp.float32)      # (C, VCOLS)
    msq = jnp.dot(s_ref[...], y * y, preferred_element_type=jnp.float32)   # (C, VCOLS)
    var = jnp.maximum(msq - mean * mean, 0.0)        # clamp: cancellation can go < 0
    scale = gamma_ref[...] * jax.lax.rsqrt(var + EPS_BN)                   # (C, VCOLS)
    shift = beta_ref[...] - mean * scale
    sf = jnp.dot(e_ref[...], scale, preferred_element_type=jnp.float32)    # (N, VCOLS)
    bf = jnp.dot(e_ref[...], shift, preferred_element_type=jnp.float32)    # (N, VCOLS)
    return jnp.maximum(y * sf + bf, 0.0)


def cossl_kernel(x_ref,
                 t1_ref, s1_ref, e1_ref, g1_ref, b1_ref,
                 t2_ref, s2_ref, e2_ref, g2_ref, b2_ref,
                 t3_ref, s3_ref, e3_ref, g3_ref, b3_ref,
                 w4_ref, rsel_ref, g4_ref, b4_ref,
                 queue_ref, idxb_ref, idxq_ref,
                 spos_ref, sneg_ref, maskneg_ref):
    x = x_ref[...]                                                 # (N0, VCOLS)

    # ---- layers 1..3: (prev AvgPool + Conv2d) as ONE matmul each, then BN+ReLU
    for t_ref, s_ref, e_ref, g_ref, b_ref in (
            (t1_ref, s1_ref, e1_ref, g1_ref, b1_ref),
            (t2_ref, s2_ref, e2_ref, g2_ref, b2_ref),
            (t3_ref, s3_ref, e3_ref, g3_ref, b3_ref)):
        y = jnp.dot(t_ref[...], x, preferred_element_type=jnp.float32)
        x = _bn_relu_vec(y, s_ref, e_ref, g_ref, b_ref)

    # ---- layer 4 (output spatial 1x1): per-view two-sided matmul producing a
    #      lane-dense (B, dim) slab; per-column BN == per-(view, channel) BN,
    #      exactly matching the two separate encoder() calls in PyTorch.
    lane = jax.lax.broadcasted_iota(jnp.int32, x.shape, 1)
    k_col = jnp.sum(jnp.where(lane == 0, x, 0.0), axis=1, keepdims=True)   # (N3, 1)
    q_col = jnp.sum(jnp.where(lane == 1, x, 0.0), axis=1, keepdims=True)   # (N3, 1)
    w4 = w4_ref[...]                                               # (N3, dim)
    rsel = rsel_ref[...]                                           # (B, N3)
    c_k = jnp.dot(rsel, w4 * k_col, preferred_element_type=jnp.float32)    # (B, dim)
    c_q = jnp.dot(rsel, w4 * q_col, preferred_element_type=jnp.float32)    # (B, dim)

    def _bn4_relu(c):
        mean = jnp.mean(c, axis=0, keepdims=True)
        var = jnp.maximum(jnp.mean(c * c, axis=0, keepdims=True) - mean * mean, 0.0)
        scale = g4_ref[...] * jax.lax.rsqrt(var + EPS_BN)
        return jnp.maximum((c - mean) * scale + b4_ref[...], 0.0)

    # AvgPool2d(3,1,1) on a 1x1 map == *(1/9) (count_include_pad=True default);
    # AdaptiveAvgPool2d(1) on a 1x1 map == identity.
    k_emb = _bn4_relu(c_k) * (1.0 / 9.0)                           # (B, dim)
    q_emb = _bn4_relu(c_q) * (1.0 / 9.0)                           # (B, dim)

    # ---- contrastive scoring epilogue (F.normalize + pos/neg scores + mask)
    inv_k = jax.lax.rsqrt(jnp.maximum(
        jnp.sum(k_emb * k_emb, axis=1, keepdims=True), EPS_NORM * EPS_NORM))
    inv_q = jax.lax.rsqrt(jnp.maximum(
        jnp.sum(q_emb * q_emb, axis=1, keepdims=True), EPS_NORM * EPS_NORM))
    spos_ref[...] = jnp.sum(q_emb * k_emb, axis=1, keepdims=True) * inv_q * inv_k
    sneg = jnp.dot(q_emb, queue_ref[...], preferred_element_type=jnp.float32)
    sneg_ref[...] = sneg * inv_q                                   # (B, cap_Q)

    b, capq = maskneg_ref.shape
    # NOTE: IndexQueue ids compared as int32 (exact for -1 sentinels / ids < 2^24).
    idxb = jnp.broadcast_to(idxb_ref[...], (b, capq))
    idxq = jnp.broadcast_to(idxq_ref[...], (b, capq))
    maskneg_ref[...] = (idxb == idxq).astype(jnp.float32)


# ---------------------------------------------------------------------------
# Host-side constant construction (done once, outside the jitted forward)
# ---------------------------------------------------------------------------
def _conv_tap_spatial(h, w, ky, kx, stride=2, pad=1):
    ho = (h + 2 * pad - 3) // stride + 1
    wo = (w + 2 * pad - 3) // stride + 1
    g = np.zeros((ho * wo, h * w), np.float32)
    for i in range(ho):
        for j in range(wo):
            p = stride * i + ky - pad
            q = stride * j + kx - pad
            if 0 <= p < h and 0 <= q < w:
                g[i * wo + j, p * w + q] = 1.0
    return g, ho, wo


def _avgpool3_spatial(h, w):
    # AvgPool2d(3, stride=1, padding=1), count_include_pad=True (always /9)
    m = np.zeros((h * w, h * w), np.float32)
    for i in range(h):
        for j in range(w):
            for di in (-1, 0, 1):
                for dj in (-1, 0, 1):
                    p, q = i + di, j + dj
                    if 0 <= p < h and 0 <= q < w:
                        m[i * w + j, p * w + q] = 1.0 / 9.0
    return m


def build_consts(bsz, t, d, dim=128, seed=0):
    out_channels = [4, 16, 64, dim]
    key = jax.random.PRNGKey(seed)
    h, w, in_c = t, d, 1
    pool_prev = None          # per-sample pool matrix of the previous layer output
    Ts, Ss, Es, gammas, betas = [], [], [], [], []
    m4 = None
    for li, oc in enumerate(out_channels):
        key, sub = jax.random.split(key)
        wconv = np.asarray(
            jax.random.normal(sub, (oc, in_c, 3, 3), jnp.float32)) * 0.1
        # Per-sample conv matrix in flattened (spatial, channel) vec space.
        # Conv bias omitted: exactly cancelled by training-mode BN mean-sub.
        taps = []
        ho = wo = None
        for ky in range(3):
            for kx in range(3):
                g, ho, wo = _conv_tap_spatial(h, w, ky, kx)
                taps.append(np.kron(g, wconv[:, :, ky, kx]))
        conv_ps = np.sum(np.stack(taps, axis=0), axis=0)
        m_ps = conv_ps if pool_prev is None else conv_ps @ pool_prev
        if li < 3:
            Ts.append(jnp.asarray(np.kron(np.eye(bsz, dtype=np.float32), m_ps)))
            n_sp = bsz * ho * wo
            c_pad = max(oc, 8)     # pad channel-stat dim so all matmul dims >= 8
            s_mat = np.kron(np.ones((1, n_sp), np.float32) / n_sp,
                            np.eye(oc, dtype=np.float32))
            e_mat = np.kron(np.ones((n_sp, 1), np.float32),
                            np.eye(oc, dtype=np.float32))
            s_mat = np.pad(s_mat, ((0, c_pad - oc), (0, 0)))
            e_mat = np.pad(e_mat, ((0, 0), (0, c_pad - oc)))
            Ss.append(jnp.asarray(s_mat))
            Es.append(jnp.asarray(e_mat))
            gammas.append(jnp.ones((c_pad, 1), jnp.float32))   # BN affine defaults
            betas.append(jnp.zeros((c_pad, 1), jnp.float32))
        else:
            m4 = m_ps                               # (dim, 2*2*64) per sample
            gammas.append(jnp.ones((1, oc), jnp.float32))
            betas.append(jnp.zeros((1, oc), jnp.float32))
        pool_prev = np.kron(_avgpool3_spatial(ho, wo),
                            np.eye(oc, dtype=np.float32))
        h, w, in_c = ho, wo, oc
    n3 = m4.shape[1]                                # per-sample layer-4 input length
    w4 = jnp.asarray(np.tile(m4.T, (bsz, 1)))       # (bsz*n3, dim)
    rsel = jnp.asarray(np.kron(np.eye(bsz, dtype=np.float32),
                               np.ones((1, n3), np.float32)))   # (bsz, bsz*n3)
    return dict(T=Ts, S=Ss, E=Es, gamma=gammas, beta=betas, W4=w4, RSel=rsel)


# ---------------------------------------------------------------------------
# CoSSL forward (fresh module: queue_full == False, no enqueue in inference)
# ---------------------------------------------------------------------------
def cossl_forward(feats, ref_feats, indices, consts, moco_queue, index_queue):
    # feats: (B, 2, T, D); ref_feats only feeds the (dead) queue_full / enqueue
    # paths of a freshly constructed module.
    del ref_feats
    bsz = feats.shape[0]
    cap_q = moco_queue.shape[1]
    n0 = consts["T"][0].shape[1]

    # Flatten both views into one (N0, VCOLS) vec input: col 0 = k view
    # (feats[:, 0]), col 1 = q view (feats[:, 1]); cols 2..7 zero padding.
    xk = feats[:, 0].reshape(n0, 1)
    xq = feats[:, 1].reshape(n0, 1)
    x_vec = jnp.concatenate(
        [xk, xq, jnp.zeros((n0, VCOLS - 2), jnp.float32)], axis=1)

    params = []
    for l in range(3):
        params += [consts["T"][l], consts["S"][l], consts["E"][l],
                   consts["gamma"][l], consts["beta"][l]]
    params += [consts["W4"], consts["RSel"], consts["gamma"][3], consts["beta"][3]]

    out_shapes = (jax.ShapeDtypeStruct((bsz, 1), jnp.float32),        # score_pos
                  jax.ShapeDtypeStruct((bsz, cap_q), jnp.float32),    # score_neg
                  jax.ShapeDtypeStruct((bsz, cap_q), jnp.float32))    # mask_neg
    spos, sneg, maskneg = pl.pallas_call(
        cossl_kernel,
        out_shape=out_shapes,
        in_specs=[_vmem()] * (1 + len(params) + 3),
        out_specs=(_vmem(), _vmem(), _vmem()),
    )(x_vec, *params, moco_queue,
      indices.astype(jnp.int32).reshape(bsz, 1),
      index_queue.astype(jnp.int32).reshape(1, cap_q))

    # trivial wrapper-side layout plumbing (column 0 of the mask is constant 1)
    score = jnp.concatenate([spos, sneg], axis=1)
    mask = jnp.concatenate([jnp.ones((bsz, 1), jnp.float32), maskneg], axis=1)
    return score, mask


if __name__ == "__main__":
    B, T, D = 2, 16, 16
    DIM, CAP_Q = 128, 256

    key = jax.random.PRNGKey(0)
    k1, k2, k3 = jax.random.split(key, 3)
    feats = jax.random.normal(k1, (B, 2, T, D), jnp.float32)
    ref_feats = jax.random.normal(k2, (B, 2304), jnp.float32)
    indices = jnp.arange(B, dtype=jnp.int32)

    # registered buffers (deterministic, matching __init__ semantics)
    moco = jax.random.normal(k3, (DIM, CAP_Q), jnp.float32)
    moco = moco / jnp.maximum(
        jnp.sqrt(jnp.sum(moco * moco, axis=0, keepdims=True)), EPS_NORM)
    index_queue = -jnp.ones((CAP_Q,), jnp.float32)

    consts = build_consts(B, T, D, DIM, seed=0)

    fwd = jax.jit(cossl_forward)
    score, mask = fwd(feats, ref_feats, indices, consts, moco, index_queue)
    jax.block_until_ready((score, mask))
    assert score.shape == (B, 1 + CAP_Q)
    assert mask.shape == (B, 1 + CAP_Q)
    print("KERNEL_OK")
</pallas_src>

<mosaic_0001>
module attributes {stable_mosaic.version = 11 : i64} {
  func.func @cossl_kernel(%arg0: memref<512x8xf32, #tpu.memory_space<vmem>>, %arg1: memref<512x512xf32, #tpu.memory_space<vmem>>, %arg2: memref<8x512xf32, #tpu.memory_space<vmem>>, %arg3: memref<512x8xf32, #tpu.memory_space<vmem>>, %arg4: memref<8x1xf32, #tpu.memory_space<vmem>>, %arg5: memref<8x1xf32, #tpu.memory_space<vmem>>, %arg6: memref<512x512xf32, #tpu.memory_space<vmem>>, %arg7: memref<16x512xf32, #tpu.memory_space<vmem>>, %arg8: memref<512x16xf32, #tpu.memory_space<vmem>>, %arg9: memref<16x1xf32, #tpu.memory_space<vmem>>, %arg10: memref<16x1xf32, #tpu.memory_space<vmem>>, %arg11: memref<512x512xf32, #tpu.memory_space<vmem>>, %arg12: memref<64x512xf32, #tpu.memory_space<vmem>>, %arg13: memref<512x64xf32, #tpu.memory_space<vmem>>, %arg14: memref<64x1xf32, #tpu.memory_space<vmem>>, %arg15: memref<64x1xf32, #tpu.memory_space<vmem>>, %arg16: memref<512x128xf32, #tpu.memory_space<vmem>>, %arg17: memref<2x512xf32, #tpu.memory_space<vmem>>, %arg18: memref<1x128xf32, #tpu.memory_space<vmem>>, %arg19: memref<1x128xf32, #tpu.memory_space<vmem>>, %arg20: memref<128x256xf32, #tpu.memory_space<vmem>>, %arg21: memref<2x1xi32, #tpu.memory_space<vmem>>, %arg22: memref<1x256xi32, #tpu.memory_space<vmem>>, %arg23: memref<2x1xf32, #tpu.memory_space<vmem>>, %arg24: memref<2x256xf32, #tpu.memory_space<vmem>>, %arg25: memref<2x256xf32, #tpu.memory_space<vmem>>) attributes {dimension_semantics = [], scalar_prefetch = 0 : i64, scratch_operands = 0 : i64, tpu.core_type = #tpu.core_type<tc>} {
    %c0 = arith.constant 0 : index
    %c0_0 = arith.constant 0 : index
    %0 = vector.load %arg0[%c0, %c0_0] : memref<512x8xf32, #tpu.memory_space<vmem>>, vector<512x8xf32>
    %c0_1 = arith.constant 0 : index
    %c0_2 = arith.constant 0 : index
    %1 = vector.load %arg1[%c0_1, %c0_2] : memref<512x512xf32, #tpu.memory_space<vmem>>, vector<512x512xf32>
    %cst = arith.constant dense<0.000000e+00> : vector<512x8xf32>
    %2 = tpu.matmul %1, %0, %cst {dimension_numbers = #tpu.dot_dimension_numbers<[1], [0], [0], [1], [0, 0, 1, 1], [], []>} : vector<512x512xf32>, vector<512x8xf32>, vector<512x8xf32> -> vector<512x8xf32>
    %c0_3 = arith.constant 0 : index
    %c0_4 = arith.constant 0 : index
    %3 = vector.load %arg2[%c0_3, %c0_4] : memref<8x512xf32, #tpu.memory_space<vmem>>, vector<8x512xf32>
    %cst_5 = arith.constant dense<0.000000e+00> : vector<8x8xf32>
    %4 = tpu.matmul %3, %2, %cst_5 {dimension_numbers = #tpu.dot_dimension_numbers<[1], [0], [0], [1], [0, 0, 1, 1], [], []>} : vector<8x512xf32>, vector<512x8xf32>, vector<8x8xf32> -> vector<8x8xf32>
    %c0_6 = arith.constant 0 : index
    %c0_7 = arith.constant 0 : index
    %5 = vector.load %arg2[%c0_6, %c0_7] : memref<8x512xf32, #tpu.memory_space<vmem>>, vector<8x512xf32>
    %6 = arith.mulf %2, %2 : vector<512x8xf32>
    %cst_8 = arith.constant dense<0.000000e+00> : vector<8x8xf32>
    %7 = tpu.matmul %5, %6, %cst_8 {dimension_numbers = #tpu.dot_dimension_numbers<[1], [0], [0], [1], [0, 0, 1, 1], [], []>} : vector<8x512xf32>, vector<512x8xf32>, vector<8x8xf32> -> vector<8x8xf32>
    %8 = arith.mulf %4, %4 : vector<8x8xf32>
    %9 = arith.subf %7, %8 : vector<8x8xf32>
    %cst_9 = arith.constant 0.000000e+00 : f32
    %10 = vector.broadcast %cst_9 : f32 to vector<8x8xf32>
    %11 = arith.maximumf %9, %10 : vector<8x8xf32>
    %c0_10 = arith.constant 0 : index
    %c0_11 = arith.constant 0 : index
    %12 = vector.load %arg4[%c0_10, %c0_11] : memref<8x1xf32, #tpu.memory_space<vmem>>, vector<8x1xf32>
    %cst_12 = arith.constant 9.99999974E-6 : f32
    %13 = vector.broadcast %cst_12 : f32 to vector<8x8xf32>
    %14 = arith.addf %11, %13 : vector<8x8xf32>
    %15 = math.rsqrt %14 : vector<8x8xf32>
    %16 = vector.broadcast %12 : vector<8x1xf32> to vector<8x8xf32>
    %17 = arith.mulf %16, %15 : vector<8x8xf32>
    %c0_13 = arith.constant 0 : index
    %c0_14 = arith.constant 0 : index
    %18 = vector.load %arg5[%c0_13, %c0_14] : memref<8x1xf32, #tpu.memory_space<vmem>>, vector<8x1xf32>
    %19 = arith.mulf %4, %17 : vector<8x8xf32>
    %20 = vector.broadcast %18 : vector<8x1xf32> to vector<8x8xf32>
    %21 = arith.subf %20, %19 : vector<8x8xf32>
    %c0_15 = arith.constant 0 : index
    %c0_16 = arith.constant 0 : index
    %22 = vector.load %arg3[%c0_15, %c0_16] : memref<512x8xf32, #tpu.memory_space<vmem>>, vector<512x8xf32>
    %cst_17 = arith.constant dense<0.000000e+00> : vector<512x8xf32>
    %23 = tpu.matmul %22, %17, %cst_17 {dimension_numbers = #tpu.dot_dimension_numbers<[1], [0], [0], [1], [0, 0, 1, 1], [], []>} : vector<512x8xf32>, vector<8x8xf32>, vector<512x8xf32> -> vector<512x8xf32>
    %c0_18 = arith.constant 0 : index
    %c0_19 = arith.constant 0 : index
    %24 = vector.load %arg3[%c0_18, %c0_19] : memref<512x8xf32, #tpu.memory_space<vmem>>, vector<512x8xf32>
    %cst_20 = arith.constant dense<0.000000e+00> : vector<512x8xf32>
    %25 = tpu.matmul %24, %21, %cst_20 {dimension_numbers = #tpu.dot_dimension_numbers<[1], [0], [0], [1], [0, 0, 1, 1], [], []>} : vector<512x8xf32>, vector<8x8xf32>, vector<512x8xf32> -> vector<512x8xf32>
    %26 = arith.mulf %2, %23 : vector<512x8xf32>
    %27 = arith.addf %26, %25 : vector<512x8xf32>
    %cst_21 = arith.constant 0.000000e+00 : f32
    %28 = vector.broadcast %cst_21 : f32 to vector<512x8xf32>
    %29 = arith.maximumf %27, %28 : vector<512x8xf32>
    %c0_22 = arith.constant 0 : index
    %c0_23 = arith.constant 0 : index
    %30 = vector.load %arg6[%c0_22, %c0_23] : memref<512x512xf32, #tpu.memory_space<vmem>>, vector<512x512xf32>
    %cst_24 = arith.constant dense<0.000000e+00> : vector<512x8xf32>
    %31 = tpu.matmul %30, %29, %cst_24 {dimension_numbers = #tpu.dot_dimension_numbers<[1], [0], [0], [1], [0, 0, 1, 1], [], []>} : vector<512x512xf32>, vector<512x8xf32>, vector<512x8xf32> -> vector<512x8xf32>
    %c0_25 = arith.constant 0 : index
    %c0_26 = arith.constant 0 : index
    %32 = vector.load %arg7[%c0_25, %c0_26] : memref<16x512xf32, #tpu.memory_space<vmem>>, vector<16x512xf32>
    %cst_27 = arith.constant dense<0.000000e+00> : vector<16x8xf32>
    %33 = tpu.matmul %32, %31, %cst_27 {dimension_numbers = #tpu.dot_dimension_numbers<[1], [0], [0], [1], [0, 0, 1, 1], [], []>} : vector<16x512xf32>, vector<512x8xf32>, vector<16x8xf32> -> vector<16x8xf32>
    %c0_28 = arith.constant 0 : index
    %c0_29 = arith.constant 0 : index
    %34 = vector.load %arg7[%c0_28, %c0_29] : memref<16x512xf32, #tpu.memory_space<vmem>>, vector<16x512xf32>
    %35 = arith.mulf %31, %31 : vector<512x8xf32>
    %cst_30 = arith.constant dense<0.000000e+00> : vector<16x8xf32>
    %36 = tpu.matmul %34, %35, %cst_30 {dimension_numbers = #tpu.dot_dimension_numbers<[1], [0], [0], [1], [0, 0, 1, 1], [], []>} : vector<16x512xf32>, vector<512x8xf32>, vector<16x8xf32> -> vector<16x8xf32>
    %37 = arith.mulf %33, %33 : vector<16x8xf32>
    %38 = arith.subf %36, %37 : vector<16x8xf32>
    %cst_31 = arith.constant 0.000000e+00 : f32
    %39 = vector.broadcast %cst_31 : f32 to vector<16x8xf32>
    %40 = arith.maximumf %38, %39 : vector<16x8xf32>
    %c0_32 = arith.constant 0 : index
    %c0_33 = arith.constant 0 : index
    %41 = vector.load %arg9[%c0_32, %c0_33] : memref<16x1xf32, #tpu.memory_space<vmem>>, vector<16x1xf32>
    %cst_34 = arith.constant 9.99999974E-6 : f32
    %42 = vector.broadcast %cst_34 : f32 to vector<16x8xf32>
    %43 = arith.addf %40, %42 : vector<16x8xf32>
    %44 = math.rsqrt %43 : vector<16x8xf32>
    %45 = vector.broadcast %41 : vector<16x1xf32> to vector<16x8xf32>
    %46 = arith.mulf %45, %44 : vector<16x8xf32>
    %c0_35 = arith.constant 0 : index
    %c0_36 = arith.constant 0 : index
    %47 = vector.load %arg10[%c0_35, %c0_36] : memref<16x1xf32, #tpu.memory_space<vmem>>, vector<16x1xf32>
    %48 = arith.mulf %33, %46 : vector<16x8xf32>
    %49 = vector.broadcast %47 : vector<16x1xf32> to vector<16x8xf32>
    %50 = arith.subf %49, %48 : vector<16x8xf32>
    %c0_37 = arith.constant 0 : index
    %c0_38 = arith.constant 0 : index
    %51 = vector.load %arg8[%c0_37, %c0_38] : memref<512x16xf32, #tpu.memory_space<vmem>>, vector<512x16xf32>
    %cst_39 = arith.constant dense<0.000000e+00> : vector<512x8xf32>
    %52 = tpu.matmul %51, %46, %cst_39 {dimension_numbers = #tpu.dot_dimension_numbers<[1], [0], [0], [1], [0, 0, 1, 1], [], []>} : vector<512x16xf32>, vector<16x8xf32>, vector<512x8xf32> -> vector<512x8xf32>
    %c0_40 = arith.constant 0 : index
    %c0_41 = arith.constant 0 : index
    %53 = vector.load %arg8[%c0_40, %c0_41] : memref<512x16xf32, #tpu.memory_space<vmem>>, vector<512x16xf32>
    %cst_42 = arith.constant dense<0.000000e+00> : vector<512x8xf32>
    %54 = tpu.matmul %53, %50, %cst_42 {dimension_numbers = #tpu.dot_dimension_numbers<[1], [0], [0], [1], [0, 0, 1, 1], [], []>} : vector<512x16xf32>, vector<16x8xf32>, vector<512x8xf32> -> vector<512x8xf32>
    %55 = arith.mulf %31, %52 : vector<512x8xf32>
    %56 = arith.addf %55, %54 : vector<512x8xf32>
    %cst_43 = arith.constant 0.000000e+00 : f32
    %57 = vector.broadcast %cst_43 : f32 to vector<512x8xf32>
    %58 = arith.maximumf %56, %57 : vector<512x8xf32>
    %c0_44 = arith.constant 0 : index
    %c0_45 = arith.constant 0 : index
    %59 = vector.load %arg11[%c0_44, %c0_45] : memref<512x512xf32, #tpu.memory_space<vmem>>, vector<512x512xf32>
    %cst_46 = arith.constant dense<0.000000e+00> : vector<512x8xf32>
    %60 = tpu.matmul %59, %58, %cst_46 {dimension_numbers = #tpu.dot_dimension_numbers<[1], [0], [0], [1], [0, 0, 1, 1], [], []>} : vector<512x512xf32>, vector<512x8xf32>, vector<512x8xf32> -> vector<512x8xf32>
    %c0_47 = arith.constant 0 : index
    %c0_48 = arith.constant 0 : index
    %61 = vector.load %arg12[%c0_47, %c0_48] : memref<64x512xf32, #tpu.memory_space<vmem>>, vector<64x512xf32>
    %cst_49 = arith.constant dense<0.000000e+00> : vector<64x8xf32>
    %62 = tpu.matmul %61, %60, %cst_49 {dimension_numbers = #tpu.dot_dimension_numbers<[1], [0], [0], [1], [0, 0, 1, 1], [], []>} : vector<64x512xf32>, vector<512x8xf32>, vector<64x8xf32> -> vector<64x8xf32>
    %c0_50 = arith.constant 0 : index
    %c0_51 = arith.constant 0 : index
    %63 = vector.load %arg12[%c0_50, %c0_51] : memref<64x512xf32, #tpu.memory_space<vmem>>, vector<64x512xf32>
    %64 = arith.mulf %60, %60 : vector<512x8xf32>
    %cst_52 = arith.constant dense<0.000000e+00> : vector<64x8xf32>
    %65 = tpu.matmul %63, %64, %cst_52 {dimension_numbers = #tpu.dot_dimension_numbers<[1], [0], [0], [1], [0, 0, 1, 1], [], []>} : vector<64x512xf32>, vector<512x8xf32>, vector<64x8xf32> -> vector<64x8xf32>
    %66 = arith.mulf %62, %62 : vector<64x8xf32>
    %67 = arith.subf %65, %66 : vector<64x8xf32>
    %cst_53 = arith.constant 0.000000e+00 : f32
    %68 = vector.broadcast %cst_53 : f32 to vector<64x8xf32>
    %69 = arith.maximumf %67, %68 : vector<64x8xf32>
    %c0_54 = arith.constant 0 : index
    %c0_55 = arith.constant 0 : index
    %70 = vector.load %arg14[%c0_54, %c0_55] : memref<64x1xf32, #tpu.memory_space<vmem>>, vector<64x1xf32>
    %cst_56 = arith.constant 9.99999974E-6 : f32
    %71 = vector.broadcast %cst_56 : f32 to vector<64x8xf32>
    %72 = arith.addf %69, %71 : vector<64x8xf32>
    %73 = math.rsqrt %72 : vector<64x8xf32>
    %74 = vector.broadcast %70 : vector<64x1xf32> to vector<64x8xf32>
    %75 = arith.mulf %74, %73 : vector<64x8xf32>
    %c0_57 = arith.constant 0 : index
    %c0_58 = arith.constant 0 : index
    %76 = vector.load %arg15[%c0_57, %c0_58] : memref<64x1xf32, #tpu.memory_space<vmem>>, vector<64x1xf32>
    %77 = arith.mulf %62, %75 : vector<64x8xf32>
    %78 = vector.broadcast %76 : vector<64x1xf32> to vector<64x8xf32>
    %79 = arith.subf %78, %77 : vector<64x8xf32>
    %c0_59 = arith.constant 0 : index
    %c0_60 = arith.constant 0 : index
    %80 = vector.load %arg13[%c0_59, %c0_60] : memref<512x64xf32, #tpu.memory_space<vmem>>, vector<512x64xf32>
    %cst_61 = arith.constant dense<0.000000e+00> : vector<512x8xf32>
    %81 = tpu.matmul %80, %75, %cst_61 {dimension_numbers = #tpu.dot_dimension_numbers<[1], [0], [0], [1], [0, 0, 1, 1], [], []>} : vector<512x64xf32>, vector<64x8xf32>, vector<512x8xf32> -> vector<512x8xf32>
    %c0_62 = arith.constant 0 : index
    %c0_63 = arith.constant 0 : index
    %82 = vector.load %arg13[%c0_62, %c0_63] : memref<512x64xf32, #tpu.memory_space<vmem>>, vector<512x64xf32>
    %cst_64 = arith.constant dense<0.000000e+00> : vector<512x8xf32>
    %83 = tpu.matmul %82, %79, %cst_64 {dimension_numbers = #tpu.dot_dimension_numbers<[1], [0], [0], [1], [0, 0, 1, 1], [], []>} : vector<512x64xf32>, vector<64x8xf32>, vector<512x8xf32> -> vector<512x8xf32>
    %84 = arith.mulf %60, %81 : vector<512x8xf32>
    %85 = arith.addf %84, %83 : vector<512x8xf32>
    %cst_65 = arith.constant 0.000000e+00 : f32
    %86 = vector.broadcast %cst_65 : f32 to vector<512x8xf32>
    %87 = arith.maximumf %85, %86 : vector<512x8xf32>
    %88 = tpu.iota {dimensions = array<i32: 1>} : vector<512x8xi32>
    %c0_i32 = arith.constant 0 : i32
    %89 = vector.broadcast %c0_i32 : i32 to vector<512x8xi32>
    %90 = arith.cmpi eq, %88, %89 : vector<512x8xi32>
    %cst_66 = arith.constant 0.000000e+00 : f32
    %91 = vector.broadcast %cst_66 : f32 to vector<512x8xf32>
    %92 = arith.select %90, %87, %91 : vector<512x8xi1>, vector<512x8xf32>
    %cst_67 = arith.constant dense<0.000000e+00> : vector<512xf32>
    %93 = vector.multi_reduction <add>, %92, %cst_67 [1] : vector<512x8xf32> to vector<512xf32>
    %94 = vector.shape_cast %93 : vector<512xf32> to vector<512x1xf32>
    %c1_i32 = arith.constant 1 : i32
    %95 = vector.broadcast %c1_i32 : i32 to vector<512x8xi32>
    %96 = arith.cmpi eq, %88, %95 : vector<512x8xi32>
    %cst_68 = arith.constant 0.000000e+00 : f32
    %97 = vector.broadcast %cst_68 : f32 to vector<512x8xf32>
    %98 = arith.select %96, %87, %97 : vector<512x8xi1>, vector<512x8xf32>
    %cst_69 = arith.constant dense<0.000000e+00> : vector<512xf32>
    %99 = vector.multi_reduction <add>, %98, %cst_69 [1] : vector<512x8xf32> to vector<512xf32>
    %100 = vector.shape_cast %99 : vector<512xf32> to vector<512x1xf32>
    %c0_70 = arith.constant 0 : index
    %c0_71 = arith.constant 0 : index
    %101 = vector.load %arg16[%c0_70, %c0_71] : memref<512x128xf32, #tpu.memory_space<vmem>>, vector<512x128xf32>
    %c0_72 = arith.constant 0 : index
    %c0_73 = arith.constant 0 : index
    %102 = vector.load %arg17[%c0_72, %c0_73] : memref<2x512xf32, #tpu.memory_space<vmem>>, vector<2x512xf32>
    %103 = vector.broadcast %94 : vector<512x1xf32> to vector<512x128xf32>
    %104 = arith.mulf %101, %103 : vector<512x128xf32>
    %cst_74 = arith.constant dense<0.000000e+00> : vector<2x128xf32>
    %105 = tpu.matmul %102, %104, %cst_74 {dimension_numbers = #tpu.dot_dimension_numbers<[1], [0], [0], [1], [0, 0, 1, 1], [], []>} : vector<2x512xf32>, vector<512x128xf32>, vector<2x128xf32> -> vector<2x128xf32>
    %106 = vector.broadcast %100 : vector<512x1xf32> to vector<512x128xf32>
    %107 = arith.mulf %101, %106 : vector<512x128xf32>
    %cst_75 = arith.constant dense<0.000000e+00> : vector<2x128xf32>
    %108 = tpu.matmul %102, %107, %cst_75 {dimension_numbers = #tpu.dot_dimension_numbers<[1], [0], [0], [1], [0, 0, 1, 1], [], []>} : vector<2x512xf32>, vector<512x128xf32>, vector<2x128xf32> -> vector<2x128xf32>
    %cst_76 = arith.constant dense<0.000000e+00> : vector<128xf32>
    %109 = vector.multi_reduction <add>, %105, %cst_76 [0] : vector<2x128xf32> to vector<128xf32>
    %110 = vector.shape_cast %109 : vector<128xf32> to vector<1x128xf32>
    %cst_77 = arith.constant 2.000000e+00 : f32
    %111 = vector.broadcast %cst_77 : f32 to vector<1x128xf32>
    %112 = arith.divf %110, %111 : vector<1x128xf32>
    %113 = arith.mulf %105, %105 : vector<2x128xf32>
    %cst_78 = arith.constant dense<0.000000e+00> : vector<128xf32>
    %114 = vector.multi_reduction <add>, %113, %cst_78 [0] : vector<2x128xf32> to vector<128xf32>
    %115 = vector.shape_cast %114 : vector<128xf32> to vector<1x128xf32>
    %cst_79 = arith.constant 2.000000e+00 : f32
    %116 = vector.broadcast %cst_79 : f32 to vector<1x128xf32>
    %117 = arith.divf %115, %116 : vector<1x128xf32>
    %118 = arith.mulf %112, %112 : vector<1x128xf32>
    %119 = arith.subf %117, %118 : vector<1x128xf32>
    %cst_80 = arith.constant 0.000000e+00 : f32
    %120 = vector.broadcast %cst_80 : f32 to vector<1x128xf32>
    %121 = arith.maximumf %119, %120 : vector<1x128xf32>
    %c0_81 = arith.constant 0 : index
    %c0_82 = arith.constant 0 : index
    %122 = vector.load %arg18[%c0_81, %c0_82] : memref<1x128xf32, #tpu.memory_space<vmem>>, vector<1x128xf32>
    %cst_83 = arith.constant 9.99999974E-6 : f32
    %123 = vector.broadcast %cst_83 : f32 to vector<1x128xf32>
    %124 = arith.addf %121, %123 : vector<1x128xf32>
    %125 = math.rsqrt %124 : vector<1x128xf32>
    %126 = arith.mulf %122, %125 : vector<1x128xf32>
    %127 = vector.broadcast %112 : vector<1x128xf32> to vector<2x128xf32>
    %128 = arith.subf %105, %127 : vector<2x128xf32>
    %129 = vector.broadcast %126 : vector<1x128xf32> to vector<2x128xf32>
    %130 = arith.mulf %128, %129 : vector<2x128xf32>
    %c0_84 = arith.constant 0 : index
    %c0_85 = arith.constant 0 : index
    %131 = vector.load %arg19[%c0_84, %c0_85] : memref<1x128xf32, #tpu.memory_space<vmem>>, vector<1x128xf32>
    %132 = vector.broadcast %131 : vector<1x128xf32> to vector<2x128xf32>
    %133 = arith.addf %130, %132 : vector<2x128xf32>
    %cst_86 = arith.constant 0.000000e+00 : f32
    %134 = vector.broadcast %cst_86 : f32 to vector<2x128xf32>
    %135 = arith.maximumf %133, %134 : vector<2x128xf32>
    %cst_87 = arith.constant 0.111111112 : f32
    %136 = vector.broadcast %cst_87 : f32 to vector<2x128xf32>
    %137 = arith.mulf %135, %136 : vector<2x128xf32>
    %cst_88 = arith.constant dense<0.000000e+00> : vector<128xf32>
    %138 = vector.multi_reduction <add>, %108, %cst_88 [0] : vector<2x128xf32> to vector<128xf32>
    %139 = vector.shape_cast %138 : vector<128xf32> to vector<1x128xf32>
    %cst_89 = arith.constant 2.000000e+00 : f32
    %140 = vector.broadcast %cst_89 : f32 to vector<1x128xf32>
    %141 = arith.divf %139, %140 : vector<1x128xf32>
    %142 = arith.mulf %108, %108 : vector<2x128xf32>
    %cst_90 = arith.constant dense<0.000000e+00> : vector<128xf32>
    %143 = vector.multi_reduction <add>, %142, %cst_90 [0] : vector<2x128xf32> to vector<128xf32>
    %144 = vector.shape_cast %143 : vector<128xf32> to vector<1x128xf32>
    %cst_91 = arith.constant 2.000000e+00 : f32
    %145 = vector.broadcast %cst_91 : f32 to vector<1x128xf32>
    %146 = arith.divf %144, %145 : vector<1x128xf32>
    %147 = arith.mulf %141, %141 : vector<1x128xf32>
    %148 = arith.subf %146, %147 : vector<1x128xf32>
    %cst_92 = arith.constant 0.000000e+00 : f32
    %149 = vector.broadcast %cst_92 : f32 to vector<1x128xf32>
    %150 = arith.maximumf %148, %149 : vector<1x128xf32>
    %c0_93 = arith.constant 0 : index
    %c0_94 = arith.constant 0 : index
    %151 = vector.load %arg18[%c0_93, %c0_94] : memref<1x128xf32, #tpu.memory_space<vmem>>, vector<1x128xf32>
    %cst_95 = arith.constant 9.99999974E-6 : f32
    %152 = vector.broadcast %cst_95 : f32 to vector<1x128xf32>
    %153 = arith.addf %150, %152 : vector<1x128xf32>
    %154 = math.rsqrt %153 : vector<1x128xf32>
    %155 = arith.mulf %151, %154 : vector<1x128xf32>
    %156 = vector.broadcast %141 : vector<1x128xf32> to vector<2x128xf32>
    %157 = arith.subf %108, %156 : vector<2x128xf32>
    %158 = vector.broadcast %155 : vector<1x128xf32> to vector<2x128xf32>
    %159 = arith.mulf %157, %158 : vector<2x128xf32>
    %c0_96 = arith.constant 0 : index
    %c0_97 = arith.constant 0 : index
    %160 = vector.load %arg19[%c0_96, %c0_97] : memref<1x128xf32, #tpu.memory_space<vmem>>, vector<1x128xf32>
    %161 = vector.broadcast %160 : vector<1x128xf32> to vector<2x128xf32>
    %162 = arith.addf %159, %161 : vector<2x128xf32>
    %cst_98 = arith.constant 0.000000e+00 : f32
    %163 = vector.broadcast %cst_98 : f32 to vector<2x128xf32>
    %164 = arith.maximumf %162, %163 : vector<2x128xf32>
    %cst_99 = arith.constant 0.111111112 : f32
    %165 = vector.broadcast %cst_99 : f32 to vector<2x128xf32>
    %166 = arith.mulf %164, %165 : vector<2x128xf32>
    %167 = arith.mulf %137, %137 : vector<2x128xf32>
    %cst_100 = arith.constant dense<0.000000e+00> : vector<2xf32>
    %168 = vector.multi_reduction <add>, %167, %cst_100 [1] : vector<2x128xf32> to vector<2xf32>
    %169 = vector.shape_cast %168 : vector<2xf32> to vector<2x1xf32>
    %cst_101 = arith.constant 1.000000e-24 : f32
    %170 = vector.broadcast %cst_101 : f32 to vector<2x1xf32>
    %171 = arith.maximumf %169, %170 : vector<2x1xf32>
    %172 = math.rsqrt %171 : vector<2x1xf32>
    %173 = arith.mulf %166, %166 : vector<2x128xf32>
    %cst_102 = arith.constant dense<0.000000e+00> : vector<2xf32>
    %174 = vector.multi_reduction <add>, %173, %cst_102 [1] : vector<2x128xf32> to vector<2xf32>
    %175 = vector.shape_cast %174 : vector<2xf32> to vector<2x1xf32>
    %cst_103 = arith.constant 1.000000e-24 : f32
    %176 = vector.broadcast %cst_103 : f32 to vector<2x1xf32>
    %177 = arith.maximumf %175, %176 : vector<2x1xf32>
    %178 = math.rsqrt %177 : vector<2x1xf32>
    %179 = arith.mulf %166, %137 : vector<2x128xf32>
    %cst_104 = arith.constant dense<0.000000e+00> : vector<2xf32>
    %180 = vector.multi_reduction <add>, %179, %cst_104 [1] : vector<2x128xf32> to vector<2xf32>
    %181 = vector.shape_cast %180 : vector<2xf32> to vector<2x1xf32>
    %182 = arith.mulf %181, %178 : vector<2x1xf32>
    %183 = arith.mulf %182, %172 : vector<2x1xf32>
    %c0_105 = arith.constant 0 : index
    %c0_106 = arith.constant 0 : index
    %184 = vector.load %arg23[%c0_105, %c0_106] : memref<2x1xf32, #tpu.memory_space<vmem>>, vector<2x1xf32>
    tpu.vector_store %arg23[%c0_105, %c0_106], %183 {strides = array<i32>} : memref<2x1xf32, #tpu.memory_space<vmem>>, vector<2x1xf32>,
    %c0_107 = arith.constant 0 : index
    %c0_108 = arith.constant 0 : index
    %185 = vector.load %arg20[%c0_107, %c0_108] : memref<128x256xf32, #tpu.memory_space<vmem>>, vector<128x256xf32>
    %cst_109 = arith.constant dense<0.000000e+00> : vector<2x256xf32>
    %186 = tpu.matmul %166, %185, %cst_109 {dimension_numbers = #tpu.dot_dimension_numbers<[1], [0], [0], [1], [0, 0, 1, 1], [], []>} : vector<2x128xf32>, vector<128x256xf32>, vector<2x256xf32> -> vector<2x256xf32>
    %187 = vector.broadcast %178 : vector<2x1xf32> to vector<2x256xf32>
    %188 = arith.mulf %186, %187 : vector<2x256xf32>
    %c0_110 = arith.constant 0 : index
    %c0_111 = arith.constant 0 : index
    %189 = vector.load %arg24[%c0_110, %c0_111] : memref<2x256xf32, #tpu.memory_space<vmem>>, vector<2x256xf32>
    tpu.vector_store %arg24[%c0_110, %c0_111], %188 {strides = array<i32>} : memref<2x256xf32, #tpu.memory_space<vmem>>, vector<2x256xf32>,
    %c0_112 = arith.constant 0 : index
    %c0_113 = arith.constant 0 : index
    %190 = vector.load %arg21[%c0_112, %c0_113] : memref<2x1xi32, #tpu.memory_space<vmem>>, vector<2x1xi32>
    %191 = vector.shape_cast %190 : vector<2x1xi32> to vector<2x1xi32>
    %192 = vector.broadcast %191 : vector<2x1xi32> to vector<2x256xi32>
    %c0_114 = arith.constant 0 : index
    %c0_115 = arith.constant 0 : index
    %193 = vector.load %arg22[%c0_114, %c0_115] : memref<1x256xi32, #tpu.memory_space<vmem>>, vector<1x256xi32>
    %194 = vector.shape_cast %193 : vector<1x256xi32> to vector<1x256xi32>
    %195 = vector.broadcast %194 : vector<1x256xi32> to vector<2x256xi32>
    %196 = arith.cmpi eq, %192, %195 : vector<2x256xi32>
    %197 = arith.extui %196 : vector<2x256xi1> to vector<2x256xi32>
    %198 = arith.sitofp %197 : vector<2x256xi32> to vector<2x256xf32>
    %c0_116 = arith.constant 0 : index
    %c0_117 = arith.constant 0 : index
    %199 = vector.load %arg25[%c0_116, %c0_117] : memref<2x256xf32, #tpu.memory_space<vmem>>, vector<2x256xf32>
    tpu.vector_store %arg25[%c0_116, %c0_117], %198 {strides = array<i32>} : memref<2x256xf32, #tpu.memory_space<vmem>>, vector<2x256xf32>,
    return
  }
}

</mosaic_0001>

<llo_original>
// kernel: squeeze.2
$region0: #{squeeze.2}
  %s0 = inlined_call_operand.vmem [shape: f32[2,1,16,16], index: 0, kind: input, shape index: {}]
  %s1 = inlined_call_operand.vmem [shape: f32[512,1], index: 1, kind: output, shape index: {}]
  $region1: #{squeeze.2} parent=0
    #allocation0 [shape = 'u8[16384]{0}', space=vmem, size = 0x4000, scoped, tag = 'scoped mem for output reshape']
    %v2 = vld [vmem:[%s0] ss:$8 sm:$0xf]
    %vm3 = vcmask 130048
    %4 = vst.msk [vmem:[#allocation0] ss:$8 sm:$0xf] %vm3, %v2
    %s5 = scalar_lea.vmem %s0, 7
    %v6 = vld [vmem:[%s5] ss:$8 sm:$0xf]
    %7 = vrot.lane.b32.xlu0 %v6, 112
    %v8 = vpop.permute.xlu0 %7
    %vm9 = vcmask 1048448
    %10 = vst.msk [vmem:[#allocation0] ss:$8 sm:$0xf] %vm9, %v8
    %s11 = scalar_lea.vmem %s0, 6
    %v12 = vld [vmem:[%s11] ss:$8 sm:$0xf]
    %13 = vrot.lane.b32.xlu0 %v12, 96
    %v14 = vpop.permute.xlu0 %13
    %vm15 = vcmask 917248
    %16 = vst.msk [vmem:[#allocation0] ss:$8 sm:$0xf] %vm15, %v14
    %s17 = scalar_lea.vmem %s0, 5
    %v18 = vld [vmem:[%s17] ss:$8 sm:$0xf]
    %19 = vrot.lane.b32.xlu0 %v18, 80
    %v20 = vpop.permute.xlu0 %19
    %vm21 = vcmask 786048
    %22 = vst.msk [vmem:[#allocation0] ss:$8 sm:$0xf] %vm21, %v20
    %s23 = scalar_lea.vmem %s0, 4
    %v24 = vld [vmem:[%s23] ss:$8 sm:$0xf]
    %25 = vrot.lane.b32.xlu0 %v24, 64
    %v26 = vpop.permute.xlu0 %25
    %vm27 = vcmask 654848
    %28 = vst.msk [vmem:[#allocation0] ss:$8 sm:$0xf] %vm27, %v26
    %s29 = scalar_lea.vmem %s0, 3
    %v30 = vld [vmem:[%s29] ss:$8 sm:$0xf]
    %31 = vrot.lane.b32.xlu0 %v30, 48
    %v32 = vpop.permute.xlu0 %31
    %vm33 = vcmask 523648
    %34 = vst.msk [vmem:[#allocation0] ss:$8 sm:$0xf] %vm33, %v32
    %s35 = scalar_lea.vmem %s0, 2
    %v36 = vld [vmem:[%s35] ss:$8 sm:$0xf]
    %37 = vrot.lane.b32.xlu0 %v36, 32
    %v38 = vpop.permute.xlu0 %37
    %vm39 = vcmask 392448
    %40 = vst.msk [vmem:[#allocation0] ss:$8 sm:$0xf] %vm39, %v38
    %s41 = scalar_lea.vmem %s0, 1
    %v42 = vld [vmem:[%s41] ss:$8 sm:$0xf]
    %43 = vrot.lane.b32.xlu0 %v42, 16
    %v44 = vpop.permute.xlu0 %43
    %vm45 = vcmask 261248
    %46 = vst.msk [vmem:[#allocation0] ss:$8 sm:$0xf] %vm45, %v44
    %s48 = sshllo.u32 0, 1
    %v50 = vld [vmem:[#allocation0] sm:%s48]
    %s51 = sshllo.u32 0, 1
    %52 = vst [vmem:[%s1] sm:%s51] %v50
    %s53 = scalar_lea.vmem [#allocation0], 8
    %v54 = vld [vmem:[%s53] sm:%s48]
    %s55 = sshllo.u32 0, 1
    %s56 = scalar_lea.vmem %s1, 1
    %57 = vst [vmem:[%s56] sm:%s55] %v54
    %s58 = scalar_lea.vmem [#allocation0], 16
    %v59 = vld [vmem:[%s58] sm:%s48]
    %s60 = sshllo.u32 0, 1
    %s61 = smul.addr 1, 2
    %s62 = scalar_lea.vmem %s1, %s61
    %63 = vst [vmem:[%s62] sm:%s60] %v59
    %s64 = scalar_lea.vmem [#allocation0], 24
    %v65 = vld [vmem:[%s64] sm:%s48]
    %s66 = sshllo.u32 0, 1
    %s67 = smul.addr 1, 3
    %s68 = scalar_lea.vmem %s1, %s67
    %69 = vst [vmem:[%s68] sm:%s66] %v65

// kernel: cossl_forward.1
$region0: #{cossl_forward.1}
  #allocation0 [shape = 'u32[]', space=smem, size = 0x4, offset = 0x4, fixed_abs, tag = 'smem constant byte address 0x4 - core index']
  #allocation1 [shape = 'u32[144,128]{1,0:T(1,128)}', space=vmem, size = 0x12000, scoped, tag = 'internal scratch']
  %s0 = inlined_call_operand.vmem [shape: f32[512,8], index: 0, kind: input, shape index: {}]
  %s1 = inlined_call_operand.vmem [shape: f32[512,512], index: 1, kind: input, shape index: {}]
  %s2 = inlined_call_operand.vmem [shape: f32[8,512], index: 2, kind: input, shape index: {}]
  %s3 = inlined_call_operand.vmem [shape: f32[512,8], index: 3, kind: input, shape index: {}]
  %s4 = inlined_call_operand.vmem [shape: f32[8,1], index: 4, kind: input, shape index: {}]
  %s5 = inlined_call_operand.vmem [shape: f32[8,1], index: 5, kind: input, shape index: {}]
  %s6 = inlined_call_operand.hbm [shape: f32[512,512], index: 6, kind: input, shape index: {}]
  %s7 = inlined_call_operand.vmem [shape: f32[16,512], index: 7, kind: input, shape index: {}]
  %s8 = inlined_call_operand.vmem [shape: f32[512,16], index: 8, kind: input, shape index: {}]
  %s9 = inlined_call_operand.vmem [shape: f32[16,1], index: 9, kind: input, shape index: {}]
  %s10 = inlined_call_operand.vmem [shape: f32[16,1], index: 10, kind: input, shape index: {}]
  %s11 = inlined_call_operand.hbm [shape: f32[512,512], index: 11, kind: input, shape index: {}]
  %s12 = inlined_call_operand.vmem [shape: f32[64,512], index: 12, kind: input, shape index: {}]
  %s13 = inlined_call_operand.vmem [shape: f32[512,64], index: 13, kind: input, shape index: {}]
  %s14 = inlined_call_operand.vmem [shape: f32[64,1], index: 14, kind: input, shape index: {}]
  %s15 = inlined_call_operand.vmem [shape: f32[64,1], index: 15, kind: input, shape index: {}]
  %s16 = inlined_call_operand.vmem [shape: f32[512,128], index: 16, kind: input, shape index: {}]
  %s17 = inlined_call_operand.hbm [shape: f32[2,512], index: 17, kind: input, shape index: {}]
  %s18 = inlined_call_operand.vmem [shape: f32[1,128], index: 18, kind: input, shape index: {}]
  %s19 = inlined_call_operand.vmem [shape: f32[1,128], index: 19, kind: input, shape index: {}]
  %s20 = inlined_call_operand.hbm [shape: f32[128,256], index: 20, kind: input, shape index: {}]
  %s21 = inlined_call_operand.vmem [shape: s32[2,1], index: 21, kind: input, shape index: {}]
  %s22 = inlined_call_operand.vmem [shape: s32[1,256], index: 22, kind: input, shape index: {}]
  %s23 = inlined_call_operand.vmem [shape: f32[2,1], index: 23, kind: output, shape index: {0}]
  %s24 = inlined_call_operand.vmem [shape: f32[2,256], index: 24, kind: output, shape index: {1}]
  %s25 = inlined_call_operand.vmem [shape: f32[2,256], index: 25, kind: output, shape index: {2}]
  %26 = xla_tuple %s23, %s24, %s25
  %s27 = sld [smem:[#allocation0]]
  $region134: #{cossl_forward.1} parent=0
    _
  %s29 = ssub.s32 1, %s27
  %s30 = scalar_select 0, %s29, %s27
  $region1: #{cossl_forward.1} parent=0
    #allocation2 [shape = 'u8[1048576]{0}', space=vmem, size = 0x100000, scoped, tag = 'input window, operand 6, single buffered']
    #allocation3 [shape = 's32[1]{0}', space=sflag, size = 0x4, scoped, tag = 'scoped memory for cossl_forward.1']
    #allocation4 [shape = 'u8[1048576]{0}', space=vmem, size = 0x100000, scoped, tag = 'input window, operand 11, single buffered']
    #allocation5 [shape = 's32[1]{0}', space=sflag, size = 0x4, scoped, tag = 'scoped memory for cossl_forward.1']
    #allocation6 [shape = 'u8[4096]{0}', space=vmem, size = 0x1000, scoped, tag = 'input window, operand 17, single buffered']
    #allocation7 [shape = 'u8[131072]{0}', space=vmem, size = 0x20000, scoped, tag = 'input window, operand 20, single buffered']
    #allocation8 [shape = 's32[1]{0}', space=sflag, size = 0x4, scoped, tag = 'scoped memory for cossl_forward.1']
    %31 = vsyncpa [#allocation3], 0
    %32 = vsyncpa [#allocation5], 0
    %33 = vsyncpa [#allocation8], 0
    // Predicated region
    $region2: #{cossl_forward.1} parent=1 // pred_check
      _
    $region3: #{cossl_forward.1} parent=1 // pred_check_branch
      %35 = sbr.rel (0) target = $region5
    $region4: #{cossl_forward.1} parent=1 // pred_region
      _
    $region5: #{cossl_forward.1} parent=1 // pred_fallthru
      _
    // Predicated region
    $region6: #{cossl_forward.1} parent=1 // pred_check
      _
    $region7: #{cossl_forward.1} parent=1 // pred_check_branch
      %37 = sbr.rel (0) target = $region9
    $region8: #{cossl_forward.1} parent=1 // pred_region
      _
    $region9: #{cossl_forward.1} parent=1 // pred_fallthru
      _
    // Predicated region
    $region10: #{cossl_forward.1} parent=1 // pred_check
      _
    $region11: #{cossl_forward.1} parent=1 // pred_check_branch
      %39 = sbr.rel (0) target = $region13
    $region12: #{cossl_forward.1} parent=1 // pred_region
      _
    $region13: #{cossl_forward.1} parent=1 // pred_fallthru
      _
    // Predicated region
    $region14: #{cossl_forward.1} parent=1 // pred_check
      _
    $region15: #{cossl_forward.1} parent=1 // pred_check_branch
      %41 = sbr.rel (0) target = $region17
    $region16: #{cossl_forward.1} parent=1 // pred_region
      _
    $region17: #{cossl_forward.1} parent=1 // pred_fallthru
      _
    // Predicated region
    $region18: #{cossl_forward.1} parent=1 // pred_check
      _
    $region19: #{cossl_forward.1} parent=1 // pred_check_branch
      %43 = sbr.rel (0) target = $region21
    $region20: #{cossl_forward.1} parent=1 // pred_region
      _
    $region21: #{cossl_forward.1} parent=1 // pred_fallthru
      _
    // Predicated region
    $region22: #{cossl_forward.1} parent=1 // pred_check
      _
    $region23: #{cossl_forward.1} parent=1 // pred_check_branch
      %45 = sbr.rel (0) target = $region25
    $region24: #{cossl_forward.1} parent=1 // pred_region
      _
    $region25: #{cossl_forward.1} parent=1 // pred_fallthru
      _
    // Predicated region
    $region26: #{cossl_forward.1} parent=1 // pred_check
      _
    $region27: #{cossl_forward.1} parent=1 // pred_check_branch
      %47 = sbr.rel (0) target = $region29
    $region28: #{cossl_forward.1} parent=1 // pred_region
      %s49 = ssub.s32 32768, 32768
      %50 = vsyncadd [#allocation3], %s49
      %s51 = sshll.u32 [#allocation2], 4
      %s52 = int_to_ptr.vmem [resolvable:$true] %s51
      %57 = dma.hbm_to_vmem [thread:$0]  %s6, 32768, %s52, [#allocation3], 512, 512, 32
    $region29: #{cossl_forward.1} parent=1 // pred_fallthru
      _
    // Predicated region
    $region30: #{cossl_forward.1} parent=1 // pred_check
      _
    $region31: #{cossl_forward.1} parent=1 // pred_check_branch
      %59 = sbr.rel (0) target = $region33
    $region32: #{cossl_forward.1} parent=1 // pred_region
      _
    $region33: #{cossl_forward.1} parent=1 // pred_fallthru
      _
    // Predicated region
    $region34: #{cossl_forward.1} parent=1 // pred_check
      _
    $region35: #{cossl_forward.1} parent=1 // pred_check_branch
      %61 = sbr.rel (0) target = $region37
    $region36: #{cossl_forward.1} parent=1 // pred_region
      _
    $region37: #{cossl_forward.1} parent=1 // pred_fallthru
      _
    // Predicated region
    $region38: #{cossl_forward.1} parent=1 // pred_check
      _
    $region39: #{cossl_forward.1} parent=1 // pred_check_branch
      %63 = sbr.rel (0) target = $region41
    $region40: #{cossl_forward.1} parent=1 // pred_region
      _
    $region41: #{cossl_forward.1} parent=1 // pred_fallthru
      _
    // Predicated region
    $region42: #{cossl_forward.1} parent=1 // pred_check
      _
    $region43: #{cossl_forward.1} parent=1 // pred_check_branch
      %65 = sbr.rel (0) target = $region45
    $region44: #{cossl_forward.1} parent=1 // pred_region
      _
    $region45: #{cossl_forward.1} parent=1 // pred_fallthru
      _
    // Predicated region
    $region46: #{cossl_forward.1} parent=1 // pred_check
      _
    $region47: #{cossl_forward.1} parent=1 // pred_check_branch
      %67 = sbr.rel (0) target = $region49
    $region48: #{cossl_forward.1} parent=1 // pred_region
      %s69 = ssub.s32 32768, 32768
      %70 = vsyncadd [#allocation5], %s69
      %s71 = sshll.u32 [#allocation4], 4
      %s72 = int_to_ptr.vmem [resolvable:$true] %s71
      %77 = dma.hbm_to_vmem [thread:$0]  %s11, 32768, %s72, [#allocation5], 512, 512, 32
    $region49: #{cossl_forward.1} parent=1 // pred_fallthru
      _
    // Predicated region
    $region50: #{cossl_forward.1} parent=1 // pred_check
      _
    $region51: #{cossl_forward.1} parent=1 // pred_check_branch
      %79 = sbr.rel (0) target = $region53
    $region52: #{cossl_forward.1} parent=1 // pred_region
      _
    $region53: #{cossl_forward.1} parent=1 // pred_fallthru
      _
    // Predicated region
    $region54: #{cossl_forward.1} parent=1 // pred_check
      _
    $region55: #{cossl_forward.1} parent=1 // pred_check_branch
      %81 = sbr.rel (0) target = $region57
    $region56: #{cossl_forward.1} parent=1 // pred_region
      _
    $region57: #{cossl_forward.1} parent=1 // pred_fallthru
      _
    // Predicated region
    $region58: #{cossl_forward.1} parent=1 // pred_check
      _
    $region59: #{cossl_forward.1} parent=1 // pred_check_branch
      %83 = sbr.rel (0) target = $region61
    $region60: #{cossl_forward.1} parent=1 // pred_region
      _
    $region61: #{cossl_forward.1} parent=1 // pred_fallthru
      _
    // Predicated region
    $region62: #{cossl_forward.1} parent=1 // pred_check
      _
    $region63: #{cossl_forward.1} parent=1 // pred_check_branch
      %85 = sbr.rel (0) target = $region65
    $region64: #{cossl_forward.1} parent=1 // pred_region
      _
    $region65: #{cossl_forward.1} parent=1 // pred_fallthru
      _
    // Predicated region
    $region66: #{cossl_forward.1} parent=1 // pred_check
      _
    $region67: #{cossl_forward.1} parent=1 // pred_check_branch
      %87 = sbr.rel (0) target = $region69
    $region68: #{cossl_forward.1} parent=1 // pred_region
      _
    $region69: #{cossl_forward.1} parent=1 // pred_fallthru
      _
    // Predicated region
    $region70: #{cossl_forward.1} parent=1 // pred_check
      _
    $region71: #{cossl_forward.1} parent=1 // pred_check_branch
      %89 = sbr.rel (0) target = $region73
    $region72: #{cossl_forward.1} parent=1 // pred_region
      %s91 = ssub.s32 128, 128
      %92 = vsyncadd [#allocation5], %s91
      %s94 = sshll.u32 [#allocation6], 4
      %s95 = int_to_ptr.vmem [resolvable:$true] %s94
      %97 = dma.hbm_to_vmem [thread:$0]  %s17, 128, %s95, [#allocation5]
    $region73: #{cossl_forward.1} parent=1 // pred_fallthru
      _
    // Predicated region
    $region74: #{cossl_forward.1} parent=1 // pred_check
      _
    $region75: #{cossl_forward.1} parent=1 // pred_check_branch
      %99 = sbr.rel (0) target = $region77
    $region76: #{cossl_forward.1} parent=1 // pred_region
      _
    $region77: #{cossl_forward.1} parent=1 // pred_fallthru
      _
    // Predicated region
    $region78: #{cossl_forward.1} parent=1 // pred_check
      _
    $region79: #{cossl_forward.1} parent=1 // pred_check_branch
      %101 = sbr.rel (0) target = $region81
    $region80: #{cossl_forward.1} parent=1 // pred_region
      _
    $region81: #{cossl_forward.1} parent=1 // pred_fallthru
      _
    // Predicated region
    $region82: #{cossl_forward.1} parent=1 // pred_check
      _
    $region83: #{cossl_forward.1} parent=1 // pred_check_branch
      %103 = sbr.rel (0) target = $region85
    $region84: #{cossl_forward.1} parent=1 // pred_region
      %s105 = ssub.s32 4096, 4096
      %106 = vsyncadd [#allocation8], %s105
      %s107 = sshll.u32 [#allocation7], 4
      %s108 = int_to_ptr.vmem [resolvable:$true] %s107
      %113 = dma.hbm_to_vmem [thread:$0]  %s20, 4096, %s108, [#allocation8], 256, 256, 16
    $region85: #{cossl_forward.1} parent=1 // pred_fallthru
      _
    // Predicated region
    $region86: #{cossl_forward.1} parent=1 // pred_check
      _
    $region87: #{cossl_forward.1} parent=1 // pred_check_branch
      %115 = sbr.rel (0) target = $region89
    $region88: #{cossl_forward.1} parent=1 // pred_region
      _
    $region89: #{cossl_forward.1} parent=1 // pred_fallthru
      _
    // Predicated region
    $region90: #{cossl_forward.1} parent=1 // pred_check
      _
    $region91: #{cossl_forward.1} parent=1 // pred_check_branch
      %117 = sbr.rel (0) target = $region93
    $region92: #{cossl_forward.1} parent=1 // pred_region
      _
    $region93: #{cossl_forward.1} parent=1 // pred_fallthru
      _
    // Predicated region
    $region94: #{cossl_forward.1} parent=1 // pred_check
      _
    $region95: #{cossl_forward.1} parent=1 // pred_check_branch
      %119 = sbr.rel (0) target = $region97
    $region96: #{cossl_forward.1} parent=1 // pred_region
      %120 = dma.done [#allocation3], 32768
    $region97: #{cossl_forward.1} parent=1 // pred_fallthru
      _
    // Predicated region
    $region98: #{cossl_forward.1} parent=1 // pred_check
      _
    $region99: #{cossl_forward.1} parent=1 // pred_check_branch
      %122 = sbr.rel (0) target = $region101
    $region100: #{cossl_forward.1} parent=1 // pred_region
      %123 = dma.done [#allocation5], 32768
    $region101: #{cossl_forward.1} parent=1 // pred_fallthru
      _
    // Predicated region
    $region102: #{cossl_forward.1} parent=1 // pred_check
      _
    $region103: #{cossl_forward.1} parent=1 // pred_check_branch
      %125 = sbr.rel (0) target = $region105
    $region104: #{cossl_forward.1} parent=1 // pred_region
      %126 = dma.done [#allocation5], 128
    $region105: #{cossl_forward.1} parent=1 // pred_fallthru
      _
    // Predicated region
    $region106: #{cossl_forward.1} parent=1 // pred_check
      _
    $region107: #{cossl_forward.1} parent=1 // pred_check_branch
      %128 = sbr.rel (0) target = $region109
    $region108: #{cossl_forward.1} parent=1 // pred_region
      %129 = dma.done [#allocation8], 4096
    $region109: #{cossl_forward.1} parent=1 // pred_fallthru
      _
    %v130 = vld [vmem:[%s0] sm:$0xff]
    %v131 = vld [vmem:[%s0 + $0x8] sm:$0xff]
    %v132 = vld [vmem:[%s0 + $0x10] sm:$0xff]
    %v133 = vld [vmem:[%s0 + $0x18] sm:$0xff]
    %v134 = vld [vmem:[%s0 + $0x20] sm:$0xff]
    %v135 = vld [vmem:[%s0 + $0x28] sm:$0xff]
    %v136 = vld [vmem:[%s0 + $0x30] sm:$0xff]
    %v137 = vld [vmem:[%s0 + $0x38] sm:$0xff]
    %v138 = vld [vmem:[%s0 + $0x40] sm:$0xff]
    %v139 = vld [vmem:[%s0 + $0x48] sm:$0xff]
    %v140 = vld [vmem:[%s0 + $0x50] sm:$0xff]
    %v141 = vld [vmem:[%s0 + $0x58] sm:$0xff]
    %v142 = vld [vmem:[%s0 + $0x60] sm:$0xff]
    %v143 = vld [vmem:[%s0 + $0x68] sm:$0xff]
    %v144 = vld [vmem:[%s0 + $0x70] sm:$0xff]
    %v145 = vld [vmem:[%s0 + $0x78] sm:$0xff]
    %v146 = vld [vmem:[%s0 + $0x80] sm:$0xff]
    %v147 = vld [vmem:[%s0 + $0x88] sm:$0xff]
    %v148 = vld [vmem:[%s0 + $0x90] sm:$0xff]
    %v149 = vld [vmem:[%s0 + $0x98] sm:$0xff]
    %v150 = vld [vmem:[%s0 + $0xa0] sm:$0xff]
    %v151 = vld [vmem:[%s0 + $0xa8] sm:$0xff]
    %v152 = vld [vmem:[%s0 + $0xb0] sm:$0xff]
    %v153 = vld [vmem:[%s0 + $0xb8] sm:$0xff]
    %v154 = vld [vmem:[%s0 + $0xc0] sm:$0xff]
    %v155 = vld [vmem:[%s0 + $0xc8] sm:$0xff]
    %v156 = vld [vmem:[%s0 + $0xd0] sm:$0xff]
    %v157 = vld [vmem:[%s0 + $0xd8] sm:$0xff]
    %v158 = vld [vmem:[%s0 + $0xe0] sm:$0xff]
    %v159 = vld [vmem:[%s0 + $0xe8] sm:$0xff]
    %v160 = vld [vmem:[%s0 + $0xf0] sm:$0xff]
    %v161 = vld [vmem:[%s0 + $0xf8] sm:$0xff]
    %v162 = vld [vmem:[%s0 + $0x100] sm:$0xff]
    %v163 = vld [vmem:[%s0 + $0x108] sm:$0xff]
    %v164 = vld [vmem:[%s0 + $0x110] sm:$0xff]
    %v165 = vld [vmem:[%s0 + $0x118] sm:$0xff]
    %v166 = vld [vmem:[%s0 + $0x120] sm:$0xff]
    %v167 = vld [vmem:[%s0 + $0x128] sm:$0xff]
    %v168 = vld [vmem:[%s0 + $0x130] sm:$0xff]
    %v169 = vld [vmem:[%s0 + $0x138] sm:$0xff]
    %v170 = vld [vmem:[%s0 + $0x140] sm:$0xff]
    %v171 = vld [vmem:[%s0 + $0x148] sm:$0xff]
    %v172 = vld [vmem:[%s0 + $0x150] sm:$0xff]
    %v173 = vld [vmem:[%s0 + $0x158] sm:$0xff]
    %v174 = vld [vmem:[%s0 + $0x160] sm:$0xff]
    %v175 = vld [vmem:[%s0 + $0x168] sm:$0xff]
    %v176 = vld [vmem:[%s0 + $0x170] sm:$0xff]
    %v177 = vld [vmem:[%s0 + $0x178] sm:$0xff]
    %v178 = vld [vmem:[%s0 + $0x180] sm:$0xff]
    %v179 = vld [vmem:[%s0 + $0x188] sm:$0xff]
    %v180 = vld [vmem:[%s0 + $0x190] sm:$0xff]
    %v181 = vld [vmem:[%s0 + $0x198] sm:$0xff]
    %v182 = vld [vmem:[%s0 + $0x1a0] sm:$0xff]
    %v183 = vld [vmem:[%s0 + $0x1a8] sm:$0xff]
    %v184 = vld [vmem:[%s0 + $0x1b0] sm:$0xff]
    %v185 = vld [vmem:[%s0 + $0x1b8] sm:$0xff]
    %v186 = vld [vmem:[%s0 + $0x1c0] sm:$0xff]
    %v187 = vld [vmem:[%s0 + $0x1c8] sm:$0xff]
    %v188 = vld [vmem:[%s0 + $0x1d0] sm:$0xff]
    %v189 = vld [vmem:[%s0 + $0x1d8] sm:$0xff]
    %v190 = vld [vmem:[%s0 + $0x1e0] sm:$0xff]
    %v191 = vld [vmem:[%s0 + $0x1e8] sm:$0xff]
    %v192 = vld [vmem:[%s0 + $0x1f0] sm:$0xff]
    %v193 = vld [vmem:[%s0 + $0x1f8] sm:$0xff]
    %v194 = vld [vmem:[%s1] sm:$0xff]
    %v195 = vld [vmem:[%s1 + $0x8] sm:$0xff]
    %v196 = vld [vmem:[%s1 + $0x10] sm:$0xff]
    %v197 = vld [vmem:[%s1 + $0x18] sm:$0xff]
    %v198 = vld [vmem:[%s1 + $0x20] sm:$0xff]
    %v199 = vld [vmem:[%s1 + $0x28] sm:$0xff]
    %v200 = vld [vmem:[%s1 + $0x30] sm:$0xff]
    %v201 = vld [vmem:[%s1 + $0x38] sm:$0xff]
    %v202 = vld [vmem:[%s1 + $0x40] sm:$0xff]
    %v203 = vld [vmem:[%s1 + $0x48] sm:$0xff]
    %v204 = vld [vmem:[%s1 + $0x50] sm:$0xff]
    %v205 = vld [vmem:[%s1 + $0x58] sm:$0xff]
    %v206 = vld [vmem:[%s1 + $0x60] sm:$0xff]
    %v207 = vld [vmem:[%s1 + $0x68] sm:$0xff]
    %v208 = vld [vmem:[%s1 + $0x70] sm:$0xff]
    %v209 = vld [vmem:[%s1 + $0x78] sm:$0xff]
    %v210 = vld [vmem:[%s1 + $0x80] sm:$0xff]
    %v211 = vld [vmem:[%s1 + $0x88] sm:$0xff]
    %v212 = vld [vmem:[%s1 + $0x90] sm:$0xff]
    %v213 = vld [vmem:[%s1 + $0x98] sm:$0xff]
    %v214 = vld [vmem:[%s1 + $0xa0] sm:$0xff]
    %v215 = vld [vmem:[%s1 + $0xa8] sm:$0xff]
    %v216 = vld [vmem:[%s1 + $0xb0] sm:$0xff]
    %v217 = vld [vmem:[%s1 + $0xb8] sm:$0xff]
    %v218 = vld [vmem:[%s1 + $0xc0] sm:$0xff]
    %v219 = vld [vmem:[%s1 + $0xc8] sm:$0xff]
    %v220 = vld [vmem:[%s1 + $0xd0] sm:$0xff]
    %v221 = vld [vmem:[%s1 + $0xd8] sm:$0xff]
    %v222 = vld [vmem:[%s1 + $0xe0] sm:$0xff]
    %v223 = vld [vmem:[%s1 + $0xe8] sm:$0xff]
    %v224 = vld [vmem:[%s1 + $0xf0] sm:$0xff]
    %v225 = vld [vmem:[%s1 + $0xf8] sm:$0xff]
    %v226 = vld [vmem:[%s1 + $0x100] sm:$0xff]
    %v227 = vld [vmem:[%s1 + $0x108] sm:$0xff]
    %v228 = vld [vmem:[%s1 + $0x110] sm:$0xff]
    %v229 = vld [vmem:[%s1 + $0x118] sm:$0xff]
    %v230 = vld [vmem:[%s1 + $0x120] sm:$0xff]
    %v231 = vld [vmem:[%s1 + $0x128] sm:$0xff]
    %v232 = vld [vmem:[%s1 + $0x130] sm:$0xff]
    %v233 = vld [vmem:[%s1 + $0x138] sm:$0xff]
    %v234 = vld [vmem:[%s1 + $0x140] sm:$0xff]
    %v235 = vld [vmem:[%s1 + $0x148] sm:$0xff]
    %v236 = vld [vmem:[%s1 + $0x150] sm:$0xff]
    %v237 = vld [vmem:[%s1 + $0x158] sm:$0xff]
    %v238 = vld [vmem:[%s1 + $0x160] sm:$0xff]
    %v239 = vld [vmem:[%s1 + $0x168] sm:$0xff]
    %v240 = vld [vmem:[%s1 + $0x170] sm:$0xff]
    %v241 = vld [vmem:[%s1 + $0x178] sm:$0xff]
    %v242 = vld [vmem:[%s1 + $0x180] sm:$0xff]
    %v243 = vld [vmem:[%s1 + $0x188] sm:$0xff]
    %v244 = vld [vmem:[%s1 + $0x190] sm:$0xff]
    %v245 = vld [vmem:[%s1 + $0x198] sm:$0xff]
    %v246 = vld [vmem:[%s1 + $0x1a0] sm:$0xff]
    %v247 = vld [vmem:[%s1 + $0x1a8] sm:$0xff]
    %v248 = vld [vmem:[%s1 + $0x1b0] sm:$0xff]
    %v249 = vld [vmem:[%s1 + $0x1b8] sm:$0xff]
    %v250 = vld [vmem:[%s1 + $0x1c0] sm:$0xff]
    %v251 = vld [vmem:[%s1 + $0x1c8] sm:$0xff]
    %v252 = vld [vmem:[%s1 + $0x1d0] sm:$0xff]
    %v253 = vld [vmem:[%s1 + $0x1d8] sm:$0xff]
    %v254 = vld [vmem:[%s1 + $0x1e0] sm:$0xff]
    %v255 = vld [vmem:[%s1 + $0x1e8] sm:$0xff]
    %v256 = vld [vmem:[%s1 + $0x1f0] sm:$0xff]
    %v257 = vld [vmem:[%s1 + $0x1f8] sm:$0xff]
    %v258 = vld [vmem:[%s1 + $0x200] sm:$0xff]
    %v259 = vld [vmem:[%s1 + $0x208] sm:$0xff]
    %v260 = vld [vmem:[%s1 + $0x210] sm:$0xff]
    %v261 = vld [vmem:[%s1 + $0x218] sm:$0xff]
    %v262 = vld [vmem:[%s1 + $0x220] sm:$0xff]
    %v263 = vld [vmem:[%s1 + $0x228] sm:$0xff]
    %v264 = vld [vmem:[%s1 + $0x230] sm:$0xff]
    %v265 = vld [vmem:[%s1 + $0x238] sm:$0xff]
    %v266 = vld [vmem:[%s1 + $0x240] sm:$0xff]
    %v267 = vld [vmem:[%s1 + $0x248] sm:$0xff]
    %v268 = vld [vmem:[%s1 + $0x250] sm:$0xff]
    %v269 = vld [vmem:[%s1 + $0x258] sm:$0xff]
    %v270 = vld [vmem:[%s1 + $0x260] sm:$0xff]
    %v271 = vld [vmem:[%s1 + $0x268] sm:$0xff]
    %v272 = vld [vmem:[%s1 + $0x270] sm:$0xff]
    %v273 = vld [vmem:[%s1 + $0x278] sm:$0xff]
    %v274 = vld [vmem:[%s1 + $0x280] sm:$0xff]
    %v275 = vld [vmem:[%s1 + $0x288] sm:$0xff]
    %v276 = vld [vmem:[%s1 + $0x290] sm:$0xff]
    %v277 = vld [vmem:[%s1 + $0x298] sm:$0xff]
    %v278 = vld [vmem:[%s1 + $0x2a0] sm:$0xff]
    %v279 = vld [vmem:[%s1 + $0x2a8] sm:$0xff]
    %v280 = vld [vmem:[%s1 + $0x2b0] sm:$0xff]
    %v281 = vld [vmem:[%s1 + $0x2b8] sm:$0xff]
    %v282 = vld [vmem:[%s1 + $0x2c0] sm:$0xff]
    %v283 = vld [vmem:[%s1 + $0x2c8] sm:$0xff]
    %v284 = vld [vmem:[%s1 + $0x2d0] sm:$0xff]
    %v285 = vld [vmem:[%s1 + $0x2d8] sm:$0xff]
    %v286 = vld [vmem:[%s1 + $0x2e0] sm:$0xff]
    %v287 = vld [vmem:[%s1 + $0x2e8] sm:$0xff]
    %v288 = vld [vmem:[%s1 + $0x2f0] sm:$0xff]
    %v289 = vld [vmem:[%s1 + $0x2f8] sm:$0xff]
    %v290 = vld [vmem:[%s1 + $0x300] sm:$0xff]
    %v291 = vld [vmem:[%s1 + $0x308] sm:$0xff]
    %v292 = vld [vmem:[%s1 + $0x310] sm:$0xff]
    %v293 = vld [vmem:[%s1 + $0x318] sm:$0xff]
    %v294 = vld [vmem:[%s1 + $0x320] sm:$0xff]
    %v295 = vld [vmem:[%s1 + $0x328] sm:$0xff]
    %v296 = vld [vmem:[%s1 + $0x330] sm:$0xff]
    %v297 = vld [vmem:[%s1 + $0x338] sm:$0xff]
    %v298 = vld [vmem:[%s1 + $0x340] sm:$0xff]
    %v299 = vld [vmem:[%s1 + $0x348] sm:$0xff]
    %v300 = vld [vmem:[%s1 + $0x350] sm:$0xff]
    %v301 = vld [vmem:[%s1 + $0x358] sm:$0xff]
    %v302 = vld [vmem:[%s1 + $0x360] sm:$0xff]
    %v303 = vld [vmem:[%s1 + $0x368] sm:$0xff]
    %v304 = vld [vmem:[%s1 + $0x370] sm:$0xff]
    %v305 = vld [vmem:[%s1 + $0x378] sm:$0xff]
    %v306 = vld [vmem:[%s1 + $0x380] sm:$0xff]
    %v307 = vld [vmem:[%s1 + $0x388] sm:$0xff]
    %v308 = vld [vmem:[%s1 + $0x390] sm:$0xff]
    %v309 = vld [vmem:[%s1 + $0x398] sm:$0xff]
    %v310 = vld [vmem:[%s1 + $0x3a0] sm:$0xff]
    %v311 = vld [vmem:[%s1 + $0x3a8] sm:$0xff]
    %v312 = vld [vmem:[%s1 + $0x3b0] sm:$0xff]
    %v313 = vld [vmem:[%s1 + $0x3b8] sm:$0xff]
    %v314 = vld [vmem:[%s1 + $0x3c0] sm:$0xff]
    %v315 = vld [vmem:[%s1 + $0x3c8] sm:$0xff]
    %v316 = vld [vmem:[%s1 + $0x3d0] sm:$0xff]
    %v317 = vld [vmem:[%s1 + $0x3d8] sm:$0xff]
    %v318 = vld [vmem:[%s1 + $0x3e0] sm:$0xff]
    %v319 = vld [vmem:[%s1 + $0x3e8] sm:$0xff]
    %v320 = vld [vmem:[%s1 + $0x3f0] sm:$0xff]
    %v321 = vld [vmem:[%s1 + $0x3f8] sm:$0xff]
    %v322 = vld [vmem:[%s1 + $0x400] sm:$0xff]
    %v323 = vld [vmem:[%s1 + $0x408] sm:$0xff]
    %v324 = vld [vmem:[%s1 + $0x410] sm:$0xff]
    %v325 = vld [vmem:[%s1 + $0x418] sm:$0xff]
    %v326 = vld [vmem:[%s1 + $0x420] sm:$0xff]
    %v327 = vld [vmem:[%s1 + $0x428] sm:$0xff]
    %v328 = vld [vmem:[%s1 + $0x430] sm:$0xff]
    %v329 = vld [vmem:[%s1 + $0x438] sm:$0xff]
    %v330 = vld [vmem:[%s1 + $0x440] sm:$0xff]
    %v331 = vld [vmem:[%s1 + $0x448] sm:$0xff]
    %v332 = vld [vmem:[%s1 + $0x450] sm:$0xff]
    %v333 = vld [vmem:[%s1 + $0x458] sm:$0xff]
    %v334 = vld [vmem:[%s1 + $0x460] sm:$0xff]
    %v335 = vld [vmem:[%s1 + $0x468] sm:$0xff]
    %v336 = vld [vmem:[%s1 + $0x470] sm:$0xff]
    %v337 = vld [vmem:[%s1 + $0x478] sm:$0xff]
    %v338 = vld [vmem:[%s1 + $0x480] sm:$0xff]
    %v339 = vld [vmem:[%s1 + $0x488] sm:$0xff]
    %v340 = vld [vmem:[%s1 + $0x490] sm:$0xff]
    %v341 = vld [vmem:[%s1 + $0x498] sm:$0xff]
    %v342 = vld [vmem:[%s1 + $0x4a0] sm:$0xff]
    %v343 = vld [vmem:[%s1 + $0x4a8] sm:$0xff]
    %v344 = vld [vmem:[%s1 + $0x4b0] sm:$0xff]
    %v345 = vld [vmem:[%s1 + $0x4b8] sm:$0xff]
    %v346 = vld [vmem:[%s1 + $0x4c0] sm:$0xff]
    %v347 = vld [vmem:[%s1 + $0x4c8] sm:$0xff]
    %v348 = vld [vmem:[%s1 + $0x4d0] sm:$0xff]
    %v349 = vld [vmem:[%s1 + $0x4d8] sm:$0xff]
    %v350 = vld [vmem:[%s1 + $0x4e0] sm:$0xff]
    %v351 = vld [vmem:[%s1 + $0x4e8] sm:$0xff]
    %v352 = vld [vmem:[%s1 + $0x4f0] sm:$0xff]
    %v353 = vld [vmem:[%s1 + $0x4f8] sm:$0xff]
    %v354 = vld [vmem:[%s1 + $0x500] sm:$0xff]
    %v355 = vld [vmem:[%s1 + $0x508] sm:$0xff]
    %v356 = vld [vmem:[%s1 + $0x510] sm:$0xff]
    %v357 = vld [vmem:[%s1 + $0x518] sm:$0xff]
    %v358 = vld [vmem:[%s1 + $0x520] sm:$0xff]
    %v359 = vld [vmem:[%s1 + $0x528] sm:$0xff]
    %v360 = vld [vmem:[%s1 + $0x530] sm:$0xff]
    %v361 = vld [vmem:[%s1 + $0x538] sm:$0xff]
    %v362 = vld [vmem:[%s1 + $0x540] sm:$0xff]
    %v363 = vld [vmem:[%s1 + $0x548] sm:$0xff]
    %v364 = vld [vmem:[%s1 + $0x550] sm:$0xff]
    %v365 = vld [vmem:[%s1 + $0x558] sm:$0xff]
    %v366 = vld [vmem:[%s1 + $0x560] sm:$0xff]
    %v367 = vld [vmem:[%s1 + $0x568] sm:$0xff]
    %v368 = vld [vmem:[%s1 + $0x570] sm:$0xff]
    %v369 = vld [vmem:[%s1 + $0x578] sm:$0xff]
    %v370 = vld [vmem:[%s1 + $0x580] sm:$0xff]
    %v371 = vld [vmem:[%s1 + $0x588] sm:$0xff]
    %v372 = vld [vmem:[%s1 + $0x590] sm:$0xff]
    %v373 = vld [vmem:[%s1 + $0x598] sm:$0xff]
    %v374 = vld [vmem:[%s1 + $0x5a0] sm:$0xff]
    %v375 = vld [vmem:[%s1 + $0x5a8] sm:$0xff]
    %v376 = vld [vmem:[%s1 + $0x5b0] sm:$0xff]
    %v377 = vld [vmem:[%s1 + $0x5b8] sm:$0xff]
    %v378 = vld [vmem:[%s1 + $0x5c0] sm:$0xff]
    %v379 = vld [vmem:[%s1 + $0x5c8] sm:$0xff]
    %v380 = vld [vmem:[%s1 + $0x5d0] sm:$0xff]
    %v381 = vld [vmem:[%s1 + $0x5d8] sm:$0xff]
    %v382 = vld [vmem:[%s1 + $0x5e0] sm:$0xff]
    %v383 = vld [vmem:[%s1 + $0x5e8] sm:$0xff]
    %v384 = vld [vmem:[%s1 + $0x5f0] sm:$0xff]
    %v385 = vld [vmem:[%s1 + $0x5f8] sm:$0xff]
    %v386 = vld [vmem:[%s1 + $0x600] sm:$0xff]
    %v387 = vld [vmem:[%s1 + $0x608] sm:$0xff]
    %v388 = vld [vmem:[%s1 + $0x610] sm:$0xff]
    %v389 = vld [vmem:[%s1 + $0x618] sm:$0xff]
    %v390 = vld [vmem:[%s1 + $0x620] sm:$0xff]
    %v391 = vld [vmem:[%s1 + $0x628] sm:$0xff]
    %v392 = vld [vmem:[%s1 + $0x630] sm:$0xff]
    %v393 = vld [vmem:[%s1 + $0x638] sm:$0xff]
    %v394 = vld [vmem:[%s1 + $0x640] sm:$0xff]
    %v395 = vld [vmem:[%s1 + $0x648] sm:$0xff]
    %v396 = vld [vmem:[%s1 + $0x650] sm:$0xff]
    %v397 = vld [vmem:[%s1 + $0x658] sm:$0xff]
    %v398 = vld [vmem:[%s1 + $0x660] sm:$0xff]
    %v399 = vld [vmem:[%s1 + $0x668] sm:$0xff]
    %v400 = vld [vmem:[%s1 + $0x670] sm:$0xff]
    %v401 = vld [vmem:[%s1 + $0x678] sm:$0xff]
    %v402 = vld [vmem:[%s1 + $0x680] sm:$0xff]
    %v403 = vld [vmem:[%s1 + $0x688] sm:$0xff]
    %v404 = vld [vmem:[%s1 + $0x690] sm:$0xff]
    %v405 = vld [vmem:[%s1 + $0x698] sm:$0xff]
    %v406 = vld [vmem:[%s1 + $0x6a0] sm:$0xff]
    %v407 = vld [vmem:[%s1 + $0x6a8] sm:$0xff]
    %v408 = vld [vmem:[%s1 + $0x6b0] sm:$0xff]
    %v409 = vld [vmem:[%s1 + $0x6b8] sm:$0xff]
    %v410 = vld [vmem:[%s1 + $0x6c0] sm:$0xff]
    %v411 = vld [vmem:[%s1 + $0x6c8] sm:$0xff]
    %v412 = vld [vmem:[%s1 + $0x6d0] sm:$0xff]
    %v413 = vld [vmem:[%s1 + $0x6d8] sm:$0xff]
    %v414 = vld [vmem:[%s1 + $0x6e0] sm:$0xff]
    %v415 = vld [vmem:[%s1 + $0x6e8] sm:$0xff]
    %v416 = vld [vmem:[%s1 + $0x6f0] sm:$0xff]
    %v417 = vld [vmem:[%s1 + $0x6f8] sm:$0xff]
    %v418 = vld [vmem:[%s1 + $0x700] sm:$0xff]
    %v419 = vld [vmem:[%s1 + $0x708] sm:$0xff]
    %v420 = vld [vmem:[%s1 + $0x710] sm:$0xff]
    %v421 = vld [vmem:[%s1 + $0x718] sm:$0xff]
    %v422 = vld [vmem:[%s1 + $0x720] sm:$0xff]
    %v423 = vld [vmem:[%s1 + $0x728] sm:$0xff]
    %v424 = vld [vmem:[%s1 + $0x730] sm:$0xff]
    %v425 = vld [vmem:[%s1 + $0x738] sm:$0xff]
    %v426 = vld [vmem:[%s1 + $0x740] sm:$0xff]
    %v427 = vld [vmem:[%s1 + $0x748] sm:$0xff]
    %v428 = vld [vmem:[%s1 + $0x750] sm:$0xff]
    %v429 = vld [vmem:[%s1 + $0x758] sm:$0xff]
    %v430 = vld [vmem:[%s1 + $0x760] sm:$0xff]
    %v431 = vld [vmem:[%s1 + $0x768] sm:$0xff]
    %v432 = vld [vmem:[%s1 + $0x770] sm:$0xff]
    %v433 = vld [vmem:[%s1 + $0x778] sm:$0xff]
    %v434 = vld [vmem:[%s1 + $0x780] sm:$0xff]
    %v435 = vld [vmem:[%s1 + $0x788] sm:$0xff]
    %v436 = vld [vmem:[%s1 + $0x790] sm:$0xff]
    %v437 = vld [vmem:[%s1 + $0x798] sm:$0xff]
    %v438 = vld [vmem:[%s1 + $0x7a0] sm:$0xff]
    %v439 = vld [vmem:[%s1 + $0x7a8] sm:$0xff]
    %v440 = vld [vmem:[%s1 + $0x7b0] sm:$0xff]
    %v441 = vld [vmem:[%s1 + $0x7b8] sm:$0xff]
    %v442 = vld [vmem:[%s1 + $0x7c0] sm:$0xff]
    %v443 = vld [vmem:[%s1 + $0x7c8] sm:$0xff]
    %v444 = vld [vmem:[%s1 + $0x7d0] sm:$0xff]
    %v445 = vld [vmem:[%s1 + $0x7d8] sm:$0xff]
    %v446 = vld [vmem:[%s1 + $0x7e0] sm:$0xff]
    %v447 = vld [vmem:[%s1 + $0x7e8] sm:$0xff]
    %v448 = vld [vmem:[%s1 + $0x7f0] sm:$0xff]
    %v449 = vld [vmem:[%s1 + $0x7f8] sm:$0xff]
    %450 = vmatprep.subr.mxu0 0.0
    %451 = vmatpush1.msra.mxu0 %v130
    %452 = vmatprep.subr.mxu0 0.0
    %453 = vmatpush1.msra.mxu0 %v131
    %454 = vmatprep.subr.mxu0 0.0
    %455 = vmatpush1.msra.mxu0 %v132
    %456 = vmatprep.subr.mxu0 0.0
    %457 = vmatpush1.msra.mxu0 %v133
    %458 = vmatprep.subr.mxu0 0.0
    %459 = vmatpush1.msra.mxu0 %v134
    %460 = vmatprep.subr.mxu0 0.0
    %461 = vmatpush1.msra.mxu0 %v135
    %462 = vmatprep.subr.mxu0 0.0
    %463 = vmatpush1.msra.mxu0 %v136
    %464 = vmatprep.subr.mxu0 0.0
    %465 = vmatpush1.msra.mxu0 %v137
    %466 = vmatprep.subr.mxu0 0.0
    %467 = vmatpush1.msra.mxu0 %v138
    %468 = vmatprep.subr.mxu0 0.0
    %469 = vmatpush1.msra.mxu0 %v139
    %470 = vmatprep.subr.mxu0 0.0
    %471 = vmatpush1.msra.mxu0 %v140
    %472 = vmatprep.subr.mxu0 0.0
    %473 = vmatpush1.msra.mxu0 %v141
    %474 = vmatprep.subr.mxu0 0.0
    %475 = vmatpush1.msra.mxu0 %v142
    %476 = vmatprep.subr.mxu0 0.0
    %477 = vmatpush1.msra.mxu0 %v143
    %478 = vmatprep.subr.mxu0 0.0
    %479 = vmatpush1.msra.mxu0 %v144
    %480 = vmatprep.subr.mxu0 0.0
    %481 = vmatpush1.msra.mxu0 %v145
    %482 = vmatprep.subr.mxu0 0.0
    %483 = vmatpush1.msra.mxu0 %v146
    %484 = vmatprep.subr.mxu0 0.0
    %485 = vmatpush1.msra.mxu0 %v147
    %486 = vmatprep.subr.mxu0 0.0
    %487 = vmatpush1.msra.mxu0 %v148
    %488 = vmatprep.subr.mxu0 0.0
    %489 = vmatpush1.msra.mxu0 %v149
    %490 = vmatprep.subr.mxu0 0.0
    %491 = vmatpush1.msra.mxu0 %v150
    %492 = vmatprep.subr.mxu0 0.0
    %493 = vmatpush1.msra.mxu0 %v151
    %494 = vmatprep.subr.mxu0 0.0
    %495 = vmatpush1.msra.mxu0 %v152
    %496 = vmatprep.subr.mxu0 0.0
    %497 = vmatpush1.msra.mxu0 %v153
    %498 = vmatprep.subr.mxu0 0.0
    %499 = vmatpush1.msra.mxu0 %v154
    %500 = vmatprep.subr.mxu0 0.0
    %501 = vmatpush1.msra.mxu0 %v155
    %502 = vmatprep.subr.mxu0 0.0
    %503 = vmatpush1.msra.mxu0 %v156
    %504 = vmatprep.subr.mxu0 0.0
    %505 = vmatpush1.msra.mxu0 %v157
    %506 = vmatprep.subr.mxu0 0.0
    %507 = vmatpush1.msra.mxu0 %v158
    %508 = vmatprep.subr.mxu0 0.0
    %509 = vmatpush1.msra.mxu0 %v159
    %510 = vmatprep.subr.mxu0 0.0
    %511 = vmatpush1.msra.mxu0 %v160
    %512 = vmatprep.subr.mxu0 0.0
    %513 = vmatpush1.msra.mxu0 %v161
    %514 = vmatprep.mubr.f32.mxu0 %v195
    %515 = vmatmul.mubr.f32.gmra.mrb[0].mxu0 %v194
    %v516 = vpop.f32.mrb[0].mxu0
    %v517 = vadd.f32 0.0, %v516
    %v518 = vpop.f32.mrb[0].mxu0
    %519 = vmatprep.mubr.f32.mxu0 %v199
    %520 = vmatmul.mubr.f32.gmra.mrb[0].mxu0 %v198
    %v521 = vpop.f32.mrb[0].mxu0
    %v522 = vadd.f32 0.0, %v521
    %v523 = vpop.f32.mrb[0].mxu0
    %524 = vmatprep.mubr.f32.mxu0 %v203
    %525 = vmatmul.mubr.f32.gmra.mrb[0].mxu0 %v202
    %v526 = vpop.f32.mrb[0].mxu0
    %v527 = vadd.f32 0.0, %v526
    %v528 = vpop.f32.mrb[0].mxu0
    %529 = vmatprep.mubr.f32.mxu0 %v207
    %530 = vmatmul.mubr.f32.gmra.mrb[0].mxu0 %v206
    %v531 = vpop.f32.mrb[0].mxu0
    %v532 = vadd.f32 0.0, %v531
    %v533 = vpop.f32.mrb[0].mxu0
    %534 = vmatprep.mubr.f32.mxu0 %v211
    %535 = vmatmul.mubr.f32.gmra.mrb[0].mxu0 %v210
    %v536 = vpop.f32.mrb[0].mxu0
    %v537 = vadd.f32 0.0, %v536
    %v538 = vpop.f32.mrb[0].mxu0
    %539 = vmatprep.mubr.f32.mxu0 %v215
    %540 = vmatmul.mubr.f32.gmra.mrb[0].mxu0 %v214
    %v541 = vpop.f32.mrb[0].mxu0
    %v542 = vadd.f32 0.0, %v541
    %v543 = vpop.f32.mrb[0].mxu0
    %544 = vmatprep.mubr.f32.mxu0 %v219
    %545 = vmatmul.mubr.f32.gmra.mrb[0].mxu0 %v218
    %v546 = vpop.f32.mrb[0].mxu0
    %v547 = vadd.f32 0.0, %v546
    %v548 = vpop.f32.mrb[0].mxu0
    %549 = vmatprep.mubr.f32.mxu0 %v223
    %550 = vmatmul.mubr.f32.gmra.mrb[0].mxu0 %v222
    %v551 = vpop.f32.mrb[0].mxu0
    %v552 = vadd.f32 0.0, %v551
    %v553 = vpop.f32.mrb[0].mxu0
    %554 = vmatprep.mubr.f32.mxu0 %v227
    %555 = vmatmul.mubr.f32.gmra.mrb[0].mxu0 %v226
    %v556 = vpop.f32.mrb[0].mxu0
    %v557 = vadd.f32 0.0, %v556
    %v558 = vpop.f32.mrb[0].mxu0
    %559 = vmatprep.mubr.f32.mxu0 %v231
    %560 = vmatmul.mubr.f32.gmra.mrb[0].mxu0 %v230
    %v561 = vpop.f32.mrb[0].mxu0
    %v562 = vadd.f32 0.0, %v561
    %v563 = vpop.f32.mrb[0].mxu0
    %564 = vmatprep.mubr.f32.mxu0 %v235
    %565 = vmatmul.mubr.f32.gmra.mrb[0].mxu0 %v234
    %v566 = vpop.f32.mrb[0].mxu0
    %v567 = vadd.f32 0.0, %v566
    %v568 = vpop.f32.mrb[0].mxu0
    %569 = vmatprep.mubr.f32.mxu0 %v239
    %570 = vmatmul.mubr.f32.gmra.mrb[0].mxu0 %v238
    %v571 = vpop.f32.mrb[0].mxu0
    %v572 = vadd.f32 0.0, %v571
    %v573 = vpop.f32.mrb[0].mxu0
    %574 = vmatprep.mubr.f32.mxu0 %v243
    %575 = vmatmul.mubr.f32.gmra.mrb[0].mxu0 %v242
    %v576 = vpop.f32.mrb[0].mxu0
    %v577 = vadd.f32 0.0, %v576
    %v578 = vpop.f32.mrb[0].mxu0
    %579 = vmatprep.mubr.f32.mxu0 %v247
    %580 = vmatmul.mubr.f32.gmra.mrb[0].mxu0 %v246
    %v581 = vpop.f32.mrb[0].mxu0
    %v582 = vadd.f32 0.0, %v581
    %v583 = vpop.f32.mrb[0].mxu0
    %584 = vmatprep.mubr.f32.mxu0 %v251
    %585 = vmatmul.mubr.f32.gmra.mrb[0].mxu0 %v250
    %v586 = vpop.f32.mrb[0].mxu0
    %v587 = vadd.f32 0.0, %v586
    %v588 = vpop.f32.mrb[0].mxu0
    %589 = vmatprep.mubr.f32.mxu0 %v255
    %590 = vmatmul.mubr.f32.gmra.mrb[0].mxu0 %v254
    %v591 = vpop.f32.mrb[0].mxu0
    %v592 = vadd.f32 0.0, %v591
    %v593 = vpop.f32.mrb[0].mxu0
    %594 = vmatprep.mubr.f32.mxu0 %v259
    %595 = vmatmul.mubr.f32.gmra.mrb[0].mxu0 %v258
    %v596 = vpop.f32.mrb[0].mxu0
    %v597 = vadd.f32 0.0, %v596
    %v598 = vpop.f32.mrb[0].mxu0
    %599 = vmatprep.mubr.f32.mxu0 %v263
    %600 = vmatmul.mubr.f32.gmra.mrb[0].mxu0 %v262
    %v601 = vpop.f32.mrb[0].mxu0
    %v602 = vadd.f32 0.0, %v601
    %v603 = vpop.f32.mrb[0].mxu0
    %604 = vmatprep.mubr.f32.mxu0 %v267
    %605 = vmatmul.mubr.f32.gmra.mrb[0].mxu0 %v266
    %v606 = vpop.f32.mrb[0].mxu0
    %v607 = vadd.f32 0.0, %v606
    %v608 = vpop.f32.mrb[0].mxu0
    %609 = vmatprep.mubr.f32.mxu0 %v271
    %610 = vmatmul.mubr.f32.gmra.mrb[0].mxu0 %v270
    %v611 = vpop.f32.mrb[0].mxu0
    %v612 = vadd.f32 0.0, %v611
    %v613 = vpop.f32.mrb[0].mxu0
    %614 = vmatprep.mubr.f32.mxu0 %v275
    %615 = vmatmul.mubr.f32.gmra.mrb[0].mxu0 %v274
    %v616 = vpop.f32.mrb[0].mxu0
    %v617 = vadd.f32 0.0, %v616
    %v618 = vpop.f32.mrb[0].mxu0
    %619 = vmatprep.mubr.f32.mxu0 %v279
    %620 = vmatmul.mubr.f32.gmra.mrb[0].mxu0 %v278
    %v621 = vpop.f32.mrb[0].mxu0
    %v622 = vadd.f32 0.0, %v621
    %v623 = vpop.f32.mrb[0].mxu0
    %624 = vmatprep.mubr.f32.mxu0 %v283
    %625 = vmatmul.mubr.f32.gmra.mrb[0].mxu0 %v282
    %v626 = vpop.f32.mrb[0].mxu0
    %v627 = vadd.f32 0.0, %v626
    %v628 = vpop.f32.mrb[0].mxu0
    %629 = vmatprep.mubr.f32.mxu0 %v287
    %630 = vmatmul.mubr.f32.gmra.mrb[0].mxu0 %v286
    %v631 = vpop.f32.mrb[0].mxu0
    %v632 = vadd.f32 0.0, %v631
    %v633 = vpop.f32.mrb[0].mxu0
    %634 = vmatprep.mubr.f32.mxu0 %v291
    %635 = vmatmul.mubr.f32.gmra.mrb[0].mxu0 %v290
    %v636 = vpop.f32.mrb[0].mxu0
    %v637 = vadd.f32 0.0, %v636
    %v638 = vpop.f32.mrb[0].mxu0
    %639 = vmatprep.mubr.f32.mxu0 %v295
    %640 = vmatmul.mubr.f32.gmra.mrb[0].mxu0 %v294
    %v641 = vpop.f32.mrb[0].mxu0
    %v642 = vadd.f32 0.0, %v641
    %v643 = vpop.f32.mrb[0].mxu0
    %644 = vmatprep.mubr.f32.mxu0 %v299
    %645 = vmatmul.mubr.f32.gmra.mrb[0].mxu0 %v298
    %v646 = vpop.f32.mrb[0].mxu0
    %v647 = vadd.f32 0.0, %v646
    %v648 = vpop.f32.mrb[0].mxu0
    %649 = vmatprep.mubr.f32.mxu0 %v303
    %650 = vmatmul.mubr.f32.gmra.mrb[0].mxu0 %v302
    %v651 = vpop.f32.mrb[0].mxu0
    %v652 = vadd.f32 0.0, %v651
    %v653 = vpop.f32.mrb[0].mxu0
    %654 = vmatprep.mubr.f32.mxu0 %v307
    %655 = vmatmul.mubr.f32.gmra.mrb[0].mxu0 %v306
    %v656 = vpop.f32.mrb[0].mxu0
    %v657 = vadd.f32 0.0, %v656
    %v658 = vpop.f32.mrb[0].mxu0
    %659 = vmatprep.mubr.f32.mxu0 %v311
    %660 = vmatmul.mubr.f32.gmra.mrb[0].mxu0 %v310
    %v661 = vpop.f32.mrb[0].mxu0
    %v662 = vadd.f32 0.0, %v661
    %v663 = vpop.f32.mrb[0].mxu0
    %664 = vmatprep.mubr.f32.mxu0 %v315
    %665 = vmatmul.mubr.f32.gmra.mrb[0].mxu0 %v314
    %v666 = vpop.f32.mrb[0].mxu0
    %v667 = vadd.f32 0.0, %v666
    %v668 = vpop.f32.mrb[0].mxu0
    %669 = vmatprep.mubr.f32.mxu0 %v319
    %670 = vmatmul.mubr.f32.gmra.mrb[0].mxu0 %v318
    %v671 = vpop.f32.mrb[0].mxu0
    %v672 = vadd.f32 0.0, %v671
    %v673 = vpop.f32.mrb[0].mxu0
    %674 = vmatprep.mubr.f32.mxu0 %v323
    %675 = vmatmul.mubr.f32.gmra.mrb[0].mxu0 %v322
    %v676 = vpop.f32.mrb[0].mxu0
    %v677 = vadd.f32 0.0, %v676
    %v678 = vpop.f32.mrb[0].mxu0
    %679 = vmatprep.mubr.f32.mxu0 %v327
    %680 = vmatmul.mubr.f32.gmra.mrb[0].mxu0 %v326
    %v681 = vpop.f32.mrb[0].mxu0
    %v682 = vadd.f32 0.0, %v681
    %v683 = vpop.f32.mrb[0].mxu0
    %684 = vmatprep.mubr.f32.mxu0 %v331
    %685 = vmatmul.mubr.f32.gmra.mrb[0].mxu0 %v330
    %v686 = vpop.f32.mrb[0].mxu0
    %v687 = vadd.f32 0.0, %v686
    %v688 = vpop.f32.mrb[0].mxu0
    %689 = vmatprep.mubr.f32.mxu0 %v335
    %690 = vmatmul.mubr.f32.gmra.mrb[0].mxu0 %v334
    %v691 = vpop.f32.mrb[0].mxu0
    %v692 = vadd.f32 0.0, %v691
    %v693 = vpop.f32.mrb[0].mxu0
    %694 = vmatprep.mubr.f32.mxu0 %v339
    %695 = vmatmul.mubr.f32.gmra.mrb[0].mxu0 %v338
    %v696 = vpop.f32.mrb[0].mxu0
    %v697 = vadd.f32 0.0, %v696
    %v698 = vpop.f32.mrb[0].mxu0
    %699 = vmatprep.mubr.f32.mxu0 %v343
    %700 = vmatmul.mubr.f32.gmra.mrb[0].mxu0 %v342
    %v701 = vpop.f32.mrb[0].mxu0
    %v702 = vadd.f32 0.0, %v701
    %v703 = vpop.f32.mrb[0].mxu0
    %704 = vmatprep.mubr.f32.mxu0 %v347
    %705 = vmatmul.mubr.f32.gmra.mrb[0].mxu0 %v346
    %v706 = vpop.f32.mrb[0].mxu0
    %v707 = vadd.f32 0.0, %v706
    %v708 = vpop.f32.mrb[0].mxu0
    %709 = vmatprep.mubr.f32.mxu0 %v351
    %710 = vmatmul.mubr.f32.gmra.mrb[0].mxu0 %v350
    %v711 = vpop.f32.mrb[0].mxu0
    %v712 = vadd.f32 0.0, %v711
    %v713 = vpop.f32.mrb[0].mxu0
    %714 = vmatprep.mubr.f32.mxu0 %v355
    %715 = vmatmul.mubr.f32.gmra.mrb[0].mxu0 %v354
    %v716 = vpop.f32.mrb[0].mxu0
    %v717 = vadd.f32 0.0, %v716
    %v718 = vpop.f32.mrb[0].mxu0
    %719 = vmatprep.mubr.f32.mxu0 %v359
    %720 = vmatmul.mubr.f32.gmra.mrb[0].mxu0 %v358
    %v721 = vpop.f32.mrb[0].mxu0
    %v722 = vadd.f32 0.0, %v721
    %v723 = vpop.f32.mrb[0].mxu0
    %724 = vmatprep.mubr.f32.mxu0 %v363
    %725 = vmatmul.mubr.f32.gmra.mrb[0].mxu0 %v362
    %v726 = vpop.f32.mrb[0].mxu0
    %v727 = vadd.f32 0.0, %v726
    %v728 = vpop.f32.mrb[0].mxu0
    %729 = vmatprep.mubr.f32.mxu0 %v367
    %730 = vmatmul.mubr.f32.gmra.mrb[0].mxu0 %v366
    %v731 = vpop.f32.mrb[0].mxu0
    %v732 = vadd.f32 0.0, %v731
    %v733 = vpop.f32.mrb[0].mxu0
    %734 = vmatprep.mubr.f32.mxu0 %v371
    %735 = vmatmul.mubr.f32.gmra.mrb[0].mxu0 %v370
    %v736 = vpop.f32.mrb[0].mxu0
    %v737 = vadd.f32 0.0, %v736
    %v738 = vpop.f32.mrb[0].mxu0
    %739 = vmatprep.mubr.f32.mxu0 %v375
    %740 = vmatmul.mubr.f32.gmra.mrb[0].mxu0 %v374
    %v741 = vpop.f32.mrb[0].mxu0
    %v742 = vadd.f32 0.0, %v741
    %v743 = vpop.f32.mrb[0].mxu0
    %744 = vmatprep.mubr.f32.mxu0 %v379
    %745 = vmatmul.mubr.f32.gmra.mrb[0].mxu0 %v378
    %v746 = vpop.f32.mrb[0].mxu0
    %v747 = vadd.f32 0.0, %v746
    %v748 = vpop.f32.mrb[0].mxu0
    %749 = vmatprep.mubr.f32.mxu0 %v383
    %750 = vmatmul.mubr.f32.gmra.mrb[0].mxu0 %v382
    %v751 = vpop.f32.mrb[0].mxu0
    %v752 = vadd.f32 0.0, %v751
    %v753 = vpop.f32.mrb[0].mxu0
    %754 = vmatprep.mubr.f32.mxu0 %v387
    %755 = vmatmul.mubr.f32.gmra.mrb[0].mxu0 %v386
    %v756 = vpop.f32.mrb[0].mxu0
    %v757 = vadd.f32 0.0, %v756
    %v758 = vpop.f32.mrb[0].mxu0
    %759 = vmatprep.mubr.f32.mxu0 %v391
    %760 = vmatmul.mubr.f32.gmra.mrb[0].mxu0 %v390
    %v761 = vpop.f32.mrb[0].mxu0
    %v762 = vadd.f32 0.0, %v761
    %v763 = vpop.f32.mrb[0].mxu0
    %764 = vmatprep.mubr.f32.mxu0 %v395
    %765 = vmatmul.mubr.f32.gmra.mrb[0].mxu0 %v394
    %v766 = vpop.f32.mrb[0].mxu0
    %v767 = vadd.f32 0.0, %v766
    %v768 = vpop.f32.mrb[0].mxu0
    %769 = vmatprep.mubr.f32.mxu0 %v399
    %770 = vmatmul.mubr.f32.gmra.mrb[0].mxu0 %v398
    %v771 = vpop.f32.mrb[0].mxu0
    %v772 = vadd.f32 0.0, %v771
    %v773 = vpop.f32.mrb[0].mxu0
    %774 = vmatprep.mubr.f32.mxu0 %v403
    %775 = vmatmul.mubr.f32.gmra.mrb[0].mxu0 %v402
    %v776 = vpop.f32.mrb[0].mxu0
    %v777 = vadd.f32 0.0, %v776
    %v778 = vpop.f32.mrb[0].mxu0
    %779 = vmatprep.mubr.f32.mxu0 %v407
    %780 = vmatmul.mubr.f32.gmra.mrb[0].mxu0 %v406
    %v781 = vpop.f32.mrb[0].mxu0
    %v782 = vadd.f32 0.0, %v781
    %v783 = vpop.f32.mrb[0].mxu0
    %784 = vmatprep.mubr.f32.mxu0 %v411
    %785 = vmatmul.mubr.f32.gmra.mrb[0].mxu0 %v410
    %v786 = vpop.f32.mrb[0].mxu0
    %v787 = vadd.f32 0.0, %v786
    %v788 = vpop.f32.mrb[0].mxu0
    %789 = vmatprep.mubr.f32.mxu0 %v415
    %790 = vmatmul.mubr.f32.gmra.mrb[0].mxu0 %v414
    %v791 = vpop.f32.mrb[0].mxu0
    %v792 = vadd.f32 0.0, %v791
    %v793 = vpop.f32.mrb[0].mxu0
    %794 = vmatprep.mubr.f32.mxu0 %v419
    %795 = vmatmul.mubr.f32.gmra.mrb[0].mxu0 %v418
    %v796 = vpop.f32.mrb[0].mxu0
    %v797 = vadd.f32 0.0, %v796
    %v798 = vpop.f32.mrb[0].mxu0
    %799 = vmatprep.mubr.f32.mxu0 %v423
    %800 = vmatmul.mubr.f32.gmra.mrb[0].mxu0 %v422
    %v801 = vpop.f32.mrb[0].mxu0
    %v802 = vadd.f32 0.0, %v801
    %v803 = vpop.f32.mrb[0].mxu0
    %804 = vmatprep.mubr.f32.mxu0 %v427
    %805 = vmatmul.mubr.f32.gmra.mrb[0].mxu0 %v426
    %v806 = vpop.f32.mrb[0].mxu0
    %v807 = vadd.f32 0.0, %v806
    %v808 = vpop.f32.mrb[0].mxu0
    %809 = vmatprep.mubr.f32.mxu0 %v431
    %810 = vmatmul.mubr.f32.gmra.mrb[0].mxu0 %v430
    %v811 = vpop.f32.mrb[0].mxu0
    %v812 = vadd.f32 0.0, %v811
    %v813 = vpop.f32.mrb[0].mxu0
    %814 = vmatprep.mubr.f32.mxu0 %v435
    %815 = vmatmul.mubr.f32.gmra.mrb[0].mxu0 %v434
    %v816 = vpop.f32.mrb[0].mxu0
    %v817 = vadd.f32 0.0, %v816
    %v818 = vpop.f32.mrb[0].mxu0
    %819 = vmatprep.mubr.f32.mxu0 %v439
    %820 = vmatmul.mubr.f32.gmra.mrb[0].mxu0 %v438
    %v821 = vpop.f32.mrb[0].mxu0
    %v822 = vadd.f32 0.0, %v821
    %v823 = vpop.f32.mrb[0].mxu0
    %824 = vmatprep.mubr.f32.mxu0 %v443
    %825 = vmatmul.mubr.f32.gmra.mrb[0].mxu0 %v442
    %v826 = vpop.f32.mrb[0].mxu0
    %v827 = vadd.f32 0.0, %v826
    %v828 = vpop.f32.mrb[0].mxu0
    %829 = vmatprep.mubr.f32.mxu0 %v447
    %830 = vmatmul.mubr.f32.gmra.mrb[0].mxu0 %v446
    %v831 = vpop.f32.mrb[0].mxu0
    %v832 = vadd.f32 0.0, %v831
    %v833 = vpop.f32.mrb[0].mxu0
    %834 = vdwg.mxu0
    %835 = vmatprep.subr.mxu0 0.0
    %836 = vmatpush1.msra.mxu0 %v162
    %837 = vmatprep.subr.mxu0 0.0
    %838 = vmatpush1.msra.mxu0 %v163
    %839 = vmatprep.subr.mxu0 0.0
    %840 = vmatpush1.msra.mxu0 %v164
    %841 = vmatprep.subr.mxu0 0.0
    %842 = vmatpush1.msra.mxu0 %v165
    %843 = vmatprep.subr.mxu0 0.0
    %844 = vmatpush1.msra.mxu0 %v166
    %845 = vmatprep.subr.mxu0 0.0
    %846 = vmatpush1.msra.mxu0 %v167
    %847 = vmatprep.subr.mxu0 0.0
    %848 = vmatpush1.msra.mxu0 %v168
    %849 = vmatprep.subr.mxu0 0.0
    %850 = vmatpush1.msra.mxu0 %v169
    %851 = vmatprep.subr.mxu0 0.0
    %852 = vmatpush1.msra.mxu0 %v170
    %853 = vmatprep.subr.mxu0 0.0
    %854 = vmatpush1.msra.mxu0 %v171
    %855 = vmatprep.subr.mxu0 0.0
    %856 = vmatpush1.msra.mxu0 %v172
    %857 = vmatprep.subr.mxu0 0.0
    %858 = vmatpush1.msra.mxu0 %v173
    %859 = vmatprep.subr.mxu0 0.0
    %860 = vmatpush1.msra.mxu0 %v174
    %861 = vmatprep.subr.mxu0 0.0
    %862 = vmatpush1.msra.mxu0 %v175
    %863 = vmatprep.subr.mxu0 0.0
    %864 = vmatpush1.msra.mxu0 %v176
    %865 = vmatprep.subr.mxu0 0.0
    %866 = vmatpush1.msra.mxu0 %v177
    %867 = vmatprep.subr.mxu0 0.0
    %868 = vmatpush1.msra.mxu0 %v178
    %869 = vmatprep.subr.mxu0 0.0
    %870 = vmatpush1.msra.mxu0 %v179
    %871 = vmatprep.subr.mxu0 0.0
    %872 = vmatpush1.msra.mxu0 %v180
    %873 = vmatprep.subr.mxu0 0.0
    %874 = vmatpush1.msra.mxu0 %v181
    %875 = vmatprep.subr.mxu0 0.0
    %876 = vmatpush1.msra.mxu0 %v182
    %877 = vmatprep.subr.mxu0 0.0
    %878 = vmatpush1.msra.mxu0 %v183
    %879 = vmatprep.subr.mxu0 0.0
    %880 = vmatpush1.msra.mxu0 %v184
    %881 = vmatprep.subr.mxu0 0.0
    %882 = vmatpush1.msra.mxu0 %v185
    %883 = vmatprep.subr.mxu0 0.0
    %884 = vmatpush1.msra.mxu0 %v186
    %885 = vmatprep.subr.mxu0 0.0
    %886 = vmatpush1.msra.mxu0 %v187
    %887 = vmatprep.subr.mxu0 0.0
    %888 = vmatpush1.msra.mxu0 %v188
    %889 = vmatprep.subr.mxu0 0.0
    %890 = vmatpush1.msra.mxu0 %v189
    %891 = vmatprep.subr.mxu0 0.0
    %892 = vmatpush1.msra.mxu0 %v190
    %893 = vmatprep.subr.mxu0 0.0
    %894 = vmatpush1.msra.mxu0 %v191
    %895 = vmatprep.subr.mxu0 0.0
    %896 = vmatpush1.msra.mxu0 %v192
    %897 = vmatprep.subr.mxu0 0.0
    %898 = vmatpush1.msra.mxu0 %v193
    %899 = vmatprep.mubr.f32.mxu0 %v197
    %900 = vmatmul.mubr.f32.gmra.mrb[0].mxu0 %v196
    %v901 = vpop.f32.mrb[0].mxu0
    %v902 = vadd.f32 %v517, %v901
    %v903 = vpop.f32.mrb[0].mxu0
    %904 = vmatprep.mubr.f32.mxu0 %v201
    %905 = vmatmul.mubr.f32.gmra.mrb[0].mxu0 %v200
    %v906 = vpop.f32.mrb[0].mxu0
    %v907 = vadd.f32 %v522, %v906
    %v908 = vpop.f32.mrb[0].mxu0
    %909 = vmatprep.mubr.f32.mxu0 %v205
    %910 = vmatmul.mubr.f32.gmra.mrb[0].mxu0 %v204
    %v911 = vpop.f32.mrb[0].mxu0
    %v912 = vadd.f32 %v527, %v911
    %v913 = vpop.f32.mrb[0].mxu0
    %914 = vmatprep.mubr.f32.mxu0 %v209
    %915 = vmatmul.mubr.f32.gmra.mrb[0].mxu0 %v208
    %v916 = vpop.f32.mrb[0].mxu0
    %v917 = vadd.f32 %v532, %v916
    %v918 = vpop.f32.mrb[0].mxu0
    %919 = vmatprep.mubr.f32.mxu0 %v213
    %920 = vmatmul.mubr.f32.gmra.mrb[0].mxu0 %v212
    %v921 = vpop.f32.mrb[0].mxu0
    %v922 = vadd.f32 %v537, %v921
    %v923 = vpop.f32.mrb[0].mxu0
    %924 = vmatprep.mubr.f32.mxu0 %v217
    %925 = vmatmul.mubr.f32.gmra.mrb[0].mxu0 %v216
    %v926 = vpop.f32.mrb[0].mxu0
    %v927 = vadd.f32 %v542, %v926
    %v928 = vpop.f32.mrb[0].mxu0
    %929 = vmatprep.mubr.f32.mxu0 %v221
    %930 = vmatmul.mubr.f32.gmra.mrb[0].mxu0 %v220
    %v931 = vpop.f32.mrb[0].mxu0
    %v932 = vadd.f32 %v547, %v931
    %v933 = vpop.f32.mrb[0].mxu0
    %934 = vmatprep.mubr.f32.mxu0 %v225
    %935 = vmatmul.mubr.f32.gmra.mrb[0].mxu0 %v224
    %v936 = vpop.f32.mrb[0].mxu0
    %v937 = vadd.f32 %v552, %v936
    %v938 = vpop.f32.mrb[0].mxu0
    %939 = vmatprep.mubr.f32.mxu0 %v229
    %940 = vmatmul.mubr.f32.gmra.mrb[0].mxu0 %v228
    %v941 = vpop.f32.mrb[0].mxu0
    %v942 = vadd.f32 %v557, %v941
    %v943 = vpop.f32.mrb[0].mxu0
    %944 = vmatprep.mubr.f32.mxu0 %v233
    %945 = vmatmul.mubr.f32.gmra.mrb[0].mxu0 %v232
    %v946 = vpop.f32.mrb[0].mxu0
    %v947 = vadd.f32 %v562, %v946
    %v948 = vpop.f32.mrb[0].mxu0
    %949 = vmatprep.mubr.f32.mxu0 %v237
    %950 = vmatmul.mubr.f32.gmra.mrb[0].mxu0 %v236
    %v951 = vpop.f32.mrb[0].mxu0
    %v952 = vadd.f32 %v567, %v951
    %v953 = vpop.f32.mrb[0].mxu0
    %954 = vmatprep.mubr.f32.mxu0 %v241
    %955 = vmatmul.mubr.f32.gmra.mrb[0].mxu0 %v240
    %v956 = vpop.f32.mrb[0].mxu0
    %v957 = vadd.f32 %v572, %v956
    %v958 = vpop.f32.mrb[0].mxu0
    %959 = vmatprep.mubr.f32.mxu0 %v245
    %960 = vmatmul.mubr.f32.gmra.mrb[0].mxu0 %v244
    %v961 = vpop.f32.mrb[0].mxu0
    %v962 = vadd.f32 %v577, %v961
    %v963 = vpop.f32.mrb[0].mxu0
    %964 = vmatprep.mubr.f32.mxu0 %v249
    %965 = vmatmul.mubr.f32.gmra.mrb[0].mxu0 %v248
    %v966 = vpop.f32.mrb[0].mxu0
    %v967 = vadd.f32 %v582, %v966
    %v968 = vpop.f32.mrb[0].mxu0
    %969 = vmatprep.mubr.f32.mxu0 %v253
    %970 = vmatmul.mubr.f32.gmra.mrb[0].mxu0 %v252
    %v971 = vpop.f32.mrb[0].mxu0
    %v972 = vadd.f32 %v587, %v971
    %v973 = vpop.f32.mrb[0].mxu0
    %974 = vmatprep.mubr.f32.mxu0 %v257
    %975 = vmatmul.mubr.f32.gmra.mrb[0].mxu0 %v256
    %v976 = vpop.f32.mrb[0].mxu0
    %v977 = vadd.f32 %v592, %v976
    %v978 = vpop.f32.mrb[0].mxu0
    %979 = vmatprep.mubr.f32.mxu0 %v261
    %980 = vmatmul.mubr.f32.gmra.mrb[0].mxu0 %v260
    %v981 = vpop.f32.mrb[0].mxu0
    %v982 = vadd.f32 %v597, %v981
    %v983 = vpop.f32.mrb[0].mxu0
    %984 = vmatprep.mubr.f32.mxu0 %v265
    %985 = vmatmul.mubr.f32.gmra.mrb[0].mxu0 %v264
    %v986 = vpop.f32.mrb[0].mxu0
    %v987 = vadd.f32 %v602, %v986
    %v988 = vpop.f32.mrb[0].mxu0
    %989 = vmatprep.mubr.f32.mxu0 %v269
    %990 = vmatmul.mubr.f32.gmra.mrb[0].mxu0 %v268
    %v991 = vpop.f32.mrb[0].mxu0
    %v992 = vadd.f32 %v607, %v991
    %v993 = vpop.f32.mrb[0].mxu0
    %994 = vmatprep.mubr.f32.mxu0 %v273
    %995 = vmatmul.mubr.f32.gmra.mrb[0].mxu0 %v272
    %v996 = vpop.f32.mrb[0].mxu0
    %v997 = vadd.f32 %v612, %v996
    %v998 = vpop.f32.mrb[0].mxu0
    %999 = vmatprep.mubr.f32.mxu0 %v277
    %1000 = vmatmul.mubr.f32.gmra.mrb[0].mxu0 %v276
    %v1001 = vpop.f32.mrb[0].mxu0
    %v1002 = vadd.f32 %v617, %v1001
    %v1003 = vpop.f32.mrb[0].mxu0
    %1004 = vmatprep.mubr.f32.mxu0 %v281
    %1005 = vmatmul.mubr.f32.gmra.mrb[0].mxu0 %v280
    %v1006 = vpop.f32.mrb[0].mxu0
    %v1007 = vadd.f32 %v622, %v1006
    %v1008 = vpop.f32.mrb[0].mxu0
    %1009 = vmatprep.mubr.f32.mxu0 %v285
    %1010 = vmatmul.mubr.f32.gmra.mrb[0].mxu0 %v284
    %v1011 = vpop.f32.mrb[0].mxu0
    %v1012 = vadd.f32 %v627, %v1011
    %v1013 = vpop.f32.mrb[0].mxu0
    %1014 = vmatprep.mubr.f32.mxu0 %v289
    %1015 = vmatmul.mubr.f32.gmra.mrb[0].mxu0 %v288
    %v1016 = vpop.f32.mrb[0].mxu0
    %v1017 = vadd.f32 %v632, %v1016
    %v1018 = vpop.f32.mrb[0].mxu0
    %1019 = vmatprep.mubr.f32.mxu0 %v293
    %1020 = vmatmul.mubr.f32.gmra.mrb[0].mxu0 %v292
    %v1021 = vpop.f32.mrb[0].mxu0
    %v1022 = vadd.f32 %v637, %v1021
    %v1023 = vpop.f32.mrb[0].mxu0
    %1024 = vmatprep.mubr.f32.mxu0 %v297
    %1025 = vmatmul.mubr.f32.gmra.mrb[0].mxu0 %v296
    %v1026 = vpop.f32.mrb[0].mxu0
    %v1027 = vadd.f32 %v642, %v1026
    %v1028 = vpop.f32.mrb[0].mxu0
    %1029 = vmatprep.mubr.f32.mxu0 %v301
    %1030 = vmatmul.mubr.f32.gmra.mrb[0].mxu0 %v300
    %v1031 = vpop.f32.mrb[0].mxu0
    %v1032 = vadd.f32 %v647, %v1031
    %v1033 = vpop.f32.mrb[0].mxu0
    %1034 = vmatprep.mubr.f32.mxu0 %v305
    %1035 = vmatmul.mubr.f32.gmra.mrb[0].mxu0 %v304
    %v1036 = vpop.f32.mrb[0].mxu0
    %v1037 = vadd.f32 %v652, %v1036
    %v1038 = vpop.f32.mrb[0].mxu0
    %1039 = vmatprep.mubr.f32.mxu0 %v309
    %1040 = vmatmul.mubr.f32.gmra.mrb[0].mxu0 %v308
    %v1041 = vpop.f32.mrb[0].mxu0
    %v1042 = vadd.f32 %v657, %v1041
    %v1043 = vpop.f32.mrb[0].mxu0
    %1044 = vmatprep.mubr.f32.mxu0 %v313
    %1045 = vmatmul.mubr.f32.gmra.mrb[0].mxu0 %v312
    %v1046 = vpop.f32.mrb[0].mxu0
    %v1047 = vadd.f32 %v662, %v1046
    %v1048 = vpop.f32.mrb[0].mxu0
    %1049 = vmatprep.mubr.f32.mxu0 %v317
    %1050 = vmatmul.mubr.f32.gmra.mrb[0].mxu0 %v316
    %v1051 = vpop.f32.mrb[0].mxu0
    %v1052 = vadd.f32 %v667, %v1051
    %v1053 = vpop.f32.mrb[0].mxu0
    %1054 = vmatprep.mubr.f32.mxu0 %v321
    %1055 = vmatmul.mubr.f32.gmra.mrb[0].mxu0 %v320
    %v1056 = vpop.f32.mrb[0].mxu0
    %v1057 = vadd.f32 %v672, %v1056
    %v1058 = vpop.f32.mrb[0].mxu0
    %1059 = vmatprep.mubr.f32.mxu0 %v325
    %1060 = vmatmul.mubr.f32.gmra.mrb[0].mxu0 %v324
    %v1061 = vpop.f32.mrb[0].mxu0
    %v1062 = vadd.f32 %v677, %v1061
    %v1063 = vpop.f32.mrb[0].mxu0
    %1064 = vmatprep.mubr.f32.mxu0 %v329
    %1065 = vmatmul.mubr.f32.gmra.mrb[0].mxu0 %v328
    %v1066 = vpop.f32.mrb[0].mxu0
    %v1067 = vadd.f32 %v682, %v1066
    %v1068 = vpop.f32.mrb[0].mxu0
    %1069 = vmatprep.mubr.f32.mxu0 %v333
    %1070 = vmatmul.mubr.f32.gmra.mrb[0].mxu0 %v332
    %v1071 = vpop.f32.mrb[0].mxu0
    %v1072 = vadd.f32 %v687, %v1071
    %v1073 = vpop.f32.mrb[0].mxu0
    %1074 = vmatprep.mubr.f32.mxu0 %v337
    %1075 = vmatmul.mubr.f32.gmra.mrb[0].mxu0 %v336
    %v1076 = vpop.f32.mrb[0].mxu0
    %v1077 = vadd.f32 %v692, %v1076
    %v1078 = vpop.f32.mrb[0].mxu0
    %1079 = vmatprep.mubr.f32.mxu0 %v341
    %1080 = vmatmul.mubr.f32.gmra.mrb[0].mxu0 %v340
    %v1081 = vpop.f32.mrb[0].mxu0
    %v1082 = vadd.f32 %v697, %v1081
    %v1083 = vpop.f32.mrb[0].mxu0
    %1084 = vmatprep.mubr.f32.mxu0 %v345
    %1085 = vmatmul.mubr.f32.gmra.mrb[0].mxu0 %v344
    %v1086 = vpop.f32.mrb[0].mxu0
    %v1087 = vadd.f32 %v702, %v1086
    %v1088 = vpop.f32.mrb[0].mxu0
    %1089 = vmatprep.mubr.f32.mxu0 %v349
    %1090 = vmatmul.mubr.f32.gmra.mrb[0].mxu0 %v348
    %v1091 = vpop.f32.mrb[0].mxu0
    %v1092 = vadd.f32 %v707, %v1091
    %v1093 = vpop.f32.mrb[0].mxu0
    %1094 = vmatprep.mubr.f32.mxu0 %v353
    %1095 = vmatmul.mubr.f32.gmra.mrb[0].mxu0 %v352
    %v1096 = vpop.f32.mrb[0].mxu0
    %v1097 = vadd.f32 %v712, %v1096
    %v1098 = vpop.f32.mrb[0].mxu0
    %1099 = vmatprep.mubr.f32.mxu0 %v357
    %1100 = vmatmul.mubr.f32.gmra.mrb[0].mxu0 %v356
    %v1101 = vpop.f32.mrb[0].mxu0
    %v1102 = vadd.f32 %v717, %v1101
    %v1103 = vpop.f32.mrb[0].mxu0
    %1104 = vmatprep.mubr.f32.mxu0 %v361
    %1105 = vmatmul.mubr.f32.gmra.mrb[0].mxu0 %v360
    %v1106 = vpop.f32.mrb[0].mxu0
    %v1107 = vadd.f32 %v722, %v1106
    %v1108 = vpop.f32.mrb[0].mxu0
    %1109 = vmatprep.mubr.f32.mxu0 %v365
    %1110 = vmatmul.mubr.f32.gmra.mrb[0].mxu0 %v364
    %v1111 = vpop.f32.mrb[0].mxu0
    %v1112 = vadd.f32 %v727, %v1111
    %v1113 = vpop.f32.mrb[0].mxu0
    %1114 = vmatprep.mubr.f32.mxu0 %v369
    %1115 = vmatmul.mubr.f32.gmra.mrb[0].mxu0 %v368
    %v1116 = vpop.f32.mrb[0].mxu0
    %v1117 = vadd.f32 %v732, %v1116
    %v1118 = vpop.f32.mrb[0].mxu0
    %1119 = vmatprep.mubr.f32.mxu0 %v373
    %1120 = vmatmul.mubr.f32.gmra.mrb[0].mxu0 %v372
    %v1121 = vpop.f32.mrb[0].mxu0
    %v1122 = vadd.f32 %v737, %v1121
    %v1123 = vpop.f32.mrb[0].mxu0
    %1124 = vmatprep.mubr.f32.mxu0 %v377
    %1125 = vmatmul.mubr.f32.gmra.mrb[0].mxu0 %v376
    %v1126 = vpop.f32.mrb[0].mxu0
    %v1127 = vadd.f32 %v742, %v1126
    %v1128 = vpop.f32.mrb[0].mxu0
    %1129 = vmatprep.mubr.f32.mxu0 %v381
    %1130 = vmatmul.mubr.f32.gmra.mrb[0].mxu0 %v380
    %v1131 = vpop.f32.mrb[0].mxu0
    %v1132 = vadd.f32 %v747, %v1131
    %v1133 = vpop.f32.mrb[0].mxu0
    %1134 = vmatprep.mubr.f32.mxu0 %v385
    %1135 = vmatmul.mubr.f32.gmra.mrb[0].mxu0 %v384
    %v1136 = vpop.f32.mrb[0].mxu0
    %v1137 = vadd.f32 %v752, %v1136
    %v1138 = vpop.f32.mrb[0].mxu0
    %1139 = vmatprep.mubr.f32.mxu0 %v389
    %1140 = vmatmul.mubr.f32.gmra.mrb[0].mxu0 %v388
    %v1141 = vpop.f32.mrb[0].mxu0
    %v1142 = vadd.f32 %v757, %v1141
    %v1143 = vpop.f32.mrb[0].mxu0
    %1144 = vmatprep.mubr.f32.mxu0 %v393
    %1145 = vmatmul.mubr.f32.gmra.mrb[0].mxu0 %v392
    %v1146 = vpop.f32.mrb[0].mxu0
    %v1147 = vadd.f32 %v762, %v1146
    %v1148 = vpop.f32.mrb[0].mxu0
    %1149 = vmatprep.mubr.f32.mxu0 %v397
    %1150 = vmatmul.mubr.f32.gmra.mrb[0].mxu0 %v396
    %v1151 = vpop.f32.mrb[0].mxu0
    %v1152 = vadd.f32 %v767, %v1151
    %v1153 = vpop.f32.mrb[0].mxu0
    %1154 = vmatprep.mubr.f32.mxu0 %v401
    %1155 = vmatmul.mubr.f32.gmra.mrb[0].mxu0 %v400
    %v1156 = vpop.f32.mrb[0].mxu0
    %v1157 = vadd.f32 %v772, %v1156
    %v1158 = vpop.f32.mrb[0].mxu0
    %1159 = vmatprep.mubr.f32.mxu0 %v405
    %1160 = vmatmul.mubr.f32.gmra.mrb[0].mxu0 %v404
    %v1161 = vpop.f32.mrb[0].mxu0
    %v1162 = vadd.f32 %v777, %v1161
    %v1163 = vpop.f32.mrb[0].mxu0
    %1164 = vmatprep.mubr.f32.mxu0 %v409
    %1165 = vmatmul.mubr.f32.gmra.mrb[0].mxu0 %v408
    %v1166 = vpop.f32.mrb[0].mxu0
    %v1167 = vadd.f32 %v782, %v1166
    %v1168 = vpop.f32.mrb[0].mxu0
    %1169 = vmatprep.mubr.f32.mxu0 %v413
    %1170 = vmatmul.mubr.f32.gmra.mrb[0].mxu0 %v412
    %v1171 = vpop.f32.mrb[0].mxu0
    %v1172 = vadd.f32 %v787, %v1171
    %v1173 = vpop.f32.mrb[0].mxu0
    %1174 = vmatprep.mubr.f32.mxu0 %v417
    %1175 = vmatmul.mubr.f32.gmra.mrb[0].mxu0 %v416
    %v1176 = vpop.f32.mrb[0].mxu0
    %v1177 = vadd.f32 %v792, %v1176
    %v1178 = vpop.f32.mrb[0].mxu0
    %1179 = vmatprep.mubr.f32.mxu0 %v421
    %1180 = vmatmul.mubr.f32.gmra.mrb[0].mxu0 %v420
    %v1181 = vpop.f32.mrb[0].mxu0
    %v1182 = vadd.f32 %v797, %v1181
    %v1183 = vpop.f32.mrb[0].mxu0
    %1184 = vmatprep.mubr.f32.mxu0 %v425
    %1185 = vmatmul.mubr.f32.gmra.mrb[0].mxu0 %v424
    %v1186 = vpop.f32.mrb[0].mxu0
    %v1187 = vadd.f32 %v802, %v1186
    %v1188 = vpop.f32.mrb[0].mxu0
    %1189 = vmatprep.mubr.f32.mxu0 %v429
    %1190 = vmatmul.mubr.f32.gmra.mrb[0].mxu0 %v428
    %v1191 = vpop.f32.mrb[0].mxu0
    %v1192 = vadd.f32 %v807, %v1191
    %v1193 = vpop.f32.mrb[0].mxu0
    %1194 = vmatprep.mubr.f32.mxu0 %v433
    %1195 = vmatmul.mubr.f32.gmra.mrb[0].mxu0 %v432
    %v1196 = vpop.f32.mrb[0].mxu0
    %v1197 = vadd.f32 %v812, %v1196
    %v1198 = vpop.f32.mrb[0].mxu0
    %1199 = vmatprep.mubr.f32.mxu0 %v437
    %1200 = vmatmul.mubr.f32.gmra.mrb[0].mxu0 %v436
    %v1201 = vpop.f32.mrb[0].mxu0
    %v1202 = vadd.f32 %v817, %v1201
    %v1203 = vpop.f32.mrb[0].mxu0
    %1204 = vmatprep.mubr.f32.mxu0 %v441
    %1205 = vmatmul.mubr.f32.gmra.mrb[0].mxu0 %v440
    %v1206 = vpop.f32.mrb[0].mxu0
    %v1207 = vadd.f32 %v822, %v1206
    %v1208 = vpop.f32.mrb[0].mxu0
    %1209 = vmatprep.mubr.f32.mxu0 %v445
    %1210 = vmatmul.mubr.f32.gmra.mrb[0].mxu0 %v444
    %v1211 = vpop.f32.mrb[0].mxu0
    %v1212 = vadd.f32 %v827, %v1211
    %v1213 = vpop.f32.mrb[0].mxu0
    %1214 = vmatprep.mubr.f32.mxu0 %v449
    %1215 = vmatmul.mubr.f32.gmra.mrb[0].mxu0 %v448
    %v1216 = vpop.f32.mrb[0].mxu0
    %v1217 = vadd.f32 %v832, %v1216
    %v1218 = vpop.f32.mrb[0].mxu0
    %1219 = vdwg.mxu0
    %v1220 = vld [vmem:[%s2] sm:$0xff]
    %v1221 = vld [vmem:[%s2 + $0x8] sm:$0xff]
    %v1222 = vld [vmem:[%s2 + $0x10] sm:$0xff]
    %v1223 = vld [vmem:[%s2 + $0x18] sm:$0xff]
    %1224 = vmatprep.subr.mxu0 0.0
    %1225 = vmatpush1.msra.mxu0 %v902
    %1226 = vmatprep.subr.mxu0 0.0
    %1227 = vmatpush1.msra.mxu0 %v907
    %1228 = vmatprep.subr.mxu0 0.0
    %1229 = vmatpush1.msra.mxu0 %v912
    %1230 = vmatprep.subr.mxu0 0.0
    %1231 = vmatpush1.msra.mxu0 %v917
    %1232 = vmatprep.subr.mxu0 0.0
    %1233 = vmatpush1.msra.mxu0 %v922
    %1234 = vmatprep.subr.mxu0 0.0
    %1235 = vmatpush1.msra.mxu0 %v927
    %1236 = vmatprep.subr.mxu0 0.0
    %1237 = vmatpush1.msra.mxu0 %v932
    %1238 = vmatprep.subr.mxu0 0.0
    %1239 = vmatpush1.msra.mxu0 %v937
    %1240 = vmatprep.subr.mxu0 0.0
    %1241 = vmatpush1.msra.mxu0 %v942
    %1242 = vmatprep.subr.mxu0 0.0
    %1243 = vmatpush1.msra.mxu0 %v947
    %1244 = vmatprep.subr.mxu0 0.0
    %1245 = vmatpush1.msra.mxu0 %v952
    %1246 = vmatprep.subr.mxu0 0.0
    %1247 = vmatpush1.msra.mxu0 %v957
    %1248 = vmatprep.subr.mxu0 0.0
    %1249 = vmatpush1.msra.mxu0 %v962
    %1250 = vmatprep.subr.mxu0 0.0
    %1251 = vmatpush1.msra.mxu0 %v967
    %1252 = vmatprep.subr.mxu0 0.0
    %1253 = vmatpush1.msra.mxu0 %v972
    %1254 = vmatprep.subr.mxu0 0.0
    %1255 = vmatpush1.msra.mxu0 %v977
    %1256 = vmatprep.subr.mxu0 0.0
    %1257 = vmatpush1.msra.mxu0 %v982
    %1258 = vmatprep.subr.mxu0 0.0
    %1259 = vmatpush1.msra.mxu0 %v987
    %1260 = vmatprep.subr.mxu0 0.0
    %1261 = vmatpush1.msra.mxu0 %v992
    %1262 = vmatprep.subr.mxu0 0.0
    %1263 = vmatpush1.msra.mxu0 %v997
    %1264 = vmatprep.subr.mxu0 0.0
    %1265 = vmatpush1.msra.mxu0 %v1002
    %1266 = vmatprep.subr.mxu0 0.0
    %1267 = vmatpush1.msra.mxu0 %v1007
    %1268 = vmatprep.subr.mxu0 0.0
    %1269 = vmatpush1.msra.mxu0 %v1012
    %1270 = vmatprep.subr.mxu0 0.0
    %1271 = vmatpush1.msra.mxu0 %v1017
    %1272 = vmatprep.subr.mxu0 0.0
    %1273 = vmatpush1.msra.mxu0 %v1022
    %1274 = vmatprep.subr.mxu0 0.0
    %1275 = vmatpush1.msra.mxu0 %v1027
    %1276 = vmatprep.subr.mxu0 0.0
    %1277 = vmatpush1.msra.mxu0 %v1032
    %1278 = vmatprep.subr.mxu0 0.0
    %1279 = vmatpush1.msra.mxu0 %v1037
    %1280 = vmatprep.subr.mxu0 0.0
    %1281 = vmatpush1.msra.mxu0 %v1042
    %1282 = vmatprep.subr.mxu0 0.0
    %1283 = vmatpush1.msra.mxu0 %v1047
    %1284 = vmatprep.subr.mxu0 0.0
    %1285 = vmatpush1.msra.mxu0 %v1052
    %1286 = vmatprep.subr.mxu0 0.0
    %1287 = vmatpush1.msra.mxu0 %v1057
    %1288 = vmatprep.mubr.f32.mxu0 %v1221
    %1289 = vmatmul.mubr.f32.gmra.mrb[0].mxu0 %v1220
    %v1290 = vpop.f32.mrb[0].mxu0
    %v1291 = vadd.f32 0.0, %v1290
    %v1292 = vpop.f32.mrb[0].mxu0
    %1293 = vdwg.mxu0
    %1294 = vmatprep.subr.mxu0 0.0
    %1295 = vmatpush1.msra.mxu0 %v1062
    %1296 = vmatprep.subr.mxu0 0.0
    %1297 = vmatpush1.msra.mxu0 %v1067
    %1298 = vmatprep.subr.mxu0 0.0
    %1299 = vmatpush1.msra.mxu0 %v1072
    %1300 = vmatprep.subr.mxu0 0.0
    %1301 = vmatpush1.msra.mxu0 %v1077
    %1302 = vmatprep.subr.mxu0 0.0
    %1303 = vmatpush1.msra.mxu0 %v1082
    %1304 = vmatprep.subr.mxu0 0.0
    %1305 = vmatpush1.msra.mxu0 %v1087
    %1306 = vmatprep.subr.mxu0 0.0
    %1307 = vmatpush1.msra.mxu0 %v1092
    %1308 = vmatprep.subr.mxu0 0.0
    %1309 = vmatpush1.msra.mxu0 %v1097
    %1310 = vmatprep.subr.mxu0 0.0
    %1311 = vmatpush1.msra.mxu0 %v1102
    %1312 = vmatprep.subr.mxu0 0.0
    %1313 = vmatpush1.msra.mxu0 %v1107
    %1314 = vmatprep.subr.mxu0 0.0
    %1315 = vmatpush1.msra.mxu0 %v1112
    %1316 = vmatprep.subr.mxu0 0.0
    %1317 = vmatpush1.msra.mxu0 %v1117
    %1318 = vmatprep.subr.mxu0 0.0
    %1319 = vmatpush1.msra.mxu0 %v1122
    %1320 = vmatprep.subr.mxu0 0.0
    %1321 = vmatpush1.msra.mxu0 %v1127
    %1322 = vmatprep.subr.mxu0 0.0
    %1323 = vmatpush1.msra.mxu0 %v1132
    %1324 = vmatprep.subr.mxu0 0.0
    %1325 = vmatpush1.msra.mxu0 %v1137
    %1326 = vmatprep.subr.mxu0 0.0
    %1327 = vmatpush1.msra.mxu0 %v1142
    %1328 = vmatprep.subr.mxu0 0.0
    %1329 = vmatpush1.msra.mxu0 %v1147
    %1330 = vmatprep.subr.mxu0 0.0
    %1331 = vmatpush1.msra.mxu0 %v1152
    %1332 = vmatprep.subr.mxu0 0.0
    %1333 = vmatpush1.msra.mxu0 %v1157
    %1334 = vmatprep.subr.mxu0 0.0
    %1335 = vmatpush1.msra.mxu0 %v1162
    %1336 = vmatprep.subr.mxu0 0.0
    %1337 = vmatpush1.msra.mxu0 %v1167
    %1338 = vmatprep.subr.mxu0 0.0
    %1339 = vmatpush1.msra.mxu0 %v1172
    %1340 = vmatprep.subr.mxu0 0.0
    %1341 = vmatpush1.msra.mxu0 %v1177
    %1342 = vmatprep.subr.mxu0 0.0
    %1343 = vmatpush1.msra.mxu0 %v1182
    %1344 = vmatprep.subr.mxu0 0.0
    %1345 = vmatpush1.msra.mxu0 %v1187
    %1346 = vmatprep.subr.mxu0 0.0
    %1347 = vmatpush1.msra.mxu0 %v1192
    %1348 = vmatprep.subr.mxu0 0.0
    %1349 = vmatpush1.msra.mxu0 %v1197
    %1350 = vmatprep.subr.mxu0 0.0
    %1351 = vmatpush1.msra.mxu0 %v1202
    %1352 = vmatprep.subr.mxu0 0.0
    %1353 = vmatpush1.msra.mxu0 %v1207
    %1354 = vmatprep.subr.mxu0 0.0
    %1355 = vmatpush1.msra.mxu0 %v1212
    %1356 = vmatprep.subr.mxu0 0.0
    %1357 = vmatpush1.msra.mxu0 %v1217
    %1358 = vmatprep.mubr.f32.mxu0 %v1223
    %1359 = vmatmul.mubr.f32.gmra.mrb[0].mxu0 %v1222
    %v1360 = vpop.f32.mrb[0].mxu0
    %v1361 = vadd.f32 %v1291, %v1360
    %v1362 = vpop.f32.mrb[0].mxu0
    %1363 = vdwg.mxu0
    %v1364 = vmul.f32 %v902, %v902
    %v1365 = vmul.f32 %v907, %v907
    %v1366 = vmul.f32 %v912, %v912
    %v1367 = vmul.f32 %v917, %v917
    %v1368 = vmul.f32 %v922, %v922
    %v1369 = vmul.f32 %v927, %v927
    %v1370 = vmul.f32 %v932, %v932
    %v1371 = vmul.f32 %v937, %v937
    %v1372 = vmul.f32 %v942, %v942
    %v1373 = vmul.f32 %v947, %v947
    %v1374 = vmul.f32 %v952, %v952
    %v1375 = vmul.f32 %v957, %v957
    %v1376 = vmul.f32 %v962, %v962
    %v1377 = vmul.f32 %v967, %v967
    %v1378 = vmul.f32 %v972, %v972
    %v1379 = vmul.f32 %v977, %v977
    %v1380 = vmul.f32 %v982, %v982
    %v1381 = vmul.f32 %v987, %v987
    %v1382 = vmul.f32 %v992, %v992
    %v1383 = vmul.f32 %v997, %v997
    %v1384 = vmul.f32 %v1002, %v1002
    %v1385 = vmul.f32 %v1007, %v1007
    %v1386 = vmul.f32 %v1012, %v1012
    %v1387 = vmul.f32 %v1017, %v1017
    %v1388 = vmul.f32 %v1022, %v1022
    %v1389 = vmul.f32 %v1027, %v1027
    %v1390 = vmul.f32 %v1032, %v1032
    %v1391 = vmul.f32 %v1037, %v1037
    %v1392 = vmul.f32 %v1042, %v1042
    %v1393 = vmul.f32 %v1047, %v1047
    %v1394 = vmul.f32 %v1052, %v1052
    %v1395 = vmul.f32 %v1057, %v1057
    %v1396 = vmul.f32 %v1062, %v1062
    %v1397 = vmul.f32 %v1067, %v1067
    %v1398 = vmul.f32 %v1072, %v1072
    %v1399 = vmul.f32 %v1077, %v1077
    %v1400 = vmul.f32 %v1082, %v1082
    %v1401 = vmul.f32 %v1087, %v1087
    %v1402 = vmul.f32 %v1092, %v1092
    %v1403 = vmul.f32 %v1097, %v1097
    %v1404 = vmul.f32 %v1102, %v1102
    %v1405 = vmul.f32 %v1107, %v1107
    %v1406 = vmul.f32 %v1112, %v1112
    %v1407 = vmul.f32 %v1117, %v1117
    %v1408 = vmul.f32 %v1122, %v1122
    %v1409 = vmul.f32 %v1127, %v1127
    %v1410 = vmul.f32 %v1132, %v1132
    %v1411 = vmul.f32 %v1137, %v1137
    %v1412 = vmul.f32 %v1142, %v1142
    %v1413 = vmul.f32 %v1147, %v1147
    %v1414 = vmul.f32 %v1152, %v1152
    %v1415 = vmul.f32 %v1157, %v1157
    %v1416 = vmul.f32 %v1162, %v1162
    %v1417 = vmul.f32 %v1167, %v1167
    %v1418 = vmul.f32 %v1172, %v1172
    %v1419 = vmul.f32 %v1177, %v1177
    %v1420 = vmul.f32 %v1182, %v1182
    %v1421 = vmul.f32 %v1187, %v1187
    %v1422 = vmul.f32 %v1192, %v1192
    %v1423 = vmul.f32 %v1197, %v1197
    %v1424 = vmul.f32 %v1202, %v1202
    %v1425 = vmul.f32 %v1207, %v1207
    %v1426 = vmul.f32 %v1212, %v1212
    %v1427 = vmul.f32 %v1217, %v1217
    %1428 = vmatprep.subr.mxu0 0.0
    %1429 = vmatpush1.msra.mxu0 %v1364
    %1430 = vmatprep.subr.mxu0 0.0
    %1431 = vmatpush1.msra.mxu0 %v1365
    %1432 = vmatprep.subr.mxu0 0.0
    %1433 = vmatpush1.msra.mxu0 %v1366
    %1434 = vmatprep.subr.mxu0 0.0
    %1435 = vmatpush1.msra.mxu0 %v1367
    %1436 = vmatprep.subr.mxu0 0.0
    %1437 = vmatpush1.msra.mxu0 %v1368
    %1438 = vmatprep.subr.mxu0 0.0
    %1439 = vmatpush1.msra.mxu0 %v1369
    %1440 = vmatprep.subr.mxu0 0.0
    %1441 = vmatpush1.msra.mxu0 %v1370
    %1442 = vmatprep.subr.mxu0 0.0
    %1443 = vmatpush1.msra.mxu0 %v1371
    %1444 = vmatprep.subr.mxu0 0.0
    %1445 = vmatpush1.msra.mxu0 %v1372
    %1446 = vmatprep.subr.mxu0 0.0
    %1447 = vmatpush1.msra.mxu0 %v1373
    %1448 = vmatprep.subr.mxu0 0.0
    %1449 = vmatpush1.msra.mxu0 %v1374
    %1450 = vmatprep.subr.mxu0 0.0
    %1451 = vmatpush1.msra.mxu0 %v1375
    %1452 = vmatprep.subr.mxu0 0.0
    %1453 = vmatpush1.msra.mxu0 %v1376
    %1454 = vmatprep.subr.mxu0 0.0
    %1455 = vmatpush1.msra.mxu0 %v1377
    %1456 = vmatprep.subr.mxu0 0.0
    %1457 = vmatpush1.msra.mxu0 %v1378
    %1458 = vmatprep.subr.mxu0 0.0
    %1459 = vmatpush1.msra.mxu0 %v1379
    %1460 = vmatprep.subr.mxu0 0.0
    %1461 = vmatpush1.msra.mxu0 %v1380
    %1462 = vmatprep.subr.mxu0 0.0
    %1463 = vmatpush1.msra.mxu0 %v1381
    %1464 = vmatprep.subr.mxu0 0.0
    %1465 = vmatpush1.msra.mxu0 %v1382
    %1466 = vmatprep.subr.mxu0 0.0
    %1467 = vmatpush1.msra.mxu0 %v1383
    %1468 = vmatprep.subr.mxu0 0.0
    %1469 = vmatpush1.msra.mxu0 %v1384
    %1470 = vmatprep.subr.mxu0 0.0
    %1471 = vmatpush1.msra.mxu0 %v1385
    %1472 = vmatprep.subr.mxu0 0.0
    %1473 = vmatpush1.msra.mxu0 %v1386
    %1474 = vmatprep.subr.mxu0 0.0
    %1475 = vmatpush1.msra.mxu0 %v1387
    %1476 = vmatprep.subr.mxu0 0.0
    %1477 = vmatpush1.msra.mxu0 %v1388
    %1478 = vmatprep.subr.mxu0 0.0
    %1479 = vmatpush1.msra.mxu0 %v1389
    %1480 = vmatprep.subr.mxu0 0.0
    %1481 = vmatpush1.msra.mxu0 %v1390
    %1482 = vmatprep.subr.mxu0 0.0
    %1483 = vmatpush1.msra.mxu0 %v1391
    %1484 = vmatprep.subr.mxu0 0.0
    %1485 = vmatpush1.msra.mxu0 %v1392
    %1486 = vmatprep.subr.mxu0 0.0
    %1487 = vmatpush1.msra.mxu0 %v1393
    %1488 = vmatprep.subr.mxu0 0.0
    %1489 = vmatpush1.msra.mxu0 %v1394
    %1490 = vmatprep.subr.mxu0 0.0
    %1491 = vmatpush1.msra.mxu0 %v1395
    %1492 = vmatprep.mubr.f32.mxu0 %v1221
    %1493 = vmatmul.mubr.f32.gmra.mrb[0].mxu0 %v1220
    %v1494 = vpop.f32.mrb[0].mxu0
    %v1495 = vadd.f32 0.0, %v1494
    %v1496 = vpop.f32.mrb[0].mxu0
    %1497 = vdwg.mxu0
    %1498 = vmatprep.subr.mxu0 0.0
    %1499 = vmatpush1.msra.mxu0 %v1396
    %1500 = vmatprep.subr.mxu0 0.0
    %1501 = vmatpush1.msra.mxu0 %v1397
    %1502 = vmatprep.subr.mxu0 0.0
    %1503 = vmatpush1.msra.mxu0 %v1398
    %1504 = vmatprep.subr.mxu0 0.0
    %1505 = vmatpush1.msra.mxu0 %v1399
    %1506 = vmatprep.subr.mxu0 0.0
    %1507 = vmatpush1.msra.mxu0 %v1400
    %1508 = vmatprep.subr.mxu0 0.0
    %1509 = vmatpush1.msra.mxu0 %v1401
    %1510 = vmatprep.subr.mxu0 0.0
    %1511 = vmatpush1.msra.mxu0 %v1402
    %1512 = vmatprep.subr.mxu0 0.0
    %1513 = vmatpush1.msra.mxu0 %v1403
    %1514 = vmatprep.subr.mxu0 0.0
    %1515 = vmatpush1.msra.mxu0 %v1404
    %1516 = vmatprep.subr.mxu0 0.0
    %1517 = vmatpush1.msra.mxu0 %v1405
    %1518 = vmatprep.subr.mxu0 0.0
    %1519 = vmatpush1.msra.mxu0 %v1406
    %1520 = vmatprep.subr.mxu0 0.0
    %1521 = vmatpush1.msra.mxu0 %v1407
    %1522 = vmatprep.subr.mxu0 0.0
    %1523 = vmatpush1.msra.mxu0 %v1408
    %1524 = vmatprep.subr.mxu0 0.0
    %1525 = vmatpush1.msra.mxu0 %v1409
    %1526 = vmatprep.subr.mxu0 0.0
    %1527 = vmatpush1.msra.mxu0 %v1410
    %1528 = vmatprep.subr.mxu0 0.0
    %1529 = vmatpush1.msra.mxu0 %v1411
    %1530 = vmatprep.subr.mxu0 0.0
    %1531 = vmatpush1.msra.mxu0 %v1412
    %1532 = vmatprep.subr.mxu0 0.0
    %1533 = vmatpush1.msra.mxu0 %v1413
    %1534 = vmatprep.subr.mxu0 0.0
    %1535 = vmatpush1.msra.mxu0 %v1414
    %1536 = vmatprep.subr.mxu0 0.0
    %1537 = vmatpush1.msra.mxu0 %v1415
    %1538 = vmatprep.subr.mxu0 0.0
    %1539 = vmatpush1.msra.mxu0 %v1416
    %1540 = vmatprep.subr.mxu0 0.0
    %1541 = vmatpush1.msra.mxu0 %v1417
    %1542 = vmatprep.subr.mxu0 0.0
    %1543 = vmatpush1.msra.mxu0 %v1418
    %1544 = vmatprep.subr.mxu0 0.0
    %1545 = vmatpush1.msra.mxu0 %v1419
    %1546 = vmatprep.subr.mxu0 0.0
    %1547 = vmatpush1.msra.mxu0 %v1420
    %1548 = vmatprep.subr.mxu0 0.0
    %1549 = vmatpush1.msra.mxu0 %v1421
    %1550 = vmatprep.subr.mxu0 0.0
    %1551 = vmatpush1.msra.mxu0 %v1422
    %1552 = vmatprep.subr.mxu0 0.0
    %1553 = vmatpush1.msra.mxu0 %v1423
    %1554 = vmatprep.subr.mxu0 0.0
    %1555 = vmatpush1.msra.mxu0 %v1424
    %1556 = vmatprep.subr.mxu0 0.0
    %1557 = vmatpush1.msra.mxu0 %v1425
    %1558 = vmatprep.subr.mxu0 0.0
    %1559 = vmatpush1.msra.mxu0 %v1426
    %1560 = vmatprep.subr.mxu0 0.0
    %1561 = vmatpush1.msra.mxu0 %v1427
    %1562 = vmatprep.mubr.f32.mxu0 %v1223
    %1563 = vmatmul.mubr.f32.gmra.mrb[0].mxu0 %v1222
    %v1564 = vpop.f32.mrb[0].mxu0
    %v1565 = vadd.f32 %v1495, %v1564
    %v1566 = vpop.f32.mrb[0].mxu0
    %1567 = vdwg.mxu0
    %v1568 = vmul.f32 %v1361, %v1361
    %v1569 = vsub.f32 %v1565, %v1568
    %v1570 = vmax.f32 %v1569, 0.0
    %v1571 = vld [vmem:[%s4] sm:$0xff]
    %v1572 = vadd.f32 %v1570, 1e-05
    %v1573 = vrsqrt.pop %v1572
    %1575 = vset.pattern.permute.xlu0 0
    %1576 = vperm.xlu0 %1575, %v1571
    %v1577 = vpop.permute.xlu0 %1576
    %v1579 = vmul.f32 %v1577, %v1573
    %v1580 = vld [vmem:[%s5] sm:$0xff]
    %v1581 = vmul.f32 %v1361, %v1579
    %1583 = vset.pattern.permute.xlu0 0
    %1584 = vperm.xlu0 %1583, %v1580
    %v1585 = vpop.permute.xlu0 %1584
    %v1587 = vsub.f32 %v1585, %v1581
    %v1588 = vld [vmem:[%s3] sm:$0xff]
    %v1589 = vld [vmem:[%s3 + $0x8] sm:$0xff]
    %v1590 = vld [vmem:[%s3 + $0x10] sm:$0xff]
    %v1591 = vld [vmem:[%s3 + $0x18] sm:$0xff]
    %v1592 = vld [vmem:[%s3 + $0x20] sm:$0xff]
    %v1593 = vld [vmem:[%s3 + $0x28] sm:$0xff]
    %v1594 = vld [vmem:[%s3 + $0x30] sm:$0xff]
    %v1595 = vld [vmem:[%s3 + $0x38] sm:$0xff]
    %v1596 = vld [vmem:[%s3 + $0x40] sm:$0xff]
    %v1597 = vld [vmem:[%s3 + $0x48] sm:$0xff]
    %v1598 = vld [vmem:[%s3 + $0x50] sm:$0xff]
    %v1599 = vld [vmem:[%s3 + $0x58] sm:$0xff]
    %v1600 = vld [vmem:[%s3 + $0x60] sm:$0xff]
    %v1601 = vld [vmem:[%s3 + $0x68] sm:$0xff]
    %v1602 = vld [vmem:[%s3 + $0x70] sm:$0xff]
    %v1603 = vld [vmem:[%s3 + $0x78] sm:$0xff]
    %v1604 = vld [vmem:[%s3 + $0x80] sm:$0xff]
    %v1605 = vld [vmem:[%s3 + $0x88] sm:$0xff]
    %v1606 = vld [vmem:[%s3 + $0x90] sm:$0xff]
    %v1607 = vld [vmem:[%s3 + $0x98] sm:$0xff]
    %v1608 = vld [vmem:[%s3 + $0xa0] sm:$0xff]
    %v1609 = vld [vmem:[%s3 + $0xa8] sm:$0xff]
    %v1610 = vld [vmem:[%s3 + $0xb0] sm:$0xff]
    %v1611 = vld [vmem:[%s3 + $0xb8] sm:$0xff]
    %v1612 = vld [vmem:[%s3 + $0xc0] sm:$0xff]
    %v1613 = vld [vmem:[%s3 + $0xc8] sm:$0xff]
    %v1614 = vld [vmem:[%s3 + $0xd0] sm:$0xff]
    %v1615 = vld [vmem:[%s3 + $0xd8] sm:$0xff]
    %v1616 = vld [vmem:[%s3 + $0xe0] sm:$0xff]
    %v1617 = vld [vmem:[%s3 + $0xe8] sm:$0xff]
    %v1618 = vld [vmem:[%s3 + $0xf0] sm:$0xff]
    %v1619 = vld [vmem:[%s3 + $0xf8] sm:$0xff]
    %v1620 = vld [vmem:[%s3 + $0x100] sm:$0xff]
    %v1621 = vld [vmem:[%s3 + $0x108] sm:$0xff]
    %v1622 = vld [vmem:[%s3 + $0x110] sm:$0xff]
    %v1623 = vld [vmem:[%s3 + $0x118] sm:$0xff]
    %v1624 = vld [vmem:[%s3 + $0x120] sm:$0xff]
    %v1625 = vld [vmem:[%s3 + $0x128] sm:$0xff]
    %v1626 = vld [vmem:[%s3 + $0x130] sm:$0xff]
    %v1627 = vld [vmem:[%s3 + $0x138] sm:$0xff]
    %v1628 = vld [vmem:[%s3 + $0x140] sm:$0xff]
    %v1629 = vld [vmem:[%s3 + $0x148] sm:$0xff]
    %v1630 = vld [vmem:[%s3 + $0x150] sm:$0xff]
    %v1631 = vld [vmem:[%s3 + $0x158] sm:$0xff]
    %v1632 = vld [vmem:[%s3 + $0x160] sm:$0xff]
    %v1633 = vld [vmem:[%s3 + $0x168] sm:$0xff]
    %v1634 = vld [vmem:[%s3 + $0x170] sm:$0xff]
    %v1635 = vld [vmem:[%s3 + $0x178] sm:$0xff]
    %v1636 = vld [vmem:[%s3 + $0x180] sm:$0xff]
    %v1637 = vld [vmem:[%s3 + $0x188] sm:$0xff]
    %v1638 = vld [vmem:[%s3 + $0x190] sm:$0xff]
    %v1639 = vld [vmem:[%s3 + $0x198] sm:$0xff]
    %v1640 = vld [vmem:[%s3 + $0x1a0] sm:$0xff]
    %v1641 = vld [vmem:[%s3 + $0x1a8] sm:$0xff]
    %v1642 = vld [vmem:[%s3 + $0x1b0] sm:$0xff]
    %v1643 = vld [vmem:[%s3 + $0x1b8] sm:$0xff]
    %v1644 = vld [vmem:[%s3 + $0x1c0] sm:$0xff]
    %v1645 = vld [vmem:[%s3 + $0x1c8] sm:$0xff]
    %v1646 = vld [vmem:[%s3 + $0x1d0] sm:$0xff]
    %v1647 = vld [vmem:[%s3 + $0x1d8] sm:$0xff]
    %v1648 = vld [vmem:[%s3 + $0x1e0] sm:$0xff]
    %v1649 = vld [vmem:[%s3 + $0x1e8] sm:$0xff]
    %v1650 = vld [vmem:[%s3 + $0x1f0] sm:$0xff]
    %v1651 = vld [vmem:[%s3 + $0x1f8] sm:$0xff]
    %vm1652 = vcmask 64512
    %v1654 = vsel %vm1652, %v1588, 0
    %v1657 = vsel %vm1652, %v1589, 0
    %v1660 = vsel %vm1652, %v1590, 0
    %v1663 = vsel %vm1652, %v1591, 0
    %v1666 = vsel %vm1652, %v1592, 0
    %v1669 = vsel %vm1652, %v1593, 0
    %v1672 = vsel %vm1652, %v1594, 0
    %v1675 = vsel %vm1652, %v1595, 0
    %v1678 = vsel %vm1652, %v1596, 0
    %v1681 = vsel %vm1652, %v1597, 0
    %v1684 = vsel %vm1652, %v1598, 0
    %v1687 = vsel %vm1652, %v1599, 0
    %v1690 = vsel %vm1652, %v1600, 0
    %v1693 = vsel %vm1652, %v1601, 0
    %v1696 = vsel %vm1652, %v1602, 0
    %v1699 = vsel %vm1652, %v1603, 0
    %v1702 = vsel %vm1652, %v1604, 0
    %v1705 = vsel %vm1652, %v1605, 0
    %v1708 = vsel %vm1652, %v1606, 0
    %v1711 = vsel %vm1652, %v1607, 0
    %v1714 = vsel %vm1652, %v1608, 0
    %v1717 = vsel %vm1652, %v1609, 0
    %v1720 = vsel %vm1652, %v1610, 0
    %v1723 = vsel %vm1652, %v1611, 0
    %v1726 = vsel %vm1652, %v1612, 0
    %v1729 = vsel %vm1652, %v1613, 0
    %v1732 = vsel %vm1652, %v1614, 0
    %v1735 = vsel %vm1652, %v1615, 0
    %v1738 = vsel %vm1652, %v1616, 0
    %v1741 = vsel %vm1652, %v1617, 0
    %v1744 = vsel %vm1652, %v1618, 0
    %v1747 = vsel %vm1652, %v1619, 0
    %v1750 = vsel %vm1652, %v1620, 0
    %v1753 = vsel %vm1652, %v1621, 0
    %v1756 = vsel %vm1652, %v1622, 0
    %v1759 = vsel %vm1652, %v1623, 0
    %v1762 = vsel %vm1652, %v1624, 0
    %v1765 = vsel %vm1652, %v1625, 0
    %v1768 = vsel %vm1652, %v1626, 0
    %v1771 = vsel %vm1652, %v1627, 0
    %v1774 = vsel %vm1652, %v1628, 0
    %v1777 = vsel %vm1652, %v1629, 0
    %v1780 = vsel %vm1652, %v1630, 0
    %v1783 = vsel %vm1652, %v1631, 0
    %v1786 = vsel %vm1652, %v1632, 0
    %v1789 = vsel %vm1652, %v1633, 0
    %v1792 = vsel %vm1652, %v1634, 0
    %v1795 = vsel %vm1652, %v1635, 0
    %v1798 = vsel %vm1652, %v1636, 0
    %v1801 = vsel %vm1652, %v1637, 0
    %v1804 = vsel %vm1652, %v1638, 0
    %v1807 = vsel %vm1652, %v1639, 0
    %v1810 = vsel %vm1652, %v1640, 0
    %v1813 = vsel %vm1652, %v1641, 0
    %v1816 = vsel %vm1652, %v1642, 0
    %v1819 = vsel %vm1652, %v1643, 0
    %v1822 = vsel %vm1652, %v1644, 0
    %v1825 = vsel %vm1652, %v1645, 0
    %v1828 = vsel %vm1652, %v1646, 0
    %v1831 = vsel %vm1652, %v1647, 0
    %v1834 = vsel %vm1652, %v1648, 0
    %v1837 = vsel %vm1652, %v1649, 0
    %v1840 = vsel %vm1652, %v1650, 0
    %v1843 = vsel %vm1652, %v1651, 0
    %1845 = vmatprep.subr.mxu0 0.0
    %1846 = vmatpush1.msra.mxu0 %v1579
    %1847 = vmatprep.subr.mxu0 0.0
    %1848 = vmatpush1.msra.mxu0 0.0
    %1849 = vmatprep.subr.mxu0 0.0
    %1850 = vmatpush1.msra.mxu0 0.0
    %1851 = vmatprep.subr.mxu0 0.0
    %1852 = vmatpush1.msra.mxu0 0.0
    %1853 = vmatprep.subr.mxu0 0.0
    %1854 = vmatpush1.msra.mxu0 0.0
    %1855 = vmatprep.subr.mxu0 0.0
    %1856 = vmatpush1.msra.mxu0 0.0
    %1857 = vmatprep.subr.mxu0 0.0
    %1858 = vmatpush1.msra.mxu0 0.0
    %1859 = vmatprep.subr.mxu0 0.0
    %1860 = vmatpush1.msra.mxu0 0.0
    %1861 = vmatprep.subr.mxu0 0.0
    %1862 = vmatpush1.msra.mxu0 0.0
    %1863 = vmatprep.subr.mxu0 0.0
    %1864 = vmatpush1.msra.mxu0 0.0
    %1865 = vmatprep.subr.mxu0 0.0
    %1866 = vmatpush1.msra.mxu0 0.0
    %1867 = vmatprep.subr.mxu0 0.0
    %1868 = vmatpush1.msra.mxu0 0.0
    %1869 = vmatprep.subr.mxu0 0.0
    %1870 = vmatpush1.msra.mxu0 0.0
    %1871 = vmatprep.subr.mxu0 0.0
    %1872 = vmatpush1.msra.mxu0 0.0
    %1873 = vmatprep.subr.mxu0 0.0
    %1874 = vmatpush1.msra.mxu0 0.0
    %1875 = vmatprep.subr.mxu0 0.0
    %1876 = vmatpush1.msra.mxu0 0.0
    %1877 = vmatprep.subr.mxu0 0.0
    %1878 = vmatpush1.msra.mxu0 0.0
    %1879 = vmatprep.subr.mxu0 0.0
    %1880 = vmatpush1.msra.mxu0 0.0
    %1881 = vmatprep.subr.mxu0 0.0
    %1882 = vmatpush1.msra.mxu0 0.0
    %1883 = vmatprep.subr.mxu0 0.0
    %1884 = vmatpush1.msra.mxu0 0.0
    %1885 = vmatprep.subr.mxu0 0.0
    %1886 = vmatpush1.msra.mxu0 0.0
    %1887 = vmatprep.subr.mxu0 0.0
    %1888 = vmatpush1.msra.mxu0 0.0
    %1889 = vmatprep.subr.mxu0 0.0
    %1890 = vmatpush1.msra.mxu0 0.0
    %1891 = vmatprep.subr.mxu0 0.0
    %1892 = vmatpush1.msra.mxu0 0.0
    %1893 = vmatprep.subr.mxu0 0.0
    %1894 = vmatpush1.msra.mxu0 0.0
    %1895 = vmatprep.subr.mxu0 0.0
    %1896 = vmatpush1.msra.mxu0 0.0
    %1897 = vmatprep.subr.mxu0 0.0
    %1898 = vmatpush1.msra.mxu0 0.0
    %1899 = vmatprep.subr.mxu0 0.0
    %1900 = vmatpush1.msra.mxu0 0.0
    %1901 = vmatprep.subr.mxu0 0.0
    %1902 = vmatpush1.msra.mxu0 0.0
    %1903 = vmatprep.subr.mxu0 0.0
    %1904 = vmatpush1.msra.mxu0 0.0
    %1905 = vmatprep.subr.mxu0 0.0
    %1906 = vmatpush1.msra.mxu0 0.0
    %1907 = vmatprep.subr.mxu0 0.0
    %1908 = vmatpush1.msra.mxu0 0.0
    %1909 = vmatprep.mubr.f32.mxu0 0.0
    %1910 = vmatmul.mubr.f32.gmra.mrb[0].mxu0 %v1654
    %v1911 = vpop.f32.mrb[0].mxu0
    %v1912 = vadd.f32 0.0, %v1911
    %v1913 = vpop.f32.mrb[0].mxu0
    %1914 = vmatprep.mubr.f32.mxu0 0.0
    %1915 = vmatmul.mubr.f32.gmra.mrb[0].mxu0 %v1657
    %v1916 = vpop.f32.mrb[0].mxu0
    %v1917 = vadd.f32 0.0, %v1916
    %v1918 = vpop.f32.mrb[0].mxu0
    %1919 = vmatprep.mubr.f32.mxu0 0.0
    %1920 = vmatmul.mubr.f32.gmra.mrb[0].mxu0 %v1660
    %v1921 = vpop.f32.mrb[0].mxu0
    %v1922 = vadd.f32 0.0, %v1921
    %v1923 = vpop.f32.mrb[0].mxu0
    %1924 = vmatprep.mubr.f32.mxu0 0.0
    %1925 = vmatmul.mubr.f32.gmra.mrb[0].mxu0 %v1663
    %v1926 = vpop.f32.mrb[0].mxu0
    %v1927 = vadd.f32 0.0, %v1926
    %v1928 = vpop.f32.mrb[0].mxu0
    %1929 = vmatprep.mubr.f32.mxu0 0.0
    %1930 = vmatmul.mubr.f32.gmra.mrb[0].mxu0 %v1666
    %v1931 = vpop.f32.mrb[0].mxu0
    %v1932 = vadd.f32 0.0, %v1931
    %v1933 = vpop.f32.mrb[0].mxu0
    %1934 = vmatprep.mubr.f32.mxu0 0.0
    %1935 = vmatmul.mubr.f32.gmra.mrb[0].mxu0 %v1669
    %v1936 = vpop.f32.mrb[0].mxu0
    %v1937 = vadd.f32 0.0, %v1936
    %v1938 = vpop.f32.mrb[0].mxu0
    %1939 = vmatprep.mubr.f32.mxu0 0.0
    %1940 = vmatmul.mubr.f32.gmra.mrb[0].mxu0 %v1672
    %v1941 = vpop.f32.mrb[0].mxu0
    %v1942 = vadd.f32 0.0, %v1941
    %v1943 = vpop.f32.mrb[0].mxu0
    %1944 = vmatprep.mubr.f32.mxu0 0.0
    %1945 = vmatmul.mubr.f32.gmra.mrb[0].mxu0 %v1675
    %v1946 = vpop.f32.mrb[0].mxu0
    %v1947 = vadd.f32 0.0, %v1946
    %v1948 = vpop.f32.mrb[0].mxu0
    %1949 = vmatprep.mubr.f32.mxu0 0.0
    %1950 = vmatmul.mubr.f32.gmra.mrb[0].mxu0 %v1678
    %v1951 = vpop.f32.mrb[0].mxu0
    %v1952 = vadd.f32 0.0, %v1951
    %v1953 = vpop.f32.mrb[0].mxu0
    %1954 = vmatprep.mubr.f32.mxu0 0.0
    %1955 = vmatmul.mubr.f32.gmra.mrb[0].mxu0 %v1681
    %v1956 = vpop.f32.mrb[0].mxu0
    %v1957 = vadd.f32 0.0, %v1956
    %v1958 = vpop.f32.mrb[0].mxu0
    %1959 = vmatprep.mubr.f32.mxu0 0.0
    %1960 = vmatmul.mubr.f32.gmra.mrb[0].mxu0 %v1684
    %v1961 = vpop.f32.mrb[0].mxu0
    %v1962 = vadd.f32 0.0, %v1961
    %v1963 = vpop.f32.mrb[0].mxu0
    %1964 = vmatprep.mubr.f32.mxu0 0.0
    %1965 = vmatmul.mubr.f32.gmra.mrb[0].mxu0 %v1687
    %v1966 = vpop.f32.mrb[0].mxu0
    %v1967 = vadd.f32 0.0, %v1966
    %v1968 = vpop.f32.mrb[0].mxu0
    %1969 = vmatprep.mubr.f32.mxu0 0.0
    %1970 = vmatmul.mubr.f32.gmra.mrb[0].mxu0 %v1690
    %v1971 = vpop.f32.mrb[0].mxu0
    %v1972 = vadd.f32 0.0, %v1971
    %v1973 = vpop.f32.mrb[0].mxu0
    %1974 = vmatprep.mubr.f32.mxu0 0.0
    %1975 = vmatmul.mubr.f32.gmra.mrb[0].mxu0 %v1693
    %v1976 = vpop.f32.mrb[0].mxu0
    %v1977 = vadd.f32 0.0, %v1976
    %v1978 = vpop.f32.mrb[0].mxu0
    %1979 = vmatprep.mubr.f32.mxu0 0.0
    %1980 = vmatmul.mubr.f32.gmra.mrb[0].mxu0 %v1696
    %v1981 = vpop.f32.mrb[0].mxu0
    %v1982 = vadd.f32 0.0, %v1981
    %v1983 = vpop.f32.mrb[0].mxu0
    %1984 = vmatprep.mubr.f32.mxu0 0.0
    %1985 = vmatmul.mubr.f32.gmra.mrb[0].mxu0 %v1699
    %v1986 = vpop.f32.mrb[0].mxu0
    %v1987 = vadd.f32 0.0, %v1986
    %v1988 = vpop.f32.mrb[0].mxu0
    %1989 = vmatprep.mubr.f32.mxu0 0.0
    %1990 = vmatmul.mubr.f32.gmra.mrb[0].mxu0 %v1702
    %v1991 = vpop.f32.mrb[0].mxu0
    %v1992 = vadd.f32 0.0, %v1991
    %v1993 = vpop.f32.mrb[0].mxu0
    %1994 = vmatprep.mubr.f32.mxu0 0.0
    %1995 = vmatmul.mubr.f32.gmra.mrb[0].mxu0 %v1705
    %v1996 = vpop.f32.mrb[0].mxu0
    %v1997 = vadd.f32 0.0, %v1996
    %v1998 = vpop.f32.mrb[0].mxu0
    %1999 = vmatprep.mubr.f32.mxu0 0.0
    %2000 = vmatmul.mubr.f32.gmra.mrb[0].mxu0 %v1708
    %v2001 = vpop.f32.mrb[0].mxu0
    %v2002 = vadd.f32 0.0, %v2001
    %v2003 = vpop.f32.mrb[0].mxu0
    %2004 = vmatprep.mubr.f32.mxu0 0.0
    %2005 = vmatmul.mubr.f32.gmra.mrb[0].mxu0 %v1711
    %v2006 = vpop.f32.mrb[0].mxu0
    %v2007 = vadd.f32 0.0, %v2006
    %v2008 = vpop.f32.mrb[0].mxu0
    %2009 = vmatprep.mubr.f32.mxu0 0.0
    %2010 = vmatmul.mubr.f32.gmra.mrb[0].mxu0 %v1714
    %v2011 = vpop.f32.mrb[0].mxu0
    %v2012 = vadd.f32 0.0, %v2011
    %v2013 = vpop.f32.mrb[0].mxu0
    %2014 = vmatprep.mubr.f32.mxu0 0.0
    %2015 = vmatmul.mubr.f32.gmra.mrb[0].mxu0 %v1717
    %v2016 = vpop.f32.mrb[0].mxu0
    %v2017 = vadd.f32 0.0, %v2016
    %v2018 = vpop.f32.mrb[0].mxu0
    %2019 = vmatprep.mubr.f32.mxu0 0.0
    %2020 = vmatmul.mubr.f32.gmra.mrb[0].mxu0 %v1720
    %v2021 = vpop.f32.mrb[0].mxu0
    %v2022 = vadd.f32 0.0, %v2021
    %v2023 = vpop.f32.mrb[0].mxu0
    %2024 = vmatprep.mubr.f32.mxu0 0.0
    %2025 = vmatmul.mubr.f32.gmra.mrb[0].mxu0 %v1723
    %v2026 = vpop.f32.mrb[0].mxu0
    %v2027 = vadd.f32 0.0, %v2026
    %v2028 = vpop.f32.mrb[0].mxu0
    %2029 = vmatprep.mubr.f32.mxu0 0.0
    %2030 = vmatmul.mubr.f32.gmra.mrb[0].mxu0 %v1726
    %v2031 = vpop.f32.mrb[0].mxu0
    %v2032 = vadd.f32 0.0, %v2031
    %v2033 = vpop.f32.mrb[0].mxu0
    %2034 = vmatprep.mubr.f32.mxu0 0.0
    %2035 = vmatmul.mubr.f32.gmra.mrb[0].mxu0 %v1729
    %v2036 = vpop.f32.mrb[0].mxu0
    %v2037 = vadd.f32 0.0, %v2036
    %v2038 = vpop.f32.mrb[0].mxu0
    %2039 = vmatprep.mubr.f32.mxu0 0.0
    %2040 = vmatmul.mubr.f32.gmra.mrb[0].mxu0 %v1732
    %v2041 = vpop.f32.mrb[0].mxu0
    %v2042 = vadd.f32 0.0, %v2041
    %v2043 = vpop.f32.mrb[0].mxu0
    %2044 = vmatprep.mubr.f32.mxu0 0.0
    %2045 = vmatmul.mubr.f32.gmra.mrb[0].mxu0 %v1735
    %v2046 = vpop.f32.mrb[0].mxu0
    %v2047 = vadd.f32 0.0, %v2046
    %v2048 = vpop.f32.mrb[0].mxu0
    %2049 = vmatprep.mubr.f32.mxu0 0.0
    %2050 = vmatmul.mubr.f32.gmra.mrb[0].mxu0 %v1738
    %v2051 = vpop.f32.mrb[0].mxu0
    %v2052 = vadd.f32 0.0, %v2051
    %v2053 = vpop.f32.mrb[0].mxu0
    %2054 = vmatprep.mubr.f32.mxu0 0.0
    %2055 = vmatmul.mubr.f32.gmra.mrb[0].mxu0 %v1741
    %v2056 = vpop.f32.mrb[0].mxu0
    %v2057 = vadd.f32 0.0, %v2056
    %v2058 = vpop.f32.mrb[0].mxu0
    %2059 = vmatprep.mubr.f32.mxu0 0.0
    %2060 = vmatmul.mubr.f32.gmra.mrb[0].mxu0 %v1744
    %v2061 = vpop.f32.mrb[0].mxu0
    %v2062 = vadd.f32 0.0, %v2061
    %v2063 = vpop.f32.mrb[0].mxu0
    %2064 = vmatprep.mubr.f32.mxu0 0.0
    %2065 = vmatmul.mubr.f32.gmra.mrb[0].mxu0 %v1747
    %v2066 = vpop.f32.mrb[0].mxu0
    %v2067 = vadd.f32 0.0, %v2066
    %v2068 = vpop.f32.mrb[0].mxu0
    %2069 = vmatprep.mubr.f32.mxu0 0.0
    %2070 = vmatmul.mubr.f32.gmra.mrb[0].mxu0 %v1750
    %v2071 = vpop.f32.mrb[0].mxu0
    %v2072 = vadd.f32 0.0, %v2071
    %v2073 = vpop.f32.mrb[0].mxu0
    %2074 = vmatprep.mubr.f32.mxu0 0.0
    %2075 = vmatmul.mubr.f32.gmra.mrb[0].mxu0 %v1753
    %v2076 = vpop.f32.mrb[0].mxu0
    %v2077 = vadd.f32 0.0, %v2076
    %v2078 = vpop.f32.mrb[0].mxu0
    %2079 = vmatprep.mubr.f32.mxu0 0.0
    %2080 = vmatmul.mubr.f32.gmra.mrb[0].mxu0 %v1756
    %v2081 = vpop.f32.mrb[0].mxu0
    %v2082 = vadd.f32 0.0, %v2081
    %v2083 = vpop.f32.mrb[0].mxu0
    %2084 = vmatprep.mubr.f32.mxu0 0.0
    %2085 = vmatmul.mubr.f32.gmra.mrb[0].mxu0 %v1759
    %v2086 = vpop.f32.mrb[0].mxu0
    %v2087 = vadd.f32 0.0, %v2086
    %v2088 = vpop.f32.mrb[0].mxu0
    %2089 = vmatprep.mubr.f32.mxu0 0.0
    %2090 = vmatmul.mubr.f32.gmra.mrb[0].mxu0 %v1762
    %v2091 = vpop.f32.mrb[0].mxu0
    %v2092 = vadd.f32 0.0, %v2091
    %v2093 = vpop.f32.mrb[0].mxu0
    %2094 = vmatprep.mubr.f32.mxu0 0.0
    %2095 = vmatmul.mubr.f32.gmra.mrb[0].mxu0 %v1765
    %v2096 = vpop.f32.mrb[0].mxu0
    %v2097 = vadd.f32 0.0, %v2096
    %v2098 = vpop.f32.mrb[0].mxu0
    %2099 = vmatprep.mubr.f32.mxu0 0.0
    %2100 = vmatmul.mubr.f32.gmra.mrb[0].mxu0 %v1768
    %v2101 = vpop.f32.mrb[0].mxu0
    %v2102 = vadd.f32 0.0, %v2101
    %v2103 = vpop.f32.mrb[0].mxu0
    %2104 = vmatprep.mubr.f32.mxu0 0.0
    %2105 = vmatmul.mubr.f32.gmra.mrb[0].mxu0 %v1771
    %v2106 = vpop.f32.mrb[0].mxu0
    %v2107 = vadd.f32 0.0, %v2106
    %v2108 = vpop.f32.mrb[0].mxu0
    %2109 = vmatprep.mubr.f32.mxu0 0.0
    %2110 = vmatmul.mubr.f32.gmra.mrb[0].mxu0 %v1774
    %v2111 = vpop.f32.mrb[0].mxu0
    %v2112 = vadd.f32 0.0, %v2111
    %v2113 = vpop.f32.mrb[0].mxu0
    %2114 = vmatprep.mubr.f32.mxu0 0.0
    %2115 = vmatmul.mubr.f32.gmra.mrb[0].mxu0 %v1777
    %v2116 = vpop.f32.mrb[0].mxu0
    %v2117 = vadd.f32 0.0, %v2116
    %v2118 = vpop.f32.mrb[0].mxu0
    %2119 = vmatprep.mubr.f32.mxu0 0.0
    %2120 = vmatmul.mubr.f32.gmra.mrb[0].mxu0 %v1780
    %v2121 = vpop.f32.mrb[0].mxu0
    %v2122 = vadd.f32 0.0, %v2121
    %v2123 = vpop.f32.mrb[0].mxu0
    %2124 = vmatprep.mubr.f32.mxu0 0.0
    %2125 = vmatmul.mubr.f32.gmra.mrb[0].mxu0 %v1783
    %v2126 = vpop.f32.mrb[0].mxu0
    %v2127 = vadd.f32 0.0, %v2126
    %v2128 = vpop.f32.mrb[0].mxu0
    %2129 = vmatprep.mubr.f32.mxu0 0.0
    %2130 = vmatmul.mubr.f32.gmra.mrb[0].mxu0 %v1786
    %v2131 = vpop.f32.mrb[0].mxu0
    %v2132 = vadd.f32 0.0, %v2131
    %v2133 = vpop.f32.mrb[0].mxu0
    %2134 = vmatprep.mubr.f32.mxu0 0.0
    %2135 = vmatmul.mubr.f32.gmra.mrb[0].mxu0 %v1789
    %v2136 = vpop.f32.mrb[0].mxu0
    %v2137 = vadd.f32 0.0, %v2136
    %v2138 = vpop.f32.mrb[0].mxu0
    %2139 = vmatprep.mubr.f32.mxu0 0.0
    %2140 = vmatmul.mubr.f32.gmra.mrb[0].mxu0 %v1792
    %v2141 = vpop.f32.mrb[0].mxu0
    %v2142 = vadd.f32 0.0, %v2141
    %v2143 = vpop.f32.mrb[0].mxu0
    %2144 = vmatprep.mubr.f32.mxu0 0.0
    %2145 = vmatmul.mubr.f32.gmra.mrb[0].mxu0 %v1795
    %v2146 = vpop.f32.mrb[0].mxu0
    %v2147 = vadd.f32 0.0, %v2146
    %v2148 = vpop.f32.mrb[0].mxu0
    %2149 = vmatprep.mubr.f32.mxu0 0.0
    %2150 = vmatmul.mubr.f32.gmra.mrb[0].mxu0 %v1798
    %v2151 = vpop.f32.mrb[0].mxu0
    %v2152 = vadd.f32 0.0, %v2151
    %v2153 = vpop.f32.mrb[0].mxu0
    %2154 = vmatprep.mubr.f32.mxu0 0.0
    %2155 = vmatmul.mubr.f32.gmra.mrb[0].mxu0 %v1801
    %v2156 = vpop.f32.mrb[0].mxu0
    %v2157 = vadd.f32 0.0, %v2156
    %v2158 = vpop.f32.mrb[0].mxu0
    %2159 = vmatprep.mubr.f32.mxu0 0.0
    %2160 = vmatmul.mubr.f32.gmra.mrb[0].mxu0 %v1804
    %v2161 = vpop.f32.mrb[0].mxu0
    %v2162 = vadd.f32 0.0, %v2161
    %v2163 = vpop.f32.mrb[0].mxu0
    %2164 = vmatprep.mubr.f32.mxu0 0.0
    %2165 = vmatmul.mubr.f32.gmra.mrb[0].mxu0 %v1807
    %v2166 = vpop.f32.mrb[0].mxu0
    %v2167 = vadd.f32 0.0, %v2166
    %v2168 = vpop.f32.mrb[0].mxu0
    %2169 = vmatprep.mubr.f32.mxu0 0.0
    %2170 = vmatmul.mubr.f32.gmra.mrb[0].mxu0 %v1810
    %v2171 = vpop.f32.mrb[0].mxu0
    %v2172 = vadd.f32 0.0, %v2171
    %v2173 = vpop.f32.mrb[0].mxu0
    %2174 = vmatprep.mubr.f32.mxu0 0.0
    %2175 = vmatmul.mubr.f32.gmra.mrb[0].mxu0 %v1813
    %v2176 = vpop.f32.mrb[0].mxu0
    %v2177 = vadd.f32 0.0, %v2176
    %v2178 = vpop.f32.mrb[0].mxu0
    %2179 = vmatprep.mubr.f32.mxu0 0.0
    %2180 = vmatmul.mubr.f32.gmra.mrb[0].mxu0 %v1816
    %v2181 = vpop.f32.mrb[0].mxu0
    %v2182 = vadd.f32 0.0, %v2181
    %v2183 = vpop.f32.mrb[0].mxu0
    %2184 = vmatprep.mubr.f32.mxu0 0.0
    %2185 = vmatmul.mubr.f32.gmra.mrb[0].mxu0 %v1819
    %v2186 = vpop.f32.mrb[0].mxu0
    %v2187 = vadd.f32 0.0, %v2186
    %v2188 = vpop.f32.mrb[0].mxu0
    %2189 = vmatprep.mubr.f32.mxu0 0.0
    %2190 = vmatmul.mubr.f32.gmra.mrb[0].mxu0 %v1822
    %v2191 = vpop.f32.mrb[0].mxu0
    %v2192 = vadd.f32 0.0, %v2191
    %v2193 = vpop.f32.mrb[0].mxu0
    %2194 = vmatprep.mubr.f32.mxu0 0.0
    %2195 = vmatmul.mubr.f32.gmra.mrb[0].mxu0 %v1825
    %v2196 = vpop.f32.mrb[0].mxu0
    %v2197 = vadd.f32 0.0, %v2196
    %v2198 = vpop.f32.mrb[0].mxu0
    %2199 = vmatprep.mubr.f32.mxu0 0.0
    %2200 = vmatmul.mubr.f32.gmra.mrb[0].mxu0 %v1828
    %v2201 = vpop.f32.mrb[0].mxu0
    %v2202 = vadd.f32 0.0, %v2201
    %v2203 = vpop.f32.mrb[0].mxu0
    %2204 = vmatprep.mubr.f32.mxu0 0.0
    %2205 = vmatmul.mubr.f32.gmra.mrb[0].mxu0 %v1831
    %v2206 = vpop.f32.mrb[0].mxu0
    %v2207 = vadd.f32 0.0, %v2206
    %v2208 = vpop.f32.mrb[0].mxu0
    %2209 = vmatprep.mubr.f32.mxu0 0.0
    %2210 = vmatmul.mubr.f32.gmra.mrb[0].mxu0 %v1834
    %v2211 = vpop.f32.mrb[0].mxu0
    %v2212 = vadd.f32 0.0, %v2211
    %v2213 = vpop.f32.mrb[0].mxu0
    %2214 = vmatprep.mubr.f32.mxu0 0.0
    %2215 = vmatmul.mubr.f32.gmra.mrb[0].mxu0 %v1837
    %v2216 = vpop.f32.mrb[0].mxu0
    %v2217 = vadd.f32 0.0, %v2216
    %v2218 = vpop.f32.mrb[0].mxu0
    %2219 = vmatprep.mubr.f32.mxu0 0.0
    %2220 = vmatmul.mubr.f32.gmra.mrb[0].mxu0 %v1840
    %v2221 = vpop.f32.mrb[0].mxu0
    %v2222 = vadd.f32 0.0, %v2221
    %v2223 = vpop.f32.mrb[0].mxu0
    %2224 = vmatprep.mubr.f32.mxu0 0.0
    %2225 = vmatmul.mubr.f32.gmra.mrb[0].mxu0 %v1843
    %v2226 = vpop.f32.mrb[0].mxu0
    %v2227 = vadd.f32 0.0, %v2226
    %v2228 = vpop.f32.mrb[0].mxu0
    %2229 = vdwg.mxu0
    %2230 = vmatprep.subr.mxu0 0.0
    %2231 = vmatpush1.msra.mxu0 %v1587
    %2232 = vmatprep.subr.mxu0 0.0
    %2233 = vmatpush1.msra.mxu0 0.0
    %2234 = vmatprep.subr.mxu0 0.0
    %2235 = vmatpush1.msra.mxu0 0.0
    %2236 = vmatprep.subr.mxu0 0.0
    %2237 = vmatpush1.msra.mxu0 0.0
    %2238 = vmatprep.subr.mxu0 0.0
    %2239 = vmatpush1.msra.mxu0 0.0
    %2240 = vmatprep.subr.mxu0 0.0
    %2241 = vmatpush1.msra.mxu0 0.0
    %2242 = vmatprep.subr.mxu0 0.0
    %2243 = vmatpush1.msra.mxu0 0.0
    %2244 = vmatprep.subr.mxu0 0.0
    %2245 = vmatpush1.msra.mxu0 0.0
    %2246 = vmatprep.subr.mxu0 0.0
    %2247 = vmatpush1.msra.mxu0 0.0
    %2248 = vmatprep.subr.mxu0 0.0
    %2249 = vmatpush1.msra.mxu0 0.0
    %2250 = vmatprep.subr.mxu0 0.0
    %2251 = vmatpush1.msra.mxu0 0.0
    %2252 = vmatprep.subr.mxu0 0.0
    %2253 = vmatpush1.msra.mxu0 0.0
    %2254 = vmatprep.subr.mxu0 0.0
    %2255 = vmatpush1.msra.mxu0 0.0
    %2256 = vmatprep.subr.mxu0 0.0
    %2257 = vmatpush1.msra.mxu0 0.0
    %2258 = vmatprep.subr.mxu0 0.0
    %2259 = vmatpush1.msra.mxu0 0.0
    %2260 = vmatprep.subr.mxu0 0.0
    %2261 = vmatpush1.msra.mxu0 0.0
    %2262 = vmatprep.subr.mxu0 0.0
    %2263 = vmatpush1.msra.mxu0 0.0
    %2264 = vmatprep.subr.mxu0 0.0
    %2265 = vmatpush1.msra.mxu0 0.0
    %2266 = vmatprep.subr.mxu0 0.0
    %2267 = vmatpush1.msra.mxu0 0.0
    %2268 = vmatprep.subr.mxu0 0.0
    %2269 = vmatpush1.msra.mxu0 0.0
    %2270 = vmatprep.subr.mxu0 0.0
    %2271 = vmatpush1.msra.mxu0 0.0
    %2272 = vmatprep.subr.mxu0 0.0
    %2273 = vmatpush1.msra.mxu0 0.0
    %2274 = vmatprep.subr.mxu0 0.0
    %2275 = vmatpush1.msra.mxu0 0.0
    %2276 = vmatprep.subr.mxu0 0.0
    %2277 = vmatpush1.msra.mxu0 0.0
    %2278 = vmatprep.subr.mxu0 0.0
    %2279 = vmatpush1.msra.mxu0 0.0
    %2280 = vmatprep.subr.mxu0 0.0
    %2281 = vmatpush1.msra.mxu0 0.0
    %2282 = vmatprep.subr.mxu0 0.0
    %2283 = vmatpush1.msra.mxu0 0.0
    %2284 = vmatprep.subr.mxu0 0.0
    %2285 = vmatpush1.msra.mxu0 0.0
    %2286 = vmatprep.subr.mxu0 0.0
    %2287 = vmatpush1.msra.mxu0 0.0
    %2288 = vmatprep.subr.mxu0 0.0
    %2289 = vmatpush1.msra.mxu0 0.0
    %2290 = vmatprep.subr.mxu0 0.0
    %2291 = vmatpush1.msra.mxu0 0.0
    %2292 = vmatprep.subr.mxu0 0.0
    %2293 = vmatpush1.msra.mxu0 0.0
    %2294 = vmatprep.mubr.f32.mxu0 0.0
    %2295 = vmatmul.mubr.f32.gmra.mrb[0].mxu0 %v1654
    %v2296 = vpop.f32.mrb[0].mxu0
    %v2297 = vadd.f32 0.0, %v2296
    %v2298 = vpop.f32.mrb[0].mxu0
    %2299 = vmatprep.mubr.f32.mxu0 0.0
    %2300 = vmatmul.mubr.f32.gmra.mrb[0].mxu0 %v1657
    %v2301 = vpop.f32.mrb[0].mxu0
    %v2302 = vadd.f32 0.0, %v2301
    %v2303 = vpop.f32.mrb[0].mxu0
    %2304 = vmatprep.mubr.f32.mxu0 0.0
    %2305 = vmatmul.mubr.f32.gmra.mrb[0].mxu0 %v1660
    %v2306 = vpop.f32.mrb[0].mxu0
    %v2307 = vadd.f32 0.0, %v2306
    %v2308 = vpop.f32.mrb[0].mxu0
    %2309 = vmatprep.mubr.f32.mxu0 0.0
    %2310 = vmatmul.mubr.f32.gmra.mrb[0].mxu0 %v1663
    %v2311 = vpop.f32.mrb[0].mxu0
    %v2312 = vadd.f32 0.0, %v2311
    %v2313 = vpop.f32.mrb[0].mxu0
    %2314 = vmatprep.mubr.f32.mxu0 0.0
    %2315 = vmatmul.mubr.f32.gmra.mrb[0].mxu0 %v1666
    %v2316 = vpop.f32.mrb[0].mxu0
    %v2317 = vadd.f32 0.0, %v2316
    %v2318 = vpop.f32.mrb[0].mxu0
    %2319 = vmatprep.mubr.f32.mxu0 0.0
    %2320 = vmatmul.mubr.f32.gmra.mrb[0].mxu0 %v1669
    %v2321 = vpop.f32.mrb[0].mxu0
    %v2322 = vadd.f32 0.0, %v2321
    %v2323 = vpop.f32.mrb[0].mxu0
    %2324 = vmatprep.mubr.f32.mxu0 0.0
    %2325 = vmatmul.mubr.f32.gmra.mrb[0].mxu0 %v1672
    %v2326 = vpop.f32.mrb[0].mxu0
    %v2327 = vadd.f32 0.0, %v2326
    %v2328 = vpop.f32.mrb[0].mxu0
    %2329 = vmatprep.mubr.f32.mxu0 0.0
    %2330 = vmatmul.mubr.f32.gmra.mrb[0].mxu0 %v1675
    %v2331 = vpop.f32.mrb[0].mxu0
    %v2332 = vadd.f32 0.0, %v2331
    %v2333 = vpop.f32.mrb[0].mxu0
    %2334 = vmatprep.mubr.f32.mxu0 0.0
    %2335 = vmatmul.mubr.f32.gmra.mrb[0].mxu0 %v1678
    %v2336 = vpop.f32.mrb[0].mxu0
    %v2337 = vadd.f32 0.0, %v2336
    %v2338 = vpop.f32.mrb[0].mxu0
    %2339 = vmatprep.mubr.f32.mxu0 0.0
    %2340 = vmatmul.mubr.f32.gmra.mrb[0].mxu0 %v1681
    %v2341 = vpop.f32.mrb[0].mxu0
    %v2342 = vadd.f32 0.0, %v2341
    %v2343 = vpop.f32.mrb[0].mxu0
    %2344 = vmatprep.mubr.f32.mxu0 0.0
    %2345 = vmatmul.mubr.f32.gmra.mrb[0].mxu0 %v1684
    %v2346 = vpop.f32.mrb[0].mxu0
    %v2347 = vadd.f32 0.0, %v2346
    %v2348 = vpop.f32.mrb[0].mxu0
    %2349 = vmatprep.mubr.f32.mxu0 0.0
    %2350 = vmatmul.mubr.f32.gmra.mrb[0].mxu0 %v1687
    %v2351 = vpop.f32.mrb[0].mxu0
    %v2352 = vadd.f32 0.0, %v2351
    %v2353 = vpop.f32.mrb[0].mxu0
    %2354 = vmatprep.mubr.f32.mxu0 0.0
    %2355 = vmatmul.mubr.f32.gmra.mrb[0].mxu0 %v1690
    %v2356 = vpop.f32.mrb[0].mxu0
    %v2357 = vadd.f32 0.0, %v2356
    %v2358 = vpop.f32.mrb[0].mxu0
    %2359 = vmatprep.mubr.f32.mxu0 0.0
    %2360 = vmatmul.mubr.f32.gmra.mrb[0].mxu0 %v1693
    %v2361 = vpop.f32.mrb[0].mxu0
    %v2362 = vadd.f32 0.0, %v2361
    %v2363 = vpop.f32.mrb[0].mxu0
    %2364 = vmatprep.mubr.f32.mxu0 0.0
    %2365 = vmatmul.mubr.f32.gmra.mrb[0].mxu0 %v1696
    %v2366 = vpop.f32.mrb[0].mxu0
    %v2367 = vadd.f32 0.0, %v2366
    %v2368 = vpop.f32.mrb[0].mxu0
    %2369 = vmatprep.mubr.f32.mxu0 0.0
    %2370 = vmatmul.mubr.f32.gmra.mrb[0].mxu0 %v1699
    %v2371 = vpop.f32.mrb[0].mxu0
    %v2372 = vadd.f32 0.0, %v2371
    %v2373 = vpop.f32.mrb[0].mxu0
    %2374 = vmatprep.mubr.f32.mxu0 0.0
    %2375 = vmatmul.mubr.f32.gmra.mrb[0].mxu0 %v1702
    %v2376 = vpop.f32.mrb[0].mxu0
    %v2377 = vadd.f32 0.0, %v2376
    %v2378 = vpop.f32.mrb[0].mxu0
    %2379 = vmatprep.mubr.f32.mxu0 0.0
    %2380 = vmatmul.mubr.f32.gmra.mrb[0].mxu0 %v1705
    %v2381 = vpop.f32.mrb[0].mxu0
    %v2382 = vadd.f32 0.0, %v2381
    %v2383 = vpop.f32.mrb[0].mxu0
    %2384 = vmatprep.mubr.f32.mxu0 0.0
    %2385 = vmatmul.mubr.f32.gmra.mrb[0].mxu0 %v1708
    %v2386 = vpop.f32.mrb[0].mxu0
    %v2387 = vadd.f32 0.0, %v2386
    %v2388 = vpop.f32.mrb[0].mxu0
    %2389 = vmatprep.mubr.f32.mxu0 0.0
    %2390 = vmatmul.mubr.f32.gmra.mrb[0].mxu0 %v1711
    %v2391 = vpop.f32.mrb[0].mxu0
    %v2392 = vadd.f32 0.0, %v2391
    %v2393 = vpop.f32.mrb[0].mxu0
    %2394 = vmatprep.mubr.f32.mxu0 0.0
    %2395 = vmatmul.mubr.f32.gmra.mrb[0].mxu0 %v1714
    %v2396 = vpop.f32.mrb[0].mxu0
    %v2397 = vadd.f32 0.0, %v2396
    %v2398 = vpop.f32.mrb[0].mxu0
    %2399 = vmatprep.mubr.f32.mxu0 0.0
    %2400 = vmatmul.mubr.f32.gmra.mrb[0].mxu0 %v1717
    %v2401 = vpop.f32.mrb[0].mxu0
    %v2402 = vadd.f32 0.0, %v2401
    %v2403 = vpop.f32.mrb[0].mxu0
    %2404 = vmatprep.mubr.f32.mxu0 0.0
    %2405 = vmatmul.mubr.f32.gmra.mrb[0].mxu0 %v1720
    %v2406 = vpop.f32.mrb[0].mxu0
    %v2407 = vadd.f32 0.0, %v2406
    %v2408 = vpop.f32.mrb[0].mxu0
    %2409 = vmatprep.mubr.f32.mxu0 0.0
    %2410 = vmatmul.mubr.f32.gmra.mrb[0].mxu0 %v1723
    %v2411 = vpop.f32.mrb[0].mxu0
    %v2412 = vadd.f32 0.0, %v2411
    %v2413 = vpop.f32.mrb[0].mxu0
    %2414 = vmatprep.mubr.f32.mxu0 0.0
    %2415 = vmatmul.mubr.f32.gmra.mrb[0].mxu0 %v1726
    %v2416 = vpop.f32.mrb[0].mxu0
    %v2417 = vadd.f32 0.0, %v2416
    %v2418 = vpop.f32.mrb[0].mxu0
    %2419 = vmatprep.mubr.f32.mxu0 0.0
    %2420 = vmatmul.mubr.f32.gmra.mrb[0].mxu0 %v1729
    %v2421 = vpop.f32.mrb[0].mxu0
    %v2422 = vadd.f32 0.0, %v2421
    %v2423 = vpop.f32.mrb[0].mxu0
    %2424 = vmatprep.mubr.f32.mxu0 0.0
    %2425 = vmatmul.mubr.f32.gmra.mrb[0].mxu0 %v1732
    %v2426 = vpop.f32.mrb[0].mxu0
    %v2427 = vadd.f32 0.0, %v2426
    %v2428 = vpop.f32.mrb[0].mxu0
    %2429 = vmatprep.mubr.f32.mxu0 0.0
    %2430 = vmatmul.mubr.f32.gmra.mrb[0].mxu0 %v1735
    %v2431 = vpop.f32.mrb[0].mxu0
    %v2432 = vadd.f32 0.0, %v2431
    %v2433 = vpop.f32.mrb[0].mxu0
    %2434 = vmatprep.mubr.f32.mxu0 0.0
    %2435 = vmatmul.mubr.f32.gmra.mrb[0].mxu0 %v1738
    %v2436 = vpop.f32.mrb[0].mxu0
    %v2437 = vadd.f32 0.0, %v2436
    %v2438 = vpop.f32.mrb[0].mxu0
    %2439 = vmatprep.mubr.f32.mxu0 0.0
    %2440 = vmatmul.mubr.f32.gmra.mrb[0].mxu0 %v1741
    %v2441 = vpop.f32.mrb[0].mxu0
    %v2442 = vadd.f32 0.0, %v2441
    %v2443 = vpop.f32.mrb[0].mxu0
    %2444 = vmatprep.mubr.f32.mxu0 0.0
    %2445 = vmatmul.mubr.f32.gmra.mrb[0].mxu0 %v1744
    %v2446 = vpop.f32.mrb[0].mxu0
    %v2447 = vadd.f32 0.0, %v2446
    %v2448 = vpop.f32.mrb[0].mxu0
    %2449 = vmatprep.mubr.f32.mxu0 0.0
    %2450 = vmatmul.mubr.f32.gmra.mrb[0].mxu0 %v1747
    %v2451 = vpop.f32.mrb[0].mxu0
    %v2452 = vadd.f32 0.0, %v2451
    %v2453 = vpop.f32.mrb[0].mxu0
    %2454 = vmatprep.mubr.f32.mxu0 0.0
    %2455 = vmatmul.mubr.f32.gmra.mrb[0].mxu0 %v1750
    %v2456 = vpop.f32.mrb[0].mxu0
    %v2457 = vadd.f32 0.0, %v2456
    %v2458 = vpop.f32.mrb[0].mxu0
    %2459 = vmatprep.mubr.f32.mxu0 0.0
    %2460 = vmatmul.mubr.f32.gmra.mrb[0].mxu0 %v1753
    %v2461 = vpop.f32.mrb[0].mxu0
    %v2462 = vadd.f32 0.0, %v2461
    %v2463 = vpop.f32.mrb[0].mxu0
    %2464 = vmatprep.mubr.f32.mxu0 0.0
    %2465 = vmatmul.mubr.f32.gmra.mrb[0].mxu0 %v1756
    %v2466 = vpop.f32.mrb[0].mxu0
    %v2467 = vadd.f32 0.0, %v2466
    %v2468 = vpop.f32.mrb[0].mxu0
    %2469 = vmatprep.mubr.f32.mxu0 0.0
    %2470 = vmatmul.mubr.f32.gmra.mrb[0].mxu0 %v1759
    %v2471 = vpop.f32.mrb[0].mxu0
    %v2472 = vadd.f32 0.0, %v2471
    %v2473 = vpop.f32.mrb[0].mxu0
    %2474 = vmatprep.mubr.f32.mxu0 0.0
    %2475 = vmatmul.mubr.f32.gmra.mrb[0].mxu0 %v1762
    %v2476 = vpop.f32.mrb[0].mxu0
    %v2477 = vadd.f32 0.0, %v2476
    %v2478 = vpop.f32.mrb[0].mxu0
    %2479 = vmatprep.mubr.f32.mxu0 0.0
    %2480 = vmatmul.mubr.f32.gmra.mrb[0].mxu0 %v1765
    %v2481 = vpop.f32.mrb[0].mxu0
    %v2482 = vadd.f32 0.0, %v2481
    %v2483 = vpop.f32.mrb[0].mxu0
    %2484 = vmatprep.mubr.f32.mxu0 0.0
    %2485 = vmatmul.mubr.f32.gmra.mrb[0].mxu0 %v1768
    %v2486 = vpop.f32.mrb[0].mxu0
    %v2487 = vadd.f32 0.0, %v2486
    %v2488 = vpop.f32.mrb[0].mxu0
    %2489 = vmatprep.mubr.f32.mxu0 0.0
    %2490 = vmatmul.mubr.f32.gmra.mrb[0].mxu0 %v1771
    %v2491 = vpop.f32.mrb[0].mxu0
    %v2492 = vadd.f32 0.0, %v2491
    %v2493 = vpop.f32.mrb[0].mxu0
    %2494 = vmatprep.mubr.f32.mxu0 0.0
    %2495 = vmatmul.mubr.f32.gmra.mrb[0].mxu0 %v1774
    %v2496 = vpop.f32.mrb[0].mxu0
    %v2497 = vadd.f32 0.0, %v2496
    %v2498 = vpop.f32.mrb[0].mxu0
    %2499 = vmatprep.mubr.f32.mxu0 0.0
    %2500 = vmatmul.mubr.f32.gmra.mrb[0].mxu0 %v1777
    %v2501 = vpop.f32.mrb[0].mxu0
    %v2502 = vadd.f32 0.0, %v2501
    %v2503 = vpop.f32.mrb[0].mxu0
    %2504 = vmatprep.mubr.f32.mxu0 0.0
    %2505 = vmatmul.mubr.f32.gmra.mrb[0].mxu0 %v1780
    %v2506 = vpop.f32.mrb[0].mxu0
    %v2507 = vadd.f32 0.0, %v2506
    %v2508 = vpop.f32.mrb[0].mxu0
    %2509 = vmatprep.mubr.f32.mxu0 0.0
    %2510 = vmatmul.mubr.f32.gmra.mrb[0].mxu0 %v1783
    %v2511 = vpop.f32.mrb[0].mxu0
    %v2512 = vadd.f32 0.0, %v2511
    %v2513 = vpop.f32.mrb[0].mxu0
    %2514 = vmatprep.mubr.f32.mxu0 0.0
    %2515 = vmatmul.mubr.f32.gmra.mrb[0].mxu0 %v1786
    %v2516 = vpop.f32.mrb[0].mxu0
    %v2517 = vadd.f32 0.0, %v2516
    %v2518 = vpop.f32.mrb[0].mxu0
    %2519 = vmatprep.mubr.f32.mxu0 0.0
    %2520 = vmatmul.mubr.f32.gmra.mrb[0].mxu0 %v1789
    %v2521 = vpop.f32.mrb[0].mxu0
    %v2522 = vadd.f32 0.0, %v2521
    %v2523 = vpop.f32.mrb[0].mxu0
    %2524 = vmatprep.mubr.f32.mxu0 0.0
    %2525 = vmatmul.mubr.f32.gmra.mrb[0].mxu0 %v1792
    %v2526 = vpop.f32.mrb[0].mxu0
    %v2527 = vadd.f32 0.0, %v2526
    %v2528 = vpop.f32.mrb[0].mxu0
    %2529 = vmatprep.mubr.f32.mxu0 0.0
    %2530 = vmatmul.mubr.f32.gmra.mrb[0].mxu0 %v1795
    %v2531 = vpop.f32.mrb[0].mxu0
    %v2532 = vadd.f32 0.0, %v2531
    %v2533 = vpop.f32.mrb[0].mxu0
    %2534 = vmatprep.mubr.f32.mxu0 0.0
    %2535 = vmatmul.mubr.f32.gmra.mrb[0].mxu0 %v1798
    %v2536 = vpop.f32.mrb[0].mxu0
    %v2537 = vadd.f32 0.0, %v2536
    %v2538 = vpop.f32.mrb[0].mxu0
    %2539 = vmatprep.mubr.f32.mxu0 0.0
    %2540 = vmatmul.mubr.f32.gmra.mrb[0].mxu0 %v1801
    %v2541 = vpop.f32.mrb[0].mxu0
    %v2542 = vadd.f32 0.0, %v2541
    %v2543 = vpop.f32.mrb[0].mxu0
    %2544 = vmatprep.mubr.f32.mxu0 0.0
    %2545 = vmatmul.mubr.f32.gmra.mrb[0].mxu0 %v1804
    %v2546 = vpop.f32.mrb[0].mxu0
    %v2547 = vadd.f32 0.0, %v2546
    %v2548 = vpop.f32.mrb[0].mxu0
    %2549 = vmatprep.mubr.f32.mxu0 0.0
    %2550 = vmatmul.mubr.f32.gmra.mrb[0].mxu0 %v1807
    %v2551 = vpop.f32.mrb[0].mxu0
    %v2552 = vadd.f32 0.0, %v2551
    %v2553 = vpop.f32.mrb[0].mxu0
    %2554 = vmatprep.mubr.f32.mxu0 0.0
    %2555 = vmatmul.mubr.f32.gmra.mrb[0].mxu0 %v1810
    %v2556 = vpop.f32.mrb[0].mxu0
    %v2557 = vadd.f32 0.0, %v2556
    %v2558 = vpop.f32.mrb[0].mxu0
    %2559 = vmatprep.mubr.f32.mxu0 0.0
    %2560 = vmatmul.mubr.f32.gmra.mrb[0].mxu0 %v1813
    %v2561 = vpop.f32.mrb[0].mxu0
    %v2562 = vadd.f32 0.0, %v2561
    %v2563 = vpop.f32.mrb[0].mxu0
    %2564 = vmatprep.mubr.f32.mxu0 0.0
    %2565 = vmatmul.mubr.f32.gmra.mrb[0].mxu0 %v1816
    %v2566 = vpop.f32.mrb[0].mxu0
    %v2567 = vadd.f32 0.0, %v2566
    %v2568 = vpop.f32.mrb[0].mxu0
    %2569 = vmatprep.mubr.f32.mxu0 0.0
    %2570 = vmatmul.mubr.f32.gmra.mrb[0].mxu0 %v1819
    %v2571 = vpop.f32.mrb[0].mxu0
    %v2572 = vadd.f32 0.0, %v2571
    %v2573 = vpop.f32.mrb[0].mxu0
    %2574 = vmatprep.mubr.f32.mxu0 0.0
    %2575 = vmatmul.mubr.f32.gmra.mrb[0].mxu0 %v1822
    %v2576 = vpop.f32.mrb[0].mxu0
    %v2577 = vadd.f32 0.0, %v2576
    %v2578 = vpop.f32.mrb[0].mxu0
    %2579 = vmatprep.mubr.f32.mxu0 0.0
    %2580 = vmatmul.mubr.f32.gmra.mrb[0].mxu0 %v1825
    %v2581 = vpop.f32.mrb[0].mxu0
    %v2582 = vadd.f32 0.0, %v2581
    %v2583 = vpop.f32.mrb[0].mxu0
    %2584 = vmatprep.mubr.f32.mxu0 0.0
    %2585 = vmatmul.mubr.f32.gmra.mrb[0].mxu0 %v1828
    %v2586 = vpop.f32.mrb[0].mxu0
    %v2587 = vadd.f32 0.0, %v2586
    %v2588 = vpop.f32.mrb[0].mxu0
    %2589 = vmatprep.mubr.f32.mxu0 0.0
    %2590 = vmatmul.mubr.f32.gmra.mrb[0].mxu0 %v1831
    %v2591 = vpop.f32.mrb[0].mxu0
    %v2592 = vadd.f32 0.0, %v2591
    %v2593 = vpop.f32.mrb[0].mxu0
    %2594 = vmatprep.mubr.f32.mxu0 0.0
    %2595 = vmatmul.mubr.f32.gmra.mrb[0].mxu0 %v1834
    %v2596 = vpop.f32.mrb[0].mxu0
    %v2597 = vadd.f32 0.0, %v2596
    %v2598 = vpop.f32.mrb[0].mxu0
    %2599 = vmatprep.mubr.f32.mxu0 0.0
    %2600 = vmatmul.mubr.f32.gmra.mrb[0].mxu0 %v1837
    %v2601 = vpop.f32.mrb[0].mxu0
    %v2602 = vadd.f32 0.0, %v2601
    %v2603 = vpop.f32.mrb[0].mxu0
    %2604 = vmatprep.mubr.f32.mxu0 0.0
    %2605 = vmatmul.mubr.f32.gmra.mrb[0].mxu0 %v1840
    %v2606 = vpop.f32.mrb[0].mxu0
    %v2607 = vadd.f32 0.0, %v2606
    %v2608 = vpop.f32.mrb[0].mxu0
    %2609 = vmatprep.mubr.f32.mxu0 0.0
    %2610 = vmatmul.mubr.f32.gmra.mrb[0].mxu0 %v1843
    %v2611 = vpop.f32.mrb[0].mxu0
    %v2612 = vadd.f32 0.0, %v2611
    %v2613 = vpop.f32.mrb[0].mxu0
    %2614 = vdwg.mxu0
    %v2615 = vmul.f32 %v902, %v1912
    %v2616 = vmul.f32 %v907, %v1917
    %v2617 = vmul.f32 %v912, %v1922
    %v2618 = vmul.f32 %v917, %v1927
    %v2619 = vmul.f32 %v922, %v1932
    %v2620 = vmul.f32 %v927, %v1937
    %v2621 = vmul.f32 %v932, %v1942
    %v2622 = vmul.f32 %v937, %v1947
    %v2623 = vmul.f32 %v942, %v1952
    %v2624 = vmul.f32 %v947, %v1957
    %v2625 = vmul.f32 %v952, %v1962
    %v2626 = vmul.f32 %v957, %v1967
    %v2627 = vmul.f32 %v962, %v1972
    %v2628 = vmul.f32 %v967, %v1977
    %v2629 = vmul.f32 %v972, %v1982
    %v2630 = vmul.f32 %v977, %v1987
    %v2631 = vmul.f32 %v982, %v1992
    %v2632 = vmul.f32 %v987, %v1997
    %v2633 = vmul.f32 %v992, %v2002
    %v2634 = vmul.f32 %v997, %v2007
    %v2635 = vmul.f32 %v1002, %v2012
    %v2636 = vmul.f32 %v1007, %v2017
    %v2637 = vmul.f32 %v1012, %v2022
    %v2638 = vmul.f32 %v1017, %v2027
    %v2639 = vmul.f32 %v1022, %v2032
    %v2640 = vmul.f32 %v1027, %v2037
    %v2641 = vmul.f32 %v1032, %v2042
    %v2642 = vmul.f32 %v1037, %v2047
    %v2643 = vmul.f32 %v1042, %v2052
    %v2644 = vmul.f32 %v1047, %v2057
    %v2645 = vmul.f32 %v1052, %v2062
    %v2646 = vmul.f32 %v1057, %v2067
    %v2647 = vmul.f32 %v1062, %v2072
    %v2648 = vmul.f32 %v1067, %v2077
    %v2649 = vmul.f32 %v1072, %v2082
    %v2650 = vmul.f32 %v1077, %v2087
    %v2651 = vmul.f32 %v1082, %v2092
    %v2652 = vmul.f32 %v1087, %v2097
    %v2653 = vmul.f32 %v1092, %v2102
    %v2654 = vmul.f32 %v1097, %v2107
    %v2655 = vmul.f32 %v1102, %v2112
    %v2656 = vmul.f32 %v1107, %v2117
    %v2657 = vmul.f32 %v1112, %v2122
    %v2658 = vmul.f32 %v1117, %v2127
    %v2659 = vmul.f32 %v1122, %v2132
    %v2660 = vmul.f32 %v1127, %v2137
    %v2661 = vmul.f32 %v1132, %v2142
    %v2662 = vmul.f32 %v1137, %v2147
    %v2663 = vmul.f32 %v1142, %v2152
    %v2664 = vmul.f32 %v1147, %v2157
    %v2665 = vmul.f32 %v1152, %v2162
    %v2666 = vmul.f32 %v1157, %v2167
    %v2667 = vmul.f32 %v1162, %v2172
    %v2668 = vmul.f32 %v1167, %v2177
    %v2669 = vmul.f32 %v1172, %v2182
    %v2670 = vmul.f32 %v1177, %v2187
    %v2671 = vmul.f32 %v1182, %v2192
    %v2672 = vmul.f32 %v1187, %v2197
    %v2673 = vmul.f32 %v1192, %v2202
    %v2674 = vmul.f32 %v1197, %v2207
    %v2675 = vmul.f32 %v1202, %v2212
    %v2676 = vmul.f32 %v1207, %v2217
    %v2677 = vmul.f32 %v1212, %v2222
    %v2678 = vmul.f32 %v1217, %v2227
    %v2679 = vadd.f32 %v2615, %v2297
    %v2680 = vadd.f32 %v2616, %v2302
    %v2681 = vadd.f32 %v2617, %v2307
    %v2682 = vadd.f32 %v2618, %v2312
    %v2683 = vadd.f32 %v2619, %v2317
    %v2684 = vadd.f32 %v2620, %v2322
    %v2685 = vadd.f32 %v2621, %v2327
    %v2686 = vadd.f32 %v2622, %v2332
    %v2687 = vadd.f32 %v2623, %v2337
    %v2688 = vadd.f32 %v2624, %v2342
    %v2689 = vadd.f32 %v2625, %v2347
    %v2690 = vadd.f32 %v2626, %v2352
    %v2691 = vadd.f32 %v2627, %v2357
    %v2692 = vadd.f32 %v2628, %v2362
    %v2693 = vadd.f32 %v2629, %v2367
    %v2694 = vadd.f32 %v2630, %v2372
    %v2695 = vadd.f32 %v2631, %v2377
    %v2696 = vadd.f32 %v2632, %v2382
    %v2697 = vadd.f32 %v2633, %v2387
    %v2698 = vadd.f32 %v2634, %v2392
    %v2699 = vadd.f32 %v2635, %v2397
    %v2700 = vadd.f32 %v2636, %v2402
    %v2701 = vadd.f32 %v2637, %v2407
    %v2702 = vadd.f32 %v2638, %v2412
    %v2703 = vadd.f32 %v2639, %v2417
    %v2704 = vadd.f32 %v2640, %v2422
    %v2705 = vadd.f32 %v2641, %v2427
    %v2706 = vadd.f32 %v2642, %v2432
    %v2707 = vadd.f32 %v2643, %v2437
    %v2708 = vadd.f32 %v2644, %v2442
    %v2709 = vadd.f32 %v2645, %v2447
    %v2710 = vadd.f32 %v2646, %v2452
    %v2711 = vadd.f32 %v2647, %v2457
    %v2712 = vadd.f32 %v2648, %v2462
    %v2713 = vadd.f32 %v2649, %v2467
    %v2714 = vadd.f32 %v2650, %v2472
    %v2715 = vadd.f32 %v2651, %v2477
    %v2716 = vadd.f32 %v2652, %v2482
    %v2717 = vadd.f32 %v2653, %v2487
    %v2718 = vadd.f32 %v2654, %v2492
    %v2719 = vadd.f32 %v2655, %v2497
    %v2720 = vadd.f32 %v2656, %v2502
    %v2721 = vadd.f32 %v2657, %v2507
    %v2722 = vadd.f32 %v2658, %v2512
    %v2723 = vadd.f32 %v2659, %v2517
    %v2724 = vadd.f32 %v2660, %v2522
    %v2725 = vadd.f32 %v2661, %v2527
    %v2726 = vadd.f32 %v2662, %v2532
    %v2727 = vadd.f32 %v2663, %v2537
    %v2728 = vadd.f32 %v2664, %v2542
    %v2729 = vadd.f32 %v2665, %v2547
    %v2730 = vadd.f32 %v2666, %v2552
    %v2731 = vadd.f32 %v2667, %v2557
    %v2732 = vadd.f32 %v2668, %v2562
    %v2733 = vadd.f32 %v2669, %v2567
    %v2734 = vadd.f32 %v2670, %v2572
    %v2735 = vadd.f32 %v2671, %v2577
    %v2736 = vadd.f32 %v2672, %v2582
    %v2737 = vadd.f32 %v2673, %v2587
    %v2738 = vadd.f32 %v2674, %v2592
    %v2739 = vadd.f32 %v2675, %v2597
    %v2740 = vadd.f32 %v2676, %v2602
    %v2741 = vadd.f32 %v2677, %v2607
    %v2742 = vadd.f32 %v2678, %v2612
    %v2743 = vmax.f32 %v2679, 0.0
    %v2744 = vmax.f32 %v2680, 0.0
    %v2745 = vmax.f32 %v2681, 0.0
    %v2746 = vmax.f32 %v2682, 0.0
    %v2747 = vmax.f32 %v2683, 0.0
    %v2748 = vmax.f32 %v2684, 0.0
    %v2749 = vmax.f32 %v2685, 0.0
    %v2750 = vmax.f32 %v2686, 0.0
    %v2751 = vmax.f32 %v2687, 0.0
    %v2752 = vmax.f32 %v2688, 0.0
    %v2753 = vmax.f32 %v2689, 0.0
    %v2754 = vmax.f32 %v2690, 0.0
    %v2755 = vmax.f32 %v2691, 0.0
    %v2756 = vmax.f32 %v2692, 0.0
    %v2757 = vmax.f32 %v2693, 0.0
    %v2758 = vmax.f32 %v2694, 0.0
    %v2759 = vmax.f32 %v2695, 0.0
    %v2760 = vmax.f32 %v2696, 0.0
    %v2761 = vmax.f32 %v2697, 0.0
    %v2762 = vmax.f32 %v2698, 0.0
    %v2763 = vmax.f32 %v2699, 0.0
    %v2764 = vmax.f32 %v2700, 0.0
    %v2765 = vmax.f32 %v2701, 0.0
    %v2766 = vmax.f32 %v2702, 0.0
    %v2767 = vmax.f32 %v2703, 0.0
    %v2768 = vmax.f32 %v2704, 0.0
    %v2769 = vmax.f32 %v2705, 0.0
    %v2770 = vmax.f32 %v2706, 0.0
    %v2771 = vmax.f32 %v2707, 0.0
    %v2772 = vmax.f32 %v2708, 0.0
    %v2773 = vmax.f32 %v2709, 0.0
    %v2774 = vmax.f32 %v2710, 0.0
    %v2775 = vmax.f32 %v2711, 0.0
    %v2776 = vmax.f32 %v2712, 0.0
    %v2777 = vmax.f32 %v2713, 0.0
    %v2778 = vmax.f32 %v2714, 0.0
    %v2779 = vmax.f32 %v2715, 0.0
    %v2780 = vmax.f32 %v2716, 0.0
    %v2781 = vmax.f32 %v2717, 0.0
    %v2782 = vmax.f32 %v2718, 0.0
    %v2783 = vmax.f32 %v2719, 0.0
    %v2784 = vmax.f32 %v2720, 0.0
    %v2785 = vmax.f32 %v2721, 0.0
    %v2786 = vmax.f32 %v2722, 0.0
    %v2787 = vmax.f32 %v2723, 0.0
    %v2788 = vmax.f32 %v2724, 0.0
    %v2789 = vmax.f32 %v2725, 0.0
    %v2790 = vmax.f32 %v2726, 0.0
    %v2791 = vmax.f32 %v2727, 0.0
    %v2792 = vmax.f32 %v2728, 0.0
    %v2793 = vmax.f32 %v2729, 0.0
    %v2794 = vmax.f32 %v2730, 0.0
    %v2795 = vmax.f32 %v2731, 0.0
    %v2796 = vmax.f32 %v2732, 0.0
    %v2797 = vmax.f32 %v2733, 0.0
    %v2798 = vmax.f32 %v2734, 0.0
    %v2799 = vmax.f32 %v2735, 0.0
    %v2800 = vmax.f32 %v2736, 0.0
    %v2801 = vmax.f32 %v2737, 0.0
    %v2802 = vmax.f32 %v2738, 0.0
    %v2803 = vmax.f32 %v2739, 0.0
    %v2804 = vmax.f32 %v2740, 0.0
    %v2805 = vmax.f32 %v2741, 0.0
    %v2806 = vmax.f32 %v2742, 0.0
    %v2807 = vld [vmem:[#allocation2] sm:$0xff]
    %v2808 = vld [vmem:[#allocation2 + $0x8] sm:$0xff]
    %v2809 = vld [vmem:[#allocation2 + $0x10] sm:$0xff]
    %v2810 = vld [vmem:[#allocation2 + $0x18] sm:$0xff]
    %v2811 = vld [vmem:[#allocation2 + $0x20] sm:$0xff]
    %v2812 = vld [vmem:[#allocation2 + $0x28] sm:$0xff]
    %v2813 = vld [vmem:[#allocation2 + $0x30] sm:$0xff]
    %v2814 = vld [vmem:[#allocation2 + $0x38] sm:$0xff]
    %v2815 = vld [vmem:[#allocation2 + $0x40] sm:$0xff]
    %v2816 = vld [vmem:[#allocation2 + $0x48] sm:$0xff]
    %v2817 = vld [vmem:[#allocation2 + $0x50] sm:$0xff]
    %v2818 = vld [vmem:[#allocation2 + $0x58] sm:$0xff]
    %v2819 = vld [vmem:[#allocation2 + $0x60] sm:$0xff]
    %v2820 = vld [vmem:[#allocation2 + $0x68] sm:$0xff]
    %v2821 = vld [vmem:[#allocation2 + $0x70] sm:$0xff]
    %v2822 = vld [vmem:[#allocation2 + $0x78] sm:$0xff]
    %v2823 = vld [vmem:[#allocation2 + $0x80] sm:$0xff]
    %v2824 = vld [vmem:[#allocation2 + $0x88] sm:$0xff]
    %v2825 = vld [vmem:[#allocation2 + $0x90] sm:$0xff]
    %v2826 = vld [vmem:[#allocation2 + $0x98] sm:$0xff]
    %v2827 = vld [vmem:[#allocation2 + $0xa0] sm:$0xff]
    %v2828 = vld [vmem:[#allocation2 + $0xa8] sm:$0xff]
    %v2829 = vld [vmem:[#allocation2 + $0xb0] sm:$0xff]
    %v2830 = vld [vmem:[#allocation2 + $0xb8] sm:$0xff]
    %v2831 = vld [vmem:[#allocation2 + $0xc0] sm:$0xff]
    %v2832 = vld [vmem:[#allocation2 + $0xc8] sm:$0xff]
    %v2833 = vld [vmem:[#allocation2 + $0xd0] sm:$0xff]
    %v2834 = vld [vmem:[#allocation2 + $0xd8] sm:$0xff]
    %v2835 = vld [vmem:[#allocation2 + $0xe0] sm:$0xff]
    %v2836 = vld [vmem:[#allocation2 + $0xe8] sm:$0xff]
    %v2837 = vld [vmem:[#allocation2 + $0xf0] sm:$0xff]
    %v2838 = vld [vmem:[#allocation2 + $0xf8] sm:$0xff]
    %v2839 = vld [vmem:[#allocation2 + $0x100] sm:$0xff]
    %v2840 = vld [vmem:[#allocation2 + $0x108] sm:$0xff]
    %v2841 = vld [vmem:[#allocation2 + $0x110] sm:$0xff]
    %v2842 = vld [vmem:[#allocation2 + $0x118] sm:$0xff]
    %v2843 = vld [vmem:[#allocation2 + $0x120] sm:$0xff]
    %v2844 = vld [vmem:[#allocation2 + $0x128] sm:$0xff]
    %v2845 = vld [vmem:[#allocation2 + $0x130] sm:$0xff]
    %v2846 = vld [vmem:[#allocation2 + $0x138] sm:$0xff]
    %v2847 = vld [vmem:[#allocation2 + $0x140] sm:$0xff]
    %v2848 = vld [vmem:[#allocation2 + $0x148] sm:$0xff]
    %v2849 = vld [vmem:[#allocation2 + $0x150] sm:$0xff]
    %v2850 = vld [vmem:[#allocation2 + $0x158] sm:$0xff]
    %v2851 = vld [vmem:[#allocation2 + $0x160] sm:$0xff]
    %v2852 = vld [vmem:[#allocation2 + $0x168] sm:$0xff]
    %v2853 = vld [vmem:[#allocation2 + $0x170] sm:$0xff]
    %v2854 = vld [vmem:[#allocation2 + $0x178] sm:$0xff]
    %v2855 = vld [vmem:[#allocation2 + $0x180] sm:$0xff]
    %v2856 = vld [vmem:[#allocation2 + $0x188] sm:$0xff]
    %v2857 = vld [vmem:[#allocation2 + $0x190] sm:$0xff]
    %v2858 = vld [vmem:[#allocation2 + $0x198] sm:$0xff]
    %v2859 = vld [vmem:[#allocation2 + $0x1a0] sm:$0xff]
    %v2860 = vld [vmem:[#allocation2 + $0x1a8] sm:$0xff]
    %v2861 = vld [vmem:[#allocation2 + $0x1b0] sm:$0xff]
    %v2862 = vld [vmem:[#allocation2 + $0x1b8] sm:$0xff]
    %v2863 = vld [vmem:[#allocation2 + $0x1c0] sm:$0xff]
    %v2864 = vld [vmem:[#allocation2 + $0x1c8] sm:$0xff]
    %v2865 = vld [vmem:[#allocation2 + $0x1d0] sm:$0xff]
    %v2866 = vld [vmem:[#allocation2 + $0x1d8] sm:$0xff]
    %v2867 = vld [vmem:[#allocation2 + $0x1e0] sm:$0xff]
    %v2868 = vld [vmem:[#allocation2 + $0x1e8] sm:$0xff]
    %v2869 = vld [vmem:[#allocation2 + $0x1f0] sm:$0xff]
    %v2870 = vld [vmem:[#allocation2 + $0x1f8] sm:$0xff]
    %v2871 = vld [vmem:[#allocation2 + $0x200] sm:$0xff]
    %v2872 = vld [vmem:[#allocation2 + $0x208] sm:$0xff]
    %v2873 = vld [vmem:[#allocation2 + $0x210] sm:$0xff]
    %v2874 = vld [vmem:[#allocation2 + $0x218] sm:$0xff]
    %v2875 = vld [vmem:[#allocation2 + $0x220] sm:$0xff]
    %v2876 = vld [vmem:[#allocation2 + $0x228] sm:$0xff]
    %v2877 = vld [vmem:[#allocation2 + $0x230] sm:$0xff]
    %v2878 = vld [vmem:[#allocation2 + $0x238] sm:$0xff]
    %v2879 = vld [vmem:[#allocation2 + $0x240] sm:$0xff]
    %v2880 = vld [vmem:[#allocation2 + $0x248] sm:$0xff]
    %v2881 = vld [vmem:[#allocation2 + $0x250] sm:$0xff]
    %v2882 = vld [vmem:[#allocation2 + $0x258] sm:$0xff]
    %v2883 = vld [vmem:[#allocation2 + $0x260] sm:$0xff]
    %v2884 = vld [vmem:[#allocation2 + $0x268] sm:$0xff]
    %v2885 = vld [vmem:[#allocation2 + $0x270] sm:$0xff]
    %v2886 = vld [vmem:[#allocation2 + $0x278] sm:$0xff]
    %v2887 = vld [vmem:[#allocation2 + $0x280] sm:$0xff]
    %v2888 = vld [vmem:[#allocation2 + $0x288] sm:$0xff]
    %v2889 = vld [vmem:[#allocation2 + $0x290] sm:$0xff]
    %v2890 = vld [vmem:[#allocation2 + $0x298] sm:$0xff]
    %v2891 = vld [vmem:[#allocation2 + $0x2a0] sm:$0xff]
    %v2892 = vld [vmem:[#allocation2 + $0x2a8] sm:$0xff]
    %v2893 = vld [vmem:[#allocation2 + $0x2b0] sm:$0xff]
    %v2894 = vld [vmem:[#allocation2 + $0x2b8] sm:$0xff]
    %v2895 = vld [vmem:[#allocation2 + $0x2c0] sm:$0xff]
    %v2896 = vld [vmem:[#allocation2 + $0x2c8] sm:$0xff]
    %v2897 = vld [vmem:[#allocation2 + $0x2d0] sm:$0xff]
    %v2898 = vld [vmem:[#allocation2 + $0x2d8] sm:$0xff]
    %v2899 = vld [vmem:[#allocation2 + $0x2e0] sm:$0xff]
    %v2900 = vld [vmem:[#allocation2 + $0x2e8] sm:$0xff]
    %v2901 = vld [vmem:[#allocation2 + $0x2f0] sm:$0xff]
    %v2902 = vld [vmem:[#allocation2 + $0x2f8] sm:$0xff]
    %v2903 = vld [vmem:[#allocation2 + $0x300] sm:$0xff]
    %v2904 = vld [vmem:[#allocation2 + $0x308] sm:$0xff]
    %v2905 = vld [vmem:[#allocation2 + $0x310] sm:$0xff]
    %v2906 = vld [vmem:[#allocation2 + $0x318] sm:$0xff]
    %v2907 = vld [vmem:[#allocation2 + $0x320] sm:$0xff]
    %v2908 = vld [vmem:[#allocation2 + $0x328] sm:$0xff]
    %v2909 = vld [vmem:[#allocation2 + $0x330] sm:$0xff]
    %v2910 = vld [vmem:[#allocation2 + $0x338] sm:$0xff]
    %v2911 = vld [vmem:[#allocation2 + $0x340] sm:$0xff]
    %v2912 = vld [vmem:[#allocation2 + $0x348] sm:$0xff]
    %v2913 = vld [vmem:[#allocation2 + $0x350] sm:$0xff]
    %v2914 = vld [vmem:[#allocation2 + $0x358] sm:$0xff]
    %v2915 = vld [vmem:[#allocation2 + $0x360] sm:$0xff]
    %v2916 = vld [vmem:[#allocation2 + $0x368] sm:$0xff]
    %v2917 = vld [vmem:[#allocation2 + $0x370] sm:$0xff]
    %v2918 = vld [vmem:[#allocation2 + $0x378] sm:$0xff]
    %v2919 = vld [vmem:[#allocation2 + $0x380] sm:$0xff]
    %v2920 = vld [vmem:[#allocation2 + $0x388] sm:$0xff]
    %v2921 = vld [vmem:[#allocation2 + $0x390] sm:$0xff]
    %v2922 = vld [vmem:[#allocation2 + $0x398] sm:$0xff]
    %v2923 = vld [vmem:[#allocation2 + $0x3a0] sm:$0xff]
    %v2924 = vld [vmem:[#allocation2 + $0x3a8] sm:$0xff]
    %v2925 = vld [vmem:[#allocation2 + $0x3b0] sm:$0xff]
    %v2926 = vld [vmem:[#allocation2 + $0x3b8] sm:$0xff]
    %v2927 = vld [vmem:[#allocation2 + $0x3c0] sm:$0xff]
    %v2928 = vld [vmem:[#allocation2 + $0x3c8] sm:$0xff]
    %v2929 = vld [vmem:[#allocation2 + $0x3d0] sm:$0xff]
    %v2930 = vld [vmem:[#allocation2 + $0x3d8] sm:$0xff]
    %v2931 = vld [vmem:[#allocation2 + $0x3e0] sm:$0xff]
    %v2932 = vld [vmem:[#allocation2 + $0x3e8] sm:$0xff]
    %v2933 = vld [vmem:[#allocation2 + $0x3f0] sm:$0xff]
    %v2934 = vld [vmem:[#allocation2 + $0x3f8] sm:$0xff]
    %v2935 = vld [vmem:[#allocation2 + $0x400] sm:$0xff]
    %v2936 = vld [vmem:[#allocation2 + $0x408] sm:$0xff]
    %v2937 = vld [vmem:[#allocation2 + $0x410] sm:$0xff]
    %v2938 = vld [vmem:[#allocation2 + $0x418] sm:$0xff]
    %v2939 = vld [vmem:[#allocation2 + $0x420] sm:$0xff]
    %v2940 = vld [vmem:[#allocation2 + $0x428] sm:$0xff]
    %v2941 = vld [vmem:[#allocation2 + $0x430] sm:$0xff]
    %v2942 = vld [vmem:[#allocation2 + $0x438] sm:$0xff]
    %v2943 = vld [vmem:[#allocation2 + $0x440] sm:$0xff]
    %v2944 = vld [vmem:[#allocation2 + $0x448] sm:$0xff]
    %v2945 = vld [vmem:[#allocation2 + $0x450] sm:$0xff]
    %v2946 = vld [vmem:[#allocation2 + $0x458] sm:$0xff]
    %v2947 = vld [vmem:[#allocation2 + $0x460] sm:$0xff]
    %v2948 = vld [vmem:[#allocation2 + $0x468] sm:$0xff]
    %v2949 = vld [vmem:[#allocation2 + $0x470] sm:$0xff]
    %v2950 = vld [vmem:[#allocation2 + $0x478] sm:$0xff]
    %v2951 = vld [vmem:[#allocation2 + $0x480] sm:$0xff]
    %v2952 = vld [vmem:[#allocation2 + $0x488] sm:$0xff]
    %v2953 = vld [vmem:[#allocation2 + $0x490] sm:$0xff]
    %v2954 = vld [vmem:[#allocation2 + $0x498] sm:$0xff]
    %v2955 = vld [vmem:[#allocation2 + $0x4a0] sm:$0xff]
    %v2956 = vld [vmem:[#allocation2 + $0x4a8] sm:$0xff]
    %v2957 = vld [vmem:[#allocation2 + $0x4b0] sm:$0xff]
    %v2958 = vld [vmem:[#allocation2 + $0x4b8] sm:$0xff]
    %v2959 = vld [vmem:[#allocation2 + $0x4c0] sm:$0xff]
    %v2960 = vld [vmem:[#allocation2 + $0x4c8] sm:$0xff]
    %v2961 = vld [vmem:[#allocation2 + $0x4d0] sm:$0xff]
    %v2962 = vld [vmem:[#allocation2 + $0x4d8] sm:$0xff]
    %v2963 = vld [vmem:[#allocation2 + $0x4e0] sm:$0xff]
    %v2964 = vld [vmem:[#allocation2 + $0x4e8] sm:$0xff]
    %v2965 = vld [vmem:[#allocation2 + $0x4f0] sm:$0xff]
    %v2966 = vld [vmem:[#allocation2 + $0x4f8] sm:$0xff]
    %v2967 = vld [vmem:[#allocation2 + $0x500] sm:$0xff]
    %v2968 = vld [vmem:[#allocation2 + $0x508] sm:$0xff]
    %v2969 = vld [vmem:[#allocation2 + $0x510] sm:$0xff]
    %v2970 = vld [vmem:[#allocation2 + $0x518] sm:$0xff]
    %v2971 = vld [vmem:[#allocation2 + $0x520] sm:$0xff]
    %v2972 = vld [vmem:[#allocation2 + $0x528] sm:$0xff]
    %v2973 = vld [vmem:[#allocation2 + $0x530] sm:$0xff]
    %v2974 = vld [vmem:[#allocation2 + $0x538] sm:$0xff]
    %v2975 = vld [vmem:[#allocation2 + $0x540] sm:$0xff]
    %v2976 = vld [vmem:[#allocation2 + $0x548] sm:$0xff]
    %v2977 = vld [vmem:[#allocation2 + $0x550] sm:$0xff]
    %v2978 = vld [vmem:[#allocation2 + $0x558] sm:$0xff]
    %v2979 = vld [vmem:[#allocation2 + $0x560] sm:$0xff]
    %v2980 = vld [vmem:[#allocation2 + $0x568] sm:$0xff]
    %v2981 = vld [vmem:[#allocation2 + $0x570] sm:$0xff]
    %v2982 = vld [vmem:[#allocation2 + $0x578] sm:$0xff]
    %v2983 = vld [vmem:[#allocation2 + $0x580] sm:$0xff]
    %v2984 = vld [vmem:[#allocation2 + $0x588] sm:$0xff]
    %v2985 = vld [vmem:[#allocation2 + $0x590] sm:$0xff]
    %v2986 = vld [vmem:[#allocation2 + $0x598] sm:$0xff]
    %v2987 = vld [vmem:[#allocation2 + $0x5a0] sm:$0xff]
    %v2988 = vld [vmem:[#allocation2 + $0x5a8] sm:$0xff]
    %v2989 = vld [vmem:[#allocation2 + $0x5b0] sm:$0xff]
    %v2990 = vld [vmem:[#allocation2 + $0x5b8] sm:$0xff]
    %v2991 = vld [vmem:[#allocation2 + $0x5c0] sm:$0xff]
    %v2992 = vld [vmem:[#allocation2 + $0x5c8] sm:$0xff]
    %v2993 = vld [vmem:[#allocation2 + $0x5d0] sm:$0xff]
    %v2994 = vld [vmem:[#allocation2 + $0x5d8] sm:$0xff]
    %v2995 = vld [vmem:[#allocation2 + $0x5e0] sm:$0xff]
    %v2996 = vld [vmem:[#allocation2 + $0x5e8] sm:$0xff]
    %v2997 = vld [vmem:[#allocation2 + $0x5f0] sm:$0xff]
    %v2998 = vld [vmem:[#allocation2 + $0x5f8] sm:$0xff]
    %v2999 = vld [vmem:[#allocation2 + $0x600] sm:$0xff]
    %v3000 = vld [vmem:[#allocation2 + $0x608] sm:$0xff]
    %v3001 = vld [vmem:[#allocation2 + $0x610] sm:$0xff]
    %v3002 = vld [vmem:[#allocation2 + $0x618] sm:$0xff]
    %v3003 = vld [vmem:[#allocation2 + $0x620] sm:$0xff]
    %v3004 = vld [vmem:[#allocation2 + $0x628] sm:$0xff]
    %v3005 = vld [vmem:[#allocation2 + $0x630] sm:$0xff]
    %v3006 = vld [vmem:[#allocation2 + $0x638] sm:$0xff]
    %v3007 = vld [vmem:[#allocation2 + $0x640] sm:$0xff]
    %v3008 = vld [vmem:[#allocation2 + $0x648] sm:$0xff]
    %v3009 = vld [vmem:[#allocation2 + $0x650] sm:$0xff]
    %v3010 = vld [vmem:[#allocation2 + $0x658] sm:$0xff]
    %v3011 = vld [vmem:[#allocation2 + $0x660] sm:$0xff]
    %v3012 = vld [vmem:[#allocation2 + $0x668] sm:$0xff]
    %v3013 = vld [vmem:[#allocation2 + $0x670] sm:$0xff]
    %v3014 = vld [vmem:[#allocation2 + $0x678] sm:$0xff]
    %v3015 = vld [vmem:[#allocation2 + $0x680] sm:$0xff]
    %v3016 = vld [vmem:[#allocation2 + $0x688] sm:$0xff]
    %v3017 = vld [vmem:[#allocation2 + $0x690] sm:$0xff]
    %v3018 = vld [vmem:[#allocation2 + $0x698] sm:$0xff]
    %v3019 = vld [vmem:[#allocation2 + $0x6a0] sm:$0xff]
    %v3020 = vld [vmem:[#allocation2 + $0x6a8] sm:$0xff]
    %v3021 = vld [vmem:[#allocation2 + $0x6b0] sm:$0xff]
    %v3022 = vld [vmem:[#allocation2 + $0x6b8] sm:$0xff]
    %v3023 = vld [vmem:[#allocation2 + $0x6c0] sm:$0xff]
    %v3024 = vld [vmem:[#allocation2 + $0x6c8] sm:$0xff]
    %v3025 = vld [vmem:[#allocation2 + $0x6d0] sm:$0xff]
    %v3026 = vld [vmem:[#allocation2 + $0x6d8] sm:$0xff]
    %v3027 = vld [vmem:[#allocation2 + $0x6e0] sm:$0xff]
    %v3028 = vld [vmem:[#allocation2 + $0x6e8] sm:$0xff]
    %v3029 = vld [vmem:[#allocation2 + $0x6f0] sm:$0xff]
    %v3030 = vld [vmem:[#allocation2 + $0x6f8] sm:$0xff]
    %v3031 = vld [vmem:[#allocation2 + $0x700] sm:$0xff]
    %v3032 = vld [vmem:[#allocation2 + $0x708] sm:$0xff]
    %v3033 = vld [vmem:[#allocation2 + $0x710] sm:$0xff]
    %v3034 = vld [vmem:[#allocation2 + $0x718] sm:$0xff]
    %v3035 = vld [vmem:[#allocation2 + $0x720] sm:$0xff]
    %v3036 = vld [vmem:[#allocation2 + $0x728] sm:$0xff]
    %v3037 = vld [vmem:[#allocation2 + $0x730] sm:$0xff]
    %v3038 = vld [vmem:[#allocation2 + $0x738] sm:$0xff]
    %v3039 = vld [vmem:[#allocation2 + $0x740] sm:$0xff]
    %v3040 = vld [vmem:[#allocation2 + $0x748] sm:$0xff]
    %v3041 = vld [vmem:[#allocation2 + $0x750] sm:$0xff]
    %v3042 = vld [vmem:[#allocation2 + $0x758] sm:$0xff]
    %v3043 = vld [vmem:[#allocation2 + $0x760] sm:$0xff]
    %v3044 = vld [vmem:[#allocation2 + $0x768] sm:$0xff]
    %v3045 = vld [vmem:[#allocation2 + $0x770] sm:$0xff]
    %v3046 = vld [vmem:[#allocation2 + $0x778] sm:$0xff]
    %v3047 = vld [vmem:[#allocation2 + $0x780] sm:$0xff]
    %v3048 = vld [vmem:[#allocation2 + $0x788] sm:$0xff]
    %v3049 = vld [vmem:[#allocation2 + $0x790] sm:$0xff]
    %v3050 = vld [vmem:[#allocation2 + $0x798] sm:$0xff]
    %v3051 = vld [vmem:[#allocation2 + $0x7a0] sm:$0xff]
    %v3052 = vld [vmem:[#allocation2 + $0x7a8] sm:$0xff]
    %v3053 = vld [vmem:[#allocation2 + $0x7b0] sm:$0xff]
    %v3054 = vld [vmem:[#allocation2 + $0x7b8] sm:$0xff]
    %v3055 = vld [vmem:[#allocation2 + $0x7c0] sm:$0xff]
    %v3056 = vld [vmem:[#allocation2 + $0x7c8] sm:$0xff]
    %v3057 = vld [vmem:[#allocation2 + $0x7d0] sm:$0xff]
    %v3058 = vld [vmem:[#allocation2 + $0x7d8] sm:$0xff]
    %v3059 = vld [vmem:[#allocation2 + $0x7e0] sm:$0xff]
    %v3060 = vld [vmem:[#allocation2 + $0x7e8] sm:$0xff]
    %v3061 = vld [vmem:[#allocation2 + $0x7f0] sm:$0xff]
    %v3062 = vld [vmem:[#allocation2 + $0x7f8] sm:$0xff]
    %3063 = vmatprep.subr.mxu0 0.0
    %3064 = vmatpush1.msra.mxu0 %v2743
    %3065 = vmatprep.subr.mxu0 0.0
    %3066 = vmatpush1.msra.mxu0 %v2744
    %3067 = vmatprep.subr.mxu0 0.0
    %3068 = vmatpush1.msra.mxu0 %v2745
    %3069 = vmatprep.subr.mxu0 0.0
    %3070 = vmatpush1.msra.mxu0 %v2746
    %3071 = vmatprep.subr.mxu0 0.0
    %3072 = vmatpush1.msra.mxu0 %v2747
    %3073 = vmatprep.subr.mxu0 0.0
    %3074 = vmatpush1.msra.mxu0 %v2748
    %3075 = vmatprep.subr.mxu0 0.0
    %3076 = vmatpush1.msra.mxu0 %v2749
    %3077 = vmatprep.subr.mxu0 0.0
    %3078 = vmatpush1.msra.mxu0 %v2750
    %3079 = vmatprep.subr.mxu0 0.0
    %3080 = vmatpush1.msra.mxu0 %v2751
    %3081 = vmatprep.subr.mxu0 0.0
    %3082 = vmatpush1.msra.mxu0 %v2752
    %3083 = vmatprep.subr.mxu0 0.0
    %3084 = vmatpush1.msra.mxu0 %v2753
    %3085 = vmatprep.subr.mxu0 0.0
    %3086 = vmatpush1.msra.mxu0 %v2754
    %3087 = vmatprep.subr.mxu0 0.0
    %3088 = vmatpush1.msra.mxu0 %v2755
    %3089 = vmatprep.subr.mxu0 0.0
    %3090 = vmatpush1.msra.mxu0 %v2756
    %3091 = vmatprep.subr.mxu0 0.0
    %3092 = vmatpush1.msra.mxu0 %v2757
    %3093 = vmatprep.subr.mxu0 0.0
    %3094 = vmatpush1.msra.mxu0 %v2758
    %3095 = vmatprep.subr.mxu0 0.0
    %3096 = vmatpush1.msra.mxu0 %v2759
    %3097 = vmatprep.subr.mxu0 0.0
    %3098 = vmatpush1.msra.mxu0 %v2760
    %3099 = vmatprep.subr.mxu0 0.0
    %3100 = vmatpush1.msra.mxu0 %v2761
    %3101 = vmatprep.subr.mxu0 0.0
    %3102 = vmatpush1.msra.mxu0 %v2762
    %3103 = vmatprep.subr.mxu0 0.0
    %3104 = vmatpush1.msra.mxu0 %v2763
    %3105 = vmatprep.subr.mxu0 0.0
    %3106 = vmatpush1.msra.mxu0 %v2764
    %3107 = vmatprep.subr.mxu0 0.0
    %3108 = vmatpush1.msra.mxu0 %v2765
    %3109 = vmatprep.subr.mxu0 0.0
    %3110 = vmatpush1.msra.mxu0 %v2766
    %3111 = vmatprep.subr.mxu0 0.0
    %3112 = vmatpush1.msra.mxu0 %v2767
    %3113 = vmatprep.subr.mxu0 0.0
    %3114 = vmatpush1.msra.mxu0 %v2768
    %3115 = vmatprep.subr.mxu0 0.0
    %3116 = vmatpush1.msra.mxu0 %v2769
    %3117 = vmatprep.subr.mxu0 0.0
    %3118 = vmatpush1.msra.mxu0 %v2770
    %3119 = vmatprep.subr.mxu0 0.0
    %3120 = vmatpush1.msra.mxu0 %v2771
    %3121 = vmatprep.subr.mxu0 0.0
    %3122 = vmatpush1.msra.mxu0 %v2772
    %3123 = vmatprep.subr.mxu0 0.0
    %3124 = vmatpush1.msra.mxu0 %v2773
    %3125 = vmatprep.subr.mxu0 0.0
    %3126 = vmatpush1.msra.mxu0 %v2774
    %3127 = vmatprep.mubr.f32.mxu0 %v2808
    %3128 = vmatmul.mubr.f32.gmra.mrb[0].mxu0 %v2807
    %v3129 = vpop.f32.mrb[0].mxu0
    %v3130 = vadd.f32 0.0, %v3129
    %v3131 = vpop.f32.mrb[0].mxu0
    %3132 = vmatprep.mubr.f32.mxu0 %v2812
    %3133 = vmatmul.mubr.f32.gmra.mrb[0].mxu0 %v2811
    %v3134 = vpop.f32.mrb[0].mxu0
    %v3135 = vadd.f32 0.0, %v3134
    %v3136 = vpop.f32.mrb[0].mxu0
    %3137 = vmatprep.mubr.f32.mxu0 %v2816
    %3138 = vmatmul.mubr.f32.gmra.mrb[0].mxu0 %v2815
    %v3139 = vpop.f32.mrb[0].mxu0
    %v3140 = vadd.f32 0.0, %v3139
    %v3141 = vpop.f32.mrb[0].mxu0
    %3142 = vmatprep.mubr.f32.mxu0 %v2820
    %3143 = vmatmul.mubr.f32.gmra.mrb[0].mxu0 %v2819
    %v3144 = vpop.f32.mrb[0].mxu0
    %v3145 = vadd.f32 0.0, %v3144
    %v3146 = vpop.f32.mrb[0].mxu0
    %3147 = vmatprep.mubr.f32.mxu0 %v2824
    %3148 = vmatmul.mubr.f32.gmra.mrb[0].mxu0 %v2823
    %v3149 = vpop.f32.mrb[0].mxu0
    %v3150 = vadd.f32 0.0, %v3149
    %v3151 = vpop.f32.mrb[0].mxu0
    %3152 = vmatprep.mubr.f32.mxu0 %v2828
    %3153 = vmatmul.mubr.f32.gmra.mrb[0].mxu0 %v2827
    %v3154 = vpop.f32.mrb[0].mxu0
    %v3155 = vadd.f32 0.0, %v3154
    %v3156 = vpop.f32.mrb[0].mxu0
    %3157 = vmatprep.mubr.f32.mxu0 %v2832
    %3158 = vmatmul.mubr.f32.gmra.mrb[0].mxu0 %v2831
    %v3159 = vpop.f32.mrb[0].mxu0
    %v3160 = vadd.f32 0.0, %v3159
    %v3161 = vpop.f32.mrb[0].mxu0
    %3162 = vmatprep.mubr.f32.mxu0 %v2836
    %3163 = vmatmul.mubr.f32.gmra.mrb[0].mxu0 %v2835
    %v3164 = vpop.f32.mrb[0].mxu0
    %v3165 = vadd.f32 0.0, %v3164
    %v3166 = vpop.f32.mrb[0].mxu0
    %3167 = vmatprep.mubr.f32.mxu0 %v2840
    %3168 = vmatmul.mubr.f32.gmra.mrb[0].mxu0 %v2839
    %v3169 = vpop.f32.mrb[0].mxu0
    %v3170 = vadd.f32 0.0, %v3169
    %v3171 = vpop.f32.mrb[0].mxu0
    %3172 = vmatprep.mubr.f32.mxu0 %v2844
    %3173 = vmatmul.mubr.f32.gmra.mrb[0].mxu0 %v2843
    %v3174 = vpop.f32.mrb[0].mxu0
    %v3175 = vadd.f32 0.0, %v3174
    %v3176 = vpop.f32.mrb[0].mxu0
    %3177 = vmatprep.mubr.f32.mxu0 %v2848
    %3178 = vmatmul.mubr.f32.gmra.mrb[0].mxu0 %v2847
    %v3179 = vpop.f32.mrb[0].mxu0
    %v3180 = vadd.f32 0.0, %v3179
    %v3181 = vpop.f32.mrb[0].mxu0
    %3182 = vmatprep.mubr.f32.mxu0 %v2852
    %3183 = vmatmul.mubr.f32.gmra.mrb[0].mxu0 %v2851
    %v3184 = vpop.f32.mrb[0].mxu0
    %v3185 = vadd.f32 0.0, %v3184
    %v3186 = vpop.f32.mrb[0].mxu0
    %3187 = vmatprep.mubr.f32.mxu0 %v2856
    %3188 = vmatmul.mubr.f32.gmra.mrb[0].mxu0 %v2855
    %v3189 = vpop.f32.mrb[0].mxu0
    %v3190 = vadd.f32 0.0, %v3189
    %v3191 = vpop.f32.mrb[0].mxu0
    %3192 = vmatprep.mubr.f32.mxu0 %v2860
    %3193 = vmatmul.mubr.f32.gmra.mrb[0].mxu0 %v2859
    %v3194 = vpop.f32.mrb[0].mxu0
    %v3195 = vadd.f32 0.0, %v3194
    %v3196 = vpop.f32.mrb[0].mxu0
    %3197 = vmatprep.mubr.f32.mxu0 %v2864
    %3198 = vmatmul.mubr.f32.gmra.mrb[0].mxu0 %v2863
    %v3199 = vpop.f32.mrb[0].mxu0
    %v3200 = vadd.f32 0.0, %v3199
    %v3201 = vpop.f32.mrb[0].mxu0
    %3202 = vmatprep.mubr.f32.mxu0 %v2868
    %3203 = vmatmul.mubr.f32.gmra.mrb[0].mxu0 %v2867
    %v3204 = vpop.f32.mrb[0].mxu0
    %v3205 = vadd.f32 0.0, %v3204
    %v3206 = vpop.f32.mrb[0].mxu0
    %3207 = vmatprep.mubr.f32.mxu0 %v2872
    %3208 = vmatmul.mubr.f32.gmra.mrb[0].mxu0 %v2871
    %v3209 = vpop.f32.mrb[0].mxu0
    %v3210 = vadd.f32 0.0, %v3209
    %v3211 = vpop.f32.mrb[0].mxu0
    %3212 = vmatprep.mubr.f32.mxu0 %v2876
    %3213 = vmatmul.mubr.f32.gmra.mrb[0].mxu0 %v2875
    %v3214 = vpop.f32.mrb[0].mxu0
    %v3215 = vadd.f32 0.0, %v3214
    %v3216 = vpop.f32.mrb[0].mxu0
    %3217 = vmatprep.mubr.f32.mxu0 %v2880
    %3218 = vmatmul.mubr.f32.gmra.mrb[0].mxu0 %v2879
    %v3219 = vpop.f32.mrb[0].mxu0
    %v3220 = vadd.f32 0.0, %v3219
    %v3221 = vpop.f32.mrb[0].mxu0
    %3222 = vmatprep.mubr.f32.mxu0 %v2884
    %3223 = vmatmul.mubr.f32.gmra.mrb[0].mxu0 %v2883
    %v3224 = vpop.f32.mrb[0].mxu0
    %v3225 = vadd.f32 0.0, %v3224
    %v3226 = vpop.f32.mrb[0].mxu0
    %3227 = vmatprep.mubr.f32.mxu0 %v2888
    %3228 = vmatmul.mubr.f32.gmra.mrb[0].mxu0 %v2887
    %v3229 = vpop.f32.mrb[0].mxu0
    %v3230 = vadd.f32 0.0, %v3229
    %v3231 = vpop.f32.mrb[0].mxu0
    %3232 = vmatprep.mubr.f32.mxu0 %v2892
    %3233 = vmatmul.mubr.f32.gmra.mrb[0].mxu0 %v2891
    %v3234 = vpop.f32.mrb[0].mxu0
    %v3235 = vadd.f32 0.0, %v3234
    %v3236 = vpop.f32.mrb[0].mxu0
    %3237 = vmatprep.mubr.f32.mxu0 %v2896
    %3238 = vmatmul.mubr.f32.gmra.mrb[0].mxu0 %v2895
    %v3239 = vpop.f32.mrb[0].mxu0
    %v3240 = vadd.f32 0.0, %v3239
    %v3241 = vpop.f32.mrb[0].mxu0
    %3242 = vmatprep.mubr.f32.mxu0 %v2900
    %3243 = vmatmul.mubr.f32.gmra.mrb[0].mxu0 %v2899
    %v3244 = vpop.f32.mrb[0].mxu0
    %v3245 = vadd.f32 0.0, %v3244
    %v3246 = vpop.f32.mrb[0].mxu0
    %3247 = vmatprep.mubr.f32.mxu0 %v2904
    %3248 = vmatmul.mubr.f32.gmra.mrb[0].mxu0 %v2903
    %v3249 = vpop.f32.mrb[0].mxu0
    %v3250 = vadd.f32 0.0, %v3249
    %v3251 = vpop.f32.mrb[0].mxu0
    %3252 = vmatprep.mubr.f32.mxu0 %v2908
    %3253 = vmatmul.mubr.f32.gmra.mrb[0].mxu0 %v2907
    %v3254 = vpop.f32.mrb[0].mxu0
    %v3255 = vadd.f32 0.0, %v3254
    %v3256 = vpop.f32.mrb[0].mxu0
    %3257 = vmatprep.mubr.f32.mxu0 %v2912
    %3258 = vmatmul.mubr.f32.gmra.mrb[0].mxu0 %v2911
    %v3259 = vpop.f32.mrb[0].mxu0
    %v3260 = vadd.f32 0.0, %v3259
    %v3261 = vpop.f32.mrb[0].mxu0
    %3262 = vmatprep.mubr.f32.mxu0 %v2916
    %3263 = vmatmul.mubr.f32.gmra.mrb[0].mxu0 %v2915
    %v3264 = vpop.f32.mrb[0].mxu0
    %v3265 = vadd.f32 0.0, %v3264
    %v3266 = vpop.f32.mrb[0].mxu0
    %3267 = vmatprep.mubr.f32.mxu0 %v2920
    %3268 = vmatmul.mubr.f32.gmra.mrb[0].mxu0 %v2919
    %v3269 = vpop.f32.mrb[0].mxu0
    %v3270 = vadd.f32 0.0, %v3269
    %v3271 = vpop.f32.mrb[0].mxu0
    %3272 = vmatprep.mubr.f32.mxu0 %v2924
    %3273 = vmatmul.mubr.f32.gmra.mrb[0].mxu0 %v2923
    %v3274 = vpop.f32.mrb[0].mxu0
    %v3275 = vadd.f32 0.0, %v3274
    %v3276 = vpop.f32.mrb[0].mxu0
    %3277 = vmatprep.mubr.f32.mxu0 %v2928
    %3278 = vmatmul.mubr.f32.gmra.mrb[0].mxu0 %v2927
    %v3279 = vpop.f32.mrb[0].mxu0
    %v3280 = vadd.f32 0.0, %v3279
    %v3281 = vpop.f32.mrb[0].mxu0
    %3282 = vmatprep.mubr.f32.mxu0 %v2932
    %3283 = vmatmul.mubr.f32.gmra.mrb[0].mxu0 %v2931
    %v3284 = vpop.f32.mrb[0].mxu0
    %v3285 = vadd.f32 0.0, %v3284
    %v3286 = vpop.f32.mrb[0].mxu0
    %3287 = vmatprep.mubr.f32.mxu0 %v2936
    %3288 = vmatmul.mubr.f32.gmra.mrb[0].mxu0 %v2935
    %v3289 = vpop.f32.mrb[0].mxu0
    %v3290 = vadd.f32 0.0, %v3289
    %v3291 = vpop.f32.mrb[0].mxu0
    %3292 = vmatprep.mubr.f32.mxu0 %v2940
    %3293 = vmatmul.mubr.f32.gmra.mrb[0].mxu0 %v2939
    %v3294 = vpop.f32.mrb[0].mxu0
    %v3295 = vadd.f32 0.0, %v3294
    %v3296 = vpop.f32.mrb[0].mxu0
    %3297 = vmatprep.mubr.f32.mxu0 %v2944
    %3298 = vmatmul.mubr.f32.gmra.mrb[0].mxu0 %v2943
    %v3299 = vpop.f32.mrb[0].mxu0
    %v3300 = vadd.f32 0.0, %v3299
    %v3301 = vpop.f32.mrb[0].mxu0
    %3302 = vmatprep.mubr.f32.mxu0 %v2948
    %3303 = vmatmul.mubr.f32.gmra.mrb[0].mxu0 %v2947
    %v3304 = vpop.f32.mrb[0].mxu0
    %v3305 = vadd.f32 0.0, %v3304
    %v3306 = vpop.f32.mrb[0].mxu0
    %3307 = vmatprep.mubr.f32.mxu0 %v2952
    %3308 = vmatmul.mubr.f32.gmra.mrb[0].mxu0 %v2951
    %v3309 = vpop.f32.mrb[0].mxu0
    %v3310 = vadd.f32 0.0, %v3309
    %v3311 = vpop.f32.mrb[0].mxu0
    %3312 = vmatprep.mubr.f32.mxu0 %v2956
    %3313 = vmatmul.mubr.f32.gmra.mrb[0].mxu0 %v2955
    %v3314 = vpop.f32.mrb[0].mxu0
    %v3315 = vadd.f32 0.0, %v3314
    %v3316 = vpop.f32.mrb[0].mxu0
    %3317 = vmatprep.mubr.f32.mxu0 %v2960
    %3318 = vmatmul.mubr.f32.gmra.mrb[0].mxu0 %v2959
    %v3319 = vpop.f32.mrb[0].mxu0
    %v3320 = vadd.f32 0.0, %v3319
    %v3321 = vpop.f32.mrb[0].mxu0
    %3322 = vmatprep.mubr.f32.mxu0 %v2964
    %3323 = vmatmul.mubr.f32.gmra.mrb[0].mxu0 %v2963
    %v3324 = vpop.f32.mrb[0].mxu0
    %v3325 = vadd.f32 0.0, %v3324
    %v3326 = vpop.f32.mrb[0].mxu0
    %3327 = vmatprep.mubr.f32.mxu0 %v2968
    %3328 = vmatmul.mubr.f32.gmra.mrb[0].mxu0 %v2967
    %v3329 = vpop.f32.mrb[0].mxu0
    %v3330 = vadd.f32 0.0, %v3329
    %v3331 = vpop.f32.mrb[0].mxu0
    %3332 = vmatprep.mubr.f32.mxu0 %v2972
    %3333 = vmatmul.mubr.f32.gmra.mrb[0].mxu0 %v2971
    %v3334 = vpop.f32.mrb[0].mxu0
    %v3335 = vadd.f32 0.0, %v3334
    %v3336 = vpop.f32.mrb[0].mxu0
    %3337 = vmatprep.mubr.f32.mxu0 %v2976
    %3338 = vmatmul.mubr.f32.gmra.mrb[0].mxu0 %v2975
    %v3339 = vpop.f32.mrb[0].mxu0
    %v3340 = vadd.f32 0.0, %v3339
    %v3341 = vpop.f32.mrb[0].mxu0
    %3342 = vmatprep.mubr.f32.mxu0 %v2980
    %3343 = vmatmul.mubr.f32.gmra.mrb[0].mxu0 %v2979
    %v3344 = vpop.f32.mrb[0].mxu0
    %v3345 = vadd.f32 0.0, %v3344
    %v3346 = vpop.f32.mrb[0].mxu0
    %3347 = vmatprep.mubr.f32.mxu0 %v2984
    %3348 = vmatmul.mubr.f32.gmra.mrb[0].mxu0 %v2983
    %v3349 = vpop.f32.mrb[0].mxu0
    %v3350 = vadd.f32 0.0, %v3349
    %v3351 = vpop.f32.mrb[0].mxu0
    %3352 = vmatprep.mubr.f32.mxu0 %v2988
    %3353 = vmatmul.mubr.f32.gmra.mrb[0].mxu0 %v2987
    %v3354 = vpop.f32.mrb[0].mxu0
    %v3355 = vadd.f32 0.0, %v3354
    %v3356 = vpop.f32.mrb[0].mxu0
    %3357 = vmatprep.mubr.f32.mxu0 %v2992
    %3358 = vmatmul.mubr.f32.gmra.mrb[0].mxu0 %v2991
    %v3359 = vpop.f32.mrb[0].mxu0
    %v3360 = vadd.f32 0.0, %v3359
    %v3361 = vpop.f32.mrb[0].mxu0
    %3362 = vmatprep.mubr.f32.mxu0 %v2996
    %3363 = vmatmul.mubr.f32.gmra.mrb[0].mxu0 %v2995
    %v3364 = vpop.f32.mrb[0].mxu0
    %v3365 = vadd.f32 0.0, %v3364
    %v3366 = vpop.f32.mrb[0].mxu0
    %3367 = vmatprep.mubr.f32.mxu0 %v3000
    %3368 = vmatmul.mubr.f32.gmra.mrb[0].mxu0 %v2999
    %v3369 = vpop.f32.mrb[0].mxu0
    %v3370 = vadd.f32 0.0, %v3369
    %v3371 = vpop.f32.mrb[0].mxu0
    %3372 = vmatprep.mubr.f32.mxu0 %v3004
    %3373 = vmatmul.mubr.f32.gmra.mrb[0].mxu0 %v3003
    %v3374 = vpop.f32.mrb[0].mxu0
    %v3375 = vadd.f32 0.0, %v3374
    %v3376 = vpop.f32.mrb[0].mxu0
    %3377 = vmatprep.mubr.f32.mxu0 %v3008
    %3378 = vmatmul.mubr.f32.gmra.mrb[0].mxu0 %v3007
    %v3379 = vpop.f32.mrb[0].mxu0
    %v3380 = vadd.f32 0.0, %v3379
    %v3381 = vpop.f32.mrb[0].mxu0
    %3382 = vmatprep.mubr.f32.mxu0 %v3012
    %3383 = vmatmul.mubr.f32.gmra.mrb[0].mxu0 %v3011
    %v3384 = vpop.f32.mrb[0].mxu0
    %v3385 = vadd.f32 0.0, %v3384
    %v3386 = vpop.f32.mrb[0].mxu0
    %3387 = vmatprep.mubr.f32.mxu0 %v3016
    %3388 = vmatmul.mubr.f32.gmra.mrb[0].mxu0 %v3015
    %v3389 = vpop.f32.mrb[0].mxu0
    %v3390 = vadd.f32 0.0, %v3389
    %v3391 = vpop.f32.mrb[0].mxu0
    %3392 = vmatprep.mubr.f32.mxu0 %v3020
    %3393 = vmatmul.mubr.f32.gmra.mrb[0].mxu0 %v3019
    %v3394 = vpop.f32.mrb[0].mxu0
    %v3395 = vadd.f32 0.0, %v3394
    %v3396 = vpop.f32.mrb[0].mxu0
    %3397 = vmatprep.mubr.f32.mxu0 %v3024
    %3398 = vmatmul.mubr.f32.gmra.mrb[0].mxu0 %v3023
    %v3399 = vpop.f32.mrb[0].mxu0
    %v3400 = vadd.f32 0.0, %v3399
    %v3401 = vpop.f32.mrb[0].mxu0
    %3402 = vmatprep.mubr.f32.mxu0 %v3028
    %3403 = vmatmul.mubr.f32.gmra.mrb[0].mxu0 %v3027
    %v3404 = vpop.f32.mrb[0].mxu0
    %v3405 = vadd.f32 0.0, %v3404
    %v3406 = vpop.f32.mrb[0].mxu0
    %3407 = vmatprep.mubr.f32.mxu0 %v3032
    %3408 = vmatmul.mubr.f32.gmra.mrb[0].mxu0 %v3031
    %v3409 = vpop.f32.mrb[0].mxu0
    %v3410 = vadd.f32 0.0, %v3409
    %v3411 = vpop.f32.mrb[0].mxu0
    %3412 = vmatprep.mubr.f32.mxu0 %v3036
    %3413 = vmatmul.mubr.f32.gmra.mrb[0].mxu0 %v3035
    %v3414 = vpop.f32.mrb[0].mxu0
    %v3415 = vadd.f32 0.0, %v3414
    %v3416 = vpop.f32.mrb[0].mxu0
    %3417 = vmatprep.mubr.f32.mxu0 %v3040
    %3418 = vmatmul.mubr.f32.gmra.mrb[0].mxu0 %v3039
    %v3419 = vpop.f32.mrb[0].mxu0
    %v3420 = vadd.f32 0.0, %v3419
    %v3421 = vpop.f32.mrb[0].mxu0
    %3422 = vmatprep.mubr.f32.mxu0 %v3044
    %3423 = vmatmul.mubr.f32.gmra.mrb[0].mxu0 %v3043
    %v3424 = vpop.f32.mrb[0].mxu0
    %v3425 = vadd.f32 0.0, %v3424
    %v3426 = vpop.f32.mrb[0].mxu0
    %3427 = vmatprep.mubr.f32.mxu0 %v3048
    %3428 = vmatmul.mubr.f32.gmra.mrb[0].mxu0 %v3047
    %v3429 = vpop.f32.mrb[0].mxu0
    %v3430 = vadd.f32 0.0, %v3429
    %v3431 = vpop.f32.mrb[0].mxu0
    %3432 = vmatprep.mubr.f32.mxu0 %v3052
    %3433 = vmatmul.mubr.f32.gmra.mrb[0].mxu0 %v3051
    %v3434 = vpop.f32.mrb[0].mxu0
    %v3435 = vadd.f32 0.0, %v3434
    %v3436 = vpop.f32.mrb[0].mxu0
    %3437 = vmatprep.mubr.f32.mxu0 %v3056
    %3438 = vmatmul.mubr.f32.gmra.mrb[0].mxu0 %v3055
    %v3439 = vpop.f32.mrb[0].mxu0
    %v3440 = vadd.f32 0.0, %v3439
    %v3441 = vpop.f32.mrb[0].mxu0
    %3442 = vmatprep.mubr.f32.mxu0 %v3060
    %3443 = vmatmul.mubr.f32.gmra.mrb[0].mxu0 %v3059
    %v3444 = vpop.f32.mrb[0].mxu0
    %v3445 = vadd.f32 0.0, %v3444
    %v3446 = vpop.f32.mrb[0].mxu0
    %3447 = vdwg.mxu0
    %3448 = vmatprep.subr.mxu0 0.0
    %3449 = vmatpush1.msra.mxu0 %v2775
    %3450 = vmatprep.subr.mxu0 0.0
    %3451 = vmatpush1.msra.mxu0 %v2776
    %3452 = vmatprep.subr.mxu0 0.0
    %3453 = vmatpush1.msra.mxu0 %v2777
    %3454 = vmatprep.subr.mxu0 0.0
    %3455 = vmatpush1.msra.mxu0 %v2778
    %3456 = vmatprep.subr.mxu0 0.0
    %3457 = vmatpush1.msra.mxu0 %v2779
    %3458 = vmatprep.subr.mxu0 0.0
    %3459 = vmatpush1.msra.mxu0 %v2780
    %3460 = vmatprep.subr.mxu0 0.0
    %3461 = vmatpush1.msra.mxu0 %v2781
    %3462 = vmatprep.subr.mxu0 0.0
    %3463 = vmatpush1.msra.mxu0 %v2782
    %3464 = vmatprep.subr.mxu0 0.0
    %3465 = vmatpush1.msra.mxu0 %v2783
    %3466 = vmatprep.subr.mxu0 0.0
    %3467 = vmatpush1.msra.mxu0 %v2784
    %3468 = vmatprep.subr.mxu0 0.0
    %3469 = vmatpush1.msra.mxu0 %v2785
    %3470 = vmatprep.subr.mxu0 0.0
    %3471 = vmatpush1.msra.mxu0 %v2786
    %3472 = vmatprep.subr.mxu0 0.0
    %3473 = vmatpush1.msra.mxu0 %v2787
    %3474 = vmatprep.subr.mxu0 0.0
    %3475 = vmatpush1.msra.mxu0 %v2788
    %3476 = vmatprep.subr.mxu0 0.0
    %3477 = vmatpush1.msra.mxu0 %v2789
    %3478 = vmatprep.subr.mxu0 0.0
    %3479 = vmatpush1.msra.mxu0 %v2790
    %3480 = vmatprep.subr.mxu0 0.0
    %3481 = vmatpush1.msra.mxu0 %v2791
    %3482 = vmatprep.subr.mxu0 0.0
    %3483 = vmatpush1.msra.mxu0 %v2792
    %3484 = vmatprep.subr.mxu0 0.0
    %3485 = vmatpush1.msra.mxu0 %v2793
    %3486 = vmatprep.subr.mxu0 0.0
    %3487 = vmatpush1.msra.mxu0 %v2794
    %3488 = vmatprep.subr.mxu0 0.0
    %3489 = vmatpush1.msra.mxu0 %v2795
    %3490 = vmatprep.subr.mxu0 0.0
    %3491 = vmatpush1.msra.mxu0 %v2796
    %3492 = vmatprep.subr.mxu0 0.0
    %3493 = vmatpush1.msra.mxu0 %v2797
    %3494 = vmatprep.subr.mxu0 0.0
    %3495 = vmatpush1.msra.mxu0 %v2798
    %3496 = vmatprep.subr.mxu0 0.0
    %3497 = vmatpush1.msra.mxu0 %v2799
    %3498 = vmatprep.subr.mxu0 0.0
    %3499 = vmatpush1.msra.mxu0 %v2800
    %3500 = vmatprep.subr.mxu0 0.0
    %3501 = vmatpush1.msra.mxu0 %v2801
    %3502 = vmatprep.subr.mxu0 0.0
    %3503 = vmatpush1.msra.mxu0 %v2802
    %3504 = vmatprep.subr.mxu0 0.0
    %3505 = vmatpush1.msra.mxu0 %v2803
    %3506 = vmatprep.subr.mxu0 0.0
    %3507 = vmatpush1.msra.mxu0 %v2804
    %3508 = vmatprep.subr.mxu0 0.0
    %3509 = vmatpush1.msra.mxu0 %v2805
    %3510 = vmatprep.subr.mxu0 0.0
    %3511 = vmatpush1.msra.mxu0 %v2806
    %3512 = vmatprep.mubr.f32.mxu0 %v2810
    %3513 = vmatmul.mubr.f32.gmra.mrb[0].mxu0 %v2809
    %v3514 = vpop.f32.mrb[0].mxu0
    %v3515 = vadd.f32 %v3130, %v3514
    %v3516 = vpop.f32.mrb[0].mxu0
    %3517 = vmatprep.mubr.f32.mxu0 %v2814
    %3518 = vmatmul.mubr.f32.gmra.mrb[0].mxu0 %v2813
    %v3519 = vpop.f32.mrb[0].mxu0
    %v3520 = vadd.f32 %v3135, %v3519
    %v3521 = vpop.f32.mrb[0].mxu0
    %3522 = vmatprep.mubr.f32.mxu0 %v2818
    %3523 = vmatmul.mubr.f32.gmra.mrb[0].mxu0 %v2817
    %v3524 = vpop.f32.mrb[0].mxu0
    %v3525 = vadd.f32 %v3140, %v3524
    %v3526 = vpop.f32.mrb[0].mxu0
    %3527 = vmatprep.mubr.f32.mxu0 %v2822
    %3528 = vmatmul.mubr.f32.gmra.mrb[0].mxu0 %v2821
    %v3529 = vpop.f32.mrb[0].mxu0
    %v3530 = vadd.f32 %v3145, %v3529
    %v3531 = vpop.f32.mrb[0].mxu0
    %3532 = vmatprep.mubr.f32.mxu0 %v2826
    %3533 = vmatmul.mubr.f32.gmra.mrb[0].mxu0 %v2825
    %v3534 = vpop.f32.mrb[0].mxu0
    %v3535 = vadd.f32 %v3150, %v3534
    %v3536 = vpop.f32.mrb[0].mxu0
    %3537 = vmatprep.mubr.f32.mxu0 %v2830
    %3538 = vmatmul.mubr.f32.gmra.mrb[0].mxu0 %v2829
    %v3539 = vpop.f32.mrb[0].mxu0
    %v3540 = vadd.f32 %v3155, %v3539
    %v3541 = vpop.f32.mrb[0].mxu0
    %3542 = vmatprep.mubr.f32.mxu0 %v2834
    %3543 = vmatmul.mubr.f32.gmra.mrb[0].mxu0 %v2833
    %v3544 = vpop.f32.mrb[0].mxu0
    %v3545 = vadd.f32 %v3160, %v3544
    %v3546 = vpop.f32.mrb[0].mxu0
    %3547 = vmatprep.mubr.f32.mxu0 %v2838
    %3548 = vmatmul.mubr.f32.gmra.mrb[0].mxu0 %v2837
    %v3549 = vpop.f32.mrb[0].mxu0
    %v3550 = vadd.f32 %v3165, %v3549
    %v3551 = vpop.f32.mrb[0].mxu0
    %3552 = vmatprep.mubr.f32.mxu0 %v2842
    %3553 = vmatmul.mubr.f32.gmra.mrb[0].mxu0 %v2841
    %v3554 = vpop.f32.mrb[0].mxu0
    %v3555 = vadd.f32 %v3170, %v3554
    %v3556 = vpop.f32.mrb[0].mxu0
    %3557 = vmatprep.mubr.f32.mxu0 %v2846
    %3558 = vmatmul.mubr.f32.gmra.mrb[0].mxu0 %v2845
    %v3559 = vpop.f32.mrb[0].mxu0
    %v3560 = vadd.f32 %v3175, %v3559
    %v3561 = vpop.f32.mrb[0].mxu0
    %3562 = vmatprep.mubr.f32.mxu0 %v2850
    %3563 = vmatmul.mubr.f32.gmra.mrb[0].mxu0 %v2849
    %v3564 = vpop.f32.mrb[0].mxu0
    %v3565 = vadd.f32 %v3180, %v3564
    %v3566 = vpop.f32.mrb[0].mxu0
    %3567 = vmatprep.mubr.f32.mxu0 %v2854
    %3568 = vmatmul.mubr.f32.gmra.mrb[0].mxu0 %v2853
    %v3569 = vpop.f32.mrb[0].mxu0
    %v3570 = vadd.f32 %v3185, %v3569
    %v3571 = vpop.f32.mrb[0].mxu0
    %3572 = vmatprep.mubr.f32.mxu0 %v2858
    %3573 = vmatmul.mubr.f32.gmra.mrb[0].mxu0 %v2857
    %v3574 = vpop.f32.mrb[0].mxu0
    %v3575 = vadd.f32 %v3190, %v3574
    %v3576 = vpop.f32.mrb[0].mxu0
    %3577 = vmatprep.mubr.f32.mxu0 %v2862
    %3578 = vmatmul.mubr.f32.gmra.mrb[0].mxu0 %v2861
    %v3579 = vpop.f32.mrb[0].mxu0
    %v3580 = vadd.f32 %v3195, %v3579
    %v3581 = vpop.f32.mrb[0].mxu0
    %3582 = vmatprep.mubr.f32.mxu0 %v2866
    %3583 = vmatmul.mubr.f32.gmra.mrb[0].mxu0 %v2865
    %v3584 = vpop.f32.mrb[0].mxu0
    %v3585 = vadd.f32 %v3200, %v3584
    %v3586 = vpop.f32.mrb[0].mxu0
    %3587 = vmatprep.mubr.f32.mxu0 %v2870
    %3588 = vmatmul.mubr.f32.gmra.mrb[0].mxu0 %v2869
    %v3589 = vpop.f32.mrb[0].mxu0
    %v3590 = vadd.f32 %v3205, %v3589
    %v3591 = vpop.f32.mrb[0].mxu0
    %3592 = vmatprep.mubr.f32.mxu0 %v2874
    %3593 = vmatmul.mubr.f32.gmra.mrb[0].mxu0 %v2873
    %v3594 = vpop.f32.mrb[0].mxu0
    %v3595 = vadd.f32 %v3210, %v3594
    %v3596 = vpop.f32.mrb[0].mxu0
    %3597 = vmatprep.mubr.f32.mxu0 %v2878
    %3598 = vmatmul.mubr.f32.gmra.mrb[0].mxu0 %v2877
    %v3599 = vpop.f32.mrb[0].mxu0
    %v3600 = vadd.f32 %v3215, %v3599
    %v3601 = vpop.f32.mrb[0].mxu0
    %3602 = vmatprep.mubr.f32.mxu0 %v2882
    %3603 = vmatmul.mubr.f32.gmra.mrb[0].mxu0 %v2881
    %v3604 = vpop.f32.mrb[0].mxu0
    %v3605 = vadd.f32 %v3220, %v3604
    %v3606 = vpop.f32.mrb[0].mxu0
    %3607 = vmatprep.mubr.f32.mxu0 %v2886
    %3608 = vmatmul.mubr.f32.gmra.mrb[0].mxu0 %v2885
    %v3609 = vpop.f32.mrb[0].mxu0
    %v3610 = vadd.f32 %v3225, %v3609
    %v3611 = vpop.f32.mrb[0].mxu0
    %3612 = vmatprep.mubr.f32.mxu0 %v2890
    %3613 = vmatmul.mubr.f32.gmra.mrb[0].mxu0 %v2889
    %v3614 = vpop.f32.mrb[0].mxu0
    %v3615 = vadd.f32 %v3230, %v3614
    %v3616 = vpop.f32.mrb[0].mxu0
    %3617 = vmatprep.mubr.f32.mxu0 %v2894
    %3618 = vmatmul.mubr.f32.gmra.mrb[0].mxu0 %v2893
    %v3619 = vpop.f32.mrb[0].mxu0
    %v3620 = vadd.f32 %v3235, %v3619
    %v3621 = vpop.f32.mrb[0].mxu0
    %3622 = vmatprep.mubr.f32.mxu0 %v2898
    %3623 = vmatmul.mubr.f32.gmra.mrb[0].mxu0 %v2897
    %v3624 = vpop.f32.mrb[0].mxu0
    %v3625 = vadd.f32 %v3240, %v3624
    %v3626 = vpop.f32.mrb[0].mxu0
    %3627 = vmatprep.mubr.f32.mxu0 %v2902
    %3628 = vmatmul.mubr.f32.gmra.mrb[0].mxu0 %v2901
    %v3629 = vpop.f32.mrb[0].mxu0
    %v3630 = vadd.f32 %v3245, %v3629
    %v3631 = vpop.f32.mrb[0].mxu0
    %3632 = vmatprep.mubr.f32.mxu0 %v2906
    %3633 = vmatmul.mubr.f32.gmra.mrb[0].mxu0 %v2905
    %v3634 = vpop.f32.mrb[0].mxu0
    %v3635 = vadd.f32 %v3250, %v3634
    %v3636 = vpop.f32.mrb[0].mxu0
    %3637 = vmatprep.mubr.f32.mxu0 %v2910
    %3638 = vmatmul.mubr.f32.gmra.mrb[0].mxu0 %v2909
    %v3639 = vpop.f32.mrb[0].mxu0
    %v3640 = vadd.f32 %v3255, %v3639
    %v3641 = vpop.f32.mrb[0].mxu0
    %3642 = vmatprep.mubr.f32.mxu0 %v2914
    %3643 = vmatmul.mubr.f32.gmra.mrb[0].mxu0 %v2913
    %v3644 = vpop.f32.mrb[0].mxu0
    %v3645 = vadd.f32 %v3260, %v3644
    %v3646 = vpop.f32.mrb[0].mxu0
    %3647 = vmatprep.mubr.f32.mxu0 %v2918
    %3648 = vmatmul.mubr.f32.gmra.mrb[0].mxu0 %v2917
    %v3649 = vpop.f32.mrb[0].mxu0
    %v3650 = vadd.f32 %v3265, %v3649
    %v3651 = vpop.f32.mrb[0].mxu0
    %3652 = vmatprep.mubr.f32.mxu0 %v2922
    %3653 = vmatmul.mubr.f32.gmra.mrb[0].mxu0 %v2921
    %v3654 = vpop.f32.mrb[0].mxu0
    %v3655 = vadd.f32 %v3270, %v3654
    %v3656 = vpop.f32.mrb[0].mxu0
    %3657 = vmatprep.mubr.f32.mxu0 %v2926
    %3658 = vmatmul.mubr.f32.gmra.mrb[0].mxu0 %v2925
    %v3659 = vpop.f32.mrb[0].mxu0
    %v3660 = vadd.f32 %v3275, %v3659
    %v3661 = vpop.f32.mrb[0].mxu0
    %3662 = vmatprep.mubr.f32.mxu0 %v2930
    %3663 = vmatmul.mubr.f32.gmra.mrb[0].mxu0 %v2929
    %v3664 = vpop.f32.mrb[0].mxu0
    %v3665 = vadd.f32 %v3280, %v3664
    %v3666 = vpop.f32.mrb[0].mxu0
    %3667 = vmatprep.mubr.f32.mxu0 %v2934
    %3668 = vmatmul.mubr.f32.gmra.mrb[0].mxu0 %v2933
    %v3669 = vpop.f32.mrb[0].mxu0
    %v3670 = vadd.f32 %v3285, %v3669
    %v3671 = vpop.f32.mrb[0].mxu0
    %3672 = vmatprep.mubr.f32.mxu0 %v2938
    %3673 = vmatmul.mubr.f32.gmra.mrb[0].mxu0 %v2937
    %v3674 = vpop.f32.mrb[0].mxu0
    %v3675 = vadd.f32 %v3290, %v3674
    %v3676 = vpop.f32.mrb[0].mxu0
    %3677 = vmatprep.mubr.f32.mxu0 %v2942
    %3678 = vmatmul.mubr.f32.gmra.mrb[0].mxu0 %v2941
    %v3679 = vpop.f32.mrb[0].mxu0
    %v3680 = vadd.f32 %v3295, %v3679
    %v3681 = vpop.f32.mrb[0].mxu0
    %3682 = vmatprep.mubr.f32.mxu0 %v2946
    %3683 = vmatmul.mubr.f32.gmra.mrb[0].mxu0 %v2945
    %v3684 = vpop.f32.mrb[0].mxu0
    %v3685 = vadd.f32 %v3300, %v3684
    %v3686 = vpop.f32.mrb[0].mxu0
    %3687 = vmatprep.mubr.f32.mxu0 %v2950
    %3688 = vmatmul.mubr.f32.gmra.mrb[0].mxu0 %v2949
    %v3689 = vpop.f32.mrb[0].mxu0
    %v3690 = vadd.f32 %v3305, %v3689
    %v3691 = vpop.f32.mrb[0].mxu0
    %3692 = vmatprep.mubr.f32.mxu0 %v2954
    %3693 = vmatmul.mubr.f32.gmra.mrb[0].mxu0 %v2953
    %v3694 = vpop.f32.mrb[0].mxu0
    %v3695 = vadd.f32 %v3310, %v3694
    %v3696 = vpop.f32.mrb[0].mxu0
    %3697 = vmatprep.mubr.f32.mxu0 %v2958
    %3698 = vmatmul.mubr.f32.gmra.mrb[0].mxu0 %v2957
    %v3699 = vpop.f32.mrb[0].mxu0
    %v3700 = vadd.f32 %v3315, %v3699
    %v3701 = vpop.f32.mrb[0].mxu0
    %3702 = vmatprep.mubr.f32.mxu0 %v2962
    %3703 = vmatmul.mubr.f32.gmra.mrb[0].mxu0 %v2961
    %v3704 = vpop.f32.mrb[0].mxu0
    %v3705 = vadd.f32 %v3320, %v3704
    %v3706 = vpop.f32.mrb[0].mxu0
    %3707 = vmatprep.mubr.f32.mxu0 %v2966
    %3708 = vmatmul.mubr.f32.gmra.mrb[0].mxu0 %v2965
    %v3709 = vpop.f32.mrb[0].mxu0
    %v3710 = vadd.f32 %v3325, %v3709
    %v3711 = vpop.f32.mrb[0].mxu0
    %3712 = vmatprep.mubr.f32.mxu0 %v2970
    %3713 = vmatmul.mubr.f32.gmra.mrb[0].mxu0 %v2969
    %v3714 = vpop.f32.mrb[0].mxu0
    %v3715 = vadd.f32 %v3330, %v3714
    %v3716 = vpop.f32.mrb[0].mxu0
    %3717 = vmatprep.mubr.f32.mxu0 %v2974
    %3718 = vmatmul.mubr.f32.gmra.mrb[0].mxu0 %v2973
    %v3719 = vpop.f32.mrb[0].mxu0
    %v3720 = vadd.f32 %v3335, %v3719
    %v3721 = vpop.f32.mrb[0].mxu0
    %3722 = vmatprep.mubr.f32.mxu0 %v2978
    %3723 = vmatmul.mubr.f32.gmra.mrb[0].mxu0 %v2977
    %v3724 = vpop.f32.mrb[0].mxu0
    %v3725 = vadd.f32 %v3340, %v3724
    %v3726 = vpop.f32.mrb[0].mxu0
    %3727 = vmatprep.mubr.f32.mxu0 %v2982
    %3728 = vmatmul.mubr.f32.gmra.mrb[0].mxu0 %v2981
    %v3729 = vpop.f32.mrb[0].mxu0
    %v3730 = vadd.f32 %v3345, %v3729
    %v3731 = vpop.f32.mrb[0].mxu0
    %3732 = vmatprep.mubr.f32.mxu0 %v2986
    %3733 = vmatmul.mubr.f32.gmra.mrb[0].mxu0 %v2985
    %v3734 = vpop.f32.mrb[0].mxu0
    %v3735 = vadd.f32 %v3350, %v3734
    %v3736 = vpop.f32.mrb[0].mxu0
    %3737 = vmatprep.mubr.f32.mxu0 %v2990
    %3738 = vmatmul.mubr.f32.gmra.mrb[0].mxu0 %v2989
    %v3739 = vpop.f32.mrb[0].mxu0
    %v3740 = vadd.f32 %v3355, %v3739
    %v3741 = vpop.f32.mrb[0].mxu0
    %3742 = vmatprep.mubr.f32.mxu0 %v2994
    %3743 = vmatmul.mubr.f32.gmra.mrb[0].mxu0 %v2993
    %v3744 = vpop.f32.mrb[0].mxu0
    %v3745 = vadd.f32 %v3360, %v3744
    %v3746 = vpop.f32.mrb[0].mxu0
    %3747 = vmatprep.mubr.f32.mxu0 %v2998
    %3748 = vmatmul.mubr.f32.gmra.mrb[0].mxu0 %v2997
    %v3749 = vpop.f32.mrb[0].mxu0
    %v3750 = vadd.f32 %v3365, %v3749
    %v3751 = vpop.f32.mrb[0].mxu0
    %3752 = vmatprep.mubr.f32.mxu0 %v3002
    %3753 = vmatmul.mubr.f32.gmra.mrb[0].mxu0 %v3001
    %v3754 = vpop.f32.mrb[0].mxu0
    %v3755 = vadd.f32 %v3370, %v3754
    %v3756 = vpop.f32.mrb[0].mxu0
    %3757 = vmatprep.mubr.f32.mxu0 %v3006
    %3758 = vmatmul.mubr.f32.gmra.mrb[0].mxu0 %v3005
    %v3759 = vpop.f32.mrb[0].mxu0
    %v3760 = vadd.f32 %v3375, %v3759
    %v3761 = vpop.f32.mrb[0].mxu0
    %3762 = vmatprep.mubr.f32.mxu0 %v3010
    %3763 = vmatmul.mubr.f32.gmra.mrb[0].mxu0 %v3009
    %v3764 = vpop.f32.mrb[0].mxu0
    %v3765 = vadd.f32 %v3380, %v3764
    %v3766 = vpop.f32.mrb[0].mxu0
    %3767 = vmatprep.mubr.f32.mxu0 %v3014
    %3768 = vmatmul.mubr.f32.gmra.mrb[0].mxu0 %v3013
    %v3769 = vpop.f32.mrb[0].mxu0
    %v3770 = vadd.f32 %v3385, %v3769
    %v3771 = vpop.f32.mrb[0].mxu0
    %3772 = vmatprep.mubr.f32.mxu0 %v3018
    %3773 = vmatmul.mubr.f32.gmra.mrb[0].mxu0 %v3017
    %v3774 = vpop.f32.mrb[0].mxu0
    %v3775 = vadd.f32 %v3390, %v3774
    %v3776 = vpop.f32.mrb[0].mxu0
    %3777 = vmatprep.mubr.f32.mxu0 %v3022
    %3778 = vmatmul.mubr.f32.gmra.mrb[0].mxu0 %v3021
    %v3779 = vpop.f32.mrb[0].mxu0
    %v3780 = vadd.f32 %v3395, %v3779
    %v3781 = vpop.f32.mrb[0].mxu0
    %3782 = vmatprep.mubr.f32.mxu0 %v3026
    %3783 = vmatmul.mubr.f32.gmra.mrb[0].mxu0 %v3025
    %v3784 = vpop.f32.mrb[0].mxu0
    %v3785 = vadd.f32 %v3400, %v3784
    %v3786 = vpop.f32.mrb[0].mxu0
    %3787 = vmatprep.mubr.f32.mxu0 %v3030
    %3788 = vmatmul.mubr.f32.gmra.mrb[0].mxu0 %v3029
    %v3789 = vpop.f32.mrb[0].mxu0
    %v3790 = vadd.f32 %v3405, %v3789
    %v3791 = vpop.f32.mrb[0].mxu0
    %3792 = vmatprep.mubr.f32.mxu0 %v3034
    %3793 = vmatmul.mubr.f32.gmra.mrb[0].mxu0 %v3033
    %v3794 = vpop.f32.mrb[0].mxu0
    %v3795 = vadd.f32 %v3410, %v3794
    %v3796 = vpop.f32.mrb[0].mxu0
    %3797 = vmatprep.mubr.f32.mxu0 %v3038
    %3798 = vmatmul.mubr.f32.gmra.mrb[0].mxu0 %v3037
    %v3799 = vpop.f32.mrb[0].mxu0
    %v3800 = vadd.f32 %v3415, %v3799
    %v3801 = vpop.f32.mrb[0].mxu0
    %3802 = vmatprep.mubr.f32.mxu0 %v3042
    %3803 = vmatmul.mubr.f32.gmra.mrb[0].mxu0 %v3041
    %v3804 = vpop.f32.mrb[0].mxu0
    %v3805 = vadd.f32 %v3420, %v3804
    %v3806 = vpop.f32.mrb[0].mxu0
    %3807 = vmatprep.mubr.f32.mxu0 %v3046
    %3808 = vmatmul.mubr.f32.gmra.mrb[0].mxu0 %v3045
    %v3809 = vpop.f32.mrb[0].mxu0
    %v3810 = vadd.f32 %v3425, %v3809
    %v3811 = vpop.f32.mrb[0].mxu0
    %3812 = vmatprep.mubr.f32.mxu0 %v3050
    %3813 = vmatmul.mubr.f32.gmra.mrb[0].mxu0 %v3049
    %v3814 = vpop.f32.mrb[0].mxu0
    %v3815 = vadd.f32 %v3430, %v3814
    %v3816 = vpop.f32.mrb[0].mxu0
    %3817 = vmatprep.mubr.f32.mxu0 %v3054
    %3818 = vmatmul.mubr.f32.gmra.mrb[0].mxu0 %v3053
    %v3819 = vpop.f32.mrb[0].mxu0
    %v3820 = vadd.f32 %v3435, %v3819
    %v3821 = vpop.f32.mrb[0].mxu0
    %3822 = vmatprep.mubr.f32.mxu0 %v3058
    %3823 = vmatmul.mubr.f32.gmra.mrb[0].mxu0 %v3057
    %v3824 = vpop.f32.mrb[0].mxu0
    %v3825 = vadd.f32 %v3440, %v3824
    %v3826 = vpop.f32.mrb[0].mxu0
    %3827 = vmatprep.mubr.f32.mxu0 %v3062
    %3828 = vmatmul.mubr.f32.gmra.mrb[0].mxu0 %v3061
    %v3829 = vpop.f32.mrb[0].mxu0
    %v3830 = vadd.f32 %v3445, %v3829
    %v3831 = vpop.f32.mrb[0].mxu0
    %3832 = vdwg.mxu0
    %v3833 = vld [vmem:[%s7] sm:$0xff]
    %v3834 = vld [vmem:[%s7 + $0x8] sm:$0xff]
    %v3835 = vld [vmem:[%s7 + $0x10] sm:$0xff]
    %v3836 = vld [vmem:[%s7 + $0x18] sm:$0xff]
    %v3837 = vld [vmem:[%s7 + $0x20] sm:$0xff]
    %v3838 = vld [vmem:[%s7 + $0x28] sm:$0xff]
    %v3839 = vld [vmem:[%s7 + $0x30] sm:$0xff]
    %v3840 = vld [vmem:[%s7 + $0x38] sm:$0xff]
    %3841 = vmatprep.subr.mxu0 0.0
    %3842 = vmatpush1.msra.mxu0 %v3515
    %3843 = vmatprep.subr.mxu0 0.0
    %3844 = vmatpush1.msra.mxu0 %v3520
    %3845 = vmatprep.subr.mxu0 0.0
    %3846 = vmatpush1.msra.mxu0 %v3525
    %3847 = vmatprep.subr.mxu0 0.0
    %3848 = vmatpush1.msra.mxu0 %v3530
    %3849 = vmatprep.subr.mxu0 0.0
    %3850 = vmatpush1.msra.mxu0 %v3535
    %3851 = vmatprep.subr.mxu0 0.0
    %3852 = vmatpush1.msra.mxu0 %v3540
    %3853 = vmatprep.subr.mxu0 0.0
    %3854 = vmatpush1.msra.mxu0 %v3545
    %3855 = vmatprep.subr.mxu0 0.0
    %3856 = vmatpush1.msra.mxu0 %v3550
    %3857 = vmatprep.subr.mxu0 0.0
    %3858 = vmatpush1.msra.mxu0 %v3555
    %3859 = vmatprep.subr.mxu0 0.0
    %3860 = vmatpush1.msra.mxu0 %v3560
    %3861 = vmatprep.subr.mxu0 0.0
    %3862 = vmatpush1.msra.mxu0 %v3565
    %3863 = vmatprep.subr.mxu0 0.0
    %3864 = vmatpush1.msra.mxu0 %v3570
    %3865 = vmatprep.subr.mxu0 0.0
    %3866 = vmatpush1.msra.mxu0 %v3575
    %3867 = vmatprep.subr.mxu0 0.0
    %3868 = vmatpush1.msra.mxu0 %v3580
    %3869 = vmatprep.subr.mxu0 0.0
    %3870 = vmatpush1.msra.mxu0 %v3585
    %3871 = vmatprep.subr.mxu0 0.0
    %3872 = vmatpush1.msra.mxu0 %v3590
    %3873 = vmatprep.subr.mxu0 0.0
    %3874 = vmatpush1.msra.mxu0 %v3595
    %3875 = vmatprep.subr.mxu0 0.0
    %3876 = vmatpush1.msra.mxu0 %v3600
    %3877 = vmatprep.subr.mxu0 0.0
    %3878 = vmatpush1.msra.mxu0 %v3605
    %3879 = vmatprep.subr.mxu0 0.0
    %3880 = vmatpush1.msra.mxu0 %v3610
    %3881 = vmatprep.subr.mxu0 0.0
    %3882 = vmatpush1.msra.mxu0 %v3615
    %3883 = vmatprep.subr.mxu0 0.0
    %3884 = vmatpush1.msra.mxu0 %v3620
    %3885 = vmatprep.subr.mxu0 0.0
    %3886 = vmatpush1.msra.mxu0 %v3625
    %3887 = vmatprep.subr.mxu0 0.0
    %3888 = vmatpush1.msra.mxu0 %v3630
    %3889 = vmatprep.subr.mxu0 0.0
    %3890 = vmatpush1.msra.mxu0 %v3635
    %3891 = vmatprep.subr.mxu0 0.0
    %3892 = vmatpush1.msra.mxu0 %v3640
    %3893 = vmatprep.subr.mxu0 0.0
    %3894 = vmatpush1.msra.mxu0 %v3645
    %3895 = vmatprep.subr.mxu0 0.0
    %3896 = vmatpush1.msra.mxu0 %v3650
    %3897 = vmatprep.subr.mxu0 0.0
    %3898 = vmatpush1.msra.mxu0 %v3655
    %3899 = vmatprep.subr.mxu0 0.0
    %3900 = vmatpush1.msra.mxu0 %v3660
    %3901 = vmatprep.subr.mxu0 0.0
    %3902 = vmatpush1.msra.mxu0 %v3665
    %3903 = vmatprep.subr.mxu0 0.0
    %3904 = vmatpush1.msra.mxu0 %v3670
    %3905 = vmatprep.mubr.f32.mxu0 %v3834
    %3906 = vmatmul.mubr.f32.gmra.mrb[0].mxu0 %v3833
    %v3907 = vpop.f32.mrb[0].mxu0
    %v3908 = vadd.f32 0.0, %v3907
    %v3909 = vpop.f32.mrb[0].mxu0
    %3910 = vmatprep.mubr.f32.mxu0 %v3838
    %3911 = vmatmul.mubr.f32.gmra.mrb[0].mxu0 %v3837
    %v3912 = vpop.f32.mrb[0].mxu0
    %v3913 = vadd.f32 0.0, %v3912
    %v3914 = vpop.f32.mrb[0].mxu0
    %3915 = vdwg.mxu0
    %3916 = vmatprep.subr.mxu0 0.0
    %3917 = vmatpush1.msra.mxu0 %v3675
    %3918 = vmatprep.subr.mxu0 0.0
    %3919 = vmatpush1.msra.mxu0 %v3680
    %3920 = vmatprep.subr.mxu0 0.0
    %3921 = vmatpush1.msra.mxu0 %v3685
    %3922 = vmatprep.subr.mxu0 0.0
    %3923 = vmatpush1.msra.mxu0 %v3690
    %3924 = vmatprep.subr.mxu0 0.0
    %3925 = vmatpush1.msra.mxu0 %v3695
    %3926 = vmatprep.subr.mxu0 0.0
    %3927 = vmatpush1.msra.mxu0 %v3700
    %3928 = vmatprep.subr.mxu0 0.0
    %3929 = vmatpush1.msra.mxu0 %v3705
    %3930 = vmatprep.subr.mxu0 0.0
    %3931 = vmatpush1.msra.mxu0 %v3710
    %3932 = vmatprep.subr.mxu0 0.0
    %3933 = vmatpush1.msra.mxu0 %v3715
    %3934 = vmatprep.subr.mxu0 0.0
    %3935 = vmatpush1.msra.mxu0 %v3720
    %3936 = vmatprep.subr.mxu0 0.0
    %3937 = vmatpush1.msra.mxu0 %v3725
    %3938 = vmatprep.subr.mxu0 0.0
    %3939 = vmatpush1.msra.mxu0 %v3730
    %3940 = vmatprep.subr.mxu0 0.0
    %3941 = vmatpush1.msra.mxu0 %v3735
    %3942 = vmatprep.subr.mxu0 0.0
    %3943 = vmatpush1.msra.mxu0 %v3740
    %3944 = vmatprep.subr.mxu0 0.0
    %3945 = vmatpush1.msra.mxu0 %v3745
    %3946 = vmatprep.subr.mxu0 0.0
    %3947 = vmatpush1.msra.mxu0 %v3750
    %3948 = vmatprep.subr.mxu0 0.0
    %3949 = vmatpush1.msra.mxu0 %v3755
    %3950 = vmatprep.subr.mxu0 0.0
    %3951 = vmatpush1.msra.mxu0 %v3760
    %3952 = vmatprep.subr.mxu0 0.0
    %3953 = vmatpush1.msra.mxu0 %v3765
    %3954 = vmatprep.subr.mxu0 0.0
    %3955 = vmatpush1.msra.mxu0 %v3770
    %3956 = vmatprep.subr.mxu0 0.0
    %3957 = vmatpush1.msra.mxu0 %v3775
    %3958 = vmatprep.subr.mxu0 0.0
    %3959 = vmatpush1.msra.mxu0 %v3780
    %3960 = vmatprep.subr.mxu0 0.0
    %3961 = vmatpush1.msra.mxu0 %v3785
    %3962 = vmatprep.subr.mxu0 0.0
    %3963 = vmatpush1.msra.mxu0 %v3790
    %3964 = vmatprep.subr.mxu0 0.0
    %3965 = vmatpush1.msra.mxu0 %v3795
    %3966 = vmatprep.subr.mxu0 0.0
    %3967 = vmatpush1.msra.mxu0 %v3800
    %3968 = vmatprep.subr.mxu0 0.0
    %3969 = vmatpush1.msra.mxu0 %v3805
    %3970 = vmatprep.subr.mxu0 0.0
    %3971 = vmatpush1.msra.mxu0 %v3810
    %3972 = vmatprep.subr.mxu0 0.0
    %3973 = vmatpush1.msra.mxu0 %v3815
    %3974 = vmatprep.subr.mxu0 0.0
    %3975 = vmatpush1.msra.mxu0 %v3820
    %3976 = vmatprep.subr.mxu0 0.0
    %3977 = vmatpush1.msra.mxu0 %v3825
    %3978 = vmatprep.subr.mxu0 0.0
    %3979 = vmatpush1.msra.mxu0 %v3830
    %3980 = vmatprep.mubr.f32.mxu0 %v3836
    %3981 = vmatmul.mubr.f32.gmra.mrb[0].mxu0 %v3835
    %v3982 = vpop.f32.mrb[0].mxu0
    %v3983 = vadd.f32 %v3908, %v3982
    %v3984 = vpop.f32.mrb[0].mxu0
    %3985 = vmatprep.mubr.f32.mxu0 %v3840
    %3986 = vmatmul.mubr.f32.gmra.mrb[0].mxu0 %v3839
    %v3987 = vpop.f32.mrb[0].mxu0
    %v3988 = vadd.f32 %v3913, %v3987
    %v3989 = vpop.f32.mrb[0].mxu0
    %3990 = vdwg.mxu0
    %v3991 = vmul.f32 %v3515, %v3515
    %v3992 = vmul.f32 %v3520, %v3520
    %v3993 = vmul.f32 %v3525, %v3525
    %v3994 = vmul.f32 %v3530, %v3530
    %v3995 = vmul.f32 %v3535, %v3535
    %v3996 = vmul.f32 %v3540, %v3540
    %v3997 = vmul.f32 %v3545, %v3545
    %v3998 = vmul.f32 %v3550, %v3550
    %v3999 = vmul.f32 %v3555, %v3555
    %v4000 = vmul.f32 %v3560, %v3560
    %v4001 = vmul.f32 %v3565, %v3565
    %v4002 = vmul.f32 %v3570, %v3570
    %v4003 = vmul.f32 %v3575, %v3575
    %v4004 = vmul.f32 %v3580, %v3580
    %v4005 = vmul.f32 %v3585, %v3585
    %v4006 = vmul.f32 %v3590, %v3590
    %v4007 = vmul.f32 %v3595, %v3595
    %v4008 = vmul.f32 %v3600, %v3600
    %v4009 = vmul.f32 %v3605, %v3605
    %v4010 = vmul.f32 %v3610, %v3610
    %v4011 = vmul.f32 %v3615, %v3615
    %v4012 = vmul.f32 %v3620, %v3620
    %v4013 = vmul.f32 %v3625, %v3625
    %v4014 = vmul.f32 %v3630, %v3630
    %v4015 = vmul.f32 %v3635, %v3635
    %v4016 = vmul.f32 %v3640, %v3640
    %v4017 = vmul.f32 %v3645, %v3645
    %v4018 = vmul.f32 %v3650, %v3650
    %v4019 = vmul.f32 %v3655, %v3655
    %v4020 = vmul.f32 %v3660, %v3660
    %v4021 = vmul.f32 %v3665, %v3665
    %v4022 = vmul.f32 %v3670, %v3670
    %v4023 = vmul.f32 %v3675, %v3675
    %v4024 = vmul.f32 %v3680, %v3680
    %v4025 = vmul.f32 %v3685, %v3685
    %v4026 = vmul.f32 %v3690, %v3690
    %v4027 = vmul.f32 %v3695, %v3695
    %v4028 = vmul.f32 %v3700, %v3700
    %v4029 = vmul.f32 %v3705, %v3705
    %v4030 = vmul.f32 %v3710, %v3710
    %v4031 = vmul.f32 %v3715, %v3715
    %v4032 = vmul.f32 %v3720, %v3720
    %v4033 = vmul.f32 %v3725, %v3725
    %v4034 = vmul.f32 %v3730, %v3730
    %v4035 = vmul.f32 %v3735, %v3735
    %v4036 = vmul.f32 %v3740, %v3740
    %v4037 = vmul.f32 %v3745, %v3745
    %v4038 = vmul.f32 %v3750, %v3750
    %v4039 = vmul.f32 %v3755, %v3755
    %v4040 = vmul.f32 %v3760, %v3760
    %v4041 = vmul.f32 %v3765, %v3765
    %v4042 = vmul.f32 %v3770, %v3770
    %v4043 = vmul.f32 %v3775, %v3775
    %v4044 = vmul.f32 %v3780, %v3780
    %v4045 = vmul.f32 %v3785, %v3785
    %v4046 = vmul.f32 %v3790, %v3790
    %v4047 = vmul.f32 %v3795, %v3795
    %v4048 = vmul.f32 %v3800, %v3800
    %v4049 = vmul.f32 %v3805, %v3805
    %v4050 = vmul.f32 %v3810, %v3810
    %v4051 = vmul.f32 %v3815, %v3815
    %v4052 = vmul.f32 %v3820, %v3820
    %v4053 = vmul.f32 %v3825, %v3825
    %v4054 = vmul.f32 %v3830, %v3830
    %4055 = vmatprep.subr.mxu0 0.0
    %4056 = vmatpush1.msra.mxu0 %v3991
    %4057 = vmatprep.subr.mxu0 0.0
    %4058 = vmatpush1.msra.mxu0 %v3992
    %4059 = vmatprep.subr.mxu0 0.0
    %4060 = vmatpush1.msra.mxu0 %v3993
    %4061 = vmatprep.subr.mxu0 0.0
    %4062 = vmatpush1.msra.mxu0 %v3994
    %4063 = vmatprep.subr.mxu0 0.0
    %4064 = vmatpush1.msra.mxu0 %v3995
    %4065 = vmatprep.subr.mxu0 0.0
    %4066 = vmatpush1.msra.mxu0 %v3996
    %4067 = vmatprep.subr.mxu0 0.0
    %4068 = vmatpush1.msra.mxu0 %v3997
    %4069 = vmatprep.subr.mxu0 0.0
    %4070 = vmatpush1.msra.mxu0 %v3998
    %4071 = vmatprep.subr.mxu0 0.0
    %4072 = vmatpush1.msra.mxu0 %v3999
    %4073 = vmatprep.subr.mxu0 0.0
    %4074 = vmatpush1.msra.mxu0 %v4000
    %4075 = vmatprep.subr.mxu0 0.0
    %4076 = vmatpush1.msra.mxu0 %v4001
    %4077 = vmatprep.subr.mxu0 0.0
    %4078 = vmatpush1.msra.mxu0 %v4002
    %4079 = vmatprep.subr.mxu0 0.0
    %4080 = vmatpush1.msra.mxu0 %v4003
    %4081 = vmatprep.subr.mxu0 0.0
    %4082 = vmatpush1.msra.mxu0 %v4004
    %4083 = vmatprep.subr.mxu0 0.0
    %4084 = vmatpush1.msra.mxu0 %v4005
    %4085 = vmatprep.subr.mxu0 0.0
    %4086 = vmatpush1.msra.mxu0 %v4006
    %4087 = vmatprep.subr.mxu0 0.0
    %4088 = vmatpush1.msra.mxu0 %v4007
    %4089 = vmatprep.subr.mxu0 0.0
    %4090 = vmatpush1.msra.mxu0 %v4008
    %4091 = vmatprep.subr.mxu0 0.0
    %4092 = vmatpush1.msra.mxu0 %v4009
    %4093 = vmatprep.subr.mxu0 0.0
    %4094 = vmatpush1.msra.mxu0 %v4010
    %4095 = vmatprep.subr.mxu0 0.0
    %4096 = vmatpush1.msra.mxu0 %v4011
    %4097 = vmatprep.subr.mxu0 0.0
    %4098 = vmatpush1.msra.mxu0 %v4012
    %4099 = vmatprep.subr.mxu0 0.0
    %4100 = vmatpush1.msra.mxu0 %v4013
    %4101 = vmatprep.subr.mxu0 0.0
    %4102 = vmatpush1.msra.mxu0 %v4014
    %4103 = vmatprep.subr.mxu0 0.0
    %4104 = vmatpush1.msra.mxu0 %v4015
    %4105 = vmatprep.subr.mxu0 0.0
    %4106 = vmatpush1.msra.mxu0 %v4016
    %4107 = vmatprep.subr.mxu0 0.0
    %4108 = vmatpush1.msra.mxu0 %v4017
    %4109 = vmatprep.subr.mxu0 0.0
    %4110 = vmatpush1.msra.mxu0 %v4018
    %4111 = vmatprep.subr.mxu0 0.0
    %4112 = vmatpush1.msra.mxu0 %v4019
    %4113 = vmatprep.subr.mxu0 0.0
    %4114 = vmatpush1.msra.mxu0 %v4020
    %4115 = vmatprep.subr.mxu0 0.0
    %4116 = vmatpush1.msra.mxu0 %v4021
    %4117 = vmatprep.subr.mxu0 0.0
    %4118 = vmatpush1.msra.mxu0 %v4022
    %4119 = vmatprep.mubr.f32.mxu0 %v3834
    %4120 = vmatmul.mubr.f32.gmra.mrb[0].mxu0 %v3833
    %v4121 = vpop.f32.mrb[0].mxu0
    %v4122 = vadd.f32 0.0, %v4121
    %v4123 = vpop.f32.mrb[0].mxu0
    %4124 = vmatprep.mubr.f32.mxu0 %v3838
    %4125 = vmatmul.mubr.f32.gmra.mrb[0].mxu0 %v3837
    %v4126 = vpop.f32.mrb[0].mxu0
    %v4127 = vadd.f32 0.0, %v4126
    %v4128 = vpop.f32.mrb[0].mxu0
    %4129 = vdwg.mxu0
    %4130 = vmatprep.subr.mxu0 0.0
    %4131 = vmatpush1.msra.mxu0 %v4023
    %4132 = vmatprep.subr.mxu0 0.0
    %4133 = vmatpush1.msra.mxu0 %v4024
    %4134 = vmatprep.subr.mxu0 0.0
    %4135 = vmatpush1.msra.mxu0 %v4025
    %4136 = vmatprep.subr.mxu0 0.0
    %4137 = vmatpush1.msra.mxu0 %v4026
    %4138 = vmatprep.subr.mxu0 0.0
    %4139 = vmatpush1.msra.mxu0 %v4027
    %4140 = vmatprep.subr.mxu0 0.0
    %4141 = vmatpush1.msra.mxu0 %v4028
    %4142 = vmatprep.subr.mxu0 0.0
    %4143 = vmatpush1.msra.mxu0 %v4029
    %4144 = vmatprep.subr.mxu0 0.0
    %4145 = vmatpush1.msra.mxu0 %v4030
    %4146 = vmatprep.subr.mxu0 0.0
    %4147 = vmatpush1.msra.mxu0 %v4031
    %4148 = vmatprep.subr.mxu0 0.0
    %4149 = vmatpush1.msra.mxu0 %v4032
    %4150 = vmatprep.subr.mxu0 0.0
    %4151 = vmatpush1.msra.mxu0 %v4033
    %4152 = vmatprep.subr.mxu0 0.0
    %4153 = vmatpush1.msra.mxu0 %v4034
    %4154 = vmatprep.subr.mxu0 0.0
    %4155 = vmatpush1.msra.mxu0 %v4035
    %4156 = vmatprep.subr.mxu0 0.0
    %4157 = vmatpush1.msra.mxu0 %v4036
    %4158 = vmatprep.subr.mxu0 0.0
    %4159 = vmatpush1.msra.mxu0 %v4037
    %4160 = vmatprep.subr.mxu0 0.0
    %4161 = vmatpush1.msra.mxu0 %v4038
    %4162 = vmatprep.subr.mxu0 0.0
    %4163 = vmatpush1.msra.mxu0 %v4039
    %4164 = vmatprep.subr.mxu0 0.0
    %4165 = vmatpush1.msra.mxu0 %v4040
    %4166 = vmatprep.subr.mxu0 0.0
    %4167 = vmatpush1.msra.mxu0 %v4041
    %4168 = vmatprep.subr.mxu0 0.0
    %4169 = vmatpush1.msra.mxu0 %v4042
    %4170 = vmatprep.subr.mxu0 0.0
    %4171 = vmatpush1.msra.mxu0 %v4043
    %4172 = vmatprep.subr.mxu0 0.0
    %4173 = vmatpush1.msra.mxu0 %v4044
    %4174 = vmatprep.subr.mxu0 0.0
    %4175 = vmatpush1.msra.mxu0 %v4045
    %4176 = vmatprep.subr.mxu0 0.0
    %4177 = vmatpush1.msra.mxu0 %v4046
    %4178 = vmatprep.subr.mxu0 0.0
    %4179 = vmatpush1.msra.mxu0 %v4047
    %4180 = vmatprep.subr.mxu0 0.0
    %4181 = vmatpush1.msra.mxu0 %v4048
    %4182 = vmatprep.subr.mxu0 0.0
    %4183 = vmatpush1.msra.mxu0 %v4049
    %4184 = vmatprep.subr.mxu0 0.0
    %4185 = vmatpush1.msra.mxu0 %v4050
    %4186 = vmatprep.subr.mxu0 0.0
    %4187 = vmatpush1.msra.mxu0 %v4051
    %4188 = vmatprep.subr.mxu0 0.0
    %4189 = vmatpush1.msra.mxu0 %v4052
    %4190 = vmatprep.subr.mxu0 0.0
    %4191 = vmatpush1.msra.mxu0 %v4053
    %4192 = vmatprep.subr.mxu0 0.0
    %4193 = vmatpush1.msra.mxu0 %v4054
    %4194 = vmatprep.mubr.f32.mxu0 %v3836
    %4195 = vmatmul.mubr.f32.gmra.mrb[0].mxu0 %v3835
    %v4196 = vpop.f32.mrb[0].mxu0
    %v4197 = vadd.f32 %v4122, %v4196
    %v4198 = vpop.f32.mrb[0].mxu0
    %4199 = vmatprep.mubr.f32.mxu0 %v3840
    %4200 = vmatmul.mubr.f32.gmra.mrb[0].mxu0 %v3839
    %v4201 = vpop.f32.mrb[0].mxu0
    %v4202 = vadd.f32 %v4127, %v4201
    %v4203 = vpop.f32.mrb[0].mxu0
    %4204 = vdwg.mxu0
    %v4205 = vmul.f32 %v3983, %v3983
    %v4206 = vmul.f32 %v3988, %v3988
    %v4207 = vsub.f32 %v4197, %v4205
    %v4208 = vsub.f32 %v4202, %v4206
    %v4209 = vmax.f32 %v4207, 0.0
    %v4210 = vmax.f32 %v4208, 0.0
    %v4211 = vld [vmem:[%s9] sm:$0xff]
    %v4212 = vld [vmem:[%s9 + $0x8] sm:$0xff]
    %v4213 = vadd.f32 %v4209, 1e-05
    %v4214 = vadd.f32 %v4210, 1e-05
    %v4215 = vrsqrt.pop %v4213
    %v4216 = vrsqrt.pop %v4214
    %4218 = vset.pattern.permute.xlu0 0
    %4219 = vperm.xlu0 %4218, %v4211
    %v4220 = vpop.permute.xlu0 %4219
    %4223 = vset.pattern.permute.xlu0 0
    %4224 = vperm.xlu0 %4223, %v4212
    %v4225 = vpop.permute.xlu0 %4224
    %v4227 = vmul.f32 %v4220, %v4215
    %v4228 = vmul.f32 %v4225, %v4216
    %v4229 = vld [vmem:[%s10] sm:$0xff]
    %v4230 = vld [vmem:[%s10 + $0x8] sm:$0xff]
    %v4231 = vmul.f32 %v3983, %v4227
    %v4232 = vmul.f32 %v3988, %v4228
    %4234 = vset.pattern.permute.xlu0 0
    %4235 = vperm.xlu0 %4234, %v4229
    %v4236 = vpop.permute.xlu0 %4235
    %4239 = vset.pattern.permute.xlu0 0
    %4240 = vperm.xlu0 %4239, %v4230
    %v4241 = vpop.permute.xlu0 %4240
    %v4243 = vsub.f32 %v4236, %v4231
    %v4244 = vsub.f32 %v4241, %v4232
    %v4245 = vld [vmem:[%s8] sm:$0xff]
    %v4246 = vld [vmem:[%s8 + $0x8] sm:$0xff]
    %v4247 = vld [vmem:[%s8 + $0x10] sm:$0xff]
    %v4248 = vld [vmem:[%s8 + $0x18] sm:$0xff]
    %v4249 = vld [vmem:[%s8 + $0x20] sm:$0xff]
    %v4250 = vld [vmem:[%s8 + $0x28] sm:$0xff]
    %v4251 = vld [vmem:[%s8 + $0x30] sm:$0xff]
    %v4252 = vld [vmem:[%s8 + $0x38] sm:$0xff]
    %v4253 = vld [vmem:[%s8 + $0x40] sm:$0xff]
    %v4254 = vld [vmem:[%s8 + $0x48] sm:$0xff]
    %v4255 = vld [vmem:[%s8 + $0x50] sm:$0xff]
    %v4256 = vld [vmem:[%s8 + $0x58] sm:$0xff]
    %v4257 = vld [vmem:[%s8 + $0x60] sm:$0xff]
    %v4258 = vld [vmem:[%s8 + $0x68] sm:$0xff]
    %v4259 = vld [vmem:[%s8 + $0x70] sm:$0xff]
    %v4260 = vld [vmem:[%s8 + $0x78] sm:$0xff]
    %v4261 = vld [vmem:[%s8 + $0x80] sm:$0xff]
    %v4262 = vld [vmem:[%s8 + $0x88] sm:$0xff]
    %v4263 = vld [vmem:[%s8 + $0x90] sm:$0xff]
    %v4264 = vld [vmem:[%s8 + $0x98] sm:$0xff]
    %v4265 = vld [vmem:[%s8 + $0xa0] sm:$0xff]
    %v4266 = vld [vmem:[%s8 + $0xa8] sm:$0xff]
    %v4267 = vld [vmem:[%s8 + $0xb0] sm:$0xff]
    %v4268 = vld [vmem:[%s8 + $0xb8] sm:$0xff]
    %v4269 = vld [vmem:[%s8 + $0xc0] sm:$0xff]
    %v4270 = vld [vmem:[%s8 + $0xc8] sm:$0xff]
    %v4271 = vld [vmem:[%s8 + $0xd0] sm:$0xff]
    %v4272 = vld [vmem:[%s8 + $0xd8] sm:$0xff]
    %v4273 = vld [vmem:[%s8 + $0xe0] sm:$0xff]
    %v4274 = vld [vmem:[%s8 + $0xe8] sm:$0xff]
    %v4275 = vld [vmem:[%s8 + $0xf0] sm:$0xff]
    %v4276 = vld [vmem:[%s8 + $0xf8] sm:$0xff]
    %v4277 = vld [vmem:[%s8 + $0x100] sm:$0xff]
    %v4278 = vld [vmem:[%s8 + $0x108] sm:$0xff]
    %v4279 = vld [vmem:[%s8 + $0x110] sm:$0xff]
    %v4280 = vld [vmem:[%s8 + $0x118] sm:$0xff]
    %v4281 = vld [vmem:[%s8 + $0x120] sm:$0xff]
    %v4282 = vld [vmem:[%s8 + $0x128] sm:$0xff]
    %v4283 = vld [vmem:[%s8 + $0x130] sm:$0xff]
    %v4284 = vld [vmem:[%s8 + $0x138] sm:$0xff]
    %v4285 = vld [vmem:[%s8 + $0x140] sm:$0xff]
    %v4286 = vld [vmem:[%s8 + $0x148] sm:$0xff]
    %v4287 = vld [vmem:[%s8 + $0x150] sm:$0xff]
    %v4288 = vld [vmem:[%s8 + $0x158] sm:$0xff]
    %v4289 = vld [vmem:[%s8 + $0x160] sm:$0xff]
    %v4290 = vld [vmem:[%s8 + $0x168] sm:$0xff]
    %v4291 = vld [vmem:[%s8 + $0x170] sm:$0xff]
    %v4292 = vld [vmem:[%s8 + $0x178] sm:$0xff]
    %v4293 = vld [vmem:[%s8 + $0x180] sm:$0xff]
    %v4294 = vld [vmem:[%s8 + $0x188] sm:$0xff]
    %v4295 = vld [vmem:[%s8 + $0x190] sm:$0xff]
    %v4296 = vld [vmem:[%s8 + $0x198] sm:$0xff]
    %v4297 = vld [vmem:[%s8 + $0x1a0] sm:$0xff]
    %v4298 = vld [vmem:[%s8 + $0x1a8] sm:$0xff]
    %v4299 = vld [vmem:[%s8 + $0x1b0] sm:$0xff]
    %v4300 = vld [vmem:[%s8 + $0x1b8] sm:$0xff]
    %v4301 = vld [vmem:[%s8 + $0x1c0] sm:$0xff]
    %v4302 = vld [vmem:[%s8 + $0x1c8] sm:$0xff]
    %v4303 = vld [vmem:[%s8 + $0x1d0] sm:$0xff]
    %v4304 = vld [vmem:[%s8 + $0x1d8] sm:$0xff]
    %v4305 = vld [vmem:[%s8 + $0x1e0] sm:$0xff]
    %v4306 = vld [vmem:[%s8 + $0x1e8] sm:$0xff]
    %v4307 = vld [vmem:[%s8 + $0x1f0] sm:$0xff]
    %v4308 = vld [vmem:[%s8 + $0x1f8] sm:$0xff]
    %vm4309 = vcmask 130048
    %v4311 = vsel %vm4309, %v4245, 0
    %v4314 = vsel %vm4309, %v4246, 0
    %v4317 = vsel %vm4309, %v4247, 0
    %v4320 = vsel %vm4309, %v4248, 0
    %v4323 = vsel %vm4309, %v4249, 0
    %v4326 = vsel %vm4309, %v4250, 0
    %v4329 = vsel %vm4309, %v4251, 0
    %v4332 = vsel %vm4309, %v4252, 0
    %v4335 = vsel %vm4309, %v4253, 0
    %v4338 = vsel %vm4309, %v4254, 0
    %v4341 = vsel %vm4309, %v4255, 0
    %v4344 = vsel %vm4309, %v4256, 0
    %v4347 = vsel %vm4309, %v4257, 0
    %v4350 = vsel %vm4309, %v4258, 0
    %v4353 = vsel %vm4309, %v4259, 0
    %v4356 = vsel %vm4309, %v4260, 0
    %v4359 = vsel %vm4309, %v4261, 0
    %v4362 = vsel %vm4309, %v4262, 0
    %v4365 = vsel %vm4309, %v4263, 0
    %v4368 = vsel %vm4309, %v4264, 0
    %v4371 = vsel %vm4309, %v4265, 0
    %v4374 = vsel %vm4309, %v4266, 0
    %v4377 = vsel %vm4309, %v4267, 0
    %v4380 = vsel %vm4309, %v4268, 0
    %v4383 = vsel %vm4309, %v4269, 0
    %v4386 = vsel %vm4309, %v4270, 0
    %v4389 = vsel %vm4309, %v4271, 0
    %v4392 = vsel %vm4309, %v4272, 0
    %v4395 = vsel %vm4309, %v4273, 0
    %v4398 = vsel %vm4309, %v4274, 0
    %v4401 = vsel %vm4309, %v4275, 0
    %v4404 = vsel %vm4309, %v4276, 0
    %v4407 = vsel %vm4309, %v4277, 0
    %v4410 = vsel %vm4309, %v4278, 0
    %v4413 = vsel %vm4309, %v4279, 0
    %v4416 = vsel %vm4309, %v4280, 0
    %v4419 = vsel %vm4309, %v4281, 0
    %v4422 = vsel %vm4309, %v4282, 0
    %v4425 = vsel %vm4309, %v4283, 0
    %v4428 = vsel %vm4309, %v4284, 0
    %v4431 = vsel %vm4309, %v4285, 0
    %v4434 = vsel %vm4309, %v4286, 0
    %v4437 = vsel %vm4309, %v4287, 0
    %v4440 = vsel %vm4309, %v4288, 0
    %v4443 = vsel %vm4309, %v4289, 0
    %v4446 = vsel %vm4309, %v4290, 0
    %v4449 = vsel %vm4309, %v4291, 0
    %v4452 = vsel %vm4309, %v4292, 0
    %v4455 = vsel %vm4309, %v4293, 0
    %v4458 = vsel %vm4309, %v4294, 0
    %v4461 = vsel %vm4309, %v4295, 0
    %v4464 = vsel %vm4309, %v4296, 0
    %v4467 = vsel %vm4309, %v4297, 0
    %v4470 = vsel %vm4309, %v4298, 0
    %v4473 = vsel %vm4309, %v4299, 0
    %v4476 = vsel %vm4309, %v4300, 0
    %v4479 = vsel %vm4309, %v4301, 0
    %v4482 = vsel %vm4309, %v4302, 0
    %v4485 = vsel %vm4309, %v4303, 0
    %v4488 = vsel %vm4309, %v4304, 0
    %v4491 = vsel %vm4309, %v4305, 0
    %v4494 = vsel %vm4309, %v4306, 0
    %v4497 = vsel %vm4309, %v4307, 0
    %v4500 = vsel %vm4309, %v4308, 0
    %4502 = vmatprep.subr.mxu0 0.0
    %4503 = vmatpush1.msra.mxu0 %v4227
    %4504 = vmatprep.subr.mxu0 0.0
    %4505 = vmatpush1.msra.mxu0 %v4228
    %4506 = vmatprep.subr.mxu0 0.0
    %4507 = vmatpush1.msra.mxu0 0.0
    %4508 = vmatprep.subr.mxu0 0.0
    %4509 = vmatpush1.msra.mxu0 0.0
    %4510 = vmatprep.subr.mxu0 0.0
    %4511 = vmatpush1.msra.mxu0 0.0
    %4512 = vmatprep.subr.mxu0 0.0
    %4513 = vmatpush1.msra.mxu0 0.0
    %4514 = vmatprep.subr.mxu0 0.0
    %4515 = vmatpush1.msra.mxu0 0.0
    %4516 = vmatprep.subr.mxu0 0.0
    %4517 = vmatpush1.msra.mxu0 0.0
    %4518 = vmatprep.subr.mxu0 0.0
    %4519 = vmatpush1.msra.mxu0 0.0
    %4520 = vmatprep.subr.mxu0 0.0
    %4521 = vmatpush1.msra.mxu0 0.0
    %4522 = vmatprep.subr.mxu0 0.0
    %4523 = vmatpush1.msra.mxu0 0.0
    %4524 = vmatprep.subr.mxu0 0.0
    %4525 = vmatpush1.msra.mxu0 0.0
    %4526 = vmatprep.subr.mxu0 0.0
    %4527 = vmatpush1.msra.mxu0 0.0
    %4528 = vmatprep.subr.mxu0 0.0
    %4529 = vmatpush1.msra.mxu0 0.0
    %4530 = vmatprep.subr.mxu0 0.0
    %4531 = vmatpush1.msra.mxu0 0.0
    %4532 = vmatprep.subr.mxu0 0.0
    %4533 = vmatpush1.msra.mxu0 0.0
    %4534 = vmatprep.subr.mxu0 0.0
    %4535 = vmatpush1.msra.mxu0 0.0
    %4536 = vmatprep.subr.mxu0 0.0
    %4537 = vmatpush1.msra.mxu0 0.0
    %4538 = vmatprep.subr.mxu0 0.0
    %4539 = vmatpush1.msra.mxu0 0.0
    %4540 = vmatprep.subr.mxu0 0.0
    %4541 = vmatpush1.msra.mxu0 0.0
    %4542 = vmatprep.subr.mxu0 0.0
    %4543 = vmatpush1.msra.mxu0 0.0
    %4544 = vmatprep.subr.mxu0 0.0
    %4545 = vmatpush1.msra.mxu0 0.0
    %4546 = vmatprep.subr.mxu0 0.0
    %4547 = vmatpush1.msra.mxu0 0.0
    %4548 = vmatprep.subr.mxu0 0.0
    %4549 = vmatpush1.msra.mxu0 0.0
    %4550 = vmatprep.subr.mxu0 0.0
    %4551 = vmatpush1.msra.mxu0 0.0
    %4552 = vmatprep.subr.mxu0 0.0
    %4553 = vmatpush1.msra.mxu0 0.0
    %4554 = vmatprep.subr.mxu0 0.0
    %4555 = vmatpush1.msra.mxu0 0.0
    %4556 = vmatprep.subr.mxu0 0.0
    %4557 = vmatpush1.msra.mxu0 0.0
    %4558 = vmatprep.subr.mxu0 0.0
    %4559 = vmatpush1.msra.mxu0 0.0
    %4560 = vmatprep.subr.mxu0 0.0
    %4561 = vmatpush1.msra.mxu0 0.0
    %4562 = vmatprep.subr.mxu0 0.0
    %4563 = vmatpush1.msra.mxu0 0.0
    %4564 = vmatprep.subr.mxu0 0.0
    %4565 = vmatpush1.msra.mxu0 0.0
    %4566 = vmatprep.mubr.f32.mxu0 0.0
    %4567 = vmatmul.mubr.f32.gmra.mrb[0].mxu0 %v4311
    %v4568 = vpop.f32.mrb[0].mxu0
    %v4569 = vadd.f32 0.0, %v4568
    %v4570 = vpop.f32.mrb[0].mxu0
    %4571 = vmatprep.mubr.f32.mxu0 0.0
    %4572 = vmatmul.mubr.f32.gmra.mrb[0].mxu0 %v4314
    %v4573 = vpop.f32.mrb[0].mxu0
    %v4574 = vadd.f32 0.0, %v4573
    %v4575 = vpop.f32.mrb[0].mxu0
    %4576 = vmatprep.mubr.f32.mxu0 0.0
    %4577 = vmatmul.mubr.f32.gmra.mrb[0].mxu0 %v4317
    %v4578 = vpop.f32.mrb[0].mxu0
    %v4579 = vadd.f32 0.0, %v4578
    %v4580 = vpop.f32.mrb[0].mxu0
    %4581 = vmatprep.mubr.f32.mxu0 0.0
    %4582 = vmatmul.mubr.f32.gmra.mrb[0].mxu0 %v4320
    %v4583 = vpop.f32.mrb[0].mxu0
    %v4584 = vadd.f32 0.0, %v4583
    %v4585 = vpop.f32.mrb[0].mxu0
    %4586 = vmatprep.mubr.f32.mxu0 0.0
    %4587 = vmatmul.mubr.f32.gmra.mrb[0].mxu0 %v4323
    %v4588 = vpop.f32.mrb[0].mxu0
    %v4589 = vadd.f32 0.0, %v4588
    %v4590 = vpop.f32.mrb[0].mxu0
    %4591 = vmatprep.mubr.f32.mxu0 0.0
    %4592 = vmatmul.mubr.f32.gmra.mrb[0].mxu0 %v4326
    %v4593 = vpop.f32.mrb[0].mxu0
    %v4594 = vadd.f32 0.0, %v4593
    %v4595 = vpop.f32.mrb[0].mxu0
    %4596 = vmatprep.mubr.f32.mxu0 0.0
    %4597 = vmatmul.mubr.f32.gmra.mrb[0].mxu0 %v4329
    %v4598 = vpop.f32.mrb[0].mxu0
    %v4599 = vadd.f32 0.0, %v4598
    %v4600 = vpop.f32.mrb[0].mxu0
    %4601 = vmatprep.mubr.f32.mxu0 0.0
    %4602 = vmatmul.mubr.f32.gmra.mrb[0].mxu0 %v4332
    %v4603 = vpop.f32.mrb[0].mxu0
    %v4604 = vadd.f32 0.0, %v4603
    %v4605 = vpop.f32.mrb[0].mxu0
    %4606 = vmatprep.mubr.f32.mxu0 0.0
    %4607 = vmatmul.mubr.f32.gmra.mrb[0].mxu0 %v4335
    %v4608 = vpop.f32.mrb[0].mxu0
    %v4609 = vadd.f32 0.0, %v4608
    %v4610 = vpop.f32.mrb[0].mxu0
    %4611 = vmatprep.mubr.f32.mxu0 0.0
    %4612 = vmatmul.mubr.f32.gmra.mrb[0].mxu0 %v4338
    %v4613 = vpop.f32.mrb[0].mxu0
    %v4614 = vadd.f32 0.0, %v4613
    %v4615 = vpop.f32.mrb[0].mxu0
    %4616 = vmatprep.mubr.f32.mxu0 0.0
    %4617 = vmatmul.mubr.f32.gmra.mrb[0].mxu0 %v4341
    %v4618 = vpop.f32.mrb[0].mxu0
    %v4619 = vadd.f32 0.0, %v4618
    %v4620 = vpop.f32.mrb[0].mxu0
    %4621 = vmatprep.mubr.f32.mxu0 0.0
    %4622 = vmatmul.mubr.f32.gmra.mrb[0].mxu0 %v4344
    %v4623 = vpop.f32.mrb[0].mxu0
    %v4624 = vadd.f32 0.0, %v4623
    %v4625 = vpop.f32.mrb[0].mxu0
    %4626 = vmatprep.mubr.f32.mxu0 0.0
    %4627 = vmatmul.mubr.f32.gmra.mrb[0].mxu0 %v4347
    %v4628 = vpop.f32.mrb[0].mxu0
    %v4629 = vadd.f32 0.0, %v4628
    %v4630 = vpop.f32.mrb[0].mxu0
    %4631 = vmatprep.mubr.f32.mxu0 0.0
    %4632 = vmatmul.mubr.f32.gmra.mrb[0].mxu0 %v4350
    %v4633 = vpop.f32.mrb[0].mxu0
    %v4634 = vadd.f32 0.0, %v4633
    %v4635 = vpop.f32.mrb[0].mxu0
    %4636 = vmatprep.mubr.f32.mxu0 0.0
    %4637 = vmatmul.mubr.f32.gmra.mrb[0].mxu0 %v4353
    %v4638 = vpop.f32.mrb[0].mxu0
    %v4639 = vadd.f32 0.0, %v4638
    %v4640 = vpop.f32.mrb[0].mxu0
    %4641 = vmatprep.mubr.f32.mxu0 0.0
    %4642 = vmatmul.mubr.f32.gmra.mrb[0].mxu0 %v4356
    %v4643 = vpop.f32.mrb[0].mxu0
    %v4644 = vadd.f32 0.0, %v4643
    %v4645 = vpop.f32.mrb[0].mxu0
    %4646 = vmatprep.mubr.f32.mxu0 0.0
    %4647 = vmatmul.mubr.f32.gmra.mrb[0].mxu0 %v4359
    %v4648 = vpop.f32.mrb[0].mxu0
    %v4649 = vadd.f32 0.0, %v4648
    %v4650 = vpop.f32.mrb[0].mxu0
    %4651 = vmatprep.mubr.f32.mxu0 0.0
    %4652 = vmatmul.mubr.f32.gmra.mrb[0].mxu0 %v4362
    %v4653 = vpop.f32.mrb[0].mxu0
    %v4654 = vadd.f32 0.0, %v4653
    %v4655 = vpop.f32.mrb[0].mxu0
    %4656 = vmatprep.mubr.f32.mxu0 0.0
    %4657 = vmatmul.mubr.f32.gmra.mrb[0].mxu0 %v4365
    %v4658 = vpop.f32.mrb[0].mxu0
    %v4659 = vadd.f32 0.0, %v4658
    %v4660 = vpop.f32.mrb[0].mxu0
    %4661 = vmatprep.mubr.f32.mxu0 0.0
    %4662 = vmatmul.mubr.f32.gmra.mrb[0].mxu0 %v4368
    %v4663 = vpop.f32.mrb[0].mxu0
    %v4664 = vadd.f32 0.0, %v4663
    %v4665 = vpop.f32.mrb[0].mxu0
    %4666 = vmatprep.mubr.f32.mxu0 0.0
    %4667 = vmatmul.mubr.f32.gmra.mrb[0].mxu0 %v4371
    %v4668 = vpop.f32.mrb[0].mxu0
    %v4669 = vadd.f32 0.0, %v4668
    %v4670 = vpop.f32.mrb[0].mxu0
    %4671 = vmatprep.mubr.f32.mxu0 0.0
    %4672 = vmatmul.mubr.f32.gmra.mrb[0].mxu0 %v4374
    %v4673 = vpop.f32.mrb[0].mxu0
    %v4674 = vadd.f32 0.0, %v4673
    %v4675 = vpop.f32.mrb[0].mxu0
    %4676 = vmatprep.mubr.f32.mxu0 0.0
    %4677 = vmatmul.mubr.f32.gmra.mrb[0].mxu0 %v4377
    %v4678 = vpop.f32.mrb[0].mxu0
    %v4679 = vadd.f32 0.0, %v4678
    %v4680 = vpop.f32.mrb[0].mxu0
    %4681 = vmatprep.mubr.f32.mxu0 0.0
    %4682 = vmatmul.mubr.f32.gmra.mrb[0].mxu0 %v4380
    %v4683 = vpop.f32.mrb[0].mxu0
    %v4684 = vadd.f32 0.0, %v4683
    %v4685 = vpop.f32.mrb[0].mxu0
    %4686 = vmatprep.mubr.f32.mxu0 0.0
    %4687 = vmatmul.mubr.f32.gmra.mrb[0].mxu0 %v4383
    %v4688 = vpop.f32.mrb[0].mxu0
    %v4689 = vadd.f32 0.0, %v4688
    %v4690 = vpop.f32.mrb[0].mxu0
    %4691 = vmatprep.mubr.f32.mxu0 0.0
    %4692 = vmatmul.mubr.f32.gmra.mrb[0].mxu0 %v4386
    %v4693 = vpop.f32.mrb[0].mxu0
    %v4694 = vadd.f32 0.0, %v4693
    %v4695 = vpop.f32.mrb[0].mxu0
    %4696 = vmatprep.mubr.f32.mxu0 0.0
    %4697 = vmatmul.mubr.f32.gmra.mrb[0].mxu0 %v4389
    %v4698 = vpop.f32.mrb[0].mxu0
    %v4699 = vadd.f32 0.0, %v4698
    %v4700 = vpop.f32.mrb[0].mxu0
    %4701 = vmatprep.mubr.f32.mxu0 0.0
    %4702 = vmatmul.mubr.f32.gmra.mrb[0].mxu0 %v4392
    %v4703 = vpop.f32.mrb[0].mxu0
    %v4704 = vadd.f32 0.0, %v4703
    %v4705 = vpop.f32.mrb[0].mxu0
    %4706 = vmatprep.mubr.f32.mxu0 0.0
    %4707 = vmatmul.mubr.f32.gmra.mrb[0].mxu0 %v4395
    %v4708 = vpop.f32.mrb[0].mxu0
    %v4709 = vadd.f32 0.0, %v4708
    %v4710 = vpop.f32.mrb[0].mxu0
    %4711 = vmatprep.mubr.f32.mxu0 0.0
    %4712 = vmatmul.mubr.f32.gmra.mrb[0].mxu0 %v4398
    %v4713 = vpop.f32.mrb[0].mxu0
    %v4714 = vadd.f32 0.0, %v4713
    %v4715 = vpop.f32.mrb[0].mxu0
    %4716 = vmatprep.mubr.f32.mxu0 0.0
    %4717 = vmatmul.mubr.f32.gmra.mrb[0].mxu0 %v4401
    %v4718 = vpop.f32.mrb[0].mxu0
    %v4719 = vadd.f32 0.0, %v4718
    %v4720 = vpop.f32.mrb[0].mxu0
    %4721 = vmatprep.mubr.f32.mxu0 0.0
    %4722 = vmatmul.mubr.f32.gmra.mrb[0].mxu0 %v4404
    %v4723 = vpop.f32.mrb[0].mxu0
    %v4724 = vadd.f32 0.0, %v4723
    %v4725 = vpop.f32.mrb[0].mxu0
    %4726 = vmatprep.mubr.f32.mxu0 0.0
    %4727 = vmatmul.mubr.f32.gmra.mrb[0].mxu0 %v4407
    %v4728 = vpop.f32.mrb[0].mxu0
    %v4729 = vadd.f32 0.0, %v4728
    %v4730 = vpop.f32.mrb[0].mxu0
    %4731 = vmatprep.mubr.f32.mxu0 0.0
    %4732 = vmatmul.mubr.f32.gmra.mrb[0].mxu0 %v4410
    %v4733 = vpop.f32.mrb[0].mxu0
    %v4734 = vadd.f32 0.0, %v4733
    %v4735 = vpop.f32.mrb[0].mxu0
    %4736 = vmatprep.mubr.f32.mxu0 0.0
    %4737 = vmatmul.mubr.f32.gmra.mrb[0].mxu0 %v4413
    %v4738 = vpop.f32.mrb[0].mxu0
    %v4739 = vadd.f32 0.0, %v4738
    %v4740 = vpop.f32.mrb[0].mxu0
    %4741 = vmatprep.mubr.f32.mxu0 0.0
    %4742 = vmatmul.mubr.f32.gmra.mrb[0].mxu0 %v4416
    %v4743 = vpop.f32.mrb[0].mxu0
    %v4744 = vadd.f32 0.0, %v4743
    %v4745 = vpop.f32.mrb[0].mxu0
    %4746 = vmatprep.mubr.f32.mxu0 0.0
    %4747 = vmatmul.mubr.f32.gmra.mrb[0].mxu0 %v4419
    %v4748 = vpop.f32.mrb[0].mxu0
    %v4749 = vadd.f32 0.0, %v4748
    %v4750 = vpop.f32.mrb[0].mxu0
    %4751 = vmatprep.mubr.f32.mxu0 0.0
    %4752 = vmatmul.mubr.f32.gmra.mrb[0].mxu0 %v4422
    %v4753 = vpop.f32.mrb[0].mxu0
    %v4754 = vadd.f32 0.0, %v4753
    %v4755 = vpop.f32.mrb[0].mxu0
    %4756 = vmatprep.mubr.f32.mxu0 0.0
    %4757 = vmatmul.mubr.f32.gmra.mrb[0].mxu0 %v4425
    %v4758 = vpop.f32.mrb[0].mxu0
    %v4759 = vadd.f32 0.0, %v4758
    %v4760 = vpop.f32.mrb[0].mxu0
    %4761 = vmatprep.mubr.f32.mxu0 0.0
    %4762 = vmatmul.mubr.f32.gmra.mrb[0].mxu0 %v4428
    %v4763 = vpop.f32.mrb[0].mxu0
    %v4764 = vadd.f32 0.0, %v4763
    %v4765 = vpop.f32.mrb[0].mxu0
    %4766 = vmatprep.mubr.f32.mxu0 0.0
    %4767 = vmatmul.mubr.f32.gmra.mrb[0].mxu0 %v4431
    %v4768 = vpop.f32.mrb[0].mxu0
    %v4769 = vadd.f32 0.0, %v4768
    %v4770 = vpop.f32.mrb[0].mxu0
    %4771 = vmatprep.mubr.f32.mxu0 0.0
    %4772 = vmatmul.mubr.f32.gmra.mrb[0].mxu0 %v4434
    %v4773 = vpop.f32.mrb[0].mxu0
    %v4774 = vadd.f32 0.0, %v4773
    %v4775 = vpop.f32.mrb[0].mxu0
    %4776 = vmatprep.mubr.f32.mxu0 0.0
    %4777 = vmatmul.mubr.f32.gmra.mrb[0].mxu0 %v4437
    %v4778 = vpop.f32.mrb[0].mxu0
    %v4779 = vadd.f32 0.0, %v4778
    %v4780 = vpop.f32.mrb[0].mxu0
    %4781 = vmatprep.mubr.f32.mxu0 0.0
    %4782 = vmatmul.mubr.f32.gmra.mrb[0].mxu0 %v4440
    %v4783 = vpop.f32.mrb[0].mxu0
    %v4784 = vadd.f32 0.0, %v4783
    %v4785 = vpop.f32.mrb[0].mxu0
    %4786 = vmatprep.mubr.f32.mxu0 0.0
    %4787 = vmatmul.mubr.f32.gmra.mrb[0].mxu0 %v4443
    %v4788 = vpop.f32.mrb[0].mxu0
    %v4789 = vadd.f32 0.0, %v4788
    %v4790 = vpop.f32.mrb[0].mxu0
    %4791 = vmatprep.mubr.f32.mxu0 0.0
    %4792 = vmatmul.mubr.f32.gmra.mrb[0].mxu0 %v4446
    %v4793 = vpop.f32.mrb[0].mxu0
    %v4794 = vadd.f32 0.0, %v4793
    %v4795 = vpop.f32.mrb[0].mxu0
    %4796 = vmatprep.mubr.f32.mxu0 0.0
    %4797 = vmatmul.mubr.f32.gmra.mrb[0].mxu0 %v4449
    %v4798 = vpop.f32.mrb[0].mxu0
    %v4799 = vadd.f32 0.0, %v4798
    %v4800 = vpop.f32.mrb[0].mxu0
    %4801 = vmatprep.mubr.f32.mxu0 0.0
    %4802 = vmatmul.mubr.f32.gmra.mrb[0].mxu0 %v4452
    %v4803 = vpop.f32.mrb[0].mxu0
    %v4804 = vadd.f32 0.0, %v4803
    %v4805 = vpop.f32.mrb[0].mxu0
    %4806 = vmatprep.mubr.f32.mxu0 0.0
    %4807 = vmatmul.mubr.f32.gmra.mrb[0].mxu0 %v4455
    %v4808 = vpop.f32.mrb[0].mxu0
    %v4809 = vadd.f32 0.0, %v4808
    %v4810 = vpop.f32.mrb[0].mxu0
    %4811 = vmatprep.mubr.f32.mxu0 0.0
    %4812 = vmatmul.mubr.f32.gmra.mrb[0].mxu0 %v4458
    %v4813 = vpop.f32.mrb[0].mxu0
    %v4814 = vadd.f32 0.0, %v4813
    %v4815 = vpop.f32.mrb[0].mxu0
    %4816 = vmatprep.mubr.f32.mxu0 0.0
    %4817 = vmatmul.mubr.f32.gmra.mrb[0].mxu0 %v4461
    %v4818 = vpop.f32.mrb[0].mxu0
    %v4819 = vadd.f32 0.0, %v4818
    %v4820 = vpop.f32.mrb[0].mxu0
    %4821 = vmatprep.mubr.f32.mxu0 0.0
    %4822 = vmatmul.mubr.f32.gmra.mrb[0].mxu0 %v4464
    %v4823 = vpop.f32.mrb[0].mxu0
    %v4824 = vadd.f32 0.0, %v4823
    %v4825 = vpop.f32.mrb[0].mxu0
    %4826 = vmatprep.mubr.f32.mxu0 0.0
    %4827 = vmatmul.mubr.f32.gmra.mrb[0].mxu0 %v4467
    %v4828 = vpop.f32.mrb[0].mxu0
    %v4829 = vadd.f32 0.0, %v4828
    %v4830 = vpop.f32.mrb[0].mxu0
    %4831 = vmatprep.mubr.f32.mxu0 0.0
    %4832 = vmatmul.mubr.f32.gmra.mrb[0].mxu0 %v4470
    %v4833 = vpop.f32.mrb[0].mxu0
    %v4834 = vadd.f32 0.0, %v4833
    %v4835 = vpop.f32.mrb[0].mxu0
    %4836 = vmatprep.mubr.f32.mxu0 0.0
    %4837 = vmatmul.mubr.f32.gmra.mrb[0].mxu0 %v4473
    %v4838 = vpop.f32.mrb[0].mxu0
    %v4839 = vadd.f32 0.0, %v4838
    %v4840 = vpop.f32.mrb[0].mxu0
    %4841 = vmatprep.mubr.f32.mxu0 0.0
    %4842 = vmatmul.mubr.f32.gmra.mrb[0].mxu0 %v4476
    %v4843 = vpop.f32.mrb[0].mxu0
    %v4844 = vadd.f32 0.0, %v4843
    %v4845 = vpop.f32.mrb[0].mxu0
    %4846 = vmatprep.mubr.f32.mxu0 0.0
    %4847 = vmatmul.mubr.f32.gmra.mrb[0].mxu0 %v4479
    %v4848 = vpop.f32.mrb[0].mxu0
    %v4849 = vadd.f32 0.0, %v4848
    %v4850 = vpop.f32.mrb[0].mxu0
    %4851 = vmatprep.mubr.f32.mxu0 0.0
    %4852 = vmatmul.mubr.f32.gmra.mrb[0].mxu0 %v4482
    %v4853 = vpop.f32.mrb[0].mxu0
    %v4854 = vadd.f32 0.0, %v4853
    %v4855 = vpop.f32.mrb[0].mxu0
    %4856 = vmatprep.mubr.f32.mxu0 0.0
    %4857 = vmatmul.mubr.f32.gmra.mrb[0].mxu0 %v4485
    %v4858 = vpop.f32.mrb[0].mxu0
    %v4859 = vadd.f32 0.0, %v4858
    %v4860 = vpop.f32.mrb[0].mxu0
    %4861 = vmatprep.mubr.f32.mxu0 0.0
    %4862 = vmatmul.mubr.f32.gmra.mrb[0].mxu0 %v4488
    %v4863 = vpop.f32.mrb[0].mxu0
    %v4864 = vadd.f32 0.0, %v4863
    %v4865 = vpop.f32.mrb[0].mxu0
    %4866 = vmatprep.mubr.f32.mxu0 0.0
    %4867 = vmatmul.mubr.f32.gmra.mrb[0].mxu0 %v4491
    %v4868 = vpop.f32.mrb[0].mxu0
    %v4869 = vadd.f32 0.0, %v4868
    %v4870 = vpop.f32.mrb[0].mxu0
    %4871 = vmatprep.mubr.f32.mxu0 0.0
    %4872 = vmatmul.mubr.f32.gmra.mrb[0].mxu0 %v4494
    %v4873 = vpop.f32.mrb[0].mxu0
    %v4874 = vadd.f32 0.0, %v4873
    %v4875 = vpop.f32.mrb[0].mxu0
    %4876 = vmatprep.mubr.f32.mxu0 0.0
    %4877 = vmatmul.mubr.f32.gmra.mrb[0].mxu0 %v4497
    %v4878 = vpop.f32.mrb[0].mxu0
    %v4879 = vadd.f32 0.0, %v4878
    %v4880 = vpop.f32.mrb[0].mxu0
    %4881 = vmatprep.mubr.f32.mxu0 0.0
    %4882 = vmatmul.mubr.f32.gmra.mrb[0].mxu0 %v4500
    %v4883 = vpop.f32.mrb[0].mxu0
    %v4884 = vadd.f32 0.0, %v4883
    %v4885 = vpop.f32.mrb[0].mxu0
    %4886 = vdwg.mxu0
    %4887 = vmatprep.subr.mxu0 0.0
    %4888 = vmatpush1.msra.mxu0 %v4243
    %4889 = vmatprep.subr.mxu0 0.0
    %4890 = vmatpush1.msra.mxu0 %v4244
    %4891 = vmatprep.subr.mxu0 0.0
    %4892 = vmatpush1.msra.mxu0 0.0
    %4893 = vmatprep.subr.mxu0 0.0
    %4894 = vmatpush1.msra.mxu0 0.0
    %4895 = vmatprep.subr.mxu0 0.0
    %4896 = vmatpush1.msra.mxu0 0.0
    %4897 = vmatprep.subr.mxu0 0.0
    %4898 = vmatpush1.msra.mxu0 0.0
    %4899 = vmatprep.subr.mxu0 0.0
    %4900 = vmatpush1.msra.mxu0 0.0
    %4901 = vmatprep.subr.mxu0 0.0
    %4902 = vmatpush1.msra.mxu0 0.0
    %4903 = vmatprep.subr.mxu0 0.0
    %4904 = vmatpush1.msra.mxu0 0.0
    %4905 = vmatprep.subr.mxu0 0.0
    %4906 = vmatpush1.msra.mxu0 0.0
    %4907 = vmatprep.subr.mxu0 0.0
    %4908 = vmatpush1.msra.mxu0 0.0
    %4909 = vmatprep.subr.mxu0 0.0
    %4910 = vmatpush1.msra.mxu0 0.0
    %4911 = vmatprep.subr.mxu0 0.0
    %4912 = vmatpush1.msra.mxu0 0.0
    %4913 = vmatprep.subr.mxu0 0.0
    %4914 = vmatpush1.msra.mxu0 0.0
    %4915 = vmatprep.subr.mxu0 0.0
    %4916 = vmatpush1.msra.mxu0 0.0
    %4917 = vmatprep.subr.mxu0 0.0
    %4918 = vmatpush1.msra.mxu0 0.0
    %4919 = vmatprep.subr.mxu0 0.0
    %4920 = vmatpush1.msra.mxu0 0.0
    %4921 = vmatprep.subr.mxu0 0.0
    %4922 = vmatpush1.msra.mxu0 0.0
    %4923 = vmatprep.subr.mxu0 0.0
    %4924 = vmatpush1.msra.mxu0 0.0
    %4925 = vmatprep.subr.mxu0 0.0
    %4926 = vmatpush1.msra.mxu0 0.0
    %4927 = vmatprep.subr.mxu0 0.0
    %4928 = vmatpush1.msra.mxu0 0.0
    %4929 = vmatprep.subr.mxu0 0.0
    %4930 = vmatpush1.msra.mxu0 0.0
    %4931 = vmatprep.subr.mxu0 0.0
    %4932 = vmatpush1.msra.mxu0 0.0
    %4933 = vmatprep.subr.mxu0 0.0
    %4934 = vmatpush1.msra.mxu0 0.0
    %4935 = vmatprep.subr.mxu0 0.0
    %4936 = vmatpush1.msra.mxu0 0.0
    %4937 = vmatprep.subr.mxu0 0.0
    %4938 = vmatpush1.msra.mxu0 0.0
    %4939 = vmatprep.subr.mxu0 0.0
    %4940 = vmatpush1.msra.mxu0 0.0
    %4941 = vmatprep.subr.mxu0 0.0
    %4942 = vmatpush1.msra.mxu0 0.0
    %4943 = vmatprep.subr.mxu0 0.0
    %4944 = vmatpush1.msra.mxu0 0.0
    %4945 = vmatprep.subr.mxu0 0.0
    %4946 = vmatpush1.msra.mxu0 0.0
    %4947 = vmatprep.subr.mxu0 0.0
    %4948 = vmatpush1.msra.mxu0 0.0
    %4949 = vmatprep.subr.mxu0 0.0
    %4950 = vmatpush1.msra.mxu0 0.0
    %4951 = vmatprep.mubr.f32.mxu0 0.0
    %4952 = vmatmul.mubr.f32.gmra.mrb[0].mxu0 %v4311
    %v4953 = vpop.f32.mrb[0].mxu0
    %v4954 = vadd.f32 0.0, %v4953
    %v4955 = vpop.f32.mrb[0].mxu0
    %4956 = vmatprep.mubr.f32.mxu0 0.0
    %4957 = vmatmul.mubr.f32.gmra.mrb[0].mxu0 %v4314
    %v4958 = vpop.f32.mrb[0].mxu0
    %v4959 = vadd.f32 0.0, %v4958
    %v4960 = vpop.f32.mrb[0].mxu0
    %4961 = vmatprep.mubr.f32.mxu0 0.0
    %4962 = vmatmul.mubr.f32.gmra.mrb[0].mxu0 %v4317
    %v4963 = vpop.f32.mrb[0].mxu0
    %v4964 = vadd.f32 0.0, %v4963
    %v4965 = vpop.f32.mrb[0].mxu0
    %4966 = vmatprep.mubr.f32.mxu0 0.0
    %4967 = vmatmul.mubr.f32.gmra.mrb[0].mxu0 %v4320
    %v4968 = vpop.f32.mrb[0].mxu0
    %v4969 = vadd.f32 0.0, %v4968
    %v4970 = vpop.f32.mrb[0].mxu0
    %4971 = vmatprep.mubr.f32.mxu0 0.0
    %4972 = vmatmul.mubr.f32.gmra.mrb[0].mxu0 %v4323
    %v4973 = vpop.f32.mrb[0].mxu0
    %v4974 = vadd.f32 0.0, %v4973
    %v4975 = vpop.f32.mrb[0].mxu0
    %4976 = vmatprep.mubr.f32.mxu0 0.0
    %4977 = vmatmul.mubr.f32.gmra.mrb[0].mxu0 %v4326
    %v4978 = vpop.f32.mrb[0].mxu0
    %v4979 = vadd.f32 0.0, %v4978
    %v4980 = vpop.f32.mrb[0].mxu0
    %4981 = vmatprep.mubr.f32.mxu0 0.0
    %4982 = vmatmul.mubr.f32.gmra.mrb[0].mxu0 %v4329
    %v4983 = vpop.f32.mrb[0].mxu0
    %v4984 = vadd.f32 0.0, %v4983
    %v4985 = vpop.f32.mrb[0].mxu0
    %4986 = vmatprep.mubr.f32.mxu0 0.0
    %4987 = vmatmul.mubr.f32.gmra.mrb[0].mxu0 %v4332
    %v4988 = vpop.f32.mrb[0].mxu0
    %v4989 = vadd.f32 0.0, %v4988
    %v4990 = vpop.f32.mrb[0].mxu0
    %4991 = vmatprep.mubr.f32.mxu0 0.0
    %4992 = vmatmul.mubr.f32.gmra.mrb[0].mxu0 %v4335
    %v4993 = vpop.f32.mrb[0].mxu0
    %v4994 = vadd.f32 0.0, %v4993
    %v4995 = vpop.f32.mrb[0].mxu0
    %4996 = vmatprep.mubr.f32.mxu0 0.0
    %4997 = vmatmul.mubr.f32.gmra.mrb[0].mxu0 %v4338
    %v4998 = vpop.f32.mrb[0].mxu0
    %v4999 = vadd.f32 0.0, %v4998
    %v5000 = vpop.f32.mrb[0].mxu0
    %5001 = vmatprep.mubr.f32.mxu0 0.0
    %5002 = vmatmul.mubr.f32.gmra.mrb[0].mxu0 %v4341
    %v5003 = vpop.f32.mrb[0].mxu0
    %v5004 = vadd.f32 0.0, %v5003
    %v5005 = vpop.f32.mrb[0].mxu0
    %5006 = vmatprep.mubr.f32.mxu0 0.0
    %5007 = vmatmul.mubr.f32.gmra.mrb[0].mxu0 %v4344
    %v5008 = vpop.f32.mrb[0].mxu0
    %v5009 = vadd.f32 0.0, %v5008
    %v5010 = vpop.f32.mrb[0].mxu0
    %5011 = vmatprep.mubr.f32.mxu0 0.0
    %5012 = vmatmul.mubr.f32.gmra.mrb[0].mxu0 %v4347
    %v5013 = vpop.f32.mrb[0].mxu0
    %v5014 = vadd.f32 0.0, %v5013
    %v5015 = vpop.f32.mrb[0].mxu0
    %5016 = vmatprep.mubr.f32.mxu0 0.0
    %5017 = vmatmul.mubr.f32.gmra.mrb[0].mxu0 %v4350
    %v5018 = vpop.f32.mrb[0].mxu0
    %v5019 = vadd.f32 0.0, %v5018
    %v5020 = vpop.f32.mrb[0].mxu0
    %5021 = vmatprep.mubr.f32.mxu0 0.0
    %5022 = vmatmul.mubr.f32.gmra.mrb[0].mxu0 %v4353
    %v5023 = vpop.f32.mrb[0].mxu0
    %v5024 = vadd.f32 0.0, %v5023
    %v5025 = vpop.f32.mrb[0].mxu0
    %5026 = vmatprep.mubr.f32.mxu0 0.0
    %5027 = vmatmul.mubr.f32.gmra.mrb[0].mxu0 %v4356
    %v5028 = vpop.f32.mrb[0].mxu0
    %v5029 = vadd.f32 0.0, %v5028
    %v5030 = vpop.f32.mrb[0].mxu0
    %5031 = vmatprep.mubr.f32.mxu0 0.0
    %5032 = vmatmul.mubr.f32.gmra.mrb[0].mxu0 %v4359
    %v5033 = vpop.f32.mrb[0].mxu0
    %v5034 = vadd.f32 0.0, %v5033
    %v5035 = vpop.f32.mrb[0].mxu0
    %5036 = vmatprep.mubr.f32.mxu0 0.0
    %5037 = vmatmul.mubr.f32.gmra.mrb[0].mxu0 %v4362
    %v5038 = vpop.f32.mrb[0].mxu0
    %v5039 = vadd.f32 0.0, %v5038
    %v5040 = vpop.f32.mrb[0].mxu0
    %5041 = vmatprep.mubr.f32.mxu0 0.0
    %5042 = vmatmul.mubr.f32.gmra.mrb[0].mxu0 %v4365
    %v5043 = vpop.f32.mrb[0].mxu0
    %v5044 = vadd.f32 0.0, %v5043
    %v5045 = vpop.f32.mrb[0].mxu0
    %5046 = vmatprep.mubr.f32.mxu0 0.0
    %5047 = vmatmul.mubr.f32.gmra.mrb[0].mxu0 %v4368
    %v5048 = vpop.f32.mrb[0].mxu0
    %v5049 = vadd.f32 0.0, %v5048
    %v5050 = vpop.f32.mrb[0].mxu0
    %5051 = vmatprep.mubr.f32.mxu0 0.0
    %5052 = vmatmul.mubr.f32.gmra.mrb[0].mxu0 %v4371
    %v5053 = vpop.f32.mrb[0].mxu0
    %v5054 = vadd.f32 0.0, %v5053
    %v5055 = vpop.f32.mrb[0].mxu0
    %5056 = vmatprep.mubr.f32.mxu0 0.0
    %5057 = vmatmul.mubr.f32.gmra.mrb[0].mxu0 %v4374
    %v5058 = vpop.f32.mrb[0].mxu0
    %v5059 = vadd.f32 0.0, %v5058
    %v5060 = vpop.f32.mrb[0].mxu0
    %5061 = vmatprep.mubr.f32.mxu0 0.0
    %5062 = vmatmul.mubr.f32.gmra.mrb[0].mxu0 %v4377
    %v5063 = vpop.f32.mrb[0].mxu0
    %v5064 = vadd.f32 0.0, %v5063
    %v5065 = vpop.f32.mrb[0].mxu0
    %5066 = vmatprep.mubr.f32.mxu0 0.0
    %5067 = vmatmul.mubr.f32.gmra.mrb[0].mxu0 %v4380
    %v5068 = vpop.f32.mrb[0].mxu0
    %v5069 = vadd.f32 0.0, %v5068
    %v5070 = vpop.f32.mrb[0].mxu0
    %5071 = vmatprep.mubr.f32.mxu0 0.0
    %5072 = vmatmul.mubr.f32.gmra.mrb[0].mxu0 %v4383
    %v5073 = vpop.f32.mrb[0].mxu0
    %v5074 = vadd.f32 0.0, %v5073
    %v5075 = vpop.f32.mrb[0].mxu0
    %5076 = vmatprep.mubr.f32.mxu0 0.0
    %5077 = vmatmul.mubr.f32.gmra.mrb[0].mxu0 %v4386
    %v5078 = vpop.f32.mrb[0].mxu0
    %v5079 = vadd.f32 0.0, %v5078
    %v5080 = vpop.f32.mrb[0].mxu0
    %5081 = vmatprep.mubr.f32.mxu0 0.0
    %5082 = vmatmul.mubr.f32.gmra.mrb[0].mxu0 %v4389
    %v5083 = vpop.f32.mrb[0].mxu0
    %v5084 = vadd.f32 0.0, %v5083
    %v5085 = vpop.f32.mrb[0].mxu0
    %5086 = vmatprep.mubr.f32.mxu0 0.0
    %5087 = vmatmul.mubr.f32.gmra.mrb[0].mxu0 %v4392
    %v5088 = vpop.f32.mrb[0].mxu0
    %v5089 = vadd.f32 0.0, %v5088
    %v5090 = vpop.f32.mrb[0].mxu0
    %5091 = vmatprep.mubr.f32.mxu0 0.0
    %5092 = vmatmul.mubr.f32.gmra.mrb[0].mxu0 %v4395
    %v5093 = vpop.f32.mrb[0].mxu0
    %v5094 = vadd.f32 0.0, %v5093
    %v5095 = vpop.f32.mrb[0].mxu0
    %5096 = vmatprep.mubr.f32.mxu0 0.0
    %5097 = vmatmul.mubr.f32.gmra.mrb[0].mxu0 %v4398
    %v5098 = vpop.f32.mrb[0].mxu0
    %v5099 = vadd.f32 0.0, %v5098
    %v5100 = vpop.f32.mrb[0].mxu0
    %5101 = vmatprep.mubr.f32.mxu0 0.0
    %5102 = vmatmul.mubr.f32.gmra.mrb[0].mxu0 %v4401
    %v5103 = vpop.f32.mrb[0].mxu0
    %v5104 = vadd.f32 0.0, %v5103
    %v5105 = vpop.f32.mrb[0].mxu0
    %5106 = vmatprep.mubr.f32.mxu0 0.0
    %5107 = vmatmul.mubr.f32.gmra.mrb[0].mxu0 %v4404
    %v5108 = vpop.f32.mrb[0].mxu0
    %v5109 = vadd.f32 0.0, %v5108
    %v5110 = vpop.f32.mrb[0].mxu0
    %5111 = vmatprep.mubr.f32.mxu0 0.0
    %5112 = vmatmul.mubr.f32.gmra.mrb[0].mxu0 %v4407
    %v5113 = vpop.f32.mrb[0].mxu0
    %v5114 = vadd.f32 0.0, %v5113
    %v5115 = vpop.f32.mrb[0].mxu0
    %5116 = vmatprep.mubr.f32.mxu0 0.0
    %5117 = vmatmul.mubr.f32.gmra.mrb[0].mxu0 %v4410
    %v5118 = vpop.f32.mrb[0].mxu0
    %v5119 = vadd.f32 0.0, %v5118
    %v5120 = vpop.f32.mrb[0].mxu0
    %5121 = vmatprep.mubr.f32.mxu0 0.0
    %5122 = vmatmul.mubr.f32.gmra.mrb[0].mxu0 %v4413
    %v5123 = vpop.f32.mrb[0].mxu0
    %v5124 = vadd.f32 0.0, %v5123
    %v5125 = vpop.f32.mrb[0].mxu0
    %5126 = vmatprep.mubr.f32.mxu0 0.0
    %5127 = vmatmul.mubr.f32.gmra.mrb[0].mxu0 %v4416
    %v5128 = vpop.f32.mrb[0].mxu0
    %v5129 = vadd.f32 0.0, %v5128
    %v5130 = vpop.f32.mrb[0].mxu0
    %5131 = vmatprep.mubr.f32.mxu0 0.0
    %5132 = vmatmul.mubr.f32.gmra.mrb[0].mxu0 %v4419
    %v5133 = vpop.f32.mrb[0].mxu0
    %v5134 = vadd.f32 0.0, %v5133
    %v5135 = vpop.f32.mrb[0].mxu0
    %5136 = vmatprep.mubr.f32.mxu0 0.0
    %5137 = vmatmul.mubr.f32.gmra.mrb[0].mxu0 %v4422
    %v5138 = vpop.f32.mrb[0].mxu0
    %v5139 = vadd.f32 0.0, %v5138
    %v5140 = vpop.f32.mrb[0].mxu0
    %5141 = vmatprep.mubr.f32.mxu0 0.0
    %5142 = vmatmul.mubr.f32.gmra.mrb[0].mxu0 %v4425
    %v5143 = vpop.f32.mrb[0].mxu0
    %v5144 = vadd.f32 0.0, %v5143
    %v5145 = vpop.f32.mrb[0].mxu0
    %5146 = vmatprep.mubr.f32.mxu0 0.0
    %5147 = vmatmul.mubr.f32.gmra.mrb[0].mxu0 %v4428
    %v5148 = vpop.f32.mrb[0].mxu0
    %v5149 = vadd.f32 0.0, %v5148
    %v5150 = vpop.f32.mrb[0].mxu0
    %5151 = vmatprep.mubr.f32.mxu0 0.0
    %5152 = vmatmul.mubr.f32.gmra.mrb[0].mxu0 %v4431
    %v5153 = vpop.f32.mrb[0].mxu0
    %v5154 = vadd.f32 0.0, %v5153
    %v5155 = vpop.f32.mrb[0].mxu0
    %5156 = vmatprep.mubr.f32.mxu0 0.0
    %5157 = vmatmul.mubr.f32.gmra.mrb[0].mxu0 %v4434
    %v5158 = vpop.f32.mrb[0].mxu0
    %v5159 = vadd.f32 0.0, %v5158
    %v5160 = vpop.f32.mrb[0].mxu0
    %5161 = vmatprep.mubr.f32.mxu0 0.0
    %5162 = vmatmul.mubr.f32.gmra.mrb[0].mxu0 %v4437
    %v5163 = vpop.f32.mrb[0].mxu0
    %v5164 = vadd.f32 0.0, %v5163
    %v5165 = vpop.f32.mrb[0].mxu0
    %5166 = vmatprep.mubr.f32.mxu0 0.0
    %5167 = vmatmul.mubr.f32.gmra.mrb[0].mxu0 %v4440
    %v5168 = vpop.f32.mrb[0].mxu0
    %v5169 = vadd.f32 0.0, %v5168
    %v5170 = vpop.f32.mrb[0].mxu0
    %5171 = vmatprep.mubr.f32.mxu0 0.0
    %5172 = vmatmul.mubr.f32.gmra.mrb[0].mxu0 %v4443
    %v5173 = vpop.f32.mrb[0].mxu0
    %v5174 = vadd.f32 0.0, %v5173
    %v5175 = vpop.f32.mrb[0].mxu0
    %5176 = vmatprep.mubr.f32.mxu0 0.0
    %5177 = vmatmul.mubr.f32.gmra.mrb[0].mxu0 %v4446
    %v5178 = vpop.f32.mrb[0].mxu0
    %v5179 = vadd.f32 0.0, %v5178
    %v5180 = vpop.f32.mrb[0].mxu0
    %5181 = vmatprep.mubr.f32.mxu0 0.0
    %5182 = vmatmul.mubr.f32.gmra.mrb[0].mxu0 %v4449
    %v5183 = vpop.f32.mrb[0].mxu0
    %v5184 = vadd.f32 0.0, %v5183
    %v5185 = vpop.f32.mrb[0].mxu0
    %5186 = vmatprep.mubr.f32.mxu0 0.0
    %5187 = vmatmul.mubr.f32.gmra.mrb[0].mxu0 %v4452
    %v5188 = vpop.f32.mrb[0].mxu0
    %v5189 = vadd.f32 0.0, %v5188
    %v5190 = vpop.f32.mrb[0].mxu0
    %5191 = vmatprep.mubr.f32.mxu0 0.0
    %5192 = vmatmul.mubr.f32.gmra.mrb[0].mxu0 %v4455
    %v5193 = vpop.f32.mrb[0].mxu0
    %v5194 = vadd.f32 0.0, %v5193
    %v5195 = vpop.f32.mrb[0].mxu0
    %5196 = vmatprep.mubr.f32.mxu0 0.0
    %5197 = vmatmul.mubr.f32.gmra.mrb[0].mxu0 %v4458
    %v5198 = vpop.f32.mrb[0].mxu0
    %v5199 = vadd.f32 0.0, %v5198
    %v5200 = vpop.f32.mrb[0].mxu0
    %5201 = vmatprep.mubr.f32.mxu0 0.0
    %5202 = vmatmul.mubr.f32.gmra.mrb[0].mxu0 %v4461
    %v5203 = vpop.f32.mrb[0].mxu0
    %v5204 = vadd.f32 0.0, %v5203
    %v5205 = vpop.f32.mrb[0].mxu0
    %5206 = vmatprep.mubr.f32.mxu0 0.0
    %5207 = vmatmul.mubr.f32.gmra.mrb[0].mxu0 %v4464
    %v5208 = vpop.f32.mrb[0].mxu0
    %v5209 = vadd.f32 0.0, %v5208
    %v5210 = vpop.f32.mrb[0].mxu0
    %5211 = vmatprep.mubr.f32.mxu0 0.0
    %5212 = vmatmul.mubr.f32.gmra.mrb[0].mxu0 %v4467
    %v5213 = vpop.f32.mrb[0].mxu0
    %v5214 = vadd.f32 0.0, %v5213
    %v5215 = vpop.f32.mrb[0].mxu0
    %5216 = vmatprep.mubr.f32.mxu0 0.0
    %5217 = vmatmul.mubr.f32.gmra.mrb[0].mxu0 %v4470
    %v5218 = vpop.f32.mrb[0].mxu0
    %v5219 = vadd.f32 0.0, %v5218
    %v5220 = vpop.f32.mrb[0].mxu0
    %5221 = vmatprep.mubr.f32.mxu0 0.0
    %5222 = vmatmul.mubr.f32.gmra.mrb[0].mxu0 %v4473
    %v5223 = vpop.f32.mrb[0].mxu0
    %v5224 = vadd.f32 0.0, %v5223
    %v5225 = vpop.f32.mrb[0].mxu0
    %5226 = vmatprep.mubr.f32.mxu0 0.0
    %5227 = vmatmul.mubr.f32.gmra.mrb[0].mxu0 %v4476
    %v5228 = vpop.f32.mrb[0].mxu0
    %v5229 = vadd.f32 0.0, %v5228
    %v5230 = vpop.f32.mrb[0].mxu0
    %5231 = vmatprep.mubr.f32.mxu0 0.0
    %5232 = vmatmul.mubr.f32.gmra.mrb[0].mxu0 %v4479
    %v5233 = vpop.f32.mrb[0].mxu0
    %v5234 = vadd.f32 0.0, %v5233
    %v5235 = vpop.f32.mrb[0].mxu0
    %5236 = vmatprep.mubr.f32.mxu0 0.0
    %5237 = vmatmul.mubr.f32.gmra.mrb[0].mxu0 %v4482
    %v5238 = vpop.f32.mrb[0].mxu0
    %v5239 = vadd.f32 0.0, %v5238
    %v5240 = vpop.f32.mrb[0].mxu0
    %5241 = vmatprep.mubr.f32.mxu0 0.0
    %5242 = vmatmul.mubr.f32.gmra.mrb[0].mxu0 %v4485
    %v5243 = vpop.f32.mrb[0].mxu0
    %v5244 = vadd.f32 0.0, %v5243
    %v5245 = vpop.f32.mrb[0].mxu0
    %5246 = vmatprep.mubr.f32.mxu0 0.0
    %5247 = vmatmul.mubr.f32.gmra.mrb[0].mxu0 %v4488
    %v5248 = vpop.f32.mrb[0].mxu0
    %v5249 = vadd.f32 0.0, %v5248
    %v5250 = vpop.f32.mrb[0].mxu0
    %5251 = vmatprep.mubr.f32.mxu0 0.0
    %5252 = vmatmul.mubr.f32.gmra.mrb[0].mxu0 %v4491
    %v5253 = vpop.f32.mrb[0].mxu0
    %v5254 = vadd.f32 0.0, %v5253
    %v5255 = vpop.f32.mrb[0].mxu0
    %5256 = vmatprep.mubr.f32.mxu0 0.0
    %5257 = vmatmul.mubr.f32.gmra.mrb[0].mxu0 %v4494
    %v5258 = vpop.f32.mrb[0].mxu0
    %v5259 = vadd.f32 0.0, %v5258
    %v5260 = vpop.f32.mrb[0].mxu0
    %5261 = vmatprep.mubr.f32.mxu0 0.0
    %5262 = vmatmul.mubr.f32.gmra.mrb[0].mxu0 %v4497
    %v5263 = vpop.f32.mrb[0].mxu0
    %v5264 = vadd.f32 0.0, %v5263
    %v5265 = vpop.f32.mrb[0].mxu0
    %5266 = vmatprep.mubr.f32.mxu0 0.0
    %5267 = vmatmul.mubr.f32.gmra.mrb[0].mxu0 %v4500
    %v5268 = vpop.f32.mrb[0].mxu0
    %v5269 = vadd.f32 0.0, %v5268
    %v5270 = vpop.f32.mrb[0].mxu0
    %5271 = vdwg.mxu0
    %v5272 = vmul.f32 %v3515, %v4569
    %v5273 = vmul.f32 %v3520, %v4574
    %v5274 = vmul.f32 %v3525, %v4579
    %v5275 = vmul.f32 %v3530, %v4584
    %v5276 = vmul.f32 %v3535, %v4589
    %v5277 = vmul.f32 %v3540, %v4594
    %v5278 = vmul.f32 %v3545, %v4599
    %v5279 = vmul.f32 %v3550, %v4604
    %v5280 = vmul.f32 %v3555, %v4609
    %v5281 = vmul.f32 %v3560, %v4614
    %v5282 = vmul.f32 %v3565, %v4619
    %v5283 = vmul.f32 %v3570, %v4624
    %v5284 = vmul.f32 %v3575, %v4629
    %v5285 = vmul.f32 %v3580, %v4634
    %v5286 = vmul.f32 %v3585, %v4639
    %v5287 = vmul.f32 %v3590, %v4644
    %v5288 = vmul.f32 %v3595, %v4649
    %v5289 = vmul.f32 %v3600, %v4654
    %v5290 = vmul.f32 %v3605, %v4659
    %v5291 = vmul.f32 %v3610, %v4664
    %v5292 = vmul.f32 %v3615, %v4669
    %v5293 = vmul.f32 %v3620, %v4674
    %v5294 = vmul.f32 %v3625, %v4679
    %v5295 = vmul.f32 %v3630, %v4684
    %v5296 = vmul.f32 %v3635, %v4689
    %v5297 = vmul.f32 %v3640, %v4694
    %v5298 = vmul.f32 %v3645, %v4699
    %v5299 = vmul.f32 %v3650, %v4704
    %v5300 = vmul.f32 %v3655, %v4709
    %v5301 = vmul.f32 %v3660, %v4714
    %v5302 = vmul.f32 %v3665, %v4719
    %v5303 = vmul.f32 %v3670, %v4724
    %v5304 = vmul.f32 %v3675, %v4729
    %v5305 = vmul.f32 %v3680, %v4734
    %v5306 = vmul.f32 %v3685, %v4739
    %v5307 = vmul.f32 %v3690, %v4744
    %v5308 = vmul.f32 %v3695, %v4749
    %v5309 = vmul.f32 %v3700, %v4754
    %v5310 = vmul.f32 %v3705, %v4759
    %v5311 = vmul.f32 %v3710, %v4764
    %v5312 = vmul.f32 %v3715, %v4769
    %v5313 = vmul.f32 %v3720, %v4774
    %v5314 = vmul.f32 %v3725, %v4779
    %v5315 = vmul.f32 %v3730, %v4784
    %v5316 = vmul.f32 %v3735, %v4789
    %v5317 = vmul.f32 %v3740, %v4794
    %v5318 = vmul.f32 %v3745, %v4799
    %v5319 = vmul.f32 %v3750, %v4804
    %v5320 = vmul.f32 %v3755, %v4809
    %v5321 = vmul.f32 %v3760, %v4814
    %v5322 = vmul.f32 %v3765, %v4819
    %v5323 = vmul.f32 %v3770, %v4824
    %v5324 = vmul.f32 %v3775, %v4829
    %v5325 = vmul.f32 %v3780, %v4834
    %v5326 = vmul.f32 %v3785, %v4839
    %v5327 = vmul.f32 %v3790, %v4844
    %v5328 = vmul.f32 %v3795, %v4849
    %v5329 = vmul.f32 %v3800, %v4854
    %v5330 = vmul.f32 %v3805, %v4859
    %v5331 = vmul.f32 %v3810, %v4864
    %v5332 = vmul.f32 %v3815, %v4869
    %v5333 = vmul.f32 %v3820, %v4874
    %v5334 = vmul.f32 %v3825, %v4879
    %v5335 = vmul.f32 %v3830, %v4884
    %v5336 = vadd.f32 %v5272, %v4954
    %v5337 = vadd.f32 %v5273, %v4959
    %v5338 = vadd.f32 %v5274, %v4964
    %v5339 = vadd.f32 %v5275, %v4969
    %v5340 = vadd.f32 %v5276, %v4974
    %v5341 = vadd.f32 %v5277, %v4979
    %v5342 = vadd.f32 %v5278, %v4984
    %v5343 = vadd.f32 %v5279, %v4989
    %v5344 = vadd.f32 %v5280, %v4994
    %v5345 = vadd.f32 %v5281, %v4999
    %v5346 = vadd.f32 %v5282, %v5004
    %v5347 = vadd.f32 %v5283, %v5009
    %v5348 = vadd.f32 %v5284, %v5014
    %v5349 = vadd.f32 %v5285, %v5019
    %v5350 = vadd.f32 %v5286, %v5024
    %v5351 = vadd.f32 %v5287, %v5029
    %v5352 = vadd.f32 %v5288, %v5034
    %v5353 = vadd.f32 %v5289, %v5039
    %v5354 = vadd.f32 %v5290, %v5044
    %v5355 = vadd.f32 %v5291, %v5049
    %v5356 = vadd.f32 %v5292, %v5054
    %v5357 = vadd.f32 %v5293, %v5059
    %v5358 = vadd.f32 %v5294, %v5064
    %v5359 = vadd.f32 %v5295, %v5069
    %v5360 = vadd.f32 %v5296, %v5074
    %v5361 = vadd.f32 %v5297, %v5079
    %v5362 = vadd.f32 %v5298, %v5084
    %v5363 = vadd.f32 %v5299, %v5089
    %v5364 = vadd.f32 %v5300, %v5094
    %v5365 = vadd.f32 %v5301, %v5099
    %v5366 = vadd.f32 %v5302, %v5104
    %v5367 = vadd.f32 %v5303, %v5109
    %v5368 = vadd.f32 %v5304, %v5114
    %v5369 = vadd.f32 %v5305, %v5119
    %v5370 = vadd.f32 %v5306, %v5124
    %v5371 = vadd.f32 %v5307, %v5129
    %v5372 = vadd.f32 %v5308, %v5134
    %v5373 = vadd.f32 %v5309, %v5139
    %v5374 = vadd.f32 %v5310, %v5144
    %v5375 = vadd.f32 %v5311, %v5149
    %v5376 = vadd.f32 %v5312, %v5154
    %v5377 = vadd.f32 %v5313, %v5159
    %v5378 = vadd.f32 %v5314, %v5164
    %v5379 = vadd.f32 %v5315, %v5169
    %v5380 = vadd.f32 %v5316, %v5174
    %v5381 = vadd.f32 %v5317, %v5179
    %v5382 = vadd.f32 %v5318, %v5184
    %v5383 = vadd.f32 %v5319, %v5189
    %v5384 = vadd.f32 %v5320, %v5194
    %v5385 = vadd.f32 %v5321, %v5199
    %v5386 = vadd.f32 %v5322, %v5204
    %v5387 = vadd.f32 %v5323, %v5209
    %v5388 = vadd.f32 %v5324, %v5214
    %v5389 = vadd.f32 %v5325, %v5219
    %v5390 = vadd.f32 %v5326, %v5224
    %v5391 = vadd.f32 %v5327, %v5229
    %v5392 = vadd.f32 %v5328, %v5234
    %v5393 = vadd.f32 %v5329, %v5239
    %v5394 = vadd.f32 %v5330, %v5244
    %v5395 = vadd.f32 %v5331, %v5249
    %v5396 = vadd.f32 %v5332, %v5254
    %v5397 = vadd.f32 %v5333, %v5259
    %v5398 = vadd.f32 %v5334, %v5264
    %v5399 = vadd.f32 %v5335, %v5269
    %v5400 = vmax.f32 %v5336, 0.0
    %v5401 = vmax.f32 %v5337, 0.0
    %v5402 = vmax.f32 %v5338, 0.0
    %v5403 = vmax.f32 %v5339, 0.0
    %v5404 = vmax.f32 %v5340, 0.0
    %v5405 = vmax.f32 %v5341, 0.0
    %v5406 = vmax.f32 %v5342, 0.0
    %v5407 = vmax.f32 %v5343, 0.0
    %v5408 = vmax.f32 %v5344, 0.0
    %v5409 = vmax.f32 %v5345, 0.0
    %v5410 = vmax.f32 %v5346, 0.0
    %v5411 = vmax.f32 %v5347, 0.0
    %v5412 = vmax.f32 %v5348, 0.0
    %v5413 = vmax.f32 %v5349, 0.0
    %v5414 = vmax.f32 %v5350, 0.0
    %v5415 = vmax.f32 %v5351, 0.0
    %v5416 = vmax.f32 %v5352, 0.0
    %v5417 = vmax.f32 %v5353, 0.0
    %v5418 = vmax.f32 %v5354, 0.0
    %v5419 = vmax.f32 %v5355, 0.0
    %v5420 = vmax.f32 %v5356, 0.0
    %v5421 = vmax.f32 %v5357, 0.0
    %v5422 = vmax.f32 %v5358, 0.0
    %v5423 = vmax.f32 %v5359, 0.0
    %v5424 = vmax.f32 %v5360, 0.0
    %v5425 = vmax.f32 %v5361, 0.0
    %v5426 = vmax.f32 %v5362, 0.0
    %v5427 = vmax.f32 %v5363, 0.0
    %v5428 = vmax.f32 %v5364, 0.0
    %v5429 = vmax.f32 %v5365, 0.0
    %v5430 = vmax.f32 %v5366, 0.0
    %v5431 = vmax.f32 %v5367, 0.0
    %v5432 = vmax.f32 %v5368, 0.0
    %v5433 = vmax.f32 %v5369, 0.0
    %v5434 = vmax.f32 %v5370, 0.0
    %v5435 = vmax.f32 %v5371, 0.0
    %v5436 = vmax.f32 %v5372, 0.0
    %v5437 = vmax.f32 %v5373, 0.0
    %v5438 = vmax.f32 %v5374, 0.0
    %v5439 = vmax.f32 %v5375, 0.0
    %v5440 = vmax.f32 %v5376, 0.0
    %v5441 = vmax.f32 %v5377, 0.0
    %v5442 = vmax.f32 %v5378, 0.0
    %v5443 = vmax.f32 %v5379, 0.0
    %v5444 = vmax.f32 %v5380, 0.0
    %v5445 = vmax.f32 %v5381, 0.0
    %v5446 = vmax.f32 %v5382, 0.0
    %v5447 = vmax.f32 %v5383, 0.0
    %v5448 = vmax.f32 %v5384, 0.0
    %v5449 = vmax.f32 %v5385, 0.0
    %v5450 = vmax.f32 %v5386, 0.0
    %v5451 = vmax.f32 %v5387, 0.0
    %v5452 = vmax.f32 %v5388, 0.0
    %v5453 = vmax.f32 %v5389, 0.0
    %v5454 = vmax.f32 %v5390, 0.0
    %v5455 = vmax.f32 %v5391, 0.0
    %v5456 = vmax.f32 %v5392, 0.0
    %v5457 = vmax.f32 %v5393, 0.0
    %v5458 = vmax.f32 %v5394, 0.0
    %v5459 = vmax.f32 %v5395, 0.0
    %v5460 = vmax.f32 %v5396, 0.0
    %v5461 = vmax.f32 %v5397, 0.0
    %v5462 = vmax.f32 %v5398, 0.0
    %v5463 = vmax.f32 %v5399, 0.0
    %v5464 = vld [vmem:[#allocation4] sm:$0xff]
    %v5465 = vld [vmem:[#allocation4 + $0x8] sm:$0xff]
    %v5466 = vld [vmem:[#allocation4 + $0x10] sm:$0xff]
    %v5467 = vld [vmem:[#allocation4 + $0x18] sm:$0xff]
    %v5468 = vld [vmem:[#allocation4 + $0x20] sm:$0xff]
    %v5469 = vld [vmem:[#allocation4 + $0x28] sm:$0xff]
    %v5470 = vld [vmem:[#allocation4 + $0x30] sm:$0xff]
    %v5471 = vld [vmem:[#allocation4 + $0x38] sm:$0xff]
    %v5472 = vld [vmem:[#allocation4 + $0x40] sm:$0xff]
    %v5473 = vld [vmem:[#allocation4 + $0x48] sm:$0xff]
    %v5474 = vld [vmem:[#allocation4 + $0x50] sm:$0xff]
    %v5475 = vld [vmem:[#allocation4 + $0x58] sm:$0xff]
    %v5476 = vld [vmem:[#allocation4 + $0x60] sm:$0xff]
    %v5477 = vld [vmem:[#allocation4 + $0x68] sm:$0xff]
    %v5478 = vld [vmem:[#allocation4 + $0x70] sm:$0xff]
    %v5479 = vld [vmem:[#allocation4 + $0x78] sm:$0xff]
    %v5480 = vld [vmem:[#allocation4 + $0x80] sm:$0xff]
    %v5481 = vld [vmem:[#allocation4 + $0x88] sm:$0xff]
    %v5482 = vld [vmem:[#allocation4 + $0x90] sm:$0xff]
    %v5483 = vld [vmem:[#allocation4 + $0x98] sm:$0xff]
    %v5484 = vld [vmem:[#allocation4 + $0xa0] sm:$0xff]
    %v5485 = vld [vmem:[#allocation4 + $0xa8] sm:$0xff]
    %v5486 = vld [vmem:[#allocation4 + $0xb0] sm:$0xff]
    %v5487 = vld [vmem:[#allocation4 + $0xb8] sm:$0xff]
    %v5488 = vld [vmem:[#allocation4 + $0xc0] sm:$0xff]
    %v5489 = vld [vmem:[#allocation4 + $0xc8] sm:$0xff]
    %v5490 = vld [vmem:[#allocation4 + $0xd0] sm:$0xff]
    %v5491 = vld [vmem:[#allocation4 + $0xd8] sm:$0xff]
    %v5492 = vld [vmem:[#allocation4 + $0xe0] sm:$0xff]
    %v5493 = vld [vmem:[#allocation4 + $0xe8] sm:$0xff]
    %v5494 = vld [vmem:[#allocation4 + $0xf0] sm:$0xff]
    %v5495 = vld [vmem:[#allocation4 + $0xf8] sm:$0xff]
    %v5496 = vld [vmem:[#allocation4 + $0x100] sm:$0xff]
    %v5497 = vld [vmem:[#allocation4 + $0x108] sm:$0xff]
    %v5498 = vld [vmem:[#allocation4 + $0x110] sm:$0xff]
    %v5499 = vld [vmem:[#allocation4 + $0x118] sm:$0xff]
    %v5500 = vld [vmem:[#allocation4 + $0x120] sm:$0xff]
    %v5501 = vld [vmem:[#allocation4 + $0x128] sm:$0xff]
    %v5502 = vld [vmem:[#allocation4 + $0x130] sm:$0xff]
    %v5503 = vld [vmem:[#allocation4 + $0x138] sm:$0xff]
    %v5504 = vld [vmem:[#allocation4 + $0x140] sm:$0xff]
    %v5505 = vld [vmem:[#allocation4 + $0x148] sm:$0xff]
    %v5506 = vld [vmem:[#allocation4 + $0x150] sm:$0xff]
    %v5507 = vld [vmem:[#allocation4 + $0x158] sm:$0xff]
    %v5508 = vld [vmem:[#allocation4 + $0x160] sm:$0xff]
    %v5509 = vld [vmem:[#allocation4 + $0x168] sm:$0xff]
    %v5510 = vld [vmem:[#allocation4 + $0x170] sm:$0xff]
    %v5511 = vld [vmem:[#allocation4 + $0x178] sm:$0xff]
    %v5512 = vld [vmem:[#allocation4 + $0x180] sm:$0xff]
    %v5513 = vld [vmem:[#allocation4 + $0x188] sm:$0xff]
    %v5514 = vld [vmem:[#allocation4 + $0x190] sm:$0xff]
    %v5515 = vld [vmem:[#allocation4 + $0x198] sm:$0xff]
    %v5516 = vld [vmem:[#allocation4 + $0x1a0] sm:$0xff]
    %v5517 = vld [vmem:[#allocation4 + $0x1a8] sm:$0xff]
    %v5518 = vld [vmem:[#allocation4 + $0x1b0] sm:$0xff]
    %v5519 = vld [vmem:[#allocation4 + $0x1b8] sm:$0xff]
    %v5520 = vld [vmem:[#allocation4 + $0x1c0] sm:$0xff]
    %v5521 = vld [vmem:[#allocation4 + $0x1c8] sm:$0xff]
    %v5522 = vld [vmem:[#allocation4 + $0x1d0] sm:$0xff]
    %v5523 = vld [vmem:[#allocation4 + $0x1d8] sm:$0xff]
    %v5524 = vld [vmem:[#allocation4 + $0x1e0] sm:$0xff]
    %v5525 = vld [vmem:[#allocation4 + $0x1e8] sm:$0xff]
    %v5526 = vld [vmem:[#allocation4 + $0x1f0] sm:$0xff]
    %v5527 = vld [vmem:[#allocation4 + $0x1f8] sm:$0xff]
    %v5528 = vld [vmem:[#allocation4 + $0x200] sm:$0xff]
    %v5529 = vld [vmem:[#allocation4 + $0x208] sm:$0xff]
    %v5530 = vld [vmem:[#allocation4 + $0x210] sm:$0xff]
    %v5531 = vld [vmem:[#allocation4 + $0x218] sm:$0xff]
    %v5532 = vld [vmem:[#allocation4 + $0x220] sm:$0xff]
    %v5533 = vld [vmem:[#allocation4 + $0x228] sm:$0xff]
    %v5534 = vld [vmem:[#allocation4 + $0x230] sm:$0xff]
    %v5535 = vld [vmem:[#allocation4 + $0x238] sm:$0xff]
    %v5536 = vld [vmem:[#allocation4 + $0x240] sm:$0xff]
    %v5537 = vld [vmem:[#allocation4 + $0x248] sm:$0xff]
    %v5538 = vld [vmem:[#allocation4 + $0x250] sm:$0xff]
    %v5539 = vld [vmem:[#allocation4 + $0x258] sm:$0xff]
    %v5540 = vld [vmem:[#allocation4 + $0x260] sm:$0xff]
    %v5541 = vld [vmem:[#allocation4 + $0x268] sm:$0xff]
    %v5542 = vld [vmem:[#allocation4 + $0x270] sm:$0xff]
    %v5543 = vld [vmem:[#allocation4 + $0x278] sm:$0xff]
    %v5544 = vld [vmem:[#allocation4 + $0x280] sm:$0xff]
    %v5545 = vld [vmem:[#allocation4 + $0x288] sm:$0xff]
    %v5546 = vld [vmem:[#allocation4 + $0x290] sm:$0xff]
    %v5547 = vld [vmem:[#allocation4 + $0x298] sm:$0xff]
    %v5548 = vld [vmem:[#allocation4 + $0x2a0] sm:$0xff]
    %v5549 = vld [vmem:[#allocation4 + $0x2a8] sm:$0xff]
    %v5550 = vld [vmem:[#allocation4 + $0x2b0] sm:$0xff]
    %v5551 = vld [vmem:[#allocation4 + $0x2b8] sm:$0xff]
    %v5552 = vld [vmem:[#allocation4 + $0x2c0] sm:$0xff]
    %v5553 = vld [vmem:[#allocation4 + $0x2c8] sm:$0xff]
    %v5554 = vld [vmem:[#allocation4 + $0x2d0] sm:$0xff]
    %v5555 = vld [vmem:[#allocation4 + $0x2d8] sm:$0xff]
    %v5556 = vld [vmem:[#allocation4 + $0x2e0] sm:$0xff]
    %v5557 = vld [vmem:[#allocation4 + $0x2e8] sm:$0xff]
    %v5558 = vld [vmem:[#allocation4 + $0x2f0] sm:$0xff]
    %v5559 = vld [vmem:[#allocation4 + $0x2f8] sm:$0xff]
    %v5560 = vld [vmem:[#allocation4 + $0x300] sm:$0xff]
    %v5561 = vld [vmem:[#allocation4 + $0x308] sm:$0xff]
    %v5562 = vld [vmem:[#allocation4 + $0x310] sm:$0xff]
    %v5563 = vld [vmem:[#allocation4 + $0x318] sm:$0xff]
    %v5564 = vld [vmem:[#allocation4 + $0x320] sm:$0xff]
    %v5565 = vld [vmem:[#allocation4 + $0x328] sm:$0xff]
    %v5566 = vld [vmem:[#allocation4 + $0x330] sm:$0xff]
    %v5567 = vld [vmem:[#allocation4 + $0x338] sm:$0xff]
    %v5568 = vld [vmem:[#allocation4 + $0x340] sm:$0xff]
    %v5569 = vld [vmem:[#allocation4 + $0x348] sm:$0xff]
    %v5570 = vld [vmem:[#allocation4 + $0x350] sm:$0xff]
    %v5571 = vld [vmem:[#allocation4 + $0x358] sm:$0xff]
    %v5572 = vld [vmem:[#allocation4 + $0x360] sm:$0xff]
    %v5573 = vld [vmem:[#allocation4 + $0x368] sm:$0xff]
    %v5574 = vld [vmem:[#allocation4 + $0x370] sm:$0xff]
    %v5575 = vld [vmem:[#allocation4 + $0x378] sm:$0xff]
    %v5576 = vld [vmem:[#allocation4 + $0x380] sm:$0xff]
    %v5577 = vld [vmem:[#allocation4 + $0x388] sm:$0xff]
    %v5578 = vld [vmem:[#allocation4 + $0x390] sm:$0xff]
    %v5579 = vld [vmem:[#allocation4 + $0x398] sm:$0xff]
    %v5580 = vld [vmem:[#allocation4 + $0x3a0] sm:$0xff]
    %v5581 = vld [vmem:[#allocation4 + $0x3a8] sm:$0xff]
    %v5582 = vld [vmem:[#allocation4 + $0x3b0] sm:$0xff]
    %v5583 = vld [vmem:[#allocation4 + $0x3b8] sm:$0xff]
    %v5584 = vld [vmem:[#allocation4 + $0x3c0] sm:$0xff]
    %v5585 = vld [vmem:[#allocation4 + $0x3c8] sm:$0xff]
    %v5586 = vld [vmem:[#allocation4 + $0x3d0] sm:$0xff]
    %v5587 = vld [vmem:[#allocation4 + $0x3d8] sm:$0xff]
    %v5588 = vld [vmem:[#allocation4 + $0x3e0] sm:$0xff]
    %v5589 = vld [vmem:[#allocation4 + $0x3e8] sm:$0xff]
    %v5590 = vld [vmem:[#allocation4 + $0x3f0] sm:$0xff]
    %v5591 = vld [vmem:[#allocation4 + $0x3f8] sm:$0xff]
    %v5592 = vld [vmem:[#allocation4 + $0x400] sm:$0xff]
    %v5593 = vld [vmem:[#allocation4 + $0x408] sm:$0xff]
    %v5594 = vld [vmem:[#allocation4 + $0x410] sm:$0xff]
    %v5595 = vld [vmem:[#allocation4 + $0x418] sm:$0xff]
    %v5596 = vld [vmem:[#allocation4 + $0x420] sm:$0xff]
    %v5597 = vld [vmem:[#allocation4 + $0x428] sm:$0xff]
    %v5598 = vld [vmem:[#allocation4 + $0x430] sm:$0xff]
    %v5599 = vld [vmem:[#allocation4 + $0x438] sm:$0xff]
    %v5600 = vld [vmem:[#allocation4 + $0x440] sm:$0xff]
    %v5601 = vld [vmem:[#allocation4 + $0x448] sm:$0xff]
    %v5602 = vld [vmem:[#allocation4 + $0x450] sm:$0xff]
    %v5603 = vld [vmem:[#allocation4 + $0x458] sm:$0xff]
    %v5604 = vld [vmem:[#allocation4 + $0x460] sm:$0xff]
    %v5605 = vld [vmem:[#allocation4 + $0x468] sm:$0xff]
    %v5606 = vld [vmem:[#allocation4 + $0x470] sm:$0xff]
    %v5607 = vld [vmem:[#allocation4 + $0x478] sm:$0xff]
    %v5608 = vld [vmem:[#allocation4 + $0x480] sm:$0xff]
    %v5609 = vld [vmem:[#allocation4 + $0x488] sm:$0xff]
    %v5610 = vld [vmem:[#allocation4 + $0x490] sm:$0xff]
    %v5611 = vld [vmem:[#allocation4 + $0x498] sm:$0xff]
    %v5612 = vld [vmem:[#allocation4 + $0x4a0] sm:$0xff]
    %v5613 = vld [vmem:[#allocation4 + $0x4a8] sm:$0xff]
    %v5614 = vld [vmem:[#allocation4 + $0x4b0] sm:$0xff]
    %v5615 = vld [vmem:[#allocation4 + $0x4b8] sm:$0xff]
    %v5616 = vld [vmem:[#allocation4 + $0x4c0] sm:$0xff]
    %v5617 = vld [vmem:[#allocation4 + $0x4c8] sm:$0xff]
    %v5618 = vld [vmem:[#allocation4 + $0x4d0] sm:$0xff]
    %v5619 = vld [vmem:[#allocation4 + $0x4d8] sm:$0xff]
    %v5620 = vld [vmem:[#allocation4 + $0x4e0] sm:$0xff]
    %v5621 = vld [vmem:[#allocation4 + $0x4e8] sm:$0xff]
    %v5622 = vld [vmem:[#allocation4 + $0x4f0] sm:$0xff]
    %v5623 = vld [vmem:[#allocation4 + $0x4f8] sm:$0xff]
    %v5624 = vld [vmem:[#allocation4 + $0x500] sm:$0xff]
    %v5625 = vld [vmem:[#allocation4 + $0x508] sm:$0xff]
    %v5626 = vld [vmem:[#allocation4 + $0x510] sm:$0xff]
    %v5627 = vld [vmem:[#allocation4 + $0x518] sm:$0xff]
    %v5628 = vld [vmem:[#allocation4 + $0x520] sm:$0xff]
    %v5629 = vld [vmem:[#allocation4 + $0x528] sm:$0xff]
    %v5630 = vld [vmem:[#allocation4 + $0x530] sm:$0xff]
    %v5631 = vld [vmem:[#allocation4 + $0x538] sm:$0xff]
    %v5632 = vld [vmem:[#allocation4 + $0x540] sm:$0xff]
    %v5633 = vld [vmem:[#allocation4 + $0x548] sm:$0xff]
    %v5634 = vld [vmem:[#allocation4 + $0x550] sm:$0xff]
    %v5635 = vld [vmem:[#allocation4 + $0x558] sm:$0xff]
    %v5636 = vld [vmem:[#allocation4 + $0x560] sm:$0xff]
    %v5637 = vld [vmem:[#allocation4 + $0x568] sm:$0xff]
    %v5638 = vld [vmem:[#allocation4 + $0x570] sm:$0xff]
    %v5639 = vld [vmem:[#allocation4 + $0x578] sm:$0xff]
    %v5640 = vld [vmem:[#allocation4 + $0x580] sm:$0xff]
    %v5641 = vld [vmem:[#allocation4 + $0x588] sm:$0xff]
    %v5642 = vld [vmem:[#allocation4 + $0x590] sm:$0xff]
    %v5643 = vld [vmem:[#allocation4 + $0x598] sm:$0xff]
    %v5644 = vld [vmem:[#allocation4 + $0x5a0] sm:$0xff]
    %v5645 = vld [vmem:[#allocation4 + $0x5a8] sm:$0xff]
    %v5646 = vld [vmem:[#allocation4 + $0x5b0] sm:$0xff]
    %v5647 = vld [vmem:[#allocation4 + $0x5b8] sm:$0xff]
    %v5648 = vld [vmem:[#allocation4 + $0x5c0] sm:$0xff]
    %v5649 = vld [vmem:[#allocation4 + $0x5c8] sm:$0xff]
    %v5650 = vld [vmem:[#allocation4 + $0x5d0] sm:$0xff]
    %v5651 = vld [vmem:[#allocation4 + $0x5d8] sm:$0xff]
    %v5652 = vld [vmem:[#allocation4 + $0x5e0] sm:$0xff]
    %v5653 = vld [vmem:[#allocation4 + $0x5e8] sm:$0xff]
    %v5654 = vld [vmem:[#allocation4 + $0x5f0] sm:$0xff]
    %v5655 = vld [vmem:[#allocation4 + $0x5f8] sm:$0xff]
    %v5656 = vld [vmem:[#allocation4 + $0x600] sm:$0xff]
    %v5657 = vld [vmem:[#allocation4 + $0x608] sm:$0xff]
    %v5658 = vld [vmem:[#allocation4 + $0x610] sm:$0xff]
    %v5659 = vld [vmem:[#allocation4 + $0x618] sm:$0xff]
    %v5660 = vld [vmem:[#allocation4 + $0x620] sm:$0xff]
    %v5661 = vld [vmem:[#allocation4 + $0x628] sm:$0xff]
    %v5662 = vld [vmem:[#allocation4 + $0x630] sm:$0xff]
    %v5663 = vld [vmem:[#allocation4 + $0x638] sm:$0xff]
    %v5664 = vld [vmem:[#allocation4 + $0x640] sm:$0xff]
    %v5665 = vld [vmem:[#allocation4 + $0x648] sm:$0xff]
    %v5666 = vld [vmem:[#allocation4 + $0x650] sm:$0xff]
    %v5667 = vld [vmem:[#allocation4 + $0x658] sm:$0xff]
    %v5668 = vld [vmem:[#allocation4 + $0x660] sm:$0xff]
    %v5669 = vld [vmem:[#allocation4 + $0x668] sm:$0xff]
    %v5670 = vld [vmem:[#allocation4 + $0x670] sm:$0xff]
    %v5671 = vld [vmem:[#allocation4 + $0x678] sm:$0xff]
    %v5672 = vld [vmem:[#allocation4 + $0x680] sm:$0xff]
    %v5673 = vld [vmem:[#allocation4 + $0x688] sm:$0xff]
    %v5674 = vld [vmem:[#allocation4 + $0x690] sm:$0xff]
    %v5675 = vld [vmem:[#allocation4 + $0x698] sm:$0xff]
    %v5676 = vld [vmem:[#allocation4 + $0x6a0] sm:$0xff]
    %v5677 = vld [vmem:[#allocation4 + $0x6a8] sm:$0xff]
    %v5678 = vld [vmem:[#allocation4 + $0x6b0] sm:$0xff]
    %v5679 = vld [vmem:[#allocation4 + $0x6b8] sm:$0xff]
    %v5680 = vld [vmem:[#allocation4 + $0x6c0] sm:$0xff]
    %v5681 = vld [vmem:[#allocation4 + $0x6c8] sm:$0xff]
    %v5682 = vld [vmem:[#allocation4 + $0x6d0] sm:$0xff]
    %v5683 = vld [vmem:[#allocation4 + $0x6d8] sm:$0xff]
    %v5684 = vld [vmem:[#allocation4 + $0x6e0] sm:$0xff]
    %v5685 = vld [vmem:[#allocation4 + $0x6e8] sm:$0xff]
    %v5686 = vld [vmem:[#allocation4 + $0x6f0] sm:$0xff]
    %v5687 = vld [vmem:[#allocation4 + $0x6f8] sm:$0xff]
    %v5688 = vld [vmem:[#allocation4 + $0x700] sm:$0xff]
    %v5689 = vld [vmem:[#allocation4 + $0x708] sm:$0xff]
    %v5690 = vld [vmem:[#allocation4 + $0x710] sm:$0xff]
    %v5691 = vld [vmem:[#allocation4 + $0x718] sm:$0xff]
    %v5692 = vld [vmem:[#allocation4 + $0x720] sm:$0xff]
    %v5693 = vld [vmem:[#allocation4 + $0x728] sm:$0xff]
    %v5694 = vld [vmem:[#allocation4 + $0x730] sm:$0xff]
    %v5695 = vld [vmem:[#allocation4 + $0x738] sm:$0xff]
    %v5696 = vld [vmem:[#allocation4 + $0x740] sm:$0xff]
    %v5697 = vld [vmem:[#allocation4 + $0x748] sm:$0xff]
    %v5698 = vld [vmem:[#allocation4 + $0x750] sm:$0xff]
    %v5699 = vld [vmem:[#allocation4 + $0x758] sm:$0xff]
    %v5700 = vld [vmem:[#allocation4 + $0x760] sm:$0xff]
    %v5701 = vld [vmem:[#allocation4 + $0x768] sm:$0xff]
    %v5702 = vld [vmem:[#allocation4 + $0x770] sm:$0xff]
    %v5703 = vld [vmem:[#allocation4 + $0x778] sm:$0xff]
    %v5704 = vld [vmem:[#allocation4 + $0x780] sm:$0xff]
    %v5705 = vld [vmem:[#allocation4 + $0x788] sm:$0xff]
    %v5706 = vld [vmem:[#allocation4 + $0x790] sm:$0xff]
    %v5707 = vld [vmem:[#allocation4 + $0x798] sm:$0xff]
    %v5708 = vld [vmem:[#allocation4 + $0x7a0] sm:$0xff]
    %v5709 = vld [vmem:[#allocation4 + $0x7a8] sm:$0xff]
    %v5710 = vld [vmem:[#allocation4 + $0x7b0] sm:$0xff]
    %v5711 = vld [vmem:[#allocation4 + $0x7b8] sm:$0xff]
    %v5712 = vld [vmem:[#allocation4 + $0x7c0] sm:$0xff]
    %v5713 = vld [vmem:[#allocation4 + $0x7c8] sm:$0xff]
    %v5714 = vld [vmem:[#allocation4 + $0x7d0] sm:$0xff]
    %v5715 = vld [vmem:[#allocation4 + $0x7d8] sm:$0xff]
    %v5716 = vld [vmem:[#allocation4 + $0x7e0] sm:$0xff]
    %v5717 = vld [vmem:[#allocation4 + $0x7e8] sm:$0xff]
    %v5718 = vld [vmem:[#allocation4 + $0x7f0] sm:$0xff]
    %v5719 = vld [vmem:[#allocation4 + $0x7f8] sm:$0xff]
    %5720 = vmatprep.subr.mxu0 0.0
    %5721 = vmatpush1.msra.mxu0 %v5400
    %5722 = vmatprep.subr.mxu0 0.0
    %5723 = vmatpush1.msra.mxu0 %v5401
    %5724 = vmatprep.subr.mxu0 0.0
    %5725 = vmatpush1.msra.mxu0 %v5402
    %5726 = vmatprep.subr.mxu0 0.0
    %5727 = vmatpush1.msra.mxu0 %v5403
    %5728 = vmatprep.subr.mxu0 0.0
    %5729 = vmatpush1.msra.mxu0 %v5404
    %5730 = vmatprep.subr.mxu0 0.0
    %5731 = vmatpush1.msra.mxu0 %v5405
    %5732 = vmatprep.subr.mxu0 0.0
    %5733 = vmatpush1.msra.mxu0 %v5406
    %5734 = vmatprep.subr.mxu0 0.0
    %5735 = vmatpush1.msra.mxu0 %v5407
    %5736 = vmatprep.subr.mxu0 0.0
    %5737 = vmatpush1.msra.mxu0 %v5408
    %5738 = vmatprep.subr.mxu0 0.0
    %5739 = vmatpush1.msra.mxu0 %v5409
    %5740 = vmatprep.subr.mxu0 0.0
    %5741 = vmatpush1.msra.mxu0 %v5410
    %5742 = vmatprep.subr.mxu0 0.0
    %5743 = vmatpush1.msra.mxu0 %v5411
    %5744 = vmatprep.subr.mxu0 0.0
    %5745 = vmatpush1.msra.mxu0 %v5412
    %5746 = vmatprep.subr.mxu0 0.0
    %5747 = vmatpush1.msra.mxu0 %v5413
    %5748 = vmatprep.subr.mxu0 0.0
    %5749 = vmatpush1.msra.mxu0 %v5414
    %5750 = vmatprep.subr.mxu0 0.0
    %5751 = vmatpush1.msra.mxu0 %v5415
    %5752 = vmatprep.subr.mxu0 0.0
    %5753 = vmatpush1.msra.mxu0 %v5416
    %5754 = vmatprep.subr.mxu0 0.0
    %5755 = vmatpush1.msra.mxu0 %v5417
    %5756 = vmatprep.subr.mxu0 0.0
    %5757 = vmatpush1.msra.mxu0 %v5418
    %5758 = vmatprep.subr.mxu0 0.0
    %5759 = vmatpush1.msra.mxu0 %v5419
    %5760 = vmatprep.subr.mxu0 0.0
    %5761 = vmatpush1.msra.mxu0 %v5420
    %5762 = vmatprep.subr.mxu0 0.0
    %5763 = vmatpush1.msra.mxu0 %v5421
    %5764 = vmatprep.subr.mxu0 0.0
    %5765 = vmatpush1.msra.mxu0 %v5422
    %5766 = vmatprep.subr.mxu0 0.0
    %5767 = vmatpush1.msra.mxu0 %v5423
    %5768 = vmatprep.subr.mxu0 0.0
    %5769 = vmatpush1.msra.mxu0 %v5424
    %5770 = vmatprep.subr.mxu0 0.0
    %5771 = vmatpush1.msra.mxu0 %v5425
    %5772 = vmatprep.subr.mxu0 0.0
    %5773 = vmatpush1.msra.mxu0 %v5426
    %5774 = vmatprep.subr.mxu0 0.0
    %5775 = vmatpush1.msra.mxu0 %v5427
    %5776 = vmatprep.subr.mxu0 0.0
    %5777 = vmatpush1.msra.mxu0 %v5428
    %5778 = vmatprep.subr.mxu0 0.0
    %5779 = vmatpush1.msra.mxu0 %v5429
    %5780 = vmatprep.subr.mxu0 0.0
    %5781 = vmatpush1.msra.mxu0 %v5430
    %5782 = vmatprep.subr.mxu0 0.0
    %5783 = vmatpush1.msra.mxu0 %v5431
    %5784 = vmatprep.mubr.f32.mxu0 %v5465
    %5785 = vmatmul.mubr.f32.gmra.mrb[0].mxu0 %v5464
    %v5786 = vpop.f32.mrb[0].mxu0
    %v5787 = vadd.f32 0.0, %v5786
    %v5788 = vpop.f32.mrb[0].mxu0
    %5789 = vmatprep.mubr.f32.mxu0 %v5469
    %5790 = vmatmul.mubr.f32.gmra.mrb[0].mxu0 %v5468
    %v5791 = vpop.f32.mrb[0].mxu0
    %v5792 = vadd.f32 0.0, %v5791
    %v5793 = vpop.f32.mrb[0].mxu0
    %5794 = vmatprep.mubr.f32.mxu0 %v5473
    %5795 = vmatmul.mubr.f32.gmra.mrb[0].mxu0 %v5472
    %v5796 = vpop.f32.mrb[0].mxu0
    %v5797 = vadd.f32 0.0, %v5796
    %v5798 = vpop.f32.mrb[0].mxu0
    %5799 = vmatprep.mubr.f32.mxu0 %v5477
    %5800 = vmatmul.mubr.f32.gmra.mrb[0].mxu0 %v5476
    %v5801 = vpop.f32.mrb[0].mxu0
    %v5802 = vadd.f32 0.0, %v5801
    %v5803 = vpop.f32.mrb[0].mxu0
    %5804 = vmatprep.mubr.f32.mxu0 %v5481
    %5805 = vmatmul.mubr.f32.gmra.mrb[0].mxu0 %v5480
    %v5806 = vpop.f32.mrb[0].mxu0
    %v5807 = vadd.f32 0.0, %v5806
    %v5808 = vpop.f32.mrb[0].mxu0
    %5809 = vmatprep.mubr.f32.mxu0 %v5485
    %5810 = vmatmul.mubr.f32.gmra.mrb[0].mxu0 %v5484
    %v5811 = vpop.f32.mrb[0].mxu0
    %v5812 = vadd.f32 0.0, %v5811
    %v5813 = vpop.f32.mrb[0].mxu0
    %5814 = vmatprep.mubr.f32.mxu0 %v5489
    %5815 = vmatmul.mubr.f32.gmra.mrb[0].mxu0 %v5488
    %v5816 = vpop.f32.mrb[0].mxu0
    %v5817 = vadd.f32 0.0, %v5816
    %v5818 = vpop.f32.mrb[0].mxu0
    %5819 = vmatprep.mubr.f32.mxu0 %v5493
    %5820 = vmatmul.mubr.f32.gmra.mrb[0].mxu0 %v5492
    %v5821 = vpop.f32.mrb[0].mxu0
    %v5822 = vadd.f32 0.0, %v5821
    %v5823 = vpop.f32.mrb[0].mxu0
    %5824 = vmatprep.mubr.f32.mxu0 %v5497
    %5825 = vmatmul.mubr.f32.gmra.mrb[0].mxu0 %v5496
    %v5826 = vpop.f32.mrb[0].mxu0
    %v5827 = vadd.f32 0.0, %v5826
    %v5828 = vpop.f32.mrb[0].mxu0
    %5829 = vmatprep.mubr.f32.mxu0 %v5501
    %5830 = vmatmul.mubr.f32.gmra.mrb[0].mxu0 %v5500
    %v5831 = vpop.f32.mrb[0].mxu0
    %v5832 = vadd.f32 0.0, %v5831
    %v5833 = vpop.f32.mrb[0].mxu0
    %5834 = vmatprep.mubr.f32.mxu0 %v5505
    %5835 = vmatmul.mubr.f32.gmra.mrb[0].mxu0 %v5504
    %v5836 = vpop.f32.mrb[0].mxu0
    %v5837 = vadd.f32 0.0, %v5836
    %v5838 = vpop.f32.mrb[0].mxu0
    %5839 = vmatprep.mubr.f32.mxu0 %v5509
    %5840 = vmatmul.mubr.f32.gmra.mrb[0].mxu0 %v5508
    %v5841 = vpop.f32.mrb[0].mxu0
    %v5842 = vadd.f32 0.0, %v5841
    %v5843 = vpop.f32.mrb[0].mxu0
    %5844 = vmatprep.mubr.f32.mxu0 %v5513
    %5845 = vmatmul.mubr.f32.gmra.mrb[0].mxu0 %v5512
    %v5846 = vpop.f32.mrb[0].mxu0
    %v5847 = vadd.f32 0.0, %v5846
    %v5848 = vpop.f32.mrb[0].mxu0
    %5849 = vmatprep.mubr.f32.mxu0 %v5517
    %5850 = vmatmul.mubr.f32.gmra.mrb[0].mxu0 %v5516
    %v5851 = vpop.f32.mrb[0].mxu0
    %v5852 = vadd.f32 0.0, %v5851
    %v5853 = vpop.f32.mrb[0].mxu0
    %5854 = vmatprep.mubr.f32.mxu0 %v5521
    %5855 = vmatmul.mubr.f32.gmra.mrb[0].mxu0 %v5520
    %v5856 = vpop.f32.mrb[0].mxu0
    %v5857 = vadd.f32 0.0, %v5856
    %v5858 = vpop.f32.mrb[0].mxu0
    %5859 = vmatprep.mubr.f32.mxu0 %v5525
    %5860 = vmatmul.mubr.f32.gmra.mrb[0].mxu0 %v5524
    %v5861 = vpop.f32.mrb[0].mxu0
    %v5862 = vadd.f32 0.0, %v5861
    %v5863 = vpop.f32.mrb[0].mxu0
    %5864 = vmatprep.mubr.f32.mxu0 %v5529
    %5865 = vmatmul.mubr.f32.gmra.mrb[0].mxu0 %v5528
    %v5866 = vpop.f32.mrb[0].mxu0
    %v5867 = vadd.f32 0.0, %v5866
    %v5868 = vpop.f32.mrb[0].mxu0
    %5869 = vmatprep.mubr.f32.mxu0 %v5533
    %5870 = vmatmul.mubr.f32.gmra.mrb[0].mxu0 %v5532
    %v5871 = vpop.f32.mrb[0].mxu0
    %v5872 = vadd.f32 0.0, %v5871
    %v5873 = vpop.f32.mrb[0].mxu0
    %5874 = vmatprep.mubr.f32.mxu0 %v5537
    %5875 = vmatmul.mubr.f32.gmra.mrb[0].mxu0 %v5536
    %v5876 = vpop.f32.mrb[0].mxu0
    %v5877 = vadd.f32 0.0, %v5876
    %v5878 = vpop.f32.mrb[0].mxu0
    %5879 = vmatprep.mubr.f32.mxu0 %v5541
    %5880 = vmatmul.mubr.f32.gmra.mrb[0].mxu0 %v5540
    %v5881 = vpop.f32.mrb[0].mxu0
    %v5882 = vadd.f32 0.0, %v5881
    %v5883 = vpop.f32.mrb[0].mxu0
    %5884 = vmatprep.mubr.f32.mxu0 %v5545
    %5885 = vmatmul.mubr.f32.gmra.mrb[0].mxu0 %v5544
    %v5886 = vpop.f32.mrb[0].mxu0
    %v5887 = vadd.f32 0.0, %v5886
    %v5888 = vpop.f32.mrb[0].mxu0
    %5889 = vmatprep.mubr.f32.mxu0 %v5549
    %5890 = vmatmul.mubr.f32.gmra.mrb[0].mxu0 %v5548
    %v5891 = vpop.f32.mrb[0].mxu0
    %v5892 = vadd.f32 0.0, %v5891
    %v5893 = vpop.f32.mrb[0].mxu0
    %5894 = vmatprep.mubr.f32.mxu0 %v5553
    %5895 = vmatmul.mubr.f32.gmra.mrb[0].mxu0 %v5552
    %v5896 = vpop.f32.mrb[0].mxu0
    %v5897 = vadd.f32 0.0, %v5896
    %v5898 = vpop.f32.mrb[0].mxu0
    %5899 = vmatprep.mubr.f32.mxu0 %v5557
    %5900 = vmatmul.mubr.f32.gmra.mrb[0].mxu0 %v5556
    %v5901 = vpop.f32.mrb[0].mxu0
    %v5902 = vadd.f32 0.0, %v5901
    %v5903 = vpop.f32.mrb[0].mxu0
    %5904 = vmatprep.mubr.f32.mxu0 %v5561
    %5905 = vmatmul.mubr.f32.gmra.mrb[0].mxu0 %v5560
    %v5906 = vpop.f32.mrb[0].mxu0
    %v5907 = vadd.f32 0.0, %v5906
    %v5908 = vpop.f32.mrb[0].mxu0
    %5909 = vmatprep.mubr.f32.mxu0 %v5565
    %5910 = vmatmul.mubr.f32.gmra.mrb[0].mxu0 %v5564
    %v5911 = vpop.f32.mrb[0].mxu0
    %v5912 = vadd.f32 0.0, %v5911
    %v5913 = vpop.f32.mrb[0].mxu0
    %5914 = vmatprep.mubr.f32.mxu0 %v5569
    %5915 = vmatmul.mubr.f32.gmra.mrb[0].mxu0 %v5568
    %v5916 = vpop.f32.mrb[0].mxu0
    %v5917 = vadd.f32 0.0, %v5916
    %v5918 = vpop.f32.mrb[0].mxu0
    %5919 = vmatprep.mubr.f32.mxu0 %v5573
    %5920 = vmatmul.mubr.f32.gmra.mrb[0].mxu0 %v5572
    %v5921 = vpop.f32.mrb[0].mxu0
    %v5922 = vadd.f32 0.0, %v5921
    %v5923 = vpop.f32.mrb[0].mxu0
    %5924 = vmatprep.mubr.f32.mxu0 %v5577
    %5925 = vmatmul.mubr.f32.gmra.mrb[0].mxu0 %v5576
    %v5926 = vpop.f32.mrb[0].mxu0
    %v5927 = vadd.f32 0.0, %v5926
    %v5928 = vpop.f32.mrb[0].mxu0
    %5929 = vmatprep.mubr.f32.mxu0 %v5581
    %5930 = vmatmul.mubr.f32.gmra.mrb[0].mxu0 %v5580
    %v5931 = vpop.f32.mrb[0].mxu0
    %v5932 = vadd.f32 0.0, %v5931
    %v5933 = vpop.f32.mrb[0].mxu0
    %5934 = vmatprep.mubr.f32.mxu0 %v5585
    %5935 = vmatmul.mubr.f32.gmra.mrb[0].mxu0 %v5584
    %v5936 = vpop.f32.mrb[0].mxu0
    %v5937 = vadd.f32 0.0, %v5936
    %v5938 = vpop.f32.mrb[0].mxu0
    %5939 = vmatprep.mubr.f32.mxu0 %v5589
    %5940 = vmatmul.mubr.f32.gmra.mrb[0].mxu0 %v5588
    %v5941 = vpop.f32.mrb[0].mxu0
    %v5942 = vadd.f32 0.0, %v5941
    %v5943 = vpop.f32.mrb[0].mxu0
    %5944 = vmatprep.mubr.f32.mxu0 %v5593
    %5945 = vmatmul.mubr.f32.gmra.mrb[0].mxu0 %v5592
    %v5946 = vpop.f32.mrb[0].mxu0
    %v5947 = vadd.f32 0.0, %v5946
    %v5948 = vpop.f32.mrb[0].mxu0
    %5949 = vmatprep.mubr.f32.mxu0 %v5597
    %5950 = vmatmul.mubr.f32.gmra.mrb[0].mxu0 %v5596
    %v5951 = vpop.f32.mrb[0].mxu0
    %v5952 = vadd.f32 0.0, %v5951
    %v5953 = vpop.f32.mrb[0].mxu0
    %5954 = vmatprep.mubr.f32.mxu0 %v5601
    %5955 = vmatmul.mubr.f32.gmra.mrb[0].mxu0 %v5600
    %v5956 = vpop.f32.mrb[0].mxu0
    %v5957 = vadd.f32 0.0, %v5956
    %v5958 = vpop.f32.mrb[0].mxu0
    %5959 = vmatprep.mubr.f32.mxu0 %v5605
    %5960 = vmatmul.mubr.f32.gmra.mrb[0].mxu0 %v5604
    %v5961 = vpop.f32.mrb[0].mxu0
    %v5962 = vadd.f32 0.0, %v5961
    %v5963 = vpop.f32.mrb[0].mxu0
    %5964 = vmatprep.mubr.f32.mxu0 %v5609
    %5965 = vmatmul.mubr.f32.gmra.mrb[0].mxu0 %v5608
    %v5966 = vpop.f32.mrb[0].mxu0
    %v5967 = vadd.f32 0.0, %v5966
    %v5968 = vpop.f32.mrb[0].mxu0
    %5969 = vmatprep.mubr.f32.mxu0 %v5613
    %5970 = vmatmul.mubr.f32.gmra.mrb[0].mxu0 %v5612
    %v5971 = vpop.f32.mrb[0].mxu0
    %v5972 = vadd.f32 0.0, %v5971
    %v5973 = vpop.f32.mrb[0].mxu0
    %5974 = vmatprep.mubr.f32.mxu0 %v5617
    %5975 = vmatmul.mubr.f32.gmra.mrb[0].mxu0 %v5616
    %v5976 = vpop.f32.mrb[0].mxu0
    %v5977 = vadd.f32 0.0, %v5976
    %v5978 = vpop.f32.mrb[0].mxu0
    %5979 = vmatprep.mubr.f32.mxu0 %v5621
    %5980 = vmatmul.mubr.f32.gmra.mrb[0].mxu0 %v5620
    %v5981 = vpop.f32.mrb[0].mxu0
    %v5982 = vadd.f32 0.0, %v5981
    %v5983 = vpop.f32.mrb[0].mxu0
    %5984 = vmatprep.mubr.f32.mxu0 %v5625
    %5985 = vmatmul.mubr.f32.gmra.mrb[0].mxu0 %v5624
    %v5986 = vpop.f32.mrb[0].mxu0
    %v5987 = vadd.f32 0.0, %v5986
    %v5988 = vpop.f32.mrb[0].mxu0
    %5989 = vmatprep.mubr.f32.mxu0 %v5629
    %5990 = vmatmul.mubr.f32.gmra.mrb[0].mxu0 %v5628
    %v5991 = vpop.f32.mrb[0].mxu0
    %v5992 = vadd.f32 0.0, %v5991
    %v5993 = vpop.f32.mrb[0].mxu0
    %5994 = vmatprep.mubr.f32.mxu0 %v5633
    %5995 = vmatmul.mubr.f32.gmra.mrb[0].mxu0 %v5632
    %v5996 = vpop.f32.mrb[0].mxu0
    %v5997 = vadd.f32 0.0, %v5996
    %v5998 = vpop.f32.mrb[0].mxu0
    %5999 = vmatprep.mubr.f32.mxu0 %v5637
    %6000 = vmatmul.mubr.f32.gmra.mrb[0].mxu0 %v5636
    %v6001 = vpop.f32.mrb[0].mxu0
    %v6002 = vadd.f32 0.0, %v6001
    %v6003 = vpop.f32.mrb[0].mxu0
    %6004 = vmatprep.mubr.f32.mxu0 %v5641
    %6005 = vmatmul.mubr.f32.gmra.mrb[0].mxu0 %v5640
    %v6006 = vpop.f32.mrb[0].mxu0
    %v6007 = vadd.f32 0.0, %v6006
    %v6008 = vpop.f32.mrb[0].mxu0
    %6009 = vmatprep.mubr.f32.mxu0 %v5645
    %6010 = vmatmul.mubr.f32.gmra.mrb[0].mxu0 %v5644
    %v6011 = vpop.f32.mrb[0].mxu0
    %v6012 = vadd.f32 0.0, %v6011
    %v6013 = vpop.f32.mrb[0].mxu0
    %6014 = vmatprep.mubr.f32.mxu0 %v5649
    %6015 = vmatmul.mubr.f32.gmra.mrb[0].mxu0 %v5648
    %v6016 = vpop.f32.mrb[0].mxu0
    %v6017 = vadd.f32 0.0, %v6016
    %v6018 = vpop.f32.mrb[0].mxu0
    %6019 = vmatprep.mubr.f32.mxu0 %v5653
    %6020 = vmatmul.mubr.f32.gmra.mrb[0].mxu0 %v5652
    %v6021 = vpop.f32.mrb[0].mxu0
    %v6022 = vadd.f32 0.0, %v6021
    %v6023 = vpop.f32.mrb[0].mxu0
    %6024 = vmatprep.mubr.f32.mxu0 %v5657
    %6025 = vmatmul.mubr.f32.gmra.mrb[0].mxu0 %v5656
    %v6026 = vpop.f32.mrb[0].mxu0
    %v6027 = vadd.f32 0.0, %v6026
    %v6028 = vpop.f32.mrb[0].mxu0
    %6029 = vmatprep.mubr.f32.mxu0 %v5661
    %6030 = vmatmul.mubr.f32.gmra.mrb[0].mxu0 %v5660
    %v6031 = vpop.f32.mrb[0].mxu0
    %v6032 = vadd.f32 0.0, %v6031
    %v6033 = vpop.f32.mrb[0].mxu0
    %6034 = vmatprep.mubr.f32.mxu0 %v5665
    %6035 = vmatmul.mubr.f32.gmra.mrb[0].mxu0 %v5664
    %v6036 = vpop.f32.mrb[0].mxu0
    %v6037 = vadd.f32 0.0, %v6036
    %v6038 = vpop.f32.mrb[0].mxu0
    %6039 = vmatprep.mubr.f32.mxu0 %v5669
    %6040 = vmatmul.mubr.f32.gmra.mrb[0].mxu0 %v5668
    %v6041 = vpop.f32.mrb[0].mxu0
    %v6042 = vadd.f32 0.0, %v6041
    %v6043 = vpop.f32.mrb[0].mxu0
    %6044 = vmatprep.mubr.f32.mxu0 %v5673
    %6045 = vmatmul.mubr.f32.gmra.mrb[0].mxu0 %v5672
    %v6046 = vpop.f32.mrb[0].mxu0
    %v6047 = vadd.f32 0.0, %v6046
    %v6048 = vpop.f32.mrb[0].mxu0
    %6049 = vmatprep.mubr.f32.mxu0 %v5677
    %6050 = vmatmul.mubr.f32.gmra.mrb[0].mxu0 %v5676
    %v6051 = vpop.f32.mrb[0].mxu0
    %v6052 = vadd.f32 0.0, %v6051
    %v6053 = vpop.f32.mrb[0].mxu0
    %6054 = vmatprep.mubr.f32.mxu0 %v5681
    %6055 = vmatmul.mubr.f32.gmra.mrb[0].mxu0 %v5680
    %v6056 = vpop.f32.mrb[0].mxu0
    %v6057 = vadd.f32 0.0, %v6056
    %v6058 = vpop.f32.mrb[0].mxu0
    %6059 = vmatprep.mubr.f32.mxu0 %v5685
    %6060 = vmatmul.mubr.f32.gmra.mrb[0].mxu0 %v5684
    %v6061 = vpop.f32.mrb[0].mxu0
    %v6062 = vadd.f32 0.0, %v6061
    %v6063 = vpop.f32.mrb[0].mxu0
    %6064 = vmatprep.mubr.f32.mxu0 %v5689
    %6065 = vmatmul.mubr.f32.gmra.mrb[0].mxu0 %v5688
    %v6066 = vpop.f32.mrb[0].mxu0
    %v6067 = vadd.f32 0.0, %v6066
    %v6068 = vpop.f32.mrb[0].mxu0
    %6069 = vmatprep.mubr.f32.mxu0 %v5693
    %6070 = vmatmul.mubr.f32.gmra.mrb[0].mxu0 %v5692
    %v6071 = vpop.f32.mrb[0].mxu0
    %v6072 = vadd.f32 0.0, %v6071
    %v6073 = vpop.f32.mrb[0].mxu0
    %6074 = vmatprep.mubr.f32.mxu0 %v5697
    %6075 = vmatmul.mubr.f32.gmra.mrb[0].mxu0 %v5696
    %v6076 = vpop.f32.mrb[0].mxu0
    %v6077 = vadd.f32 0.0, %v6076
    %v6078 = vpop.f32.mrb[0].mxu0
    %6079 = vmatprep.mubr.f32.mxu0 %v5701
    %6080 = vmatmul.mubr.f32.gmra.mrb[0].mxu0 %v5700
    %v6081 = vpop.f32.mrb[0].mxu0
    %v6082 = vadd.f32 0.0, %v6081
    %v6083 = vpop.f32.mrb[0].mxu0
    %6084 = vmatprep.mubr.f32.mxu0 %v5705
    %6085 = vmatmul.mubr.f32.gmra.mrb[0].mxu0 %v5704
    %v6086 = vpop.f32.mrb[0].mxu0
    %v6087 = vadd.f32 0.0, %v6086
    %v6088 = vpop.f32.mrb[0].mxu0
    %6089 = vmatprep.mubr.f32.mxu0 %v5709
    %6090 = vmatmul.mubr.f32.gmra.mrb[0].mxu0 %v5708
    %v6091 = vpop.f32.mrb[0].mxu0
    %v6092 = vadd.f32 0.0, %v6091
    %v6093 = vpop.f32.mrb[0].mxu0
    %6094 = vmatprep.mubr.f32.mxu0 %v5713
    %6095 = vmatmul.mubr.f32.gmra.mrb[0].mxu0 %v5712
    %v6096 = vpop.f32.mrb[0].mxu0
    %v6097 = vadd.f32 0.0, %v6096
    %v6098 = vpop.f32.mrb[0].mxu0
    %6099 = vmatprep.mubr.f32.mxu0 %v5717
    %6100 = vmatmul.mubr.f32.gmra.mrb[0].mxu0 %v5716
    %v6101 = vpop.f32.mrb[0].mxu0
    %v6102 = vadd.f32 0.0, %v6101
    %v6103 = vpop.f32.mrb[0].mxu0
    %6104 = vdwg.mxu0
    %6105 = vmatprep.subr.mxu0 0.0
    %6106 = vmatpush1.msra.mxu0 %v5432
    %6107 = vmatprep.subr.mxu0 0.0
    %6108 = vmatpush1.msra.mxu0 %v5433
    %6109 = vmatprep.subr.mxu0 0.0
    %6110 = vmatpush1.msra.mxu0 %v5434
    %6111 = vmatprep.subr.mxu0 0.0
    %6112 = vmatpush1.msra.mxu0 %v5435
    %6113 = vmatprep.subr.mxu0 0.0
    %6114 = vmatpush1.msra.mxu0 %v5436
    %6115 = vmatprep.subr.mxu0 0.0
    %6116 = vmatpush1.msra.mxu0 %v5437
    %6117 = vmatprep.subr.mxu0 0.0
    %6118 = vmatpush1.msra.mxu0 %v5438
    %6119 = vmatprep.subr.mxu0 0.0
    %6120 = vmatpush1.msra.mxu0 %v5439
    %6121 = vmatprep.subr.mxu0 0.0
    %6122 = vmatpush1.msra.mxu0 %v5440
    %6123 = vmatprep.subr.mxu0 0.0
    %6124 = vmatpush1.msra.mxu0 %v5441
    %6125 = vmatprep.subr.mxu0 0.0
    %6126 = vmatpush1.msra.mxu0 %v5442
    %6127 = vmatprep.subr.mxu0 0.0
    %6128 = vmatpush1.msra.mxu0 %v5443
    %6129 = vmatprep.subr.mxu0 0.0
    %6130 = vmatpush1.msra.mxu0 %v5444
    %6131 = vmatprep.subr.mxu0 0.0
    %6132 = vmatpush1.msra.mxu0 %v5445
    %6133 = vmatprep.subr.mxu0 0.0
    %6134 = vmatpush1.msra.mxu0 %v5446
    %6135 = vmatprep.subr.mxu0 0.0
    %6136 = vmatpush1.msra.mxu0 %v5447
    %6137 = vmatprep.subr.mxu0 0.0
    %6138 = vmatpush1.msra.mxu0 %v5448
    %6139 = vmatprep.subr.mxu0 0.0
    %6140 = vmatpush1.msra.mxu0 %v5449
    %6141 = vmatprep.subr.mxu0 0.0
    %6142 = vmatpush1.msra.mxu0 %v5450
    %6143 = vmatprep.subr.mxu0 0.0
    %6144 = vmatpush1.msra.mxu0 %v5451
    %6145 = vmatprep.subr.mxu0 0.0
    %6146 = vmatpush1.msra.mxu0 %v5452
    %6147 = vmatprep.subr.mxu0 0.0
    %6148 = vmatpush1.msra.mxu0 %v5453
    %6149 = vmatprep.subr.mxu0 0.0
    %6150 = vmatpush1.msra.mxu0 %v5454
    %6151 = vmatprep.subr.mxu0 0.0
    %6152 = vmatpush1.msra.mxu0 %v5455
    %6153 = vmatprep.subr.mxu0 0.0
    %6154 = vmatpush1.msra.mxu0 %v5456
    %6155 = vmatprep.subr.mxu0 0.0
    %6156 = vmatpush1.msra.mxu0 %v5457
    %6157 = vmatprep.subr.mxu0 0.0
    %6158 = vmatpush1.msra.mxu0 %v5458
    %6159 = vmatprep.subr.mxu0 0.0
    %6160 = vmatpush1.msra.mxu0 %v5459
    %6161 = vmatprep.subr.mxu0 0.0
    %6162 = vmatpush1.msra.mxu0 %v5460
    %6163 = vmatprep.subr.mxu0 0.0
    %6164 = vmatpush1.msra.mxu0 %v5461
    %6165 = vmatprep.subr.mxu0 0.0
    %6166 = vmatpush1.msra.mxu0 %v5462
    %6167 = vmatprep.subr.mxu0 0.0
    %6168 = vmatpush1.msra.mxu0 %v5463
    %6169 = vmatprep.mubr.f32.mxu0 %v5467
    %6170 = vmatmul.mubr.f32.gmra.mrb[0].mxu0 %v5466
    %v6171 = vpop.f32.mrb[0].mxu0
    %v6172 = vadd.f32 %v5787, %v6171
    %v6173 = vpop.f32.mrb[0].mxu0
    %6174 = vmatprep.mubr.f32.mxu0 %v5471
    %6175 = vmatmul.mubr.f32.gmra.mrb[0].mxu0 %v5470
    %v6176 = vpop.f32.mrb[0].mxu0
    %v6177 = vadd.f32 %v5792, %v6176
    %v6178 = vpop.f32.mrb[0].mxu0
    %6179 = vmatprep.mubr.f32.mxu0 %v5475
    %6180 = vmatmul.mubr.f32.gmra.mrb[0].mxu0 %v5474
    %v6181 = vpop.f32.mrb[0].mxu0
    %v6182 = vadd.f32 %v5797, %v6181
    %v6183 = vpop.f32.mrb[0].mxu0
    %6184 = vmatprep.mubr.f32.mxu0 %v5479
    %6185 = vmatmul.mubr.f32.gmra.mrb[0].mxu0 %v5478
    %v6186 = vpop.f32.mrb[0].mxu0
    %v6187 = vadd.f32 %v5802, %v6186
    %v6188 = vpop.f32.mrb[0].mxu0
    %6189 = vmatprep.mubr.f32.mxu0 %v5483
    %6190 = vmatmul.mubr.f32.gmra.mrb[0].mxu0 %v5482
    %v6191 = vpop.f32.mrb[0].mxu0
    %v6192 = vadd.f32 %v5807, %v6191
    %v6193 = vpop.f32.mrb[0].mxu0
    %6194 = vmatprep.mubr.f32.mxu0 %v5487
    %6195 = vmatmul.mubr.f32.gmra.mrb[0].mxu0 %v5486
    %v6196 = vpop.f32.mrb[0].mxu0
    %v6197 = vadd.f32 %v5812, %v6196
    %v6198 = vpop.f32.mrb[0].mxu0
    %6199 = vmatprep.mubr.f32.mxu0 %v5491
    %6200 = vmatmul.mubr.f32.gmra.mrb[0].mxu0 %v5490
    %v6201 = vpop.f32.mrb[0].mxu0
    %v6202 = vadd.f32 %v5817, %v6201
    %v6203 = vpop.f32.mrb[0].mxu0
    %6204 = vmatprep.mubr.f32.mxu0 %v5495
    %6205 = vmatmul.mubr.f32.gmra.mrb[0].mxu0 %v5494
    %v6206 = vpop.f32.mrb[0].mxu0
    %v6207 = vadd.f32 %v5822, %v6206
    %v6208 = vpop.f32.mrb[0].mxu0
    %6209 = vmatprep.mubr.f32.mxu0 %v5499
    %6210 = vmatmul.mubr.f32.gmra.mrb[0].mxu0 %v5498
    %v6211 = vpop.f32.mrb[0].mxu0
    %v6212 = vadd.f32 %v5827, %v6211
    %v6213 = vpop.f32.mrb[0].mxu0
    %6214 = vmatprep.mubr.f32.mxu0 %v5503
    %6215 = vmatmul.mubr.f32.gmra.mrb[0].mxu0 %v5502
    %v6216 = vpop.f32.mrb[0].mxu0
    %v6217 = vadd.f32 %v5832, %v6216
    %v6218 = vpop.f32.mrb[0].mxu0
    %6219 = vmatprep.mubr.f32.mxu0 %v5507
    %6220 = vmatmul.mubr.f32.gmra.mrb[0].mxu0 %v5506
    %v6221 = vpop.f32.mrb[0].mxu0
    %v6222 = vadd.f32 %v5837, %v6221
    %v6223 = vpop.f32.mrb[0].mxu0
    %6224 = vmatprep.mubr.f32.mxu0 %v5511
    %6225 = vmatmul.mubr.f32.gmra.mrb[0].mxu0 %v5510
    %v6226 = vpop.f32.mrb[0].mxu0
    %v6227 = vadd.f32 %v5842, %v6226
    %v6228 = vpop.f32.mrb[0].mxu0
    %6229 = vmatprep.mubr.f32.mxu0 %v5515
    %6230 = vmatmul.mubr.f32.gmra.mrb[0].mxu0 %v5514
    %v6231 = vpop.f32.mrb[0].mxu0
    %v6232 = vadd.f32 %v5847, %v6231
    %v6233 = vpop.f32.mrb[0].mxu0
    %6234 = vmatprep.mubr.f32.mxu0 %v5519
    %6235 = vmatmul.mubr.f32.gmra.mrb[0].mxu0 %v5518
    %v6236 = vpop.f32.mrb[0].mxu0
    %v6237 = vadd.f32 %v5852, %v6236
    %v6238 = vpop.f32.mrb[0].mxu0
    %6239 = vmatprep.mubr.f32.mxu0 %v5523
    %6240 = vmatmul.mubr.f32.gmra.mrb[0].mxu0 %v5522
    %v6241 = vpop.f32.mrb[0].mxu0
    %v6242 = vadd.f32 %v5857, %v6241
    %v6243 = vpop.f32.mrb[0].mxu0
    %6244 = vmatprep.mubr.f32.mxu0 %v5527
    %6245 = vmatmul.mubr.f32.gmra.mrb[0].mxu0 %v5526
    %v6246 = vpop.f32.mrb[0].mxu0
    %v6247 = vadd.f32 %v5862, %v6246
    %v6248 = vpop.f32.mrb[0].mxu0
    %6249 = vmatprep.mubr.f32.mxu0 %v5531
    %6250 = vmatmul.mubr.f32.gmra.mrb[0].mxu0 %v5530
    %v6251 = vpop.f32.mrb[0].mxu0
    %v6252 = vadd.f32 %v5867, %v6251
    %v6253 = vpop.f32.mrb[0].mxu0
    %6254 = vmatprep.mubr.f32.mxu0 %v5535
    %6255 = vmatmul.mubr.f32.gmra.mrb[0].mxu0 %v5534
    %v6256 = vpop.f32.mrb[0].mxu0
    %v6257 = vadd.f32 %v5872, %v6256
    %v6258 = vpop.f32.mrb[0].mxu0
    %6259 = vmatprep.mubr.f32.mxu0 %v5539
    %6260 = vmatmul.mubr.f32.gmra.mrb[0].mxu0 %v5538
    %v6261 = vpop.f32.mrb[0].mxu0
    %v6262 = vadd.f32 %v5877, %v6261
    %v6263 = vpop.f32.mrb[0].mxu0
    %6264 = vmatprep.mubr.f32.mxu0 %v5543
    %6265 = vmatmul.mubr.f32.gmra.mrb[0].mxu0 %v5542
    %v6266 = vpop.f32.mrb[0].mxu0
    %v6267 = vadd.f32 %v5882, %v6266
    %v6268 = vpop.f32.mrb[0].mxu0
    %6269 = vmatprep.mubr.f32.mxu0 %v5547
    %6270 = vmatmul.mubr.f32.gmra.mrb[0].mxu0 %v5546
    %v6271 = vpop.f32.mrb[0].mxu0
    %v6272 = vadd.f32 %v5887, %v6271
    %v6273 = vpop.f32.mrb[0].mxu0
    %6274 = vmatprep.mubr.f32.mxu0 %v5551
    %6275 = vmatmul.mubr.f32.gmra.mrb[0].mxu0 %v5550
    %v6276 = vpop.f32.mrb[0].mxu0
    %v6277 = vadd.f32 %v5892, %v6276
    %v6278 = vpop.f32.mrb[0].mxu0
    %6279 = vmatprep.mubr.f32.mxu0 %v5555
    %6280 = vmatmul.mubr.f32.gmra.mrb[0].mxu0 %v5554
    %v6281 = vpop.f32.mrb[0].mxu0
    %v6282 = vadd.f32 %v5897, %v6281
    %v6283 = vpop.f32.mrb[0].mxu0
    %6284 = vmatprep.mubr.f32.mxu0 %v5559
    %6285 = vmatmul.mubr.f32.gmra.mrb[0].mxu0 %v5558
    %v6286 = vpop.f32.mrb[0].mxu0
    %v6287 = vadd.f32 %v5902, %v6286
    %v6288 = vpop.f32.mrb[0].mxu0
    %6289 = vmatprep.mubr.f32.mxu0 %v5563
    %6290 = vmatmul.mubr.f32.gmra.mrb[0].mxu0 %v5562
    %v6291 = vpop.f32.mrb[0].mxu0
    %v6292 = vadd.f32 %v5907, %v6291
    %v6293 = vpop.f32.mrb[0].mxu0
    %6294 = vmatprep.mubr.f32.mxu0 %v5567
    %6295 = vmatmul.mubr.f32.gmra.mrb[0].mxu0 %v5566
    %v6296 = vpop.f32.mrb[0].mxu0
    %v6297 = vadd.f32 %v5912, %v6296
    %v6298 = vpop.f32.mrb[0].mxu0
    %6299 = vmatprep.mubr.f32.mxu0 %v5571
    %6300 = vmatmul.mubr.f32.gmra.mrb[0].mxu0 %v5570
    %v6301 = vpop.f32.mrb[0].mxu0
    %v6302 = vadd.f32 %v5917, %v6301
    %v6303 = vpop.f32.mrb[0].mxu0
    %6304 = vmatprep.mubr.f32.mxu0 %v5575
    %6305 = vmatmul.mubr.f32.gmra.mrb[0].mxu0 %v5574
    %v6306 = vpop.f32.mrb[0].mxu0
    %v6307 = vadd.f32 %v5922, %v6306
    %v6308 = vpop.f32.mrb[0].mxu0
    %6309 = vmatprep.mubr.f32.mxu0 %v5579
    %6310 = vmatmul.mubr.f32.gmra.mrb[0].mxu0 %v5578
    %v6311 = vpop.f32.mrb[0].mxu0
    %v6312 = vadd.f32 %v5927, %v6311
    %v6313 = vpop.f32.mrb[0].mxu0
    %6314 = vmatprep.mubr.f32.mxu0 %v5583
    %6315 = vmatmul.mubr.f32.gmra.mrb[0].mxu0 %v5582
    %v6316 = vpop.f32.mrb[0].mxu0
    %v6317 = vadd.f32 %v5932, %v6316
    %v6318 = vpop.f32.mrb[0].mxu0
    %6319 = vmatprep.mubr.f32.mxu0 %v5587
    %6320 = vmatmul.mubr.f32.gmra.mrb[0].mxu0 %v5586
    %v6321 = vpop.f32.mrb[0].mxu0
    %v6322 = vadd.f32 %v5937, %v6321
    %v6323 = vpop.f32.mrb[0].mxu0
    %6324 = vmatprep.mubr.f32.mxu0 %v5591
    %6325 = vmatmul.mubr.f32.gmra.mrb[0].mxu0 %v5590
    %v6326 = vpop.f32.mrb[0].mxu0
    %v6327 = vadd.f32 %v5942, %v6326
    %v6328 = vpop.f32.mrb[0].mxu0
    %6329 = vmatprep.mubr.f32.mxu0 %v5595
    %6330 = vmatmul.mubr.f32.gmra.mrb[0].mxu0 %v5594
    %v6331 = vpop.f32.mrb[0].mxu0
    %v6332 = vadd.f32 %v5947, %v6331
    %v6333 = vpop.f32.mrb[0].mxu0
    %6334 = vmatprep.mubr.f32.mxu0 %v5599
    %6335 = vmatmul.mubr.f32.gmra.mrb[0].mxu0 %v5598
    %v6336 = vpop.f32.mrb[0].mxu0
    %v6337 = vadd.f32 %v5952, %v6336
    %v6338 = vpop.f32.mrb[0].mxu0
    %6339 = vmatprep.mubr.f32.mxu0 %v5603
    %6340 = vmatmul.mubr.f32.gmra.mrb[0].mxu0 %v5602
    %v6341 = vpop.f32.mrb[0].mxu0
    %v6342 = vadd.f32 %v5957, %v6341
    %v6343 = vpop.f32.mrb[0].mxu0
    %6344 = vmatprep.mubr.f32.mxu0 %v5607
    %6345 = vmatmul.mubr.f32.gmra.mrb[0].mxu0 %v5606
    %v6346 = vpop.f32.mrb[0].mxu0
    %v6347 = vadd.f32 %v5962, %v6346
    %v6348 = vpop.f32.mrb[0].mxu0
    %6349 = vmatprep.mubr.f32.mxu0 %v5611
    %6350 = vmatmul.mubr.f32.gmra.mrb[0].mxu0 %v5610
    %v6351 = vpop.f32.mrb[0].mxu0
    %v6352 = vadd.f32 %v5967, %v6351
    %v6353 = vpop.f32.mrb[0].mxu0
    %6354 = vmatprep.mubr.f32.mxu0 %v5615
    %6355 = vmatmul.mubr.f32.gmra.mrb[0].mxu0 %v5614
    %v6356 = vpop.f32.mrb[0].mxu0
    %v6357 = vadd.f32 %v5972, %v6356
    %v6358 = vpop.f32.mrb[0].mxu0
    %6359 = vmatprep.mubr.f32.mxu0 %v5619
    %6360 = vmatmul.mubr.f32.gmra.mrb[0].mxu0 %v5618
    %v6361 = vpop.f32.mrb[0].mxu0
    %v6362 = vadd.f32 %v5977, %v6361
    %v6363 = vpop.f32.mrb[0].mxu0
    %6364 = vmatprep.mubr.f32.mxu0 %v5623
    %6365 = vmatmul.mubr.f32.gmra.mrb[0].mxu0 %v5622
    %v6366 = vpop.f32.mrb[0].mxu0
    %v6367 = vadd.f32 %v5982, %v6366
    %v6368 = vpop.f32.mrb[0].mxu0
    %6369 = vmatprep.mubr.f32.mxu0 %v5627
    %6370 = vmatmul.mubr.f32.gmra.mrb[0].mxu0 %v5626
    %v6371 = vpop.f32.mrb[0].mxu0
    %v6372 = vadd.f32 %v5987, %v6371
    %v6373 = vpop.f32.mrb[0].mxu0
    %6374 = vmatprep.mubr.f32.mxu0 %v5631
    %6375 = vmatmul.mubr.f32.gmra.mrb[0].mxu0 %v5630
    %v6376 = vpop.f32.mrb[0].mxu0
    %v6377 = vadd.f32 %v5992, %v6376
    %v6378 = vpop.f32.mrb[0].mxu0
    %6379 = vmatprep.mubr.f32.mxu0 %v5635
    %6380 = vmatmul.mubr.f32.gmra.mrb[0].mxu0 %v5634
    %v6381 = vpop.f32.mrb[0].mxu0
    %v6382 = vadd.f32 %v5997, %v6381
    %v6383 = vpop.f32.mrb[0].mxu0
    %6384 = vmatprep.mubr.f32.mxu0 %v5639
    %6385 = vmatmul.mubr.f32.gmra.mrb[0].mxu0 %v5638
    %v6386 = vpop.f32.mrb[0].mxu0
    %v6387 = vadd.f32 %v6002, %v6386
    %v6388 = vpop.f32.mrb[0].mxu0
    %6389 = vmatprep.mubr.f32.mxu0 %v5643
    %6390 = vmatmul.mubr.f32.gmra.mrb[0].mxu0 %v5642
    %v6391 = vpop.f32.mrb[0].mxu0
    %v6392 = vadd.f32 %v6007, %v6391
    %v6393 = vpop.f32.mrb[0].mxu0
    %6394 = vmatprep.mubr.f32.mxu0 %v5647
    %6395 = vmatmul.mubr.f32.gmra.mrb[0].mxu0 %v5646
    %v6396 = vpop.f32.mrb[0].mxu0
    %v6397 = vadd.f32 %v6012, %v6396
    %v6398 = vpop.f32.mrb[0].mxu0
    %6399 = vmatprep.mubr.f32.mxu0 %v5651
    %6400 = vmatmul.mubr.f32.gmra.mrb[0].mxu0 %v5650
    %v6401 = vpop.f32.mrb[0].mxu0
    %v6402 = vadd.f32 %v6017, %v6401
    %v6403 = vpop.f32.mrb[0].mxu0
    %6404 = vmatprep.mubr.f32.mxu0 %v5655
    %6405 = vmatmul.mubr.f32.gmra.mrb[0].mxu0 %v5654
    %v6406 = vpop.f32.mrb[0].mxu0
    %v6407 = vadd.f32 %v6022, %v6406
    %v6408 = vpop.f32.mrb[0].mxu0
    %6409 = vmatprep.mubr.f32.mxu0 %v5659
    %6410 = vmatmul.mubr.f32.gmra.mrb[0].mxu0 %v5658
    %v6411 = vpop.f32.mrb[0].mxu0
    %v6412 = vadd.f32 %v6027, %v6411
    %v6413 = vpop.f32.mrb[0].mxu0
    %6414 = vmatprep.mubr.f32.mxu0 %v5663
    %6415 = vmatmul.mubr.f32.gmra.mrb[0].mxu0 %v5662
    %v6416 = vpop.f32.mrb[0].mxu0
    %v6417 = vadd.f32 %v6032, %v6416
    %v6418 = vpop.f32.mrb[0].mxu0
    %6419 = vmatprep.mubr.f32.mxu0 %v5667
    %6420 = vmatmul.mubr.f32.gmra.mrb[0].mxu0 %v5666
    %v6421 = vpop.f32.mrb[0].mxu0
    %v6422 = vadd.f32 %v6037, %v6421
    %v6423 = vpop.f32.mrb[0].mxu0
    %6424 = vmatprep.mubr.f32.mxu0 %v5671
    %6425 = vmatmul.mubr.f32.gmra.mrb[0].mxu0 %v5670
    %v6426 = vpop.f32.mrb[0].mxu0
    %v6427 = vadd.f32 %v6042, %v6426
    %v6428 = vpop.f32.mrb[0].mxu0
    %6429 = vmatprep.mubr.f32.mxu0 %v5675
    %6430 = vmatmul.mubr.f32.gmra.mrb[0].mxu0 %v5674
    %v6431 = vpop.f32.mrb[0].mxu0
    %v6432 = vadd.f32 %v6047, %v6431
    %v6433 = vpop.f32.mrb[0].mxu0
    %6434 = vmatprep.mubr.f32.mxu0 %v5679
    %6435 = vmatmul.mubr.f32.gmra.mrb[0].mxu0 %v5678
    %v6436 = vpop.f32.mrb[0].mxu0
    %v6437 = vadd.f32 %v6052, %v6436
    %v6438 = vpop.f32.mrb[0].mxu0
    %6439 = vmatprep.mubr.f32.mxu0 %v5683
    %6440 = vmatmul.mubr.f32.gmra.mrb[0].mxu0 %v5682
    %v6441 = vpop.f32.mrb[0].mxu0
    %v6442 = vadd.f32 %v6057, %v6441
    %v6443 = vpop.f32.mrb[0].mxu0
    %6444 = vmatprep.mubr.f32.mxu0 %v5687
    %6445 = vmatmul.mubr.f32.gmra.mrb[0].mxu0 %v5686
    %v6446 = vpop.f32.mrb[0].mxu0
    %v6447 = vadd.f32 %v6062, %v6446
    %v6448 = vpop.f32.mrb[0].mxu0
    %6449 = vmatprep.mubr.f32.mxu0 %v5691
    %6450 = vmatmul.mubr.f32.gmra.mrb[0].mxu0 %v5690
    %v6451 = vpop.f32.mrb[0].mxu0
    %v6452 = vadd.f32 %v6067, %v6451
    %v6453 = vpop.f32.mrb[0].mxu0
    %6454 = vmatprep.mubr.f32.mxu0 %v5695
    %6455 = vmatmul.mubr.f32.gmra.mrb[0].mxu0 %v5694
    %v6456 = vpop.f32.mrb[0].mxu0
    %v6457 = vadd.f32 %v6072, %v6456
    %v6458 = vpop.f32.mrb[0].mxu0
    %6459 = vmatprep.mubr.f32.mxu0 %v5699
    %6460 = vmatmul.mubr.f32.gmra.mrb[0].mxu0 %v5698
    %v6461 = vpop.f32.mrb[0].mxu0
    %v6462 = vadd.f32 %v6077, %v6461
    %v6463 = vpop.f32.mrb[0].mxu0
    %6464 = vmatprep.mubr.f32.mxu0 %v5703
    %6465 = vmatmul.mubr.f32.gmra.mrb[0].mxu0 %v5702
    %v6466 = vpop.f32.mrb[0].mxu0
    %v6467 = vadd.f32 %v6082, %v6466
    %v6468 = vpop.f32.mrb[0].mxu0
    %6469 = vmatprep.mubr.f32.mxu0 %v5707
    %6470 = vmatmul.mubr.f32.gmra.mrb[0].mxu0 %v5706
    %v6471 = vpop.f32.mrb[0].mxu0
    %v6472 = vadd.f32 %v6087, %v6471
    %v6473 = vpop.f32.mrb[0].mxu0
    %6474 = vmatprep.mubr.f32.mxu0 %v5711
    %6475 = vmatmul.mubr.f32.gmra.mrb[0].mxu0 %v5710
    %v6476 = vpop.f32.mrb[0].mxu0
    %v6477 = vadd.f32 %v6092, %v6476
    %v6478 = vpop.f32.mrb[0].mxu0
    %6479 = vmatprep.mubr.f32.mxu0 %v5715
    %6480 = vmatmul.mubr.f32.gmra.mrb[0].mxu0 %v5714
    %v6481 = vpop.f32.mrb[0].mxu0
    %v6482 = vadd.f32 %v6097, %v6481
    %v6483 = vpop.f32.mrb[0].mxu0
    %6484 = vmatprep.mubr.f32.mxu0 %v5719
    %6485 = vmatmul.mubr.f32.gmra.mrb[0].mxu0 %v5718
    %v6486 = vpop.f32.mrb[0].mxu0
    %v6487 = vadd.f32 %v6102, %v6486
    %v6488 = vpop.f32.mrb[0].mxu0
    %6489 = vdwg.mxu0
    %v6490 = vld [vmem:[%s12] sm:$0xff]
    %v6491 = vld [vmem:[%s12 + $0x8] sm:$0xff]
    %v6492 = vld [vmem:[%s12 + $0x10] sm:$0xff]
    %v6493 = vld [vmem:[%s12 + $0x18] sm:$0xff]
    %v6494 = vld [vmem:[%s12 + $0x20] sm:$0xff]
    %v6495 = vld [vmem:[%s12 + $0x28] sm:$0xff]
    %v6496 = vld [vmem:[%s12 + $0x30] sm:$0xff]
    %v6497 = vld [vmem:[%s12 + $0x38] sm:$0xff]
    %v6498 = vld [vmem:[%s12 + $0x40] sm:$0xff]
    %v6499 = vld [vmem:[%s12 + $0x48] sm:$0xff]
    %v6500 = vld [vmem:[%s12 + $0x50] sm:$0xff]
    %v6501 = vld [vmem:[%s12 + $0x58] sm:$0xff]
    %v6502 = vld [vmem:[%s12 + $0x60] sm:$0xff]
    %v6503 = vld [vmem:[%s12 + $0x68] sm:$0xff]
    %v6504 = vld [vmem:[%s12 + $0x70] sm:$0xff]
    %v6505 = vld [vmem:[%s12 + $0x78] sm:$0xff]
    %v6506 = vld [vmem:[%s12 + $0x80] sm:$0xff]
    %v6507 = vld [vmem:[%s12 + $0x88] sm:$0xff]
    %v6508 = vld [vmem:[%s12 + $0x90] sm:$0xff]
    %v6509 = vld [vmem:[%s12 + $0x98] sm:$0xff]
    %v6510 = vld [vmem:[%s12 + $0xa0] sm:$0xff]
    %v6511 = vld [vmem:[%s12 + $0xa8] sm:$0xff]
    %v6512 = vld [vmem:[%s12 + $0xb0] sm:$0xff]
    %v6513 = vld [vmem:[%s12 + $0xb8] sm:$0xff]
    %v6514 = vld [vmem:[%s12 + $0xc0] sm:$0xff]
    %v6515 = vld [vmem:[%s12 + $0xc8] sm:$0xff]
    %v6516 = vld [vmem:[%s12 + $0xd0] sm:$0xff]
    %v6517 = vld [vmem:[%s12 + $0xd8] sm:$0xff]
    %v6518 = vld [vmem:[%s12 + $0xe0] sm:$0xff]
    %v6519 = vld [vmem:[%s12 + $0xe8] sm:$0xff]
    %v6520 = vld [vmem:[%s12 + $0xf0] sm:$0xff]
    %v6521 = vld [vmem:[%s12 + $0xf8] sm:$0xff]
    %6522 = vmatprep.subr.mxu0 0.0
    %6523 = vmatpush1.msra.mxu0 %v6172
    %6524 = vmatprep.subr.mxu0 0.0
    %6525 = vmatpush1.msra.mxu0 %v6177
    %6526 = vmatprep.subr.mxu0 0.0
    %6527 = vmatpush1.msra.mxu0 %v6182
    %6528 = vmatprep.subr.mxu0 0.0
    %6529 = vmatpush1.msra.mxu0 %v6187
    %6530 = vmatprep.subr.mxu0 0.0
    %6531 = vmatpush1.msra.mxu0 %v6192
    %6532 = vmatprep.subr.mxu0 0.0
    %6533 = vmatpush1.msra.mxu0 %v6197
    %6534 = vmatprep.subr.mxu0 0.0
    %6535 = vmatpush1.msra.mxu0 %v6202
    %6536 = vmatprep.subr.mxu0 0.0
    %6537 = vmatpush1.msra.mxu0 %v6207
    %6538 = vmatprep.subr.mxu0 0.0
    %6539 = vmatpush1.msra.mxu0 %v6212
    %6540 = vmatprep.subr.mxu0 0.0
    %6541 = vmatpush1.msra.mxu0 %v6217
    %6542 = vmatprep.subr.mxu0 0.0
    %6543 = vmatpush1.msra.mxu0 %v6222
    %6544 = vmatprep.subr.mxu0 0.0
    %6545 = vmatpush1.msra.mxu0 %v6227
    %6546 = vmatprep.subr.mxu0 0.0
    %6547 = vmatpush1.msra.mxu0 %v6232
    %6548 = vmatprep.subr.mxu0 0.0
    %6549 = vmatpush1.msra.mxu0 %v6237
    %6550 = vmatprep.subr.mxu0 0.0
    %6551 = vmatpush1.msra.mxu0 %v6242
    %6552 = vmatprep.subr.mxu0 0.0
    %6553 = vmatpush1.msra.mxu0 %v6247
    %6554 = vmatprep.subr.mxu0 0.0
    %6555 = vmatpush1.msra.mxu0 %v6252
    %6556 = vmatprep.subr.mxu0 0.0
    %6557 = vmatpush1.msra.mxu0 %v6257
    %6558 = vmatprep.subr.mxu0 0.0
    %6559 = vmatpush1.msra.mxu0 %v6262
    %6560 = vmatprep.subr.mxu0 0.0
    %6561 = vmatpush1.msra.mxu0 %v6267
    %6562 = vmatprep.subr.mxu0 0.0
    %6563 = vmatpush1.msra.mxu0 %v6272
    %6564 = vmatprep.subr.mxu0 0.0
    %6565 = vmatpush1.msra.mxu0 %v6277
    %6566 = vmatprep.subr.mxu0 0.0
    %6567 = vmatpush1.msra.mxu0 %v6282
    %6568 = vmatprep.subr.mxu0 0.0
    %6569 = vmatpush1.msra.mxu0 %v6287
    %6570 = vmatprep.subr.mxu0 0.0
    %6571 = vmatpush1.msra.mxu0 %v6292
    %6572 = vmatprep.subr.mxu0 0.0
    %6573 = vmatpush1.msra.mxu0 %v6297
    %6574 = vmatprep.subr.mxu0 0.0
    %6575 = vmatpush1.msra.mxu0 %v6302
    %6576 = vmatprep.subr.mxu0 0.0
    %6577 = vmatpush1.msra.mxu0 %v6307
    %6578 = vmatprep.subr.mxu0 0.0
    %6579 = vmatpush1.msra.mxu0 %v6312
    %6580 = vmatprep.subr.mxu0 0.0
    %6581 = vmatpush1.msra.mxu0 %v6317
    %6582 = vmatprep.subr.mxu0 0.0
    %6583 = vmatpush1.msra.mxu0 %v6322
    %6584 = vmatprep.subr.mxu0 0.0
    %6585 = vmatpush1.msra.mxu0 %v6327
    %6586 = vmatprep.mubr.f32.mxu0 %v6491
    %6587 = vmatmul.mubr.f32.gmra.mrb[0].mxu0 %v6490
    %v6588 = vpop.f32.mrb[0].mxu0
    %v6589 = vadd.f32 0.0, %v6588
    %v6590 = vpop.f32.mrb[0].mxu0
    %6591 = vmatprep.mubr.f32.mxu0 %v6495
    %6592 = vmatmul.mubr.f32.gmra.mrb[0].mxu0 %v6494
    %v6593 = vpop.f32.mrb[0].mxu0
    %v6594 = vadd.f32 0.0, %v6593
    %v6595 = vpop.f32.mrb[0].mxu0
    %6596 = vmatprep.mubr.f32.mxu0 %v6499
    %6597 = vmatmul.mubr.f32.gmra.mrb[0].mxu0 %v6498
    %v6598 = vpop.f32.mrb[0].mxu0
    %v6599 = vadd.f32 0.0, %v6598
    %v6600 = vpop.f32.mrb[0].mxu0
    %6601 = vmatprep.mubr.f32.mxu0 %v6503
    %6602 = vmatmul.mubr.f32.gmra.mrb[0].mxu0 %v6502
    %v6603 = vpop.f32.mrb[0].mxu0
    %v6604 = vadd.f32 0.0, %v6603
    %v6605 = vpop.f32.mrb[0].mxu0
    %6606 = vmatprep.mubr.f32.mxu0 %v6507
    %6607 = vmatmul.mubr.f32.gmra.mrb[0].mxu0 %v6506
    %v6608 = vpop.f32.mrb[0].mxu0
    %v6609 = vadd.f32 0.0, %v6608
    %v6610 = vpop.f32.mrb[0].mxu0
    %6611 = vmatprep.mubr.f32.mxu0 %v6511
    %6612 = vmatmul.mubr.f32.gmra.mrb[0].mxu0 %v6510
    %v6613 = vpop.f32.mrb[0].mxu0
    %v6614 = vadd.f32 0.0, %v6613
    %v6615 = vpop.f32.mrb[0].mxu0
    %6616 = vmatprep.mubr.f32.mxu0 %v6515
    %6617 = vmatmul.mubr.f32.gmra.mrb[0].mxu0 %v6514
    %v6618 = vpop.f32.mrb[0].mxu0
    %v6619 = vadd.f32 0.0, %v6618
    %v6620 = vpop.f32.mrb[0].mxu0
    %6621 = vmatprep.mubr.f32.mxu0 %v6519
    %6622 = vmatmul.mubr.f32.gmra.mrb[0].mxu0 %v6518
    %v6623 = vpop.f32.mrb[0].mxu0
    %v6624 = vadd.f32 0.0, %v6623
    %v6625 = vpop.f32.mrb[0].mxu0
    %6626 = vdwg.mxu0
    %6627 = vmatprep.subr.mxu0 0.0
    %6628 = vmatpush1.msra.mxu0 %v6332
    %6629 = vmatprep.subr.mxu0 0.0
    %6630 = vmatpush1.msra.mxu0 %v6337
    %6631 = vmatprep.subr.mxu0 0.0
    %6632 = vmatpush1.msra.mxu0 %v6342
    %6633 = vmatprep.subr.mxu0 0.0
    %6634 = vmatpush1.msra.mxu0 %v6347
    %6635 = vmatprep.subr.mxu0 0.0
    %6636 = vmatpush1.msra.mxu0 %v6352
    %6637 = vmatprep.subr.mxu0 0.0
    %6638 = vmatpush1.msra.mxu0 %v6357
    %6639 = vmatprep.subr.mxu0 0.0
    %6640 = vmatpush1.msra.mxu0 %v6362
    %6641 = vmatprep.subr.mxu0 0.0
    %6642 = vmatpush1.msra.mxu0 %v6367
    %6643 = vmatprep.subr.mxu0 0.0
    %6644 = vmatpush1.msra.mxu0 %v6372
    %6645 = vmatprep.subr.mxu0 0.0
    %6646 = vmatpush1.msra.mxu0 %v6377
    %6647 = vmatprep.subr.mxu0 0.0
    %6648 = vmatpush1.msra.mxu0 %v6382
    %6649 = vmatprep.subr.mxu0 0.0
    %6650 = vmatpush1.msra.mxu0 %v6387
    %6651 = vmatprep.subr.mxu0 0.0
    %6652 = vmatpush1.msra.mxu0 %v6392
    %6653 = vmatprep.subr.mxu0 0.0
    %6654 = vmatpush1.msra.mxu0 %v6397
    %6655 = vmatprep.subr.mxu0 0.0
    %6656 = vmatpush1.msra.mxu0 %v6402
    %6657 = vmatprep.subr.mxu0 0.0
    %6658 = vmatpush1.msra.mxu0 %v6407
    %6659 = vmatprep.subr.mxu0 0.0
    %6660 = vmatpush1.msra.mxu0 %v6412
    %6661 = vmatprep.subr.mxu0 0.0
    %6662 = vmatpush1.msra.mxu0 %v6417
    %6663 = vmatprep.subr.mxu0 0.0
    %6664 = vmatpush1.msra.mxu0 %v6422
    %6665 = vmatprep.subr.mxu0 0.0
    %6666 = vmatpush1.msra.mxu0 %v6427
    %6667 = vmatprep.subr.mxu0 0.0
    %6668 = vmatpush1.msra.mxu0 %v6432
    %6669 = vmatprep.subr.mxu0 0.0
    %6670 = vmatpush1.msra.mxu0 %v6437
    %6671 = vmatprep.subr.mxu0 0.0
    %6672 = vmatpush1.msra.mxu0 %v6442
    %6673 = vmatprep.subr.mxu0 0.0
    %6674 = vmatpush1.msra.mxu0 %v6447
    %6675 = vmatprep.subr.mxu0 0.0
    %6676 = vmatpush1.msra.mxu0 %v6452
    %6677 = vmatprep.subr.mxu0 0.0
    %6678 = vmatpush1.msra.mxu0 %v6457
    %6679 = vmatprep.subr.mxu0 0.0
    %6680 = vmatpush1.msra.mxu0 %v6462
    %6681 = vmatprep.subr.mxu0 0.0
    %6682 = vmatpush1.msra.mxu0 %v6467
    %6683 = vmatprep.subr.mxu0 0.0
    %6684 = vmatpush1.msra.mxu0 %v6472
    %6685 = vmatprep.subr.mxu0 0.0
    %6686 = vmatpush1.msra.mxu0 %v6477
    %6687 = vmatprep.subr.mxu0 0.0
    %6688 = vmatpush1.msra.mxu0 %v6482
    %6689 = vmatprep.subr.mxu0 0.0
    %6690 = vmatpush1.msra.mxu0 %v6487
    %6691 = vmatprep.mubr.f32.mxu0 %v6493
    %6692 = vmatmul.mubr.f32.gmra.mrb[0].mxu0 %v6492
    %v6693 = vpop.f32.mrb[0].mxu0
    %v6694 = vadd.f32 %v6589, %v6693
    %v6695 = vpop.f32.mrb[0].mxu0
    %6696 = vmatprep.mubr.f32.mxu0 %v6497
    %6697 = vmatmul.mubr.f32.gmra.mrb[0].mxu0 %v6496
    %v6698 = vpop.f32.mrb[0].mxu0
    %v6699 = vadd.f32 %v6594, %v6698
    %v6700 = vpop.f32.mrb[0].mxu0
    %6701 = vmatprep.mubr.f32.mxu0 %v6501
    %6702 = vmatmul.mubr.f32.gmra.mrb[0].mxu0 %v6500
    %v6703 = vpop.f32.mrb[0].mxu0
    %v6704 = vadd.f32 %v6599, %v6703
    %v6705 = vpop.f32.mrb[0].mxu0
    %6706 = vmatprep.mubr.f32.mxu0 %v6505
    %6707 = vmatmul.mubr.f32.gmra.mrb[0].mxu0 %v6504
    %v6708 = vpop.f32.mrb[0].mxu0
    %v6709 = vadd.f32 %v6604, %v6708
    %v6710 = vpop.f32.mrb[0].mxu0
    %6711 = vmatprep.mubr.f32.mxu0 %v6509
    %6712 = vmatmul.mubr.f32.gmra.mrb[0].mxu0 %v6508
    %v6713 = vpop.f32.mrb[0].mxu0
    %v6714 = vadd.f32 %v6609, %v6713
    %v6715 = vpop.f32.mrb[0].mxu0
    %6716 = vmatprep.mubr.f32.mxu0 %v6513
    %6717 = vmatmul.mubr.f32.gmra.mrb[0].mxu0 %v6512
    %v6718 = vpop.f32.mrb[0].mxu0
    %v6719 = vadd.f32 %v6614, %v6718
    %v6720 = vpop.f32.mrb[0].mxu0
    %6721 = vmatprep.mubr.f32.mxu0 %v6517
    %6722 = vmatmul.mubr.f32.gmra.mrb[0].mxu0 %v6516
    %v6723 = vpop.f32.mrb[0].mxu0
    %v6724 = vadd.f32 %v6619, %v6723
    %v6725 = vpop.f32.mrb[0].mxu0
    %6726 = vmatprep.mubr.f32.mxu0 %v6521
    %6727 = vmatmul.mubr.f32.gmra.mrb[0].mxu0 %v6520
    %v6728 = vpop.f32.mrb[0].mxu0
    %v6729 = vadd.f32 %v6624, %v6728
    %v6730 = vpop.f32.mrb[0].mxu0
    %6731 = vdwg.mxu0
    %v6732 = vmul.f32 %v6172, %v6172
    %v6733 = vmul.f32 %v6177, %v6177
    %v6734 = vmul.f32 %v6182, %v6182
    %v6735 = vmul.f32 %v6187, %v6187
    %v6736 = vmul.f32 %v6192, %v6192
    %v6737 = vmul.f32 %v6197, %v6197
    %v6738 = vmul.f32 %v6202, %v6202
    %v6739 = vmul.f32 %v6207, %v6207
    %v6740 = vmul.f32 %v6212, %v6212
    %v6741 = vmul.f32 %v6217, %v6217
    %v6742 = vmul.f32 %v6222, %v6222
    %v6743 = vmul.f32 %v6227, %v6227
    %v6744 = vmul.f32 %v6232, %v6232
    %v6745 = vmul.f32 %v6237, %v6237
    %v6746 = vmul.f32 %v6242, %v6242
    %v6747 = vmul.f32 %v6247, %v6247
    %v6748 = vmul.f32 %v6252, %v6252
    %v6749 = vmul.f32 %v6257, %v6257
    %v6750 = vmul.f32 %v6262, %v6262
    %v6751 = vmul.f32 %v6267, %v6267
    %v6752 = vmul.f32 %v6272, %v6272
    %v6753 = vmul.f32 %v6277, %v6277
    %v6754 = vmul.f32 %v6282, %v6282
    %v6755 = vmul.f32 %v6287, %v6287
    %v6756 = vmul.f32 %v6292, %v6292
    %v6757 = vmul.f32 %v6297, %v6297
    %v6758 = vmul.f32 %v6302, %v6302
    %v6759 = vmul.f32 %v6307, %v6307
    %v6760 = vmul.f32 %v6312, %v6312
    %v6761 = vmul.f32 %v6317, %v6317
    %v6762 = vmul.f32 %v6322, %v6322
    %v6763 = vmul.f32 %v6327, %v6327
    %v6764 = vmul.f32 %v6332, %v6332
    %v6765 = vmul.f32 %v6337, %v6337
    %v6766 = vmul.f32 %v6342, %v6342
    %v6767 = vmul.f32 %v6347, %v6347
    %v6768 = vmul.f32 %v6352, %v6352
    %v6769 = vmul.f32 %v6357, %v6357
    %v6770 = vmul.f32 %v6362, %v6362
    %v6771 = vmul.f32 %v6367, %v6367
    %v6772 = vmul.f32 %v6372, %v6372
    %v6773 = vmul.f32 %v6377, %v6377
    %v6774 = vmul.f32 %v6382, %v6382
    %v6775 = vmul.f32 %v6387, %v6387
    %v6776 = vmul.f32 %v6392, %v6392
    %v6777 = vmul.f32 %v6397, %v6397
    %v6778 = vmul.f32 %v6402, %v6402
    %v6779 = vmul.f32 %v6407, %v6407
    %v6780 = vmul.f32 %v6412, %v6412
    %v6781 = vmul.f32 %v6417, %v6417
    %v6782 = vmul.f32 %v6422, %v6422
    %v6783 = vmul.f32 %v6427, %v6427
    %v6784 = vmul.f32 %v6432, %v6432
    %v6785 = vmul.f32 %v6437, %v6437
    %v6786 = vmul.f32 %v6442, %v6442
    %v6787 = vmul.f32 %v6447, %v6447
    %v6788 = vmul.f32 %v6452, %v6452
    %v6789 = vmul.f32 %v6457, %v6457
    %v6790 = vmul.f32 %v6462, %v6462
    %v6791 = vmul.f32 %v6467, %v6467
    %v6792 = vmul.f32 %v6472, %v6472
    %v6793 = vmul.f32 %v6477, %v6477
    %v6794 = vmul.f32 %v6482, %v6482
    %v6795 = vmul.f32 %v6487, %v6487
    %6796 = vmatprep.subr.mxu0 0.0
    %6797 = vmatpush1.msra.mxu0 %v6732
    %6798 = vmatprep.subr.mxu0 0.0
    %6799 = vmatpush1.msra.mxu0 %v6733
    %6800 = vmatprep.subr.mxu0 0.0
    %6801 = vmatpush1.msra.mxu0 %v6734
    %6802 = vmatprep.subr.mxu0 0.0
    %6803 = vmatpush1.msra.mxu0 %v6735
    %6804 = vmatprep.subr.mxu0 0.0
    %6805 = vmatpush1.msra.mxu0 %v6736
    %6806 = vmatprep.subr.mxu0 0.0
    %6807 = vmatpush1.msra.mxu0 %v6737
    %6808 = vmatprep.subr.mxu0 0.0
    %6809 = vmatpush1.msra.mxu0 %v6738
    %6810 = vmatprep.subr.mxu0 0.0
    %6811 = vmatpush1.msra.mxu0 %v6739
    %6812 = vmatprep.subr.mxu0 0.0
    %6813 = vmatpush1.msra.mxu0 %v6740
    %6814 = vmatprep.subr.mxu0 0.0
    %6815 = vmatpush1.msra.mxu0 %v6741
    %6816 = vmatprep.subr.mxu0 0.0
    %6817 = vmatpush1.msra.mxu0 %v6742
    %6818 = vmatprep.subr.mxu0 0.0
    %6819 = vmatpush1.msra.mxu0 %v6743
    %6820 = vmatprep.subr.mxu0 0.0
    %6821 = vmatpush1.msra.mxu0 %v6744
    %6822 = vmatprep.subr.mxu0 0.0
    %6823 = vmatpush1.msra.mxu0 %v6745
    %6824 = vmatprep.subr.mxu0 0.0
    %6825 = vmatpush1.msra.mxu0 %v6746
    %6826 = vmatprep.subr.mxu0 0.0
    %6827 = vmatpush1.msra.mxu0 %v6747
    %6828 = vmatprep.subr.mxu0 0.0
    %6829 = vmatpush1.msra.mxu0 %v6748
    %6830 = vmatprep.subr.mxu0 0.0
    %6831 = vmatpush1.msra.mxu0 %v6749
    %6832 = vmatprep.subr.mxu0 0.0
    %6833 = vmatpush1.msra.mxu0 %v6750
    %6834 = vmatprep.subr.mxu0 0.0
    %6835 = vmatpush1.msra.mxu0 %v6751
    %6836 = vmatprep.subr.mxu0 0.0
    %6837 = vmatpush1.msra.mxu0 %v6752
    %6838 = vmatprep.subr.mxu0 0.0
    %6839 = vmatpush1.msra.mxu0 %v6753
    %6840 = vmatprep.subr.mxu0 0.0
    %6841 = vmatpush1.msra.mxu0 %v6754
    %6842 = vmatprep.subr.mxu0 0.0
    %6843 = vmatpush1.msra.mxu0 %v6755
    %6844 = vmatprep.subr.mxu0 0.0
    %6845 = vmatpush1.msra.mxu0 %v6756
    %6846 = vmatprep.subr.mxu0 0.0
    %6847 = vmatpush1.msra.mxu0 %v6757
    %6848 = vmatprep.subr.mxu0 0.0
    %6849 = vmatpush1.msra.mxu0 %v6758
    %6850 = vmatprep.subr.mxu0 0.0
    %6851 = vmatpush1.msra.mxu0 %v6759
    %6852 = vmatprep.subr.mxu0 0.0
    %6853 = vmatpush1.msra.mxu0 %v6760
    %6854 = vmatprep.subr.mxu0 0.0
    %6855 = vmatpush1.msra.mxu0 %v6761
    %6856 = vmatprep.subr.mxu0 0.0
    %6857 = vmatpush1.msra.mxu0 %v6762
    %6858 = vmatprep.subr.mxu0 0.0
    %6859 = vmatpush1.msra.mxu0 %v6763
    %6860 = vmatprep.mubr.f32.mxu0 %v6491
    %6861 = vmatmul.mubr.f32.gmra.mrb[0].mxu0 %v6490
    %v6862 = vpop.f32.mrb[0].mxu0
    %v6863 = vadd.f32 0.0, %v6862
    %v6864 = vpop.f32.mrb[0].mxu0
    %6865 = vmatprep.mubr.f32.mxu0 %v6495
    %6866 = vmatmul.mubr.f32.gmra.mrb[0].mxu0 %v6494
    %v6867 = vpop.f32.mrb[0].mxu0
    %v6868 = vadd.f32 0.0, %v6867
    %v6869 = vpop.f32.mrb[0].mxu0
    %6870 = vmatprep.mubr.f32.mxu0 %v6499
    %6871 = vmatmul.mubr.f32.gmra.mrb[0].mxu0 %v6498
    %v6872 = vpop.f32.mrb[0].mxu0
    %v6873 = vadd.f32 0.0, %v6872
    %v6874 = vpop.f32.mrb[0].mxu0
    %6875 = vmatprep.mubr.f32.mxu0 %v6503
    %6876 = vmatmul.mubr.f32.gmra.mrb[0].mxu0 %v6502
    %v6877 = vpop.f32.mrb[0].mxu0
    %v6878 = vadd.f32 0.0, %v6877
    %v6879 = vpop.f32.mrb[0].mxu0
    %6880 = vmatprep.mubr.f32.mxu0 %v6507
    %6881 = vmatmul.mubr.f32.gmra.mrb[0].mxu0 %v6506
    %v6882 = vpop.f32.mrb[0].mxu0
    %v6883 = vadd.f32 0.0, %v6882
    %v6884 = vpop.f32.mrb[0].mxu0
    %6885 = vmatprep.mubr.f32.mxu0 %v6511
    %6886 = vmatmul.mubr.f32.gmra.mrb[0].mxu0 %v6510
    %v6887 = vpop.f32.mrb[0].mxu0
    %v6888 = vadd.f32 0.0, %v6887
    %v6889 = vpop.f32.mrb[0].mxu0
    %6890 = vmatprep.mubr.f32.mxu0 %v6515
    %6891 = vmatmul.mubr.f32.gmra.mrb[0].mxu0 %v6514
    %v6892 = vpop.f32.mrb[0].mxu0
    %v6893 = vadd.f32 0.0, %v6892
    %v6894 = vpop.f32.mrb[0].mxu0
    %6895 = vmatprep.mubr.f32.mxu0 %v6519
    %6896 = vmatmul.mubr.f32.gmra.mrb[0].mxu0 %v6518
    %v6897 = vpop.f32.mrb[0].mxu0
    %v6898 = vadd.f32 0.0, %v6897
    %v6899 = vpop.f32.mrb[0].mxu0
    %6900 = vdwg.mxu0
    %6901 = vmatprep.subr.mxu0 0.0
    %6902 = vmatpush1.msra.mxu0 %v6764
    %6903 = vmatprep.subr.mxu0 0.0
    %6904 = vmatpush1.msra.mxu0 %v6765
    %6905 = vmatprep.subr.mxu0 0.0
    %6906 = vmatpush1.msra.mxu0 %v6766
    %6907 = vmatprep.subr.mxu0 0.0
    %6908 = vmatpush1.msra.mxu0 %v6767
    %6909 = vmatprep.subr.mxu0 0.0
    %6910 = vmatpush1.msra.mxu0 %v6768
    %6911 = vmatprep.subr.mxu0 0.0
    %6912 = vmatpush1.msra.mxu0 %v6769
    %6913 = vmatprep.subr.mxu0 0.0
    %6914 = vmatpush1.msra.mxu0 %v6770
    %6915 = vmatprep.subr.mxu0 0.0
    %6916 = vmatpush1.msra.mxu0 %v6771
    %6917 = vmatprep.subr.mxu0 0.0
    %6918 = vmatpush1.msra.mxu0 %v6772
    %6919 = vmatprep.subr.mxu0 0.0
    %6920 = vmatpush1.msra.mxu0 %v6773
    %6921 = vmatprep.subr.mxu0 0.0
    %6922 = vmatpush1.msra.mxu0 %v6774
    %6923 = vmatprep.subr.mxu0 0.0
    %6924 = vmatpush1.msra.mxu0 %v6775
    %6925 = vmatprep.subr.mxu0 0.0
    %6926 = vmatpush1.msra.mxu0 %v6776
    %6927 = vmatprep.subr.mxu0 0.0
    %6928 = vmatpush1.msra.mxu0 %v6777
    %6929 = vmatprep.subr.mxu0 0.0
    %6930 = vmatpush1.msra.mxu0 %v6778
    %6931 = vmatprep.subr.mxu0 0.0
    %6932 = vmatpush1.msra.mxu0 %v6779
    %6933 = vmatprep.subr.mxu0 0.0
    %6934 = vmatpush1.msra.mxu0 %v6780
    %6935 = vmatprep.subr.mxu0 0.0
    %6936 = vmatpush1.msra.mxu0 %v6781
    %6937 = vmatprep.subr.mxu0 0.0
    %6938 = vmatpush1.msra.mxu0 %v6782
    %6939 = vmatprep.subr.mxu0 0.0
    %6940 = vmatpush1.msra.mxu0 %v6783
    %6941 = vmatprep.subr.mxu0 0.0
    %6942 = vmatpush1.msra.mxu0 %v6784
    %6943 = vmatprep.subr.mxu0 0.0
    %6944 = vmatpush1.msra.mxu0 %v6785
    %6945 = vmatprep.subr.mxu0 0.0
    %6946 = vmatpush1.msra.mxu0 %v6786
    %6947 = vmatprep.subr.mxu0 0.0
    %6948 = vmatpush1.msra.mxu0 %v6787
    %6949 = vmatprep.subr.mxu0 0.0
    %6950 = vmatpush1.msra.mxu0 %v6788
    %6951 = vmatprep.subr.mxu0 0.0
    %6952 = vmatpush1.msra.mxu0 %v6789
    %6953 = vmatprep.subr.mxu0 0.0
    %6954 = vmatpush1.msra.mxu0 %v6790
    %6955 = vmatprep.subr.mxu0 0.0
    %6956 = vmatpush1.msra.mxu0 %v6791
    %6957 = vmatprep.subr.mxu0 0.0
    %6958 = vmatpush1.msra.mxu0 %v6792
    %6959 = vmatprep.subr.mxu0 0.0
    %6960 = vmatpush1.msra.mxu0 %v6793
    %6961 = vmatprep.subr.mxu0 0.0
    %6962 = vmatpush1.msra.mxu0 %v6794
    %6963 = vmatprep.subr.mxu0 0.0
    %6964 = vmatpush1.msra.mxu0 %v6795
    %6965 = vmatprep.mubr.f32.mxu0 %v6493
    %6966 = vmatmul.mubr.f32.gmra.mrb[0].mxu0 %v6492
    %v6967 = vpop.f32.mrb[0].mxu0
    %v6968 = vadd.f32 %v6863, %v6967
    %v6969 = vpop.f32.mrb[0].mxu0
    %6970 = vmatprep.mubr.f32.mxu0 %v6497
    %6971 = vmatmul.mubr.f32.gmra.mrb[0].mxu0 %v6496
    %v6972 = vpop.f32.mrb[0].mxu0
    %v6973 = vadd.f32 %v6868, %v6972
    %v6974 = vpop.f32.mrb[0].mxu0
    %6975 = vmatprep.mubr.f32.mxu0 %v6501
    %6976 = vmatmul.mubr.f32.gmra.mrb[0].mxu0 %v6500
    %v6977 = vpop.f32.mrb[0].mxu0
    %v6978 = vadd.f32 %v6873, %v6977
    %v6979 = vpop.f32.mrb[0].mxu0
    %6980 = vmatprep.mubr.f32.mxu0 %v6505
    %6981 = vmatmul.mubr.f32.gmra.mrb[0].mxu0 %v6504
    %v6982 = vpop.f32.mrb[0].mxu0
    %v6983 = vadd.f32 %v6878, %v6982
    %v6984 = vpop.f32.mrb[0].mxu0
    %6985 = vmatprep.mubr.f32.mxu0 %v6509
    %6986 = vmatmul.mubr.f32.gmra.mrb[0].mxu0 %v6508
    %v6987 = vpop.f32.mrb[0].mxu0
    %v6988 = vadd.f32 %v6883, %v6987
    %v6989 = vpop.f32.mrb[0].mxu0
    %6990 = vmatprep.mubr.f32.mxu0 %v6513
    %6991 = vmatmul.mubr.f32.gmra.mrb[0].mxu0 %v6512
    %v6992 = vpop.f32.mrb[0].mxu0
    %v6993 = vadd.f32 %v6888, %v6992
    %v6994 = vpop.f32.mrb[0].mxu0
    %6995 = vmatprep.mubr.f32.mxu0 %v6517
    %6996 = vmatmul.mubr.f32.gmra.mrb[0].mxu0 %v6516
    %v6997 = vpop.f32.mrb[0].mxu0
    %v6998 = vadd.f32 %v6893, %v6997
    %v6999 = vpop.f32.mrb[0].mxu0
    %7000 = vmatprep.mubr.f32.mxu0 %v6521
    %7001 = vmatmul.mubr.f32.gmra.mrb[0].mxu0 %v6520
    %v7002 = vpop.f32.mrb[0].mxu0
    %v7003 = vadd.f32 %v6898, %v7002
    %v7004 = vpop.f32.mrb[0].mxu0
    %7005 = vdwg.mxu0
    %v7006 = vmul.f32 %v6694, %v6694
    %v7007 = vmul.f32 %v6699, %v6699
    %v7008 = vmul.f32 %v6704, %v6704
    %v7009 = vmul.f32 %v6709, %v6709
    %v7010 = vmul.f32 %v6714, %v6714
    %v7011 = vmul.f32 %v6719, %v6719
    %v7012 = vmul.f32 %v6724, %v6724
    %v7013 = vmul.f32 %v6729, %v6729
    %v7014 = vsub.f32 %v6968, %v7006
    %v7015 = vsub.f32 %v6973, %v7007
    %v7016 = vsub.f32 %v6978, %v7008
    %v7017 = vsub.f32 %v6983, %v7009
    %v7018 = vsub.f32 %v6988, %v7010
    %v7019 = vsub.f32 %v6993, %v7011
    %v7020 = vsub.f32 %v6998, %v7012
    %v7021 = vsub.f32 %v7003, %v7013
    %v7022 = vmax.f32 %v7014, 0.0
    %v7023 = vmax.f32 %v7015, 0.0
    %v7024 = vmax.f32 %v7016, 0.0
    %v7025 = vmax.f32 %v7017, 0.0
    %v7026 = vmax.f32 %v7018, 0.0
    %v7027 = vmax.f32 %v7019, 0.0
    %v7028 = vmax.f32 %v7020, 0.0
    %v7029 = vmax.f32 %v7021, 0.0
    %v7030 = vld [vmem:[%s14] sm:$0xff]
    %v7031 = vld [vmem:[%s14 + $0x8] sm:$0xff]
    %v7032 = vld [vmem:[%s14 + $0x10] sm:$0xff]
    %v7033 = vld [vmem:[%s14 + $0x18] sm:$0xff]
    %v7034 = vld [vmem:[%s14 + $0x20] sm:$0xff]
    %v7035 = vld [vmem:[%s14 + $0x28] sm:$0xff]
    %v7036 = vld [vmem:[%s14 + $0x30] sm:$0xff]
    %v7037 = vld [vmem:[%s14 + $0x38] sm:$0xff]
    %v7038 = vadd.f32 %v7022, 1e-05
    %v7039 = vadd.f32 %v7023, 1e-05
    %v7040 = vadd.f32 %v7024, 1e-05
    %v7041 = vadd.f32 %v7025, 1e-05
    %v7042 = vadd.f32 %v7026, 1e-05
    %v7043 = vadd.f32 %v7027, 1e-05
    %v7044 = vadd.f32 %v7028, 1e-05
    %v7045 = vadd.f32 %v7029, 1e-05
    %v7046 = vrsqrt.pop %v7038
    %v7047 = vrsqrt.pop %v7039
    %v7048 = vrsqrt.pop %v7040
    %v7049 = vrsqrt.pop %v7041
    %v7050 = vrsqrt.pop %v7042
    %v7051 = vrsqrt.pop %v7043
    %v7052 = vrsqrt.pop %v7044
    %v7053 = vrsqrt.pop %v7045
    %7055 = vset.pattern.permute.xlu0 0
    %7056 = vperm.xlu0 %7055, %v7030
    %v7057 = vpop.permute.xlu0 %7056
    %7060 = vset.pattern.permute.xlu0 0
    %7061 = vperm.xlu0 %7060, %v7031
    %v7062 = vpop.permute.xlu0 %7061
    %7065 = vset.pattern.permute.xlu0 0
    %7066 = vperm.xlu0 %7065, %v7032
    %v7067 = vpop.permute.xlu0 %7066
    %7070 = vset.pattern.permute.xlu0 0
    %7071 = vperm.xlu0 %7070, %v7033
    %v7072 = vpop.permute.xlu0 %7071
    %7075 = vset.pattern.permute.xlu0 0
    %7076 = vperm.xlu0 %7075, %v7034
    %v7077 = vpop.permute.xlu0 %7076
    %7080 = vset.pattern.permute.xlu0 0
    %7081 = vperm.xlu0 %7080, %v7035
    %v7082 = vpop.permute.xlu0 %7081
    %7085 = vset.pattern.permute.xlu0 0
    %7086 = vperm.xlu0 %7085, %v7036
    %v7087 = vpop.permute.xlu0 %7086
    %7090 = vset.pattern.permute.xlu0 0
    %7091 = vperm.xlu0 %7090, %v7037
    %v7092 = vpop.permute.xlu0 %7091
    %v7094 = vmul.f32 %v7057, %v7046
    %v7095 = vmul.f32 %v7062, %v7047
    %v7096 = vmul.f32 %v7067, %v7048
    %v7097 = vmul.f32 %v7072, %v7049
    %v7098 = vmul.f32 %v7077, %v7050
    %v7099 = vmul.f32 %v7082, %v7051
    %v7100 = vmul.f32 %v7087, %v7052
    %v7101 = vmul.f32 %v7092, %v7053
    %v7102 = vld [vmem:[%s15] sm:$0xff]
    %v7103 = vld [vmem:[%s15 + $0x8] sm:$0xff]
    %v7104 = vld [vmem:[%s15 + $0x10] sm:$0xff]
    %v7105 = vld [vmem:[%s15 + $0x18] sm:$0xff]
    %v7106 = vld [vmem:[%s15 + $0x20] sm:$0xff]
    %v7107 = vld [vmem:[%s15 + $0x28] sm:$0xff]
    %v7108 = vld [vmem:[%s15 + $0x30] sm:$0xff]
    %v7109 = vld [vmem:[%s15 + $0x38] sm:$0xff]
    %v7110 = vmul.f32 %v6694, %v7094
    %v7111 = vmul.f32 %v6699, %v7095
    %v7112 = vmul.f32 %v6704, %v7096
    %v7113 = vmul.f32 %v6709, %v7097
    %v7114 = vmul.f32 %v6714, %v7098
    %v7115 = vmul.f32 %v6719, %v7099
    %v7116 = vmul.f32 %v6724, %v7100
    %v7117 = vmul.f32 %v6729, %v7101
    %7119 = vset.pattern.permute.xlu0 0
    %7120 = vperm.xlu0 %7119, %v7102
    %v7121 = vpop.permute.xlu0 %7120
    %7124 = vset.pattern.permute.xlu0 0
    %7125 = vperm.xlu0 %7124, %v7103
    %v7126 = vpop.permute.xlu0 %7125
    %7129 = vset.pattern.permute.xlu0 0
    %7130 = vperm.xlu0 %7129, %v7104
    %v7131 = vpop.permute.xlu0 %7130
    %7134 = vset.pattern.permute.xlu0 0
    %7135 = vperm.xlu0 %7134, %v7105
    %v7136 = vpop.permute.xlu0 %7135
    %7139 = vset.pattern.permute.xlu0 0
    %7140 = vperm.xlu0 %7139, %v7106
    %v7141 = vpop.permute.xlu0 %7140
    %7144 = vset.pattern.permute.xlu0 0
    %7145 = vperm.xlu0 %7144, %v7107
    %v7146 = vpop.permute.xlu0 %7145
    %7149 = vset.pattern.permute.xlu0 0
    %7150 = vperm.xlu0 %7149, %v7108
    %v7151 = vpop.permute.xlu0 %7150
    %7154 = vset.pattern.permute.xlu0 0
    %7155 = vperm.xlu0 %7154, %v7109
    %v7156 = vpop.permute.xlu0 %7155
    %v7158 = vsub.f32 %v7121, %v7110
    %v7159 = vsub.f32 %v7126, %v7111
    %v7160 = vsub.f32 %v7131, %v7112
    %v7161 = vsub.f32 %v7136, %v7113
    %v7162 = vsub.f32 %v7141, %v7114
    %v7163 = vsub.f32 %v7146, %v7115
    %v7164 = vsub.f32 %v7151, %v7116
    %v7165 = vsub.f32 %v7156, %v7117
    %v7166 = vld [vmem:[%s13] sm:$0xff]
    %v7167 = vld [vmem:[%s13 + $0x8] sm:$0xff]
    %v7168 = vld [vmem:[%s13 + $0x10] sm:$0xff]
    %v7169 = vld [vmem:[%s13 + $0x18] sm:$0xff]
    %v7170 = vld [vmem:[%s13 + $0x20] sm:$0xff]
    %v7171 = vld [vmem:[%s13 + $0x28] sm:$0xff]
    %v7172 = vld [vmem:[%s13 + $0x30] sm:$0xff]
    %v7173 = vld [vmem:[%s13 + $0x38] sm:$0xff]
    %v7174 = vld [vmem:[%s13 + $0x40] sm:$0xff]
    %v7175 = vld [vmem:[%s13 + $0x48] sm:$0xff]
    %v7176 = vld [vmem:[%s13 + $0x50] sm:$0xff]
    %v7177 = vld [vmem:[%s13 + $0x58] sm:$0xff]
    %v7178 = vld [vmem:[%s13 + $0x60] sm:$0xff]
    %v7179 = vld [vmem:[%s13 + $0x68] sm:$0xff]
    %v7180 = vld [vmem:[%s13 + $0x70] sm:$0xff]
    %v7181 = vld [vmem:[%s13 + $0x78] sm:$0xff]
    %v7182 = vld [vmem:[%s13 + $0x80] sm:$0xff]
    %v7183 = vld [vmem:[%s13 + $0x88] sm:$0xff]
    %v7184 = vld [vmem:[%s13 + $0x90] sm:$0xff]
    %v7185 = vld [vmem:[%s13 + $0x98] sm:$0xff]
    %v7186 = vld [vmem:[%s13 + $0xa0] sm:$0xff]
    %v7187 = vld [vmem:[%s13 + $0xa8] sm:$0xff]
    %v7188 = vld [vmem:[%s13 + $0xb0] sm:$0xff]
    %v7189 = vld [vmem:[%s13 + $0xb8] sm:$0xff]
    %v7190 = vld [vmem:[%s13 + $0xc0] sm:$0xff]
    %v7191 = vld [vmem:[%s13 + $0xc8] sm:$0xff]
    %v7192 = vld [vmem:[%s13 + $0xd0] sm:$0xff]
    %v7193 = vld [vmem:[%s13 + $0xd8] sm:$0xff]
    %v7194 = vld [vmem:[%s13 + $0xe0] sm:$0xff]
    %v7195 = vld [vmem:[%s13 + $0xe8] sm:$0xff]
    %v7196 = vld [vmem:[%s13 + $0xf0] sm:$0xff]
    %v7197 = vld [vmem:[%s13 + $0xf8] sm:$0xff]
    %v7198 = vld [vmem:[%s13 + $0x100] sm:$0xff]
    %v7199 = vld [vmem:[%s13 + $0x108] sm:$0xff]
    %v7200 = vld [vmem:[%s13 + $0x110] sm:$0xff]
    %v7201 = vld [vmem:[%s13 + $0x118] sm:$0xff]
    %v7202 = vld [vmem:[%s13 + $0x120] sm:$0xff]
    %v7203 = vld [vmem:[%s13 + $0x128] sm:$0xff]
    %v7204 = vld [vmem:[%s13 + $0x130] sm:$0xff]
    %v7205 = vld [vmem:[%s13 + $0x138] sm:$0xff]
    %v7206 = vld [vmem:[%s13 + $0x140] sm:$0xff]
    %v7207 = vld [vmem:[%s13 + $0x148] sm:$0xff]
    %v7208 = vld [vmem:[%s13 + $0x150] sm:$0xff]
    %v7209 = vld [vmem:[%s13 + $0x158] sm:$0xff]
    %v7210 = vld [vmem:[%s13 + $0x160] sm:$0xff]
    %v7211 = vld [vmem:[%s13 + $0x168] sm:$0xff]
    %v7212 = vld [vmem:[%s13 + $0x170] sm:$0xff]
    %v7213 = vld [vmem:[%s13 + $0x178] sm:$0xff]
    %v7214 = vld [vmem:[%s13 + $0x180] sm:$0xff]
    %v7215 = vld [vmem:[%s13 + $0x188] sm:$0xff]
    %v7216 = vld [vmem:[%s13 + $0x190] sm:$0xff]
    %v7217 = vld [vmem:[%s13 + $0x198] sm:$0xff]
    %v7218 = vld [vmem:[%s13 + $0x1a0] sm:$0xff]
    %v7219 = vld [vmem:[%s13 + $0x1a8] sm:$0xff]
    %v7220 = vld [vmem:[%s13 + $0x1b0] sm:$0xff]
    %v7221 = vld [vmem:[%s13 + $0x1b8] sm:$0xff]
    %v7222 = vld [vmem:[%s13 + $0x1c0] sm:$0xff]
    %v7223 = vld [vmem:[%s13 + $0x1c8] sm:$0xff]
    %v7224 = vld [vmem:[%s13 + $0x1d0] sm:$0xff]
    %v7225 = vld [vmem:[%s13 + $0x1d8] sm:$0xff]
    %v7226 = vld [vmem:[%s13 + $0x1e0] sm:$0xff]
    %v7227 = vld [vmem:[%s13 + $0x1e8] sm:$0xff]
    %v7228 = vld [vmem:[%s13 + $0x1f0] sm:$0xff]
    %v7229 = vld [vmem:[%s13 + $0x1f8] sm:$0xff]
    %vm7230 = vcmask 523264
    %v7232 = vsel %vm7230, %v7166, 0
    %v7235 = vsel %vm7230, %v7167, 0
    %v7238 = vsel %vm7230, %v7168, 0
    %v7241 = vsel %vm7230, %v7169, 0
    %v7244 = vsel %vm7230, %v7170, 0
    %v7247 = vsel %vm7230, %v7171, 0
    %v7250 = vsel %vm7230, %v7172, 0
    %v7253 = vsel %vm7230, %v7173, 0
    %v7256 = vsel %vm7230, %v7174, 0
    %v7259 = vsel %vm7230, %v7175, 0
    %v7262 = vsel %vm7230, %v7176, 0
    %v7265 = vsel %vm7230, %v7177, 0
    %v7268 = vsel %vm7230, %v7178, 0
    %v7271 = vsel %vm7230, %v7179, 0
    %v7274 = vsel %vm7230, %v7180, 0
    %v7277 = vsel %vm7230, %v7181, 0
    %v7280 = vsel %vm7230, %v7182, 0
    %v7283 = vsel %vm7230, %v7183, 0
    %v7286 = vsel %vm7230, %v7184, 0
    %v7289 = vsel %vm7230, %v7185, 0
    %v7292 = vsel %vm7230, %v7186, 0
    %v7295 = vsel %vm7230, %v7187, 0
    %v7298 = vsel %vm7230, %v7188, 0
    %v7301 = vsel %vm7230, %v7189, 0
    %v7304 = vsel %vm7230, %v7190, 0
    %v7307 = vsel %vm7230, %v7191, 0
    %v7310 = vsel %vm7230, %v7192, 0
    %v7313 = vsel %vm7230, %v7193, 0
    %v7316 = vsel %vm7230, %v7194, 0
    %v7319 = vsel %vm7230, %v7195, 0
    %v7322 = vsel %vm7230, %v7196, 0
    %v7325 = vsel %vm7230, %v7197, 0
    %v7328 = vsel %vm7230, %v7198, 0
    %v7331 = vsel %vm7230, %v7199, 0
    %v7334 = vsel %vm7230, %v7200, 0
    %v7337 = vsel %vm7230, %v7201, 0
    %v7340 = vsel %vm7230, %v7202, 0
    %v7343 = vsel %vm7230, %v7203, 0
    %v7346 = vsel %vm7230, %v7204, 0
    %v7349 = vsel %vm7230, %v7205, 0
    %v7352 = vsel %vm7230, %v7206, 0
    %v7355 = vsel %vm7230, %v7207, 0
    %v7358 = vsel %vm7230, %v7208, 0
    %v7361 = vsel %vm7230, %v7209, 0
    %v7364 = vsel %vm7230, %v7210, 0
    %v7367 = vsel %vm7230, %v7211, 0
    %v7370 = vsel %vm7230, %v7212, 0
    %v7373 = vsel %vm7230, %v7213, 0
    %v7376 = vsel %vm7230, %v7214, 0
    %v7379 = vsel %vm7230, %v7215, 0
    %v7382 = vsel %vm7230, %v7216, 0
    %v7385 = vsel %vm7230, %v7217, 0
    %v7388 = vsel %vm7230, %v7218, 0
    %v7391 = vsel %vm7230, %v7219, 0
    %v7394 = vsel %vm7230, %v7220, 0
    %v7397 = vsel %vm7230, %v7221, 0
    %v7400 = vsel %vm7230, %v7222, 0
    %v7403 = vsel %vm7230, %v7223, 0
    %v7406 = vsel %vm7230, %v7224, 0
    %v7409 = vsel %vm7230, %v7225, 0
    %v7412 = vsel %vm7230, %v7226, 0
    %v7415 = vsel %vm7230, %v7227, 0
    %v7418 = vsel %vm7230, %v7228, 0
    %v7421 = vsel %vm7230, %v7229, 0
    %7423 = vmatprep.subr.mxu0 0.0
    %7424 = vmatpush1.msra.mxu0 %v7094
    %7425 = vmatprep.subr.mxu0 0.0
    %7426 = vmatpush1.msra.mxu0 %v7095
    %7427 = vmatprep.subr.mxu0 0.0
    %7428 = vmatpush1.msra.mxu0 %v7096
    %7429 = vmatprep.subr.mxu0 0.0
    %7430 = vmatpush1.msra.mxu0 %v7097
    %7431 = vmatprep.subr.mxu0 0.0
    %7432 = vmatpush1.msra.mxu0 %v7098
    %7433 = vmatprep.subr.mxu0 0.0
    %7434 = vmatpush1.msra.mxu0 %v7099
    %7435 = vmatprep.subr.mxu0 0.0
    %7436 = vmatpush1.msra.mxu0 %v7100
    %7437 = vmatprep.subr.mxu0 0.0
    %7438 = vmatpush1.msra.mxu0 %v7101
    %7439 = vmatprep.subr.mxu0 0.0
    %7440 = vmatpush1.msra.mxu0 0.0
    %7441 = vmatprep.subr.mxu0 0.0
    %7442 = vmatpush1.msra.mxu0 0.0
    %7443 = vmatprep.subr.mxu0 0.0
    %7444 = vmatpush1.msra.mxu0 0.0
    %7445 = vmatprep.subr.mxu0 0.0
    %7446 = vmatpush1.msra.mxu0 0.0
    %7447 = vmatprep.subr.mxu0 0.0
    %7448 = vmatpush1.msra.mxu0 0.0
    %7449 = vmatprep.subr.mxu0 0.0
    %7450 = vmatpush1.msra.mxu0 0.0
    %7451 = vmatprep.subr.mxu0 0.0
    %7452 = vmatpush1.msra.mxu0 0.0
    %7453 = vmatprep.subr.mxu0 0.0
    %7454 = vmatpush1.msra.mxu0 0.0
    %7455 = vmatprep.subr.mxu0 0.0
    %7456 = vmatpush1.msra.mxu0 0.0
    %7457 = vmatprep.subr.mxu0 0.0
    %7458 = vmatpush1.msra.mxu0 0.0
    %7459 = vmatprep.subr.mxu0 0.0
    %7460 = vmatpush1.msra.mxu0 0.0
    %7461 = vmatprep.subr.mxu0 0.0
    %7462 = vmatpush1.msra.mxu0 0.0
    %7463 = vmatprep.subr.mxu0 0.0
    %7464 = vmatpush1.msra.mxu0 0.0
    %7465 = vmatprep.subr.mxu0 0.0
    %7466 = vmatpush1.msra.mxu0 0.0
    %7467 = vmatprep.subr.mxu0 0.0
    %7468 = vmatpush1.msra.mxu0 0.0
    %7469 = vmatprep.subr.mxu0 0.0
    %7470 = vmatpush1.msra.mxu0 0.0
    %7471 = vmatprep.subr.mxu0 0.0
    %7472 = vmatpush1.msra.mxu0 0.0
    %7473 = vmatprep.subr.mxu0 0.0
    %7474 = vmatpush1.msra.mxu0 0.0
    %7475 = vmatprep.subr.mxu0 0.0
    %7476 = vmatpush1.msra.mxu0 0.0
    %7477 = vmatprep.subr.mxu0 0.0
    %7478 = vmatpush1.msra.mxu0 0.0
    %7479 = vmatprep.subr.mxu0 0.0
    %7480 = vmatpush1.msra.mxu0 0.0
    %7481 = vmatprep.subr.mxu0 0.0
    %7482 = vmatpush1.msra.mxu0 0.0
    %7483 = vmatprep.subr.mxu0 0.0
    %7484 = vmatpush1.msra.mxu0 0.0
    %7485 = vmatprep.subr.mxu0 0.0
    %7486 = vmatpush1.msra.mxu0 0.0
    %7487 = vmatprep.mubr.f32.mxu0 0.0
    %7488 = vmatmul.mubr.f32.gmra.mrb[0].mxu0 %v7232
    %v7489 = vpop.f32.mrb[0].mxu0
    %v7490 = vadd.f32 0.0, %v7489
    %v7491 = vpop.f32.mrb[0].mxu0
    %7492 = vmatprep.mubr.f32.mxu0 0.0
    %7493 = vmatmul.mubr.f32.gmra.mrb[0].mxu0 %v7235
    %v7494 = vpop.f32.mrb[0].mxu0
    %v7495 = vadd.f32 0.0, %v7494
    %v7496 = vpop.f32.mrb[0].mxu0
    %7497 = vmatprep.mubr.f32.mxu0 0.0
    %7498 = vmatmul.mubr.f32.gmra.mrb[0].mxu0 %v7238
    %v7499 = vpop.f32.mrb[0].mxu0
    %v7500 = vadd.f32 0.0, %v7499
    %v7501 = vpop.f32.mrb[0].mxu0
    %7502 = vmatprep.mubr.f32.mxu0 0.0
    %7503 = vmatmul.mubr.f32.gmra.mrb[0].mxu0 %v7241
    %v7504 = vpop.f32.mrb[0].mxu0
    %v7505 = vadd.f32 0.0, %v7504
    %v7506 = vpop.f32.mrb[0].mxu0
    %7507 = vmatprep.mubr.f32.mxu0 0.0
    %7508 = vmatmul.mubr.f32.gmra.mrb[0].mxu0 %v7244
    %v7509 = vpop.f32.mrb[0].mxu0
    %v7510 = vadd.f32 0.0, %v7509
    %v7511 = vpop.f32.mrb[0].mxu0
    %7512 = vmatprep.mubr.f32.mxu0 0.0
    %7513 = vmatmul.mubr.f32.gmra.mrb[0].mxu0 %v7247
    %v7514 = vpop.f32.mrb[0].mxu0
    %v7515 = vadd.f32 0.0, %v7514
    %v7516 = vpop.f32.mrb[0].mxu0
    %7517 = vmatprep.mubr.f32.mxu0 0.0
    %7518 = vmatmul.mubr.f32.gmra.mrb[0].mxu0 %v7250
    %v7519 = vpop.f32.mrb[0].mxu0
    %v7520 = vadd.f32 0.0, %v7519
    %v7521 = vpop.f32.mrb[0].mxu0
    %7522 = vmatprep.mubr.f32.mxu0 0.0
    %7523 = vmatmul.mubr.f32.gmra.mrb[0].mxu0 %v7253
    %v7524 = vpop.f32.mrb[0].mxu0
    %v7525 = vadd.f32 0.0, %v7524
    %v7526 = vpop.f32.mrb[0].mxu0
    %7527 = vmatprep.mubr.f32.mxu0 0.0
    %7528 = vmatmul.mubr.f32.gmra.mrb[0].mxu0 %v7256
    %v7529 = vpop.f32.mrb[0].mxu0
    %v7530 = vadd.f32 0.0, %v7529
    %v7531 = vpop.f32.mrb[0].mxu0
    %7532 = vmatprep.mubr.f32.mxu0 0.0
    %7533 = vmatmul.mubr.f32.gmra.mrb[0].mxu0 %v7259
    %v7534 = vpop.f32.mrb[0].mxu0
    %v7535 = vadd.f32 0.0, %v7534
    %v7536 = vpop.f32.mrb[0].mxu0
    %7537 = vmatprep.mubr.f32.mxu0 0.0
    %7538 = vmatmul.mubr.f32.gmra.mrb[0].mxu0 %v7262
    %v7539 = vpop.f32.mrb[0].mxu0
    %v7540 = vadd.f32 0.0, %v7539
    %v7541 = vpop.f32.mrb[0].mxu0
    %7542 = vmatprep.mubr.f32.mxu0 0.0
    %7543 = vmatmul.mubr.f32.gmra.mrb[0].mxu0 %v7265
    %v7544 = vpop.f32.mrb[0].mxu0
    %v7545 = vadd.f32 0.0, %v7544
    %v7546 = vpop.f32.mrb[0].mxu0
    %7547 = vmatprep.mubr.f32.mxu0 0.0
    %7548 = vmatmul.mubr.f32.gmra.mrb[0].mxu0 %v7268
    %v7549 = vpop.f32.mrb[0].mxu0
    %v7550 = vadd.f32 0.0, %v7549
    %v7551 = vpop.f32.mrb[0].mxu0
    %7552 = vmatprep.mubr.f32.mxu0 0.0
    %7553 = vmatmul.mubr.f32.gmra.mrb[0].mxu0 %v7271
    %v7554 = vpop.f32.mrb[0].mxu0
    %v7555 = vadd.f32 0.0, %v7554
    %v7556 = vpop.f32.mrb[0].mxu0
    %7557 = vmatprep.mubr.f32.mxu0 0.0
    %7558 = vmatmul.mubr.f32.gmra.mrb[0].mxu0 %v7274
    %v7559 = vpop.f32.mrb[0].mxu0
    %v7560 = vadd.f32 0.0, %v7559
    %v7561 = vpop.f32.mrb[0].mxu0
    %7562 = vmatprep.mubr.f32.mxu0 0.0
    %7563 = vmatmul.mubr.f32.gmra.mrb[0].mxu0 %v7277
    %v7564 = vpop.f32.mrb[0].mxu0
    %v7565 = vadd.f32 0.0, %v7564
    %v7566 = vpop.f32.mrb[0].mxu0
    %7567 = vmatprep.mubr.f32.mxu0 0.0
    %7568 = vmatmul.mubr.f32.gmra.mrb[0].mxu0 %v7280
    %v7569 = vpop.f32.mrb[0].mxu0
    %v7570 = vadd.f32 0.0, %v7569
    %v7571 = vpop.f32.mrb[0].mxu0
    %7572 = vmatprep.mubr.f32.mxu0 0.0
    %7573 = vmatmul.mubr.f32.gmra.mrb[0].mxu0 %v7283
    %v7574 = vpop.f32.mrb[0].mxu0
    %v7575 = vadd.f32 0.0, %v7574
    %v7576 = vpop.f32.mrb[0].mxu0
    %7577 = vmatprep.mubr.f32.mxu0 0.0
    %7578 = vmatmul.mubr.f32.gmra.mrb[0].mxu0 %v7286
    %v7579 = vpop.f32.mrb[0].mxu0
    %v7580 = vadd.f32 0.0, %v7579
    %v7581 = vpop.f32.mrb[0].mxu0
    %7582 = vmatprep.mubr.f32.mxu0 0.0
    %7583 = vmatmul.mubr.f32.gmra.mrb[0].mxu0 %v7289
    %v7584 = vpop.f32.mrb[0].mxu0
    %v7585 = vadd.f32 0.0, %v7584
    %v7586 = vpop.f32.mrb[0].mxu0
    %7587 = vmatprep.mubr.f32.mxu0 0.0
    %7588 = vmatmul.mubr.f32.gmra.mrb[0].mxu0 %v7292
    %v7589 = vpop.f32.mrb[0].mxu0
    %v7590 = vadd.f32 0.0, %v7589
    %v7591 = vpop.f32.mrb[0].mxu0
    %7592 = vmatprep.mubr.f32.mxu0 0.0
    %7593 = vmatmul.mubr.f32.gmra.mrb[0].mxu0 %v7295
    %v7594 = vpop.f32.mrb[0].mxu0
    %v7595 = vadd.f32 0.0, %v7594
    %v7596 = vpop.f32.mrb[0].mxu0
    %7597 = vmatprep.mubr.f32.mxu0 0.0
    %7598 = vmatmul.mubr.f32.gmra.mrb[0].mxu0 %v7298
    %v7599 = vpop.f32.mrb[0].mxu0
    %v7600 = vadd.f32 0.0, %v7599
    %v7601 = vpop.f32.mrb[0].mxu0
    %7602 = vmatprep.mubr.f32.mxu0 0.0
    %7603 = vmatmul.mubr.f32.gmra.mrb[0].mxu0 %v7301
    %v7604 = vpop.f32.mrb[0].mxu0
    %v7605 = vadd.f32 0.0, %v7604
    %v7606 = vpop.f32.mrb[0].mxu0
    %7607 = vmatprep.mubr.f32.mxu0 0.0
    %7608 = vmatmul.mubr.f32.gmra.mrb[0].mxu0 %v7304
    %v7609 = vpop.f32.mrb[0].mxu0
    %v7610 = vadd.f32 0.0, %v7609
    %v7611 = vpop.f32.mrb[0].mxu0
    %7612 = vmatprep.mubr.f32.mxu0 0.0
    %7613 = vmatmul.mubr.f32.gmra.mrb[0].mxu0 %v7307
    %v7614 = vpop.f32.mrb[0].mxu0
    %v7615 = vadd.f32 0.0, %v7614
    %v7616 = vpop.f32.mrb[0].mxu0
    %7617 = vmatprep.mubr.f32.mxu0 0.0
    %7618 = vmatmul.mubr.f32.gmra.mrb[0].mxu0 %v7310
    %v7619 = vpop.f32.mrb[0].mxu0
    %v7620 = vadd.f32 0.0, %v7619
    %v7621 = vpop.f32.mrb[0].mxu0
    %7622 = vmatprep.mubr.f32.mxu0 0.0
    %7623 = vmatmul.mubr.f32.gmra.mrb[0].mxu0 %v7313
    %v7624 = vpop.f32.mrb[0].mxu0
    %v7625 = vadd.f32 0.0, %v7624
    %v7626 = vpop.f32.mrb[0].mxu0
    %7627 = vmatprep.mubr.f32.mxu0 0.0
    %7628 = vmatmul.mubr.f32.gmra.mrb[0].mxu0 %v7316
    %v7629 = vpop.f32.mrb[0].mxu0
    %v7630 = vadd.f32 0.0, %v7629
    %v7631 = vpop.f32.mrb[0].mxu0
    %7632 = vmatprep.mubr.f32.mxu0 0.0
    %7633 = vmatmul.mubr.f32.gmra.mrb[0].mxu0 %v7319
    %v7634 = vpop.f32.mrb[0].mxu0
    %v7635 = vadd.f32 0.0, %v7634
    %v7636 = vpop.f32.mrb[0].mxu0
    %7637 = vmatprep.mubr.f32.mxu0 0.0
    %7638 = vmatmul.mubr.f32.gmra.mrb[0].mxu0 %v7322
    %v7639 = vpop.f32.mrb[0].mxu0
    %v7640 = vadd.f32 0.0, %v7639
    %v7641 = vpop.f32.mrb[0].mxu0
    %7642 = vmatprep.mubr.f32.mxu0 0.0
    %7643 = vmatmul.mubr.f32.gmra.mrb[0].mxu0 %v7325
    %v7644 = vpop.f32.mrb[0].mxu0
    %v7645 = vadd.f32 0.0, %v7644
    %v7646 = vpop.f32.mrb[0].mxu0
    %7647 = vmatprep.mubr.f32.mxu0 0.0
    %7648 = vmatmul.mubr.f32.gmra.mrb[0].mxu0 %v7328
    %v7649 = vpop.f32.mrb[0].mxu0
    %v7650 = vadd.f32 0.0, %v7649
    %v7651 = vpop.f32.mrb[0].mxu0
    %7652 = vmatprep.mubr.f32.mxu0 0.0
    %7653 = vmatmul.mubr.f32.gmra.mrb[0].mxu0 %v7331
    %v7654 = vpop.f32.mrb[0].mxu0
    %v7655 = vadd.f32 0.0, %v7654
    %v7656 = vpop.f32.mrb[0].mxu0
    %7657 = vmatprep.mubr.f32.mxu0 0.0
    %7658 = vmatmul.mubr.f32.gmra.mrb[0].mxu0 %v7334
    %v7659 = vpop.f32.mrb[0].mxu0
    %v7660 = vadd.f32 0.0, %v7659
    %v7661 = vpop.f32.mrb[0].mxu0
    %7662 = vmatprep.mubr.f32.mxu0 0.0
    %7663 = vmatmul.mubr.f32.gmra.mrb[0].mxu0 %v7337
    %v7664 = vpop.f32.mrb[0].mxu0
    %v7665 = vadd.f32 0.0, %v7664
    %v7666 = vpop.f32.mrb[0].mxu0
    %7667 = vmatprep.mubr.f32.mxu0 0.0
    %7668 = vmatmul.mubr.f32.gmra.mrb[0].mxu0 %v7340
    %v7669 = vpop.f32.mrb[0].mxu0
    %v7670 = vadd.f32 0.0, %v7669
    %v7671 = vpop.f32.mrb[0].mxu0
    %7672 = vmatprep.mubr.f32.mxu0 0.0
    %7673 = vmatmul.mubr.f32.gmra.mrb[0].mxu0 %v7343
    %v7674 = vpop.f32.mrb[0].mxu0
    %v7675 = vadd.f32 0.0, %v7674
    %v7676 = vpop.f32.mrb[0].mxu0
    %7677 = vmatprep.mubr.f32.mxu0 0.0
    %7678 = vmatmul.mubr.f32.gmra.mrb[0].mxu0 %v7346
    %v7679 = vpop.f32.mrb[0].mxu0
    %v7680 = vadd.f32 0.0, %v7679
    %v7681 = vpop.f32.mrb[0].mxu0
    %7682 = vmatprep.mubr.f32.mxu0 0.0
    %7683 = vmatmul.mubr.f32.gmra.mrb[0].mxu0 %v7349
    %v7684 = vpop.f32.mrb[0].mxu0
    %v7685 = vadd.f32 0.0, %v7684
    %v7686 = vpop.f32.mrb[0].mxu0
    %7687 = vmatprep.mubr.f32.mxu0 0.0
    %7688 = vmatmul.mubr.f32.gmra.mrb[0].mxu0 %v7352
    %v7689 = vpop.f32.mrb[0].mxu0
    %v7690 = vadd.f32 0.0, %v7689
    %v7691 = vpop.f32.mrb[0].mxu0
    %7692 = vmatprep.mubr.f32.mxu0 0.0
    %7693 = vmatmul.mubr.f32.gmra.mrb[0].mxu0 %v7355
    %v7694 = vpop.f32.mrb[0].mxu0
    %v7695 = vadd.f32 0.0, %v7694
    %v7696 = vpop.f32.mrb[0].mxu0
    %7697 = vmatprep.mubr.f32.mxu0 0.0
    %7698 = vmatmul.mubr.f32.gmra.mrb[0].mxu0 %v7358
    %v7699 = vpop.f32.mrb[0].mxu0
    %v7700 = vadd.f32 0.0, %v7699
    %v7701 = vpop.f32.mrb[0].mxu0
    %7702 = vmatprep.mubr.f32.mxu0 0.0
    %7703 = vmatmul.mubr.f32.gmra.mrb[0].mxu0 %v7361
    %v7704 = vpop.f32.mrb[0].mxu0
    %v7705 = vadd.f32 0.0, %v7704
    %v7706 = vpop.f32.mrb[0].mxu0
    %7707 = vmatprep.mubr.f32.mxu0 0.0
    %7708 = vmatmul.mubr.f32.gmra.mrb[0].mxu0 %v7364
    %v7709 = vpop.f32.mrb[0].mxu0
    %v7710 = vadd.f32 0.0, %v7709
    %v7711 = vpop.f32.mrb[0].mxu0
    %7712 = vmatprep.mubr.f32.mxu0 0.0
    %7713 = vmatmul.mubr.f32.gmra.mrb[0].mxu0 %v7367
    %v7714 = vpop.f32.mrb[0].mxu0
    %v7715 = vadd.f32 0.0, %v7714
    %v7716 = vpop.f32.mrb[0].mxu0
    %7717 = vmatprep.mubr.f32.mxu0 0.0
    %7718 = vmatmul.mubr.f32.gmra.mrb[0].mxu0 %v7370
    %v7719 = vpop.f32.mrb[0].mxu0
    %v7720 = vadd.f32 0.0, %v7719
    %v7721 = vpop.f32.mrb[0].mxu0
    %7722 = vmatprep.mubr.f32.mxu0 0.0
    %7723 = vmatmul.mubr.f32.gmra.mrb[0].mxu0 %v7373
    %v7724 = vpop.f32.mrb[0].mxu0
    %v7725 = vadd.f32 0.0, %v7724
    %v7726 = vpop.f32.mrb[0].mxu0
    %7727 = vmatprep.mubr.f32.mxu0 0.0
    %7728 = vmatmul.mubr.f32.gmra.mrb[0].mxu0 %v7376
    %v7729 = vpop.f32.mrb[0].mxu0
    %v7730 = vadd.f32 0.0, %v7729
    %v7731 = vpop.f32.mrb[0].mxu0
    %7732 = vmatprep.mubr.f32.mxu0 0.0
    %7733 = vmatmul.mubr.f32.gmra.mrb[0].mxu0 %v7379
    %v7734 = vpop.f32.mrb[0].mxu0
    %v7735 = vadd.f32 0.0, %v7734
    %v7736 = vpop.f32.mrb[0].mxu0
    %7737 = vmatprep.mubr.f32.mxu0 0.0
    %7738 = vmatmul.mubr.f32.gmra.mrb[0].mxu0 %v7382
    %v7739 = vpop.f32.mrb[0].mxu0
    %v7740 = vadd.f32 0.0, %v7739
    %v7741 = vpop.f32.mrb[0].mxu0
    %7742 = vmatprep.mubr.f32.mxu0 0.0
    %7743 = vmatmul.mubr.f32.gmra.mrb[0].mxu0 %v7385
    %v7744 = vpop.f32.mrb[0].mxu0
    %v7745 = vadd.f32 0.0, %v7744
    %v7746 = vpop.f32.mrb[0].mxu0
    %7747 = vmatprep.mubr.f32.mxu0 0.0
    %7748 = vmatmul.mubr.f32.gmra.mrb[0].mxu0 %v7388
    %v7749 = vpop.f32.mrb[0].mxu0
    %v7750 = vadd.f32 0.0, %v7749
    %v7751 = vpop.f32.mrb[0].mxu0
    %7752 = vmatprep.mubr.f32.mxu0 0.0
    %7753 = vmatmul.mubr.f32.gmra.mrb[0].mxu0 %v7391
    %v7754 = vpop.f32.mrb[0].mxu0
    %v7755 = vadd.f32 0.0, %v7754
    %v7756 = vpop.f32.mrb[0].mxu0
    %7757 = vmatprep.mubr.f32.mxu0 0.0
    %7758 = vmatmul.mubr.f32.gmra.mrb[0].mxu0 %v7394
    %v7759 = vpop.f32.mrb[0].mxu0
    %v7760 = vadd.f32 0.0, %v7759
    %v7761 = vpop.f32.mrb[0].mxu0
    %7762 = vmatprep.mubr.f32.mxu0 0.0
    %7763 = vmatmul.mubr.f32.gmra.mrb[0].mxu0 %v7397
    %v7764 = vpop.f32.mrb[0].mxu0
    %v7765 = vadd.f32 0.0, %v7764
    %v7766 = vpop.f32.mrb[0].mxu0
    %7767 = vmatprep.mubr.f32.mxu0 0.0
    %7768 = vmatmul.mubr.f32.gmra.mrb[0].mxu0 %v7400
    %v7769 = vpop.f32.mrb[0].mxu0
    %v7770 = vadd.f32 0.0, %v7769
    %v7771 = vpop.f32.mrb[0].mxu0
    %7772 = vmatprep.mubr.f32.mxu0 0.0
    %7773 = vmatmul.mubr.f32.gmra.mrb[0].mxu0 %v7403
    %v7774 = vpop.f32.mrb[0].mxu0
    %v7775 = vadd.f32 0.0, %v7774
    %v7776 = vpop.f32.mrb[0].mxu0
    %7777 = vmatprep.mubr.f32.mxu0 0.0
    %7778 = vmatmul.mubr.f32.gmra.mrb[0].mxu0 %v7406
    %v7779 = vpop.f32.mrb[0].mxu0
    %v7780 = vadd.f32 0.0, %v7779
    %v7781 = vpop.f32.mrb[0].mxu0
    %7782 = vmatprep.mubr.f32.mxu0 0.0
    %7783 = vmatmul.mubr.f32.gmra.mrb[0].mxu0 %v7409
    %v7784 = vpop.f32.mrb[0].mxu0
    %v7785 = vadd.f32 0.0, %v7784
    %v7786 = vpop.f32.mrb[0].mxu0
    %7787 = vmatprep.mubr.f32.mxu0 0.0
    %7788 = vmatmul.mubr.f32.gmra.mrb[0].mxu0 %v7412
    %v7789 = vpop.f32.mrb[0].mxu0
    %v7790 = vadd.f32 0.0, %v7789
    %v7791 = vpop.f32.mrb[0].mxu0
    %7792 = vmatprep.mubr.f32.mxu0 0.0
    %7793 = vmatmul.mubr.f32.gmra.mrb[0].mxu0 %v7415
    %v7794 = vpop.f32.mrb[0].mxu0
    %v7795 = vadd.f32 0.0, %v7794
    %v7796 = vpop.f32.mrb[0].mxu0
    %7797 = vmatprep.mubr.f32.mxu0 0.0
    %7798 = vmatmul.mubr.f32.gmra.mrb[0].mxu0 %v7418
    %v7799 = vpop.f32.mrb[0].mxu0
    %v7800 = vadd.f32 0.0, %v7799
    %v7801 = vpop.f32.mrb[0].mxu0
    %7802 = vmatprep.mubr.f32.mxu0 0.0
    %7803 = vmatmul.mubr.f32.gmra.mrb[0].mxu0 %v7421
    %v7804 = vpop.f32.mrb[0].mxu0
    %v7805 = vadd.f32 0.0, %v7804
    %v7806 = vpop.f32.mrb[0].mxu0
    %7807 = vdwg.mxu0
    %7808 = vmatprep.subr.mxu0 0.0
    %7809 = vmatpush1.msra.mxu0 %v7158
    %7810 = vmatprep.subr.mxu0 0.0
    %7811 = vmatpush1.msra.mxu0 %v7159
    %7812 = vmatprep.subr.mxu0 0.0
    %7813 = vmatpush1.msra.mxu0 %v7160
    %7814 = vmatprep.subr.mxu0 0.0
    %7815 = vmatpush1.msra.mxu0 %v7161
    %7816 = vmatprep.subr.mxu0 0.0
    %7817 = vmatpush1.msra.mxu0 %v7162
    %7818 = vmatprep.subr.mxu0 0.0
    %7819 = vmatpush1.msra.mxu0 %v7163
    %7820 = vmatprep.subr.mxu0 0.0
    %7821 = vmatpush1.msra.mxu0 %v7164
    %7822 = vmatprep.subr.mxu0 0.0
    %7823 = vmatpush1.msra.mxu0 %v7165
    %7824 = vmatprep.subr.mxu0 0.0
    %7825 = vmatpush1.msra.mxu0 0.0
    %7826 = vmatprep.subr.mxu0 0.0
    %7827 = vmatpush1.msra.mxu0 0.0
    %7828 = vmatprep.subr.mxu0 0.0
    %7829 = vmatpush1.msra.mxu0 0.0
    %7830 = vmatprep.subr.mxu0 0.0
    %7831 = vmatpush1.msra.mxu0 0.0
    %7832 = vmatprep.subr.mxu0 0.0
    %7833 = vmatpush1.msra.mxu0 0.0
    %7834 = vmatprep.subr.mxu0 0.0
    %7835 = vmatpush1.msra.mxu0 0.0
    %7836 = vmatprep.subr.mxu0 0.0
    %7837 = vmatpush1.msra.mxu0 0.0
    %7838 = vmatprep.subr.mxu0 0.0
    %7839 = vmatpush1.msra.mxu0 0.0
    %7840 = vmatprep.subr.mxu0 0.0
    %7841 = vmatpush1.msra.mxu0 0.0
    %7842 = vmatprep.subr.mxu0 0.0
    %7843 = vmatpush1.msra.mxu0 0.0
    %7844 = vmatprep.subr.mxu0 0.0
    %7845 = vmatpush1.msra.mxu0 0.0
    %7846 = vmatprep.subr.mxu0 0.0
    %7847 = vmatpush1.msra.mxu0 0.0
    %7848 = vmatprep.subr.mxu0 0.0
    %7849 = vmatpush1.msra.mxu0 0.0
    %7850 = vmatprep.subr.mxu0 0.0
    %7851 = vmatpush1.msra.mxu0 0.0
    %7852 = vmatprep.subr.mxu0 0.0
    %7853 = vmatpush1.msra.mxu0 0.0
    %7854 = vmatprep.subr.mxu0 0.0
    %7855 = vmatpush1.msra.mxu0 0.0
    %7856 = vmatprep.subr.mxu0 0.0
    %7857 = vmatpush1.msra.mxu0 0.0
    %7858 = vmatprep.subr.mxu0 0.0
    %7859 = vmatpush1.msra.mxu0 0.0
    %7860 = vmatprep.subr.mxu0 0.0
    %7861 = vmatpush1.msra.mxu0 0.0
    %7862 = vmatprep.subr.mxu0 0.0
    %7863 = vmatpush1.msra.mxu0 0.0
    %7864 = vmatprep.subr.mxu0 0.0
    %7865 = vmatpush1.msra.mxu0 0.0
    %7866 = vmatprep.subr.mxu0 0.0
    %7867 = vmatpush1.msra.mxu0 0.0
    %7868 = vmatprep.subr.mxu0 0.0
    %7869 = vmatpush1.msra.mxu0 0.0
    %7870 = vmatprep.subr.mxu0 0.0
    %7871 = vmatpush1.msra.mxu0 0.0
    %7872 = vmatprep.mubr.f32.mxu0 0.0
    %7873 = vmatmul.mubr.f32.gmra.mrb[0].mxu0 %v7232
    %v7874 = vpop.f32.mrb[0].mxu0
    %v7875 = vadd.f32 0.0, %v7874
    %v7876 = vpop.f32.mrb[0].mxu0
    %7877 = vmatprep.mubr.f32.mxu0 0.0
    %7878 = vmatmul.mubr.f32.gmra.mrb[0].mxu0 %v7235
    %v7879 = vpop.f32.mrb[0].mxu0
    %v7880 = vadd.f32 0.0, %v7879
    %v7881 = vpop.f32.mrb[0].mxu0
    %7882 = vmatprep.mubr.f32.mxu0 0.0
    %7883 = vmatmul.mubr.f32.gmra.mrb[0].mxu0 %v7238
    %v7884 = vpop.f32.mrb[0].mxu0
    %v7885 = vadd.f32 0.0, %v7884
    %v7886 = vpop.f32.mrb[0].mxu0
    %7887 = vmatprep.mubr.f32.mxu0 0.0
    %7888 = vmatmul.mubr.f32.gmra.mrb[0].mxu0 %v7241
    %v7889 = vpop.f32.mrb[0].mxu0
    %v7890 = vadd.f32 0.0, %v7889
    %v7891 = vpop.f32.mrb[0].mxu0
    %7892 = vmatprep.mubr.f32.mxu0 0.0
    %7893 = vmatmul.mubr.f32.gmra.mrb[0].mxu0 %v7244
    %v7894 = vpop.f32.mrb[0].mxu0
    %v7895 = vadd.f32 0.0, %v7894
    %v7896 = vpop.f32.mrb[0].mxu0
    %7897 = vmatprep.mubr.f32.mxu0 0.0
    %7898 = vmatmul.mubr.f32.gmra.mrb[0].mxu0 %v7247
    %v7899 = vpop.f32.mrb[0].mxu0
    %v7900 = vadd.f32 0.0, %v7899
    %v7901 = vpop.f32.mrb[0].mxu0
    %7902 = vmatprep.mubr.f32.mxu0 0.0
    %7903 = vmatmul.mubr.f32.gmra.mrb[0].mxu0 %v7250
    %v7904 = vpop.f32.mrb[0].mxu0
    %v7905 = vadd.f32 0.0, %v7904
    %v7906 = vpop.f32.mrb[0].mxu0
    %7907 = vmatprep.mubr.f32.mxu0 0.0
    %7908 = vmatmul.mubr.f32.gmra.mrb[0].mxu0 %v7253
    %v7909 = vpop.f32.mrb[0].mxu0
    %v7910 = vadd.f32 0.0, %v7909
    %v7911 = vpop.f32.mrb[0].mxu0
    %7912 = vmatprep.mubr.f32.mxu0 0.0
    %7913 = vmatmul.mubr.f32.gmra.mrb[0].mxu0 %v7256
    %v7914 = vpop.f32.mrb[0].mxu0
    %v7915 = vadd.f32 0.0, %v7914
    %v7916 = vpop.f32.mrb[0].mxu0
    %7917 = vmatprep.mubr.f32.mxu0 0.0
    %7918 = vmatmul.mubr.f32.gmra.mrb[0].mxu0 %v7259
    %v7919 = vpop.f32.mrb[0].mxu0
    %v7920 = vadd.f32 0.0, %v7919
    %v7921 = vpop.f32.mrb[0].mxu0
    %7922 = vmatprep.mubr.f32.mxu0 0.0
    %7923 = vmatmul.mubr.f32.gmra.mrb[0].mxu0 %v7262
    %v7924 = vpop.f32.mrb[0].mxu0
    %v7925 = vadd.f32 0.0, %v7924
    %v7926 = vpop.f32.mrb[0].mxu0
    %7927 = vmatprep.mubr.f32.mxu0 0.0
    %7928 = vmatmul.mubr.f32.gmra.mrb[0].mxu0 %v7265
    %v7929 = vpop.f32.mrb[0].mxu0
    %v7930 = vadd.f32 0.0, %v7929
    %v7931 = vpop.f32.mrb[0].mxu0
    %7932 = vmatprep.mubr.f32.mxu0 0.0
    %7933 = vmatmul.mubr.f32.gmra.mrb[0].mxu0 %v7268
    %v7934 = vpop.f32.mrb[0].mxu0
    %v7935 = vadd.f32 0.0, %v7934
    %v7936 = vpop.f32.mrb[0].mxu0
    %7937 = vmatprep.mubr.f32.mxu0 0.0
    %7938 = vmatmul.mubr.f32.gmra.mrb[0].mxu0 %v7271
    %v7939 = vpop.f32.mrb[0].mxu0
    %v7940 = vadd.f32 0.0, %v7939
    %v7941 = vpop.f32.mrb[0].mxu0
    %7942 = vmatprep.mubr.f32.mxu0 0.0
    %7943 = vmatmul.mubr.f32.gmra.mrb[0].mxu0 %v7274
    %v7944 = vpop.f32.mrb[0].mxu0
    %v7945 = vadd.f32 0.0, %v7944
    %v7946 = vpop.f32.mrb[0].mxu0
    %7947 = vmatprep.mubr.f32.mxu0 0.0
    %7948 = vmatmul.mubr.f32.gmra.mrb[0].mxu0 %v7277
    %v7949 = vpop.f32.mrb[0].mxu0
    %v7950 = vadd.f32 0.0, %v7949
    %v7951 = vpop.f32.mrb[0].mxu0
    %7952 = vmatprep.mubr.f32.mxu0 0.0
    %7953 = vmatmul.mubr.f32.gmra.mrb[0].mxu0 %v7280
    %v7954 = vpop.f32.mrb[0].mxu0
    %v7955 = vadd.f32 0.0, %v7954
    %v7956 = vpop.f32.mrb[0].mxu0
    %7957 = vmatprep.mubr.f32.mxu0 0.0
    %7958 = vmatmul.mubr.f32.gmra.mrb[0].mxu0 %v7283
    %v7959 = vpop.f32.mrb[0].mxu0
    %v7960 = vadd.f32 0.0, %v7959
    %v7961 = vpop.f32.mrb[0].mxu0
    %7962 = vmatprep.mubr.f32.mxu0 0.0
    %7963 = vmatmul.mubr.f32.gmra.mrb[0].mxu0 %v7286
    %v7964 = vpop.f32.mrb[0].mxu0
    %v7965 = vadd.f32 0.0, %v7964
    %v7966 = vpop.f32.mrb[0].mxu0
    %7967 = vmatprep.mubr.f32.mxu0 0.0
    %7968 = vmatmul.mubr.f32.gmra.mrb[0].mxu0 %v7289
    %v7969 = vpop.f32.mrb[0].mxu0
    %v7970 = vadd.f32 0.0, %v7969
    %v7971 = vpop.f32.mrb[0].mxu0
    %7972 = vmatprep.mubr.f32.mxu0 0.0
    %7973 = vmatmul.mubr.f32.gmra.mrb[0].mxu0 %v7292
    %v7974 = vpop.f32.mrb[0].mxu0
    %v7975 = vadd.f32 0.0, %v7974
    %v7976 = vpop.f32.mrb[0].mxu0
    %7977 = vmatprep.mubr.f32.mxu0 0.0
    %7978 = vmatmul.mubr.f32.gmra.mrb[0].mxu0 %v7295
    %v7979 = vpop.f32.mrb[0].mxu0
    %v7980 = vadd.f32 0.0, %v7979
    %v7981 = vpop.f32.mrb[0].mxu0
    %7982 = vmatprep.mubr.f32.mxu0 0.0
    %7983 = vmatmul.mubr.f32.gmra.mrb[0].mxu0 %v7298
    %v7984 = vpop.f32.mrb[0].mxu0
    %v7985 = vadd.f32 0.0, %v7984
    %v7986 = vpop.f32.mrb[0].mxu0
    %7987 = vmatprep.mubr.f32.mxu0 0.0
    %7988 = vmatmul.mubr.f32.gmra.mrb[0].mxu0 %v7301
    %v7989 = vpop.f32.mrb[0].mxu0
    %v7990 = vadd.f32 0.0, %v7989
    %v7991 = vpop.f32.mrb[0].mxu0
    %7992 = vmatprep.mubr.f32.mxu0 0.0
    %7993 = vmatmul.mubr.f32.gmra.mrb[0].mxu0 %v7304
    %v7994 = vpop.f32.mrb[0].mxu0
    %v7995 = vadd.f32 0.0, %v7994
    %v7996 = vpop.f32.mrb[0].mxu0
    %7997 = vmatprep.mubr.f32.mxu0 0.0
    %7998 = vmatmul.mubr.f32.gmra.mrb[0].mxu0 %v7307
    %v7999 = vpop.f32.mrb[0].mxu0
    %v8000 = vadd.f32 0.0, %v7999
    %v8001 = vpop.f32.mrb[0].mxu0
    %8002 = vmatprep.mubr.f32.mxu0 0.0
    %8003 = vmatmul.mubr.f32.gmra.mrb[0].mxu0 %v7310
    %v8004 = vpop.f32.mrb[0].mxu0
    %v8005 = vadd.f32 0.0, %v8004
    %v8006 = vpop.f32.mrb[0].mxu0
    %8007 = vmatprep.mubr.f32.mxu0 0.0
    %8008 = vmatmul.mubr.f32.gmra.mrb[0].mxu0 %v7313
    %v8009 = vpop.f32.mrb[0].mxu0
    %v8010 = vadd.f32 0.0, %v8009
    %v8011 = vpop.f32.mrb[0].mxu0
    %8012 = vmatprep.mubr.f32.mxu0 0.0
    %8013 = vmatmul.mubr.f32.gmra.mrb[0].mxu0 %v7316
    %v8014 = vpop.f32.mrb[0].mxu0
    %v8015 = vadd.f32 0.0, %v8014
    %v8016 = vpop.f32.mrb[0].mxu0
    %8017 = vmatprep.mubr.f32.mxu0 0.0
    %8018 = vmatmul.mubr.f32.gmra.mrb[0].mxu0 %v7319
    %v8019 = vpop.f32.mrb[0].mxu0
    %v8020 = vadd.f32 0.0, %v8019
    %v8021 = vpop.f32.mrb[0].mxu0
    %8022 = vmatprep.mubr.f32.mxu0 0.0
    %8023 = vmatmul.mubr.f32.gmra.mrb[0].mxu0 %v7322
    %v8024 = vpop.f32.mrb[0].mxu0
    %v8025 = vadd.f32 0.0, %v8024
    %v8026 = vpop.f32.mrb[0].mxu0
    %8027 = vmatprep.mubr.f32.mxu0 0.0
    %8028 = vmatmul.mubr.f32.gmra.mrb[0].mxu0 %v7325
    %v8029 = vpop.f32.mrb[0].mxu0
    %v8030 = vadd.f32 0.0, %v8029
    %v8031 = vpop.f32.mrb[0].mxu0
    %8032 = vmatprep.mubr.f32.mxu0 0.0
    %8033 = vmatmul.mubr.f32.gmra.mrb[0].mxu0 %v7328
    %v8034 = vpop.f32.mrb[0].mxu0
    %v8035 = vadd.f32 0.0, %v8034
    %v8036 = vpop.f32.mrb[0].mxu0
    %8037 = vmatprep.mubr.f32.mxu0 0.0
    %8038 = vmatmul.mubr.f32.gmra.mrb[0].mxu0 %v7331
    %v8039 = vpop.f32.mrb[0].mxu0
    %v8040 = vadd.f32 0.0, %v8039
    %v8041 = vpop.f32.mrb[0].mxu0
    %8042 = vmatprep.mubr.f32.mxu0 0.0
    %8043 = vmatmul.mubr.f32.gmra.mrb[0].mxu0 %v7334
    %v8044 = vpop.f32.mrb[0].mxu0
    %v8045 = vadd.f32 0.0, %v8044
    %v8046 = vpop.f32.mrb[0].mxu0
    %8047 = vmatprep.mubr.f32.mxu0 0.0
    %8048 = vmatmul.mubr.f32.gmra.mrb[0].mxu0 %v7337
    %v8049 = vpop.f32.mrb[0].mxu0
    %v8050 = vadd.f32 0.0, %v8049
    %v8051 = vpop.f32.mrb[0].mxu0
    %8052 = vmatprep.mubr.f32.mxu0 0.0
    %8053 = vmatmul.mubr.f32.gmra.mrb[0].mxu0 %v7340
    %v8054 = vpop.f32.mrb[0].mxu0
    %v8055 = vadd.f32 0.0, %v8054
    %v8056 = vpop.f32.mrb[0].mxu0
    %8057 = vmatprep.mubr.f32.mxu0 0.0
    %8058 = vmatmul.mubr.f32.gmra.mrb[0].mxu0 %v7343
    %v8059 = vpop.f32.mrb[0].mxu0
    %v8060 = vadd.f32 0.0, %v8059
    %v8061 = vpop.f32.mrb[0].mxu0
    %8062 = vmatprep.mubr.f32.mxu0 0.0
    %8063 = vmatmul.mubr.f32.gmra.mrb[0].mxu0 %v7346
    %v8064 = vpop.f32.mrb[0].mxu0
    %v8065 = vadd.f32 0.0, %v8064
    %v8066 = vpop.f32.mrb[0].mxu0
    %8067 = vmatprep.mubr.f32.mxu0 0.0
    %8068 = vmatmul.mubr.f32.gmra.mrb[0].mxu0 %v7349
    %v8069 = vpop.f32.mrb[0].mxu0
    %v8070 = vadd.f32 0.0, %v8069
    %v8071 = vpop.f32.mrb[0].mxu0
    %8072 = vmatprep.mubr.f32.mxu0 0.0
    %8073 = vmatmul.mubr.f32.gmra.mrb[0].mxu0 %v7352
    %v8074 = vpop.f32.mrb[0].mxu0
    %v8075 = vadd.f32 0.0, %v8074
    %v8076 = vpop.f32.mrb[0].mxu0
    %8077 = vmatprep.mubr.f32.mxu0 0.0
    %8078 = vmatmul.mubr.f32.gmra.mrb[0].mxu0 %v7355
    %v8079 = vpop.f32.mrb[0].mxu0
    %v8080 = vadd.f32 0.0, %v8079
    %v8081 = vpop.f32.mrb[0].mxu0
    %8082 = vmatprep.mubr.f32.mxu0 0.0
    %8083 = vmatmul.mubr.f32.gmra.mrb[0].mxu0 %v7358
    %v8084 = vpop.f32.mrb[0].mxu0
    %v8085 = vadd.f32 0.0, %v8084
    %v8086 = vpop.f32.mrb[0].mxu0
    %8087 = vmatprep.mubr.f32.mxu0 0.0
    %8088 = vmatmul.mubr.f32.gmra.mrb[0].mxu0 %v7361
    %v8089 = vpop.f32.mrb[0].mxu0
    %v8090 = vadd.f32 0.0, %v8089
    %v8091 = vpop.f32.mrb[0].mxu0
    %8092 = vmatprep.mubr.f32.mxu0 0.0
    %8093 = vmatmul.mubr.f32.gmra.mrb[0].mxu0 %v7364
    %v8094 = vpop.f32.mrb[0].mxu0
    %v8095 = vadd.f32 0.0, %v8094
    %v8096 = vpop.f32.mrb[0].mxu0
    %8097 = vmatprep.mubr.f32.mxu0 0.0
    %8098 = vmatmul.mubr.f32.gmra.mrb[0].mxu0 %v7367
    %v8099 = vpop.f32.mrb[0].mxu0
    %v8100 = vadd.f32 0.0, %v8099
    %v8101 = vpop.f32.mrb[0].mxu0
    %8102 = vmatprep.mubr.f32.mxu0 0.0
    %8103 = vmatmul.mubr.f32.gmra.mrb[0].mxu0 %v7370
    %v8104 = vpop.f32.mrb[0].mxu0
    %v8105 = vadd.f32 0.0, %v8104
    %v8106 = vpop.f32.mrb[0].mxu0
    %8107 = vmatprep.mubr.f32.mxu0 0.0
    %8108 = vmatmul.mubr.f32.gmra.mrb[0].mxu0 %v7373
    %v8109 = vpop.f32.mrb[0].mxu0
    %v8110 = vadd.f32 0.0, %v8109
    %v8111 = vpop.f32.mrb[0].mxu0
    %8112 = vmatprep.mubr.f32.mxu0 0.0
    %8113 = vmatmul.mubr.f32.gmra.mrb[0].mxu0 %v7376
    %v8114 = vpop.f32.mrb[0].mxu0
    %v8115 = vadd.f32 0.0, %v8114
    %v8116 = vpop.f32.mrb[0].mxu0
    %8117 = vmatprep.mubr.f32.mxu0 0.0
    %8118 = vmatmul.mubr.f32.gmra.mrb[0].mxu0 %v7379
    %v8119 = vpop.f32.mrb[0].mxu0
    %v8120 = vadd.f32 0.0, %v8119
    %v8121 = vpop.f32.mrb[0].mxu0
    %8122 = vmatprep.mubr.f32.mxu0 0.0
    %8123 = vmatmul.mubr.f32.gmra.mrb[0].mxu0 %v7382
    %v8124 = vpop.f32.mrb[0].mxu0
    %v8125 = vadd.f32 0.0, %v8124
    %v8126 = vpop.f32.mrb[0].mxu0
    %8127 = vmatprep.mubr.f32.mxu0 0.0
    %8128 = vmatmul.mubr.f32.gmra.mrb[0].mxu0 %v7385
    %v8129 = vpop.f32.mrb[0].mxu0
    %v8130 = vadd.f32 0.0, %v8129
    %v8131 = vpop.f32.mrb[0].mxu0
    %8132 = vmatprep.mubr.f32.mxu0 0.0
    %8133 = vmatmul.mubr.f32.gmra.mrb[0].mxu0 %v7388
    %v8134 = vpop.f32.mrb[0].mxu0
    %v8135 = vadd.f32 0.0, %v8134
    %v8136 = vpop.f32.mrb[0].mxu0
    %8137 = vmatprep.mubr.f32.mxu0 0.0
    %8138 = vmatmul.mubr.f32.gmra.mrb[0].mxu0 %v7391
    %v8139 = vpop.f32.mrb[0].mxu0
    %v8140 = vadd.f32 0.0, %v8139
    %v8141 = vpop.f32.mrb[0].mxu0
    %8142 = vmatprep.mubr.f32.mxu0 0.0
    %8143 = vmatmul.mubr.f32.gmra.mrb[0].mxu0 %v7394
    %v8144 = vpop.f32.mrb[0].mxu0
    %v8145 = vadd.f32 0.0, %v8144
    %v8146 = vpop.f32.mrb[0].mxu0
    %8147 = vmatprep.mubr.f32.mxu0 0.0
    %8148 = vmatmul.mubr.f32.gmra.mrb[0].mxu0 %v7397
    %v8149 = vpop.f32.mrb[0].mxu0
    %v8150 = vadd.f32 0.0, %v8149
    %v8151 = vpop.f32.mrb[0].mxu0
    %8152 = vmatprep.mubr.f32.mxu0 0.0
    %8153 = vmatmul.mubr.f32.gmra.mrb[0].mxu0 %v7400
    %v8154 = vpop.f32.mrb[0].mxu0
    %v8155 = vadd.f32 0.0, %v8154
    %v8156 = vpop.f32.mrb[0].mxu0
    %8157 = vmatprep.mubr.f32.mxu0 0.0
    %8158 = vmatmul.mubr.f32.gmra.mrb[0].mxu0 %v7403
    %v8159 = vpop.f32.mrb[0].mxu0
    %v8160 = vadd.f32 0.0, %v8159
    %v8161 = vpop.f32.mrb[0].mxu0
    %8162 = vmatprep.mubr.f32.mxu0 0.0
    %8163 = vmatmul.mubr.f32.gmra.mrb[0].mxu0 %v7406
    %v8164 = vpop.f32.mrb[0].mxu0
    %v8165 = vadd.f32 0.0, %v8164
    %v8166 = vpop.f32.mrb[0].mxu0
    %8167 = vmatprep.mubr.f32.mxu0 0.0
    %8168 = vmatmul.mubr.f32.gmra.mrb[0].mxu0 %v7409
    %v8169 = vpop.f32.mrb[0].mxu0
    %v8170 = vadd.f32 0.0, %v8169
    %v8171 = vpop.f32.mrb[0].mxu0
    %8172 = vmatprep.mubr.f32.mxu0 0.0
    %8173 = vmatmul.mubr.f32.gmra.mrb[0].mxu0 %v7412
    %v8174 = vpop.f32.mrb[0].mxu0
    %v8175 = vadd.f32 0.0, %v8174
    %v8176 = vpop.f32.mrb[0].mxu0
    %8177 = vmatprep.mubr.f32.mxu0 0.0
    %8178 = vmatmul.mubr.f32.gmra.mrb[0].mxu0 %v7415
    %v8179 = vpop.f32.mrb[0].mxu0
    %v8180 = vadd.f32 0.0, %v8179
    %v8181 = vpop.f32.mrb[0].mxu0
    %8182 = vmatprep.mubr.f32.mxu0 0.0
    %8183 = vmatmul.mubr.f32.gmra.mrb[0].mxu0 %v7418
    %v8184 = vpop.f32.mrb[0].mxu0
    %v8185 = vadd.f32 0.0, %v8184
    %v8186 = vpop.f32.mrb[0].mxu0
    %8187 = vmatprep.mubr.f32.mxu0 0.0
    %8188 = vmatmul.mubr.f32.gmra.mrb[0].mxu0 %v7421
    %v8189 = vpop.f32.mrb[0].mxu0
    %v8190 = vadd.f32 0.0, %v8189
    %v8191 = vpop.f32.mrb[0].mxu0
    %8192 = vdwg.mxu0
    %v8193 = vmul.f32 %v6172, %v7490
    %v8194 = vmul.f32 %v6177, %v7495
    %v8195 = vmul.f32 %v6182, %v7500
    %v8196 = vmul.f32 %v6187, %v7505
    %v8197 = vmul.f32 %v6192, %v7510
    %v8198 = vmul.f32 %v6197, %v7515
    %v8199 = vmul.f32 %v6202, %v7520
    %v8200 = vmul.f32 %v6207, %v7525
    %v8201 = vmul.f32 %v6212, %v7530
    %v8202 = vmul.f32 %v6217, %v7535
    %v8203 = vmul.f32 %v6222, %v7540
    %v8204 = vmul.f32 %v6227, %v7545
    %v8205 = vmul.f32 %v6232, %v7550
    %v8206 = vmul.f32 %v6237, %v7555
    %v8207 = vmul.f32 %v6242, %v7560
    %v8208 = vmul.f32 %v6247, %v7565
    %v8209 = vmul.f32 %v6252, %v7570
    %v8210 = vmul.f32 %v6257, %v7575
    %v8211 = vmul.f32 %v6262, %v7580
    %v8212 = vmul.f32 %v6267, %v7585
    %v8213 = vmul.f32 %v6272, %v7590
    %v8214 = vmul.f32 %v6277, %v7595
    %v8215 = vmul.f32 %v6282, %v7600
    %v8216 = vmul.f32 %v6287, %v7605
    %v8217 = vmul.f32 %v6292, %v7610
    %v8218 = vmul.f32 %v6297, %v7615
    %v8219 = vmul.f32 %v6302, %v7620
    %v8220 = vmul.f32 %v6307, %v7625
    %v8221 = vmul.f32 %v6312, %v7630
    %v8222 = vmul.f32 %v6317, %v7635
    %v8223 = vmul.f32 %v6322, %v7640
    %v8224 = vmul.f32 %v6327, %v7645
    %v8225 = vmul.f32 %v6332, %v7650
    %v8226 = vmul.f32 %v6337, %v7655
    %v8227 = vmul.f32 %v6342, %v7660
    %v8228 = vmul.f32 %v6347, %v7665
    %v8229 = vmul.f32 %v6352, %v7670
    %v8230 = vmul.f32 %v6357, %v7675
    %v8231 = vmul.f32 %v6362, %v7680
    %v8232 = vmul.f32 %v6367, %v7685
    %v8233 = vmul.f32 %v6372, %v7690
    %v8234 = vmul.f32 %v6377, %v7695
    %v8235 = vmul.f32 %v6382, %v7700
    %v8236 = vmul.f32 %v6387, %v7705
    %v8237 = vmul.f32 %v6392, %v7710
    %v8238 = vmul.f32 %v6397, %v7715
    %v8239 = vmul.f32 %v6402, %v7720
    %v8240 = vmul.f32 %v6407, %v7725
    %v8241 = vmul.f32 %v6412, %v7730
    %v8242 = vmul.f32 %v6417, %v7735
    %v8243 = vmul.f32 %v6422, %v7740
    %v8244 = vmul.f32 %v6427, %v7745
    %v8245 = vmul.f32 %v6432, %v7750
    %v8246 = vmul.f32 %v6437, %v7755
    %v8247 = vmul.f32 %v6442, %v7760
    %v8248 = vmul.f32 %v6447, %v7765
    %v8249 = vmul.f32 %v6452, %v7770
    %v8250 = vmul.f32 %v6457, %v7775
    %v8251 = vmul.f32 %v6462, %v7780
    %v8252 = vmul.f32 %v6467, %v7785
    %v8253 = vmul.f32 %v6472, %v7790
    %v8254 = vmul.f32 %v6477, %v7795
    %v8255 = vmul.f32 %v6482, %v7800
    %v8256 = vmul.f32 %v6487, %v7805
    %v8257 = vadd.f32 %v8193, %v7875
    %v8258 = vadd.f32 %v8194, %v7880
    %v8259 = vadd.f32 %v8195, %v7885
    %v8260 = vadd.f32 %v8196, %v7890
    %v8261 = vadd.f32 %v8197, %v7895
    %v8262 = vadd.f32 %v8198, %v7900
    %v8263 = vadd.f32 %v8199, %v7905
    %v8264 = vadd.f32 %v8200, %v7910
    %v8265 = vadd.f32 %v8201, %v7915
    %v8266 = vadd.f32 %v8202, %v7920
    %v8267 = vadd.f32 %v8203, %v7925
    %v8268 = vadd.f32 %v8204, %v7930
    %v8269 = vadd.f32 %v8205, %v7935
    %v8270 = vadd.f32 %v8206, %v7940
    %v8271 = vadd.f32 %v8207, %v7945
    %v8272 = vadd.f32 %v8208, %v7950
    %v8273 = vadd.f32 %v8209, %v7955
    %v8274 = vadd.f32 %v8210, %v7960
    %v8275 = vadd.f32 %v8211, %v7965
    %v8276 = vadd.f32 %v8212, %v7970
    %v8277 = vadd.f32 %v8213, %v7975
    %v8278 = vadd.f32 %v8214, %v7980
    %v8279 = vadd.f32 %v8215, %v7985
    %v8280 = vadd.f32 %v8216, %v7990
    %v8281 = vadd.f32 %v8217, %v7995
    %v8282 = vadd.f32 %v8218, %v8000
    %v8283 = vadd.f32 %v8219, %v8005
    %v8284 = vadd.f32 %v8220, %v8010
    %v8285 = vadd.f32 %v8221, %v8015
    %v8286 = vadd.f32 %v8222, %v8020
    %v8287 = vadd.f32 %v8223, %v8025
    %v8288 = vadd.f32 %v8224, %v8030
    %v8289 = vadd.f32 %v8225, %v8035
    %v8290 = vadd.f32 %v8226, %v8040
    %v8291 = vadd.f32 %v8227, %v8045
    %v8292 = vadd.f32 %v8228, %v8050
    %v8293 = vadd.f32 %v8229, %v8055
    %v8294 = vadd.f32 %v8230, %v8060
    %v8295 = vadd.f32 %v8231, %v8065
    %v8296 = vadd.f32 %v8232, %v8070
    %v8297 = vadd.f32 %v8233, %v8075
    %v8298 = vadd.f32 %v8234, %v8080
    %v8299 = vadd.f32 %v8235, %v8085
    %v8300 = vadd.f32 %v8236, %v8090
    %v8301 = vadd.f32 %v8237, %v8095
    %v8302 = vadd.f32 %v8238, %v8100
    %v8303 = vadd.f32 %v8239, %v8105
    %v8304 = vadd.f32 %v8240, %v8110
    %v8305 = vadd.f32 %v8241, %v8115
    %v8306 = vadd.f32 %v8242, %v8120
    %v8307 = vadd.f32 %v8243, %v8125
    %v8308 = vadd.f32 %v8244, %v8130
    %v8309 = vadd.f32 %v8245, %v8135
    %v8310 = vadd.f32 %v8246, %v8140
    %v8311 = vadd.f32 %v8247, %v8145
    %v8312 = vadd.f32 %v8248, %v8150
    %v8313 = vadd.f32 %v8249, %v8155
    %v8314 = vadd.f32 %v8250, %v8160
    %v8315 = vadd.f32 %v8251, %v8165
    %v8316 = vadd.f32 %v8252, %v8170
    %v8317 = vadd.f32 %v8253, %v8175
    %v8318 = vadd.f32 %v8254, %v8180
    %v8319 = vadd.f32 %v8255, %v8185
    %v8320 = vadd.f32 %v8256, %v8190
    %v8321 = vmax.f32 %v8257, 0.0
    %v8322 = vmax.f32 %v8258, 0.0
    %v8323 = vmax.f32 %v8259, 0.0
    %v8324 = vmax.f32 %v8260, 0.0
    %v8325 = vmax.f32 %v8261, 0.0
    %v8326 = vmax.f32 %v8262, 0.0
    %v8327 = vmax.f32 %v8263, 0.0
    %v8328 = vmax.f32 %v8264, 0.0
    %v8329 = vmax.f32 %v8265, 0.0
    %v8330 = vmax.f32 %v8266, 0.0
    %v8331 = vmax.f32 %v8267, 0.0
    %v8332 = vmax.f32 %v8268, 0.0
    %v8333 = vmax.f32 %v8269, 0.0
    %v8334 = vmax.f32 %v8270, 0.0
    %v8335 = vmax.f32 %v8271, 0.0
    %v8336 = vmax.f32 %v8272, 0.0
    %v8337 = vmax.f32 %v8273, 0.0
    %v8338 = vmax.f32 %v8274, 0.0
    %v8339 = vmax.f32 %v8275, 0.0
    %v8340 = vmax.f32 %v8276, 0.0
    %v8341 = vmax.f32 %v8277, 0.0
    %v8342 = vmax.f32 %v8278, 0.0
    %v8343 = vmax.f32 %v8279, 0.0
    %v8344 = vmax.f32 %v8280, 0.0
    %v8345 = vmax.f32 %v8281, 0.0
    %v8346 = vmax.f32 %v8282, 0.0
    %v8347 = vmax.f32 %v8283, 0.0
    %v8348 = vmax.f32 %v8284, 0.0
    %v8349 = vmax.f32 %v8285, 0.0
    %v8350 = vmax.f32 %v8286, 0.0
    %v8351 = vmax.f32 %v8287, 0.0
    %v8352 = vmax.f32 %v8288, 0.0
    %v8353 = vmax.f32 %v8289, 0.0
    %v8354 = vmax.f32 %v8290, 0.0
    %v8355 = vmax.f32 %v8291, 0.0
    %v8356 = vmax.f32 %v8292, 0.0
    %v8357 = vmax.f32 %v8293, 0.0
    %v8358 = vmax.f32 %v8294, 0.0
    %v8359 = vmax.f32 %v8295, 0.0
    %v8360 = vmax.f32 %v8296, 0.0
    %v8361 = vmax.f32 %v8297, 0.0
    %v8362 = vmax.f32 %v8298, 0.0
    %v8363 = vmax.f32 %v8299, 0.0
    %v8364 = vmax.f32 %v8300, 0.0
    %v8365 = vmax.f32 %v8301, 0.0
    %v8366 = vmax.f32 %v8302, 0.0
    %v8367 = vmax.f32 %v8303, 0.0
    %v8368 = vmax.f32 %v8304, 0.0
    %v8369 = vmax.f32 %v8305, 0.0
    %v8370 = vmax.f32 %v8306, 0.0
    %v8371 = vmax.f32 %v8307, 0.0
    %v8372 = vmax.f32 %v8308, 0.0
    %v8373 = vmax.f32 %v8309, 0.0
    %v8374 = vmax.f32 %v8310, 0.0
    %v8375 = vmax.f32 %v8311, 0.0
    %v8376 = vmax.f32 %v8312, 0.0
    %v8377 = vmax.f32 %v8313, 0.0
    %v8378 = vmax.f32 %v8314, 0.0
    %v8379 = vmax.f32 %v8315, 0.0
    %v8380 = vmax.f32 %v8316, 0.0
    %v8381 = vmax.f32 %v8317, 0.0
    %v8382 = vmax.f32 %v8318, 0.0
    %v8383 = vmax.f32 %v8319, 0.0
    %v8384 = vmax.f32 %v8320, 0.0
    %v8385 = vlaneseq
    %v8386 = vand.u32 %v8385, 127
    %vm8387 = vcmp.eq.s32.totalorder %v8386, 0
    %v8388 = vsel %vm8387, %v8321, 0.0
    %v8389 = vsel %vm8387, %v8322, 0.0
    %v8390 = vsel %vm8387, %v8323, 0.0
    %v8391 = vsel %vm8387, %v8324, 0.0
    %v8392 = vsel %vm8387, %v8325, 0.0
    %v8393 = vsel %vm8387, %v8326, 0.0
    %v8394 = vsel %vm8387, %v8327, 0.0
    %v8395 = vsel %vm8387, %v8328, 0.0
    %v8396 = vsel %vm8387, %v8329, 0.0
    %v8397 = vsel %vm8387, %v8330, 0.0
    %v8398 = vsel %vm8387, %v8331, 0.0
    %v8399 = vsel %vm8387, %v8332, 0.0
    %v8400 = vsel %vm8387, %v8333, 0.0
    %v8401 = vsel %vm8387, %v8334, 0.0
    %v8402 = vsel %vm8387, %v8335, 0.0
    %v8403 = vsel %vm8387, %v8336, 0.0
    %v8404 = vsel %vm8387, %v8337, 0.0
    %v8405 = vsel %vm8387, %v8338, 0.0
    %v8406 = vsel %vm8387, %v8339, 0.0
    %v8407 = vsel %vm8387, %v8340, 0.0
    %v8408 = vsel %vm8387, %v8341, 0.0
    %v8409 = vsel %vm8387, %v8342, 0.0
    %v8410 = vsel %vm8387, %v8343, 0.0
    %v8411 = vsel %vm8387, %v8344, 0.0
    %v8412 = vsel %vm8387, %v8345, 0.0
    %v8413 = vsel %vm8387, %v8346, 0.0
    %v8414 = vsel %vm8387, %v8347, 0.0
    %v8415 = vsel %vm8387, %v8348, 0.0
    %v8416 = vsel %vm8387, %v8349, 0.0
    %v8417 = vsel %vm8387, %v8350, 0.0
    %v8418 = vsel %vm8387, %v8351, 0.0
    %v8419 = vsel %vm8387, %v8352, 0.0
    %v8420 = vsel %vm8387, %v8353, 0.0
    %v8421 = vsel %vm8387, %v8354, 0.0
    %v8422 = vsel %vm8387, %v8355, 0.0
    %v8423 = vsel %vm8387, %v8356, 0.0
    %v8424 = vsel %vm8387, %v8357, 0.0
    %v8425 = vsel %vm8387, %v8358, 0.0
    %v8426 = vsel %vm8387, %v8359, 0.0
    %v8427 = vsel %vm8387, %v8360, 0.0
    %v8428 = vsel %vm8387, %v8361, 0.0
    %v8429 = vsel %vm8387, %v8362, 0.0
    %v8430 = vsel %vm8387, %v8363, 0.0
    %v8431 = vsel %vm8387, %v8364, 0.0
    %v8432 = vsel %vm8387, %v8365, 0.0
    %v8433 = vsel %vm8387, %v8366, 0.0
    %v8434 = vsel %vm8387, %v8367, 0.0
    %v8435 = vsel %vm8387, %v8368, 0.0
    %v8436 = vsel %vm8387, %v8369, 0.0
    %v8437 = vsel %vm8387, %v8370, 0.0
    %v8438 = vsel %vm8387, %v8371, 0.0
    %v8439 = vsel %vm8387, %v8372, 0.0
    %v8440 = vsel %vm8387, %v8373, 0.0
    %v8441 = vsel %vm8387, %v8374, 0.0
    %v8442 = vsel %vm8387, %v8375, 0.0
    %v8443 = vsel %vm8387, %v8376, 0.0
    %v8444 = vsel %vm8387, %v8377, 0.0
    %v8445 = vsel %vm8387, %v8378, 0.0
    %v8446 = vsel %vm8387, %v8379, 0.0
    %v8447 = vsel %vm8387, %v8380, 0.0
    %v8448 = vsel %vm8387, %v8381, 0.0
    %v8449 = vsel %vm8387, %v8382, 0.0
    %v8450 = vsel %vm8387, %v8383, 0.0
    %v8451 = vsel %vm8387, %v8384, 0.0
    %v8452 = vsel %vm1652, %v8388, 0.0
    %8453 = vadd.xlane.f32.xlu0 %v8452
    %v8454 = vpop.xlane.xlu0 %8453
    %v8455 = vsel %vm1652, %v8389, 0.0
    %8456 = vadd.xlane.f32.xlu0 %v8455
    %v8457 = vpop.xlane.xlu0 %8456
    %v8458 = vsel %vm1652, %v8390, 0.0
    %8459 = vadd.xlane.f32.xlu0 %v8458
    %v8460 = vpop.xlane.xlu0 %8459
    %v8461 = vsel %vm1652, %v8391, 0.0
    %8462 = vadd.xlane.f32.xlu0 %v8461
    %v8463 = vpop.xlane.xlu0 %8462
    %v8464 = vsel %vm1652, %v8392, 0.0
    %8465 = vadd.xlane.f32.xlu0 %v8464
    %v8466 = vpop.xlane.xlu0 %8465
    %v8467 = vsel %vm1652, %v8393, 0.0
    %8468 = vadd.xlane.f32.xlu0 %v8467
    %v8469 = vpop.xlane.xlu0 %8468
    %v8470 = vsel %vm1652, %v8394, 0.0
    %8471 = vadd.xlane.f32.xlu0 %v8470
    %v8472 = vpop.xlane.xlu0 %8471
    %v8473 = vsel %vm1652, %v8395, 0.0
    %8474 = vadd.xlane.f32.xlu0 %v8473
    %v8475 = vpop.xlane.xlu0 %8474
    %v8476 = vsel %vm1652, %v8396, 0.0
    %8477 = vadd.xlane.f32.xlu0 %v8476
    %v8478 = vpop.xlane.xlu0 %8477
    %v8479 = vsel %vm1652, %v8397, 0.0
    %8480 = vadd.xlane.f32.xlu0 %v8479
    %v8481 = vpop.xlane.xlu0 %8480
    %v8482 = vsel %vm1652, %v8398, 0.0
    %8483 = vadd.xlane.f32.xlu0 %v8482
    %v8484 = vpop.xlane.xlu0 %8483
    %v8485 = vsel %vm1652, %v8399, 0.0
    %8486 = vadd.xlane.f32.xlu0 %v8485
    %v8487 = vpop.xlane.xlu0 %8486
    %v8488 = vsel %vm1652, %v8400, 0.0
    %8489 = vadd.xlane.f32.xlu0 %v8488
    %v8490 = vpop.xlane.xlu0 %8489
    %v8491 = vsel %vm1652, %v8401, 0.0
    %8492 = vadd.xlane.f32.xlu0 %v8491
    %v8493 = vpop.xlane.xlu0 %8492
    %v8494 = vsel %vm1652, %v8402, 0.0
    %8495 = vadd.xlane.f32.xlu0 %v8494
    %v8496 = vpop.xlane.xlu0 %8495
    %v8497 = vsel %vm1652, %v8403, 0.0
    %8498 = vadd.xlane.f32.xlu0 %v8497
    %v8499 = vpop.xlane.xlu0 %8498
    %v8500 = vsel %vm1652, %v8404, 0.0
    %8501 = vadd.xlane.f32.xlu0 %v8500
    %v8502 = vpop.xlane.xlu0 %8501
    %v8503 = vsel %vm1652, %v8405, 0.0
    %8504 = vadd.xlane.f32.xlu0 %v8503
    %v8505 = vpop.xlane.xlu0 %8504
    %v8506 = vsel %vm1652, %v8406, 0.0
    %8507 = vadd.xlane.f32.xlu0 %v8506
    %v8508 = vpop.xlane.xlu0 %8507
    %v8509 = vsel %vm1652, %v8407, 0.0
    %8510 = vadd.xlane.f32.xlu0 %v8509
    %v8511 = vpop.xlane.xlu0 %8510
    %v8512 = vsel %vm1652, %v8408, 0.0
    %8513 = vadd.xlane.f32.xlu0 %v8512
    %v8514 = vpop.xlane.xlu0 %8513
    %v8515 = vsel %vm1652, %v8409, 0.0
    %8516 = vadd.xlane.f32.xlu0 %v8515
    %v8517 = vpop.xlane.xlu0 %8516
    %v8518 = vsel %vm1652, %v8410, 0.0
    %8519 = vadd.xlane.f32.xlu0 %v8518
    %v8520 = vpop.xlane.xlu0 %8519
    %v8521 = vsel %vm1652, %v8411, 0.0
    %8522 = vadd.xlane.f32.xlu0 %v8521
    %v8523 = vpop.xlane.xlu0 %8522
    %v8524 = vsel %vm1652, %v8412, 0.0
    %8525 = vadd.xlane.f32.xlu0 %v8524
    %v8526 = vpop.xlane.xlu0 %8525
    %v8527 = vsel %vm1652, %v8413, 0.0
    %8528 = vadd.xlane.f32.xlu0 %v8527
    %v8529 = vpop.xlane.xlu0 %8528
    %v8530 = vsel %vm1652, %v8414, 0.0
    %8531 = vadd.xlane.f32.xlu0 %v8530
    %v8532 = vpop.xlane.xlu0 %8531
    %v8533 = vsel %vm1652, %v8415, 0.0
    %8534 = vadd.xlane.f32.xlu0 %v8533
    %v8535 = vpop.xlane.xlu0 %8534
    %v8536 = vsel %vm1652, %v8416, 0.0
    %8537 = vadd.xlane.f32.xlu0 %v8536
    %v8538 = vpop.xlane.xlu0 %8537
    %v8539 = vsel %vm1652, %v8417, 0.0
    %8540 = vadd.xlane.f32.xlu0 %v8539
    %v8541 = vpop.xlane.xlu0 %8540
    %v8542 = vsel %vm1652, %v8418, 0.0
    %8543 = vadd.xlane.f32.xlu0 %v8542
    %v8544 = vpop.xlane.xlu0 %8543
    %v8545 = vsel %vm1652, %v8419, 0.0
    %8546 = vadd.xlane.f32.xlu0 %v8545
    %v8547 = vpop.xlane.xlu0 %8546
    %v8548 = vsel %vm1652, %v8420, 0.0
    %8549 = vadd.xlane.f32.xlu0 %v8548
    %v8550 = vpop.xlane.xlu0 %8549
    %v8551 = vsel %vm1652, %v8421, 0.0
    %8552 = vadd.xlane.f32.xlu0 %v8551
    %v8553 = vpop.xlane.xlu0 %8552
    %v8554 = vsel %vm1652, %v8422, 0.0
    %8555 = vadd.xlane.f32.xlu0 %v8554
    %v8556 = vpop.xlane.xlu0 %8555
    %v8557 = vsel %vm1652, %v8423, 0.0
    %8558 = vadd.xlane.f32.xlu0 %v8557
    %v8559 = vpop.xlane.xlu0 %8558
    %v8560 = vsel %vm1652, %v8424, 0.0
    %8561 = vadd.xlane.f32.xlu0 %v8560
    %v8562 = vpop.xlane.xlu0 %8561
    %v8563 = vsel %vm1652, %v8425, 0.0
    %8564 = vadd.xlane.f32.xlu0 %v8563
    %v8565 = vpop.xlane.xlu0 %8564
    %v8566 = vsel %vm1652, %v8426, 0.0
    %8567 = vadd.xlane.f32.xlu0 %v8566
    %v8568 = vpop.xlane.xlu0 %8567
    %v8569 = vsel %vm1652, %v8427, 0.0
    %8570 = vadd.xlane.f32.xlu0 %v8569
    %v8571 = vpop.xlane.xlu0 %8570
    %v8572 = vsel %vm1652, %v8428, 0.0
    %8573 = vadd.xlane.f32.xlu0 %v8572
    %v8574 = vpop.xlane.xlu0 %8573
    %v8575 = vsel %vm1652, %v8429, 0.0
    %8576 = vadd.xlane.f32.xlu0 %v8575
    %v8577 = vpop.xlane.xlu0 %8576
    %v8578 = vsel %vm1652, %v8430, 0.0
    %8579 = vadd.xlane.f32.xlu0 %v8578
    %v8580 = vpop.xlane.xlu0 %8579
    %v8581 = vsel %vm1652, %v8431, 0.0
    %8582 = vadd.xlane.f32.xlu0 %v8581
    %v8583 = vpop.xlane.xlu0 %8582
    %v8584 = vsel %vm1652, %v8432, 0.0
    %8585 = vadd.xlane.f32.xlu0 %v8584
    %v8586 = vpop.xlane.xlu0 %8585
    %v8587 = vsel %vm1652, %v8433, 0.0
    %8588 = vadd.xlane.f32.xlu0 %v8587
    %v8589 = vpop.xlane.xlu0 %8588
    %v8590 = vsel %vm1652, %v8434, 0.0
    %8591 = vadd.xlane.f32.xlu0 %v8590
    %v8592 = vpop.xlane.xlu0 %8591
    %v8593 = vsel %vm1652, %v8435, 0.0
    %8594 = vadd.xlane.f32.xlu0 %v8593
    %v8595 = vpop.xlane.xlu0 %8594
    %v8596 = vsel %vm1652, %v8436, 0.0
    %8597 = vadd.xlane.f32.xlu0 %v8596
    %v8598 = vpop.xlane.xlu0 %8597
    %v8599 = vsel %vm1652, %v8437, 0.0
    %8600 = vadd.xlane.f32.xlu0 %v8599
    %v8601 = vpop.xlane.xlu0 %8600
    %v8602 = vsel %vm1652, %v8438, 0.0
    %8603 = vadd.xlane.f32.xlu0 %v8602
    %v8604 = vpop.xlane.xlu0 %8603
    %v8605 = vsel %vm1652, %v8439, 0.0
    %8606 = vadd.xlane.f32.xlu0 %v8605
    %v8607 = vpop.xlane.xlu0 %8606
    %v8608 = vsel %vm1652, %v8440, 0.0
    %8609 = vadd.xlane.f32.xlu0 %v8608
    %v8610 = vpop.xlane.xlu0 %8609
    %v8611 = vsel %vm1652, %v8441, 0.0
    %8612 = vadd.xlane.f32.xlu0 %v8611
    %v8613 = vpop.xlane.xlu0 %8612
    %v8614 = vsel %vm1652, %v8442, 0.0
    %8615 = vadd.xlane.f32.xlu0 %v8614
    %v8616 = vpop.xlane.xlu0 %8615
    %v8617 = vsel %vm1652, %v8443, 0.0
    %8618 = vadd.xlane.f32.xlu0 %v8617
    %v8619 = vpop.xlane.xlu0 %8618
    %v8620 = vsel %vm1652, %v8444, 0.0
    %8621 = vadd.xlane.f32.xlu0 %v8620
    %v8622 = vpop.xlane.xlu0 %8621
    %v8623 = vsel %vm1652, %v8445, 0.0
    %8624 = vadd.xlane.f32.xlu0 %v8623
    %v8625 = vpop.xlane.xlu0 %8624
    %v8626 = vsel %vm1652, %v8446, 0.0
    %8627 = vadd.xlane.f32.xlu0 %v8626
    %v8628 = vpop.xlane.xlu0 %8627
    %v8629 = vsel %vm1652, %v8447, 0.0
    %8630 = vadd.xlane.f32.xlu0 %v8629
    %v8631 = vpop.xlane.xlu0 %8630
    %v8632 = vsel %vm1652, %v8448, 0.0
    %8633 = vadd.xlane.f32.xlu0 %v8632
    %v8634 = vpop.xlane.xlu0 %8633
    %v8635 = vsel %vm1652, %v8449, 0.0
    %8636 = vadd.xlane.f32.xlu0 %v8635
    %v8637 = vpop.xlane.xlu0 %8636
    %v8638 = vsel %vm1652, %v8450, 0.0
    %8639 = vadd.xlane.f32.xlu0 %v8638
    %v8640 = vpop.xlane.xlu0 %8639
    %v8641 = vsel %vm1652, %v8451, 0.0
    %8642 = vadd.xlane.f32.xlu0 %v8641
    %v8643 = vpop.xlane.xlu0 %8642
    %vm8644 = vcmp.eq.s32.totalorder %v8386, 1
    %v8645 = vsel %vm8644, %v8321, 0.0
    %v8646 = vsel %vm8644, %v8322, 0.0
    %v8647 = vsel %vm8644, %v8323, 0.0
    %v8648 = vsel %vm8644, %v8324, 0.0
    %v8649 = vsel %vm8644, %v8325, 0.0
    %v8650 = vsel %vm8644, %v8326, 0.0
    %v8651 = vsel %vm8644, %v8327, 0.0
    %v8652 = vsel %vm8644, %v8328, 0.0
    %v8653 = vsel %vm8644, %v8329, 0.0
    %v8654 = vsel %vm8644, %v8330, 0.0
    %v8655 = vsel %vm8644, %v8331, 0.0
    %v8656 = vsel %vm8644, %v8332, 0.0
    %v8657 = vsel %vm8644, %v8333, 0.0
    %v8658 = vsel %vm8644, %v8334, 0.0
    %v8659 = vsel %vm8644, %v8335, 0.0
    %v8660 = vsel %vm8644, %v8336, 0.0
    %v8661 = vsel %vm8644, %v8337, 0.0
    %v8662 = vsel %vm8644, %v8338, 0.0
    %v8663 = vsel %vm8644, %v8339, 0.0
    %v8664 = vsel %vm8644, %v8340, 0.0
    %v8665 = vsel %vm8644, %v8341, 0.0
    %v8666 = vsel %vm8644, %v8342, 0.0
    %v8667 = vsel %vm8644, %v8343, 0.0
    %v8668 = vsel %vm8644, %v8344, 0.0
    %v8669 = vsel %vm8644, %v8345, 0.0
    %v8670 = vsel %vm8644, %v8346, 0.0
    %v8671 = vsel %vm8644, %v8347, 0.0
    %v8672 = vsel %vm8644, %v8348, 0.0
    %v8673 = vsel %vm8644, %v8349, 0.0
    %v8674 = vsel %vm8644, %v8350, 0.0
    %v8675 = vsel %vm8644, %v8351, 0.0
    %v8676 = vsel %vm8644, %v8352, 0.0
    %v8677 = vsel %vm8644, %v8353, 0.0
    %v8678 = vsel %vm8644, %v8354, 0.0
    %v8679 = vsel %vm8644, %v8355, 0.0
    %v8680 = vsel %vm8644, %v8356, 0.0
    %v8681 = vsel %vm8644, %v8357, 0.0
    %v8682 = vsel %vm8644, %v8358, 0.0
    %v8683 = vsel %vm8644, %v8359, 0.0
    %v8684 = vsel %vm8644, %v8360, 0.0
    %v8685 = vsel %vm8644, %v8361, 0.0
    %v8686 = vsel %vm8644, %v8362, 0.0
    %v8687 = vsel %vm8644, %v8363, 0.0
    %v8688 = vsel %vm8644, %v8364, 0.0
    %v8689 = vsel %vm8644, %v8365, 0.0
    %v8690 = vsel %vm8644, %v8366, 0.0
    %v8691 = vsel %vm8644, %v8367, 0.0
    %v8692 = vsel %vm8644, %v8368, 0.0
    %v8693 = vsel %vm8644, %v8369, 0.0
    %v8694 = vsel %vm8644, %v8370, 0.0
    %v8695 = vsel %vm8644, %v8371, 0.0
    %v8696 = vsel %vm8644, %v8372, 0.0
    %v8697 = vsel %vm8644, %v8373, 0.0
    %v8698 = vsel %vm8644, %v8374, 0.0
    %v8699 = vsel %vm8644, %v8375, 0.0
    %v8700 = vsel %vm8644, %v8376, 0.0
    %v8701 = vsel %vm8644, %v8377, 0.0
    %v8702 = vsel %vm8644, %v8378, 0.0
    %v8703 = vsel %vm8644, %v8379, 0.0
    %v8704 = vsel %vm8644, %v8380, 0.0
    %v8705 = vsel %vm8644, %v8381, 0.0
    %v8706 = vsel %vm8644, %v8382, 0.0
    %v8707 = vsel %vm8644, %v8383, 0.0
    %v8708 = vsel %vm8644, %v8384, 0.0
    %v8709 = vsel %vm1652, %v8645, 0.0
    %8710 = vadd.xlane.f32.xlu0 %v8709
    %v8711 = vpop.xlane.xlu0 %8710
    %v8712 = vsel %vm1652, %v8646, 0.0
    %8713 = vadd.xlane.f32.xlu0 %v8712
    %v8714 = vpop.xlane.xlu0 %8713
    %v8715 = vsel %vm1652, %v8647, 0.0
    %8716 = vadd.xlane.f32.xlu0 %v8715
    %v8717 = vpop.xlane.xlu0 %8716
    %v8718 = vsel %vm1652, %v8648, 0.0
    %8719 = vadd.xlane.f32.xlu0 %v8718
    %v8720 = vpop.xlane.xlu0 %8719
    %v8721 = vsel %vm1652, %v8649, 0.0
    %8722 = vadd.xlane.f32.xlu0 %v8721
    %v8723 = vpop.xlane.xlu0 %8722
    %v8724 = vsel %vm1652, %v8650, 0.0
    %8725 = vadd.xlane.f32.xlu0 %v8724
    %v8726 = vpop.xlane.xlu0 %8725
    %v8727 = vsel %vm1652, %v8651, 0.0
    %8728 = vadd.xlane.f32.xlu0 %v8727
    %v8729 = vpop.xlane.xlu0 %8728
    %v8730 = vsel %vm1652, %v8652, 0.0
    %8731 = vadd.xlane.f32.xlu0 %v8730
    %v8732 = vpop.xlane.xlu0 %8731
    %v8733 = vsel %vm1652, %v8653, 0.0
    %8734 = vadd.xlane.f32.xlu0 %v8733
    %v8735 = vpop.xlane.xlu0 %8734
    %v8736 = vsel %vm1652, %v8654, 0.0
    %8737 = vadd.xlane.f32.xlu0 %v8736
    %v8738 = vpop.xlane.xlu0 %8737
    %v8739 = vsel %vm1652, %v8655, 0.0
    %8740 = vadd.xlane.f32.xlu0 %v8739
    %v8741 = vpop.xlane.xlu0 %8740
    %v8742 = vsel %vm1652, %v8656, 0.0
    %8743 = vadd.xlane.f32.xlu0 %v8742
    %v8744 = vpop.xlane.xlu0 %8743
    %v8745 = vsel %vm1652, %v8657, 0.0
    %8746 = vadd.xlane.f32.xlu0 %v8745
    %v8747 = vpop.xlane.xlu0 %8746
    %v8748 = vsel %vm1652, %v8658, 0.0
    %8749 = vadd.xlane.f32.xlu0 %v8748
    %v8750 = vpop.xlane.xlu0 %8749
    %v8751 = vsel %vm1652, %v8659, 0.0
    %8752 = vadd.xlane.f32.xlu0 %v8751
    %v8753 = vpop.xlane.xlu0 %8752
    %v8754 = vsel %vm1652, %v8660, 0.0
    %8755 = vadd.xlane.f32.xlu0 %v8754
    %v8756 = vpop.xlane.xlu0 %8755
    %v8757 = vsel %vm1652, %v8661, 0.0
    %8758 = vadd.xlane.f32.xlu0 %v8757
    %v8759 = vpop.xlane.xlu0 %8758
    %v8760 = vsel %vm1652, %v8662, 0.0
    %8761 = vadd.xlane.f32.xlu0 %v8760
    %v8762 = vpop.xlane.xlu0 %8761
    %v8763 = vsel %vm1652, %v8663, 0.0
    %8764 = vadd.xlane.f32.xlu0 %v8763
    %v8765 = vpop.xlane.xlu0 %8764
    %v8766 = vsel %vm1652, %v8664, 0.0
    %8767 = vadd.xlane.f32.xlu0 %v8766
    %v8768 = vpop.xlane.xlu0 %8767
    %v8769 = vsel %vm1652, %v8665, 0.0
    %8770 = vadd.xlane.f32.xlu0 %v8769
    %v8771 = vpop.xlane.xlu0 %8770
    %v8772 = vsel %vm1652, %v8666, 0.0
    %8773 = vadd.xlane.f32.xlu0 %v8772
    %v8774 = vpop.xlane.xlu0 %8773
    %v8775 = vsel %vm1652, %v8667, 0.0
    %8776 = vadd.xlane.f32.xlu0 %v8775
    %v8777 = vpop.xlane.xlu0 %8776
    %v8778 = vsel %vm1652, %v8668, 0.0
    %8779 = vadd.xlane.f32.xlu0 %v8778
    %v8780 = vpop.xlane.xlu0 %8779
    %v8781 = vsel %vm1652, %v8669, 0.0
    %8782 = vadd.xlane.f32.xlu0 %v8781
    %v8783 = vpop.xlane.xlu0 %8782
    %v8784 = vsel %vm1652, %v8670, 0.0
    %8785 = vadd.xlane.f32.xlu0 %v8784
    %v8786 = vpop.xlane.xlu0 %8785
    %v8787 = vsel %vm1652, %v8671, 0.0
    %8788 = vadd.xlane.f32.xlu0 %v8787
    %v8789 = vpop.xlane.xlu0 %8788
    %v8790 = vsel %vm1652, %v8672, 0.0
    %8791 = vadd.xlane.f32.xlu0 %v8790
    %v8792 = vpop.xlane.xlu0 %8791
    %v8793 = vsel %vm1652, %v8673, 0.0
    %8794 = vadd.xlane.f32.xlu0 %v8793
    %v8795 = vpop.xlane.xlu0 %8794
    %v8796 = vsel %vm1652, %v8674, 0.0
    %8797 = vadd.xlane.f32.xlu0 %v8796
    %v8798 = vpop.xlane.xlu0 %8797
    %v8799 = vsel %vm1652, %v8675, 0.0
    %8800 = vadd.xlane.f32.xlu0 %v8799
    %v8801 = vpop.xlane.xlu0 %8800
    %v8802 = vsel %vm1652, %v8676, 0.0
    %8803 = vadd.xlane.f32.xlu0 %v8802
    %v8804 = vpop.xlane.xlu0 %8803
    %v8805 = vsel %vm1652, %v8677, 0.0
    %8806 = vadd.xlane.f32.xlu0 %v8805
    %v8807 = vpop.xlane.xlu0 %8806
    %v8808 = vsel %vm1652, %v8678, 0.0
    %8809 = vadd.xlane.f32.xlu0 %v8808
    %v8810 = vpop.xlane.xlu0 %8809
    %v8811 = vsel %vm1652, %v8679, 0.0
    %8812 = vadd.xlane.f32.xlu0 %v8811
    %v8813 = vpop.xlane.xlu0 %8812
    %v8814 = vsel %vm1652, %v8680, 0.0
    %8815 = vadd.xlane.f32.xlu0 %v8814
    %v8816 = vpop.xlane.xlu0 %8815
    %v8817 = vsel %vm1652, %v8681, 0.0
    %8818 = vadd.xlane.f32.xlu0 %v8817
    %v8819 = vpop.xlane.xlu0 %8818
    %v8820 = vsel %vm1652, %v8682, 0.0
    %8821 = vadd.xlane.f32.xlu0 %v8820
    %v8822 = vpop.xlane.xlu0 %8821
    %v8823 = vsel %vm1652, %v8683, 0.0
    %8824 = vadd.xlane.f32.xlu0 %v8823
    %v8825 = vpop.xlane.xlu0 %8824
    %v8826 = vsel %vm1652, %v8684, 0.0
    %8827 = vadd.xlane.f32.xlu0 %v8826
    %v8828 = vpop.xlane.xlu0 %8827
    %v8829 = vsel %vm1652, %v8685, 0.0
    %8830 = vadd.xlane.f32.xlu0 %v8829
    %v8831 = vpop.xlane.xlu0 %8830
    %v8832 = vsel %vm1652, %v8686, 0.0
    %8833 = vadd.xlane.f32.xlu0 %v8832
    %v8834 = vpop.xlane.xlu0 %8833
    %v8835 = vsel %vm1652, %v8687, 0.0
    %8836 = vadd.xlane.f32.xlu0 %v8835
    %v8837 = vpop.xlane.xlu0 %8836
    %v8838 = vsel %vm1652, %v8688, 0.0
    %8839 = vadd.xlane.f32.xlu0 %v8838
    %v8840 = vpop.xlane.xlu0 %8839
    %v8841 = vsel %vm1652, %v8689, 0.0
    %8842 = vadd.xlane.f32.xlu0 %v8841
    %v8843 = vpop.xlane.xlu0 %8842
    %v8844 = vsel %vm1652, %v8690, 0.0
    %8845 = vadd.xlane.f32.xlu0 %v8844
    %v8846 = vpop.xlane.xlu0 %8845
    %v8847 = vsel %vm1652, %v8691, 0.0
    %8848 = vadd.xlane.f32.xlu0 %v8847
    %v8849 = vpop.xlane.xlu0 %8848
    %v8850 = vsel %vm1652, %v8692, 0.0
    %8851 = vadd.xlane.f32.xlu0 %v8850
    %v8852 = vpop.xlane.xlu0 %8851
    %v8853 = vsel %vm1652, %v8693, 0.0
    %8854 = vadd.xlane.f32.xlu0 %v8853
    %v8855 = vpop.xlane.xlu0 %8854
    %v8856 = vsel %vm1652, %v8694, 0.0
    %8857 = vadd.xlane.f32.xlu0 %v8856
    %v8858 = vpop.xlane.xlu0 %8857
    %v8859 = vsel %vm1652, %v8695, 0.0
    %8860 = vadd.xlane.f32.xlu0 %v8859
    %v8861 = vpop.xlane.xlu0 %8860
    %v8862 = vsel %vm1652, %v8696, 0.0
    %8863 = vadd.xlane.f32.xlu0 %v8862
    %v8864 = vpop.xlane.xlu0 %8863
    %v8865 = vsel %vm1652, %v8697, 0.0
    %8866 = vadd.xlane.f32.xlu0 %v8865
    %v8867 = vpop.xlane.xlu0 %8866
    %v8868 = vsel %vm1652, %v8698, 0.0
    %8869 = vadd.xlane.f32.xlu0 %v8868
    %v8870 = vpop.xlane.xlu0 %8869
    %v8871 = vsel %vm1652, %v8699, 0.0
    %8872 = vadd.xlane.f32.xlu0 %v8871
    %v8873 = vpop.xlane.xlu0 %8872
    %v8874 = vsel %vm1652, %v8700, 0.0
    %8875 = vadd.xlane.f32.xlu0 %v8874
    %v8876 = vpop.xlane.xlu0 %8875
    %v8877 = vsel %vm1652, %v8701, 0.0
    %8878 = vadd.xlane.f32.xlu0 %v8877
    %v8879 = vpop.xlane.xlu0 %8878
    %v8880 = vsel %vm1652, %v8702, 0.0
    %8881 = vadd.xlane.f32.xlu0 %v8880
    %v8882 = vpop.xlane.xlu0 %8881
    %v8883 = vsel %vm1652, %v8703, 0.0
    %8884 = vadd.xlane.f32.xlu0 %v8883
    %v8885 = vpop.xlane.xlu0 %8884
    %v8886 = vsel %vm1652, %v8704, 0.0
    %8887 = vadd.xlane.f32.xlu0 %v8886
    %v8888 = vpop.xlane.xlu0 %8887
    %v8889 = vsel %vm1652, %v8705, 0.0
    %8890 = vadd.xlane.f32.xlu0 %v8889
    %v8891 = vpop.xlane.xlu0 %8890
    %v8892 = vsel %vm1652, %v8706, 0.0
    %8893 = vadd.xlane.f32.xlu0 %v8892
    %v8894 = vpop.xlane.xlu0 %8893
    %v8895 = vsel %vm1652, %v8707, 0.0
    %8896 = vadd.xlane.f32.xlu0 %v8895
    %v8897 = vpop.xlane.xlu0 %8896
    %v8898 = vsel %vm1652, %v8708, 0.0
    %8899 = vadd.xlane.f32.xlu0 %v8898
    %v8900 = vpop.xlane.xlu0 %8899
    %v8901 = vld [vmem:[%s16] sm:$0xff]
    %v8902 = vld [vmem:[%s16 + $0x8] sm:$0xff]
    %v8903 = vld [vmem:[%s16 + $0x10] sm:$0xff]
    %v8904 = vld [vmem:[%s16 + $0x18] sm:$0xff]
    %v8905 = vld [vmem:[%s16 + $0x20] sm:$0xff]
    %v8906 = vld [vmem:[%s16 + $0x28] sm:$0xff]
    %v8907 = vld [vmem:[%s16 + $0x30] sm:$0xff]
    %v8908 = vld [vmem:[%s16 + $0x38] sm:$0xff]
    %v8909 = vld [vmem:[%s16 + $0x40] sm:$0xff]
    %v8910 = vld [vmem:[%s16 + $0x48] sm:$0xff]
    %v8911 = vld [vmem:[%s16 + $0x50] sm:$0xff]
    %v8912 = vld [vmem:[%s16 + $0x58] sm:$0xff]
    %v8913 = vld [vmem:[%s16 + $0x60] sm:$0xff]
    %v8914 = vld [vmem:[%s16 + $0x68] sm:$0xff]
    %v8915 = vld [vmem:[%s16 + $0x70] sm:$0xff]
    %v8916 = vld [vmem:[%s16 + $0x78] sm:$0xff]
    %v8917 = vld [vmem:[%s16 + $0x80] sm:$0xff]
    %v8918 = vld [vmem:[%s16 + $0x88] sm:$0xff]
    %v8919 = vld [vmem:[%s16 + $0x90] sm:$0xff]
    %v8920 = vld [vmem:[%s16 + $0x98] sm:$0xff]
    %v8921 = vld [vmem:[%s16 + $0xa0] sm:$0xff]
    %v8922 = vld [vmem:[%s16 + $0xa8] sm:$0xff]
    %v8923 = vld [vmem:[%s16 + $0xb0] sm:$0xff]
    %v8924 = vld [vmem:[%s16 + $0xb8] sm:$0xff]
    %v8925 = vld [vmem:[%s16 + $0xc0] sm:$0xff]
    %v8926 = vld [vmem:[%s16 + $0xc8] sm:$0xff]
    %v8927 = vld [vmem:[%s16 + $0xd0] sm:$0xff]
    %v8928 = vld [vmem:[%s16 + $0xd8] sm:$0xff]
    %v8929 = vld [vmem:[%s16 + $0xe0] sm:$0xff]
    %v8930 = vld [vmem:[%s16 + $0xe8] sm:$0xff]
    %v8931 = vld [vmem:[%s16 + $0xf0] sm:$0xff]
    %v8932 = vld [vmem:[%s16 + $0xf8] sm:$0xff]
    %v8933 = vld [vmem:[%s16 + $0x100] sm:$0xff]
    %v8934 = vld [vmem:[%s16 + $0x108] sm:$0xff]
    %v8935 = vld [vmem:[%s16 + $0x110] sm:$0xff]
    %v8936 = vld [vmem:[%s16 + $0x118] sm:$0xff]
    %v8937 = vld [vmem:[%s16 + $0x120] sm:$0xff]
    %v8938 = vld [vmem:[%s16 + $0x128] sm:$0xff]
    %v8939 = vld [vmem:[%s16 + $0x130] sm:$0xff]
    %v8940 = vld [vmem:[%s16 + $0x138] sm:$0xff]
    %v8941 = vld [vmem:[%s16 + $0x140] sm:$0xff]
    %v8942 = vld [vmem:[%s16 + $0x148] sm:$0xff]
    %v8943 = vld [vmem:[%s16 + $0x150] sm:$0xff]
    %v8944 = vld [vmem:[%s16 + $0x158] sm:$0xff]
    %v8945 = vld [vmem:[%s16 + $0x160] sm:$0xff]
    %v8946 = vld [vmem:[%s16 + $0x168] sm:$0xff]
    %v8947 = vld [vmem:[%s16 + $0x170] sm:$0xff]
    %v8948 = vld [vmem:[%s16 + $0x178] sm:$0xff]
    %v8949 = vld [vmem:[%s16 + $0x180] sm:$0xff]
    %v8950 = vld [vmem:[%s16 + $0x188] sm:$0xff]
    %v8951 = vld [vmem:[%s16 + $0x190] sm:$0xff]
    %v8952 = vld [vmem:[%s16 + $0x198] sm:$0xff]
    %v8953 = vld [vmem:[%s16 + $0x1a0] sm:$0xff]
    %v8954 = vld [vmem:[%s16 + $0x1a8] sm:$0xff]
    %v8955 = vld [vmem:[%s16 + $0x1b0] sm:$0xff]
    %v8956 = vld [vmem:[%s16 + $0x1b8] sm:$0xff]
    %v8957 = vld [vmem:[%s16 + $0x1c0] sm:$0xff]
    %v8958 = vld [vmem:[%s16 + $0x1c8] sm:$0xff]
    %v8959 = vld [vmem:[%s16 + $0x1d0] sm:$0xff]
    %v8960 = vld [vmem:[%s16 + $0x1d8] sm:$0xff]
    %v8961 = vld [vmem:[%s16 + $0x1e0] sm:$0xff]
    %v8962 = vld [vmem:[%s16 + $0x1e8] sm:$0xff]
    %v8963 = vld [vmem:[%s16 + $0x1f0] sm:$0xff]
    %v8964 = vld [vmem:[%s16 + $0x1f8] sm:$0xff]
    %v8965 = vld [vmem:[#allocation6] sm:$0xff]
    %v8966 = vmul.f32 %v8901, %v8454
    %v8967 = vmul.f32 %v8902, %v8457
    %v8968 = vmul.f32 %v8903, %v8460
    %v8969 = vmul.f32 %v8904, %v8463
    %v8970 = vmul.f32 %v8905, %v8466
    %v8971 = vmul.f32 %v8906, %v8469
    %v8972 = vmul.f32 %v8907, %v8472
    %v8973 = vmul.f32 %v8908, %v8475
    %v8974 = vmul.f32 %v8909, %v8478
    %v8975 = vmul.f32 %v8910, %v8481
    %v8976 = vmul.f32 %v8911, %v8484
    %v8977 = vmul.f32 %v8912, %v8487
    %v8978 = vmul.f32 %v8913, %v8490
    %v8979 = vmul.f32 %v8914, %v8493
    %v8980 = vmul.f32 %v8915, %v8496
    %v8981 = vmul.f32 %v8916, %v8499
    %v8982 = vmul.f32 %v8917, %v8502
    %v8983 = vmul.f32 %v8918, %v8505
    %v8984 = vmul.f32 %v8919, %v8508
    %v8985 = vmul.f32 %v8920, %v8511
    %v8986 = vmul.f32 %v8921, %v8514
    %v8987 = vmul.f32 %v8922, %v8517
    %v8988 = vmul.f32 %v8923, %v8520
    %v8989 = vmul.f32 %v8924, %v8523
    %v8990 = vmul.f32 %v8925, %v8526
    %v8991 = vmul.f32 %v8926, %v8529
    %v8992 = vmul.f32 %v8927, %v8532
    %v8993 = vmul.f32 %v8928, %v8535
    %v8994 = vmul.f32 %v8929, %v8538
    %v8995 = vmul.f32 %v8930, %v8541
    %v8996 = vmul.f32 %v8931, %v8544
    %v8997 = vmul.f32 %v8932, %v8547
    %v8998 = vmul.f32 %v8933, %v8550
    %v8999 = vmul.f32 %v8934, %v8553
    %v9000 = vmul.f32 %v8935, %v8556
    %v9001 = vmul.f32 %v8936, %v8559
    %v9002 = vmul.f32 %v8937, %v8562
    %v9003 = vmul.f32 %v8938, %v8565
    %v9004 = vmul.f32 %v8939, %v8568
    %v9005 = vmul.f32 %v8940, %v8571
    %v9006 = vmul.f32 %v8941, %v8574
    %v9007 = vmul.f32 %v8942, %v8577
    %v9008 = vmul.f32 %v8943, %v8580
    %v9009 = vmul.f32 %v8944, %v8583
    %v9010 = vmul.f32 %v8945, %v8586
    %v9011 = vmul.f32 %v8946, %v8589
    %v9012 = vmul.f32 %v8947, %v8592
    %v9013 = vmul.f32 %v8948, %v8595
    %v9014 = vmul.f32 %v8949, %v8598
    %v9015 = vmul.f32 %v8950, %v8601
    %v9016 = vmul.f32 %v8951, %v8604
    %v9017 = vmul.f32 %v8952, %v8607
    %v9018 = vmul.f32 %v8953, %v8610
    %v9019 = vmul.f32 %v8954, %v8613
    %v9020 = vmul.f32 %v8955, %v8616
    %v9021 = vmul.f32 %v8956, %v8619
    %v9022 = vmul.f32 %v8957, %v8622
    %v9023 = vmul.f32 %v8958, %v8625
    %v9024 = vmul.f32 %v8959, %v8628
    %v9025 = vmul.f32 %v8960, %v8631
    %v9026 = vmul.f32 %v8961, %v8634
    %v9027 = vmul.f32 %v8962, %v8637
    %v9028 = vmul.f32 %v8963, %v8640
    %v9029 = vmul.f32 %v8964, %v8643
    %v9031 = vcombine.high %v8965, %v8965
    %v9033 = vunpack.c.l.s4 1983009808
    %v9034 = vunpack.c.0.s8 %v9033
    %v9035 = vlaneseq
    %v9036 = vshrl.u32 %v9035, 7
    %v9037 = vsub.s32 %v9034, %v9036
    %v9038 = vrot.slane %v8965, %v9037
    %v9040 = vunpack.c.l.s4 1983009808
    %v9041 = vunpack.c.0.s8 %v9040
    %v9042 = vlaneseq
    %v9043 = vshrl.u32 %v9042, 7
    %v9044 = vsub.s32 %v9041, %v9043
    %v9045 = vrot.slane %v9031, %v9044
    %v9046 = vcombine.high %v9038, %v9038
    %v9047 = vcombine.high %v9045, %v9045
    %9052 = vmatprep.subr.mxu0 0.0
    %9053 = vmatpush1.msra.mxu0 %v8966
    %9054 = vmatprep.subr.mxu0 0.0
    %9055 = vmatpush1.msra.mxu0 %v8967
    %9056 = vmatprep.subr.mxu0 0.0
    %9057 = vmatpush1.msra.mxu0 %v8968
    %9058 = vmatprep.subr.mxu0 0.0
    %9059 = vmatpush1.msra.mxu0 %v8969
    %9060 = vmatprep.subr.mxu0 0.0
    %9061 = vmatpush1.msra.mxu0 %v8970
    %9062 = vmatprep.subr.mxu0 0.0
    %9063 = vmatpush1.msra.mxu0 %v8971
    %9064 = vmatprep.subr.mxu0 0.0
    %9065 = vmatpush1.msra.mxu0 %v8972
    %9066 = vmatprep.subr.mxu0 0.0
    %9067 = vmatpush1.msra.mxu0 %v8973
    %9068 = vmatprep.subr.mxu0 0.0
    %9069 = vmatpush1.msra.mxu0 %v8974
    %9070 = vmatprep.subr.mxu0 0.0
    %9071 = vmatpush1.msra.mxu0 %v8975
    %9072 = vmatprep.subr.mxu0 0.0
    %9073 = vmatpush1.msra.mxu0 %v8976
    %9074 = vmatprep.subr.mxu0 0.0
    %9075 = vmatpush1.msra.mxu0 %v8977
    %9076 = vmatprep.subr.mxu0 0.0
    %9077 = vmatpush1.msra.mxu0 %v8978
    %9078 = vmatprep.subr.mxu0 0.0
    %9079 = vmatpush1.msra.mxu0 %v8979
    %9080 = vmatprep.subr.mxu0 0.0
    %9081 = vmatpush1.msra.mxu0 %v8980
    %9082 = vmatprep.subr.mxu0 0.0
    %9083 = vmatpush1.msra.mxu0 %v8981
    %9084 = vmatprep.subr.mxu0 0.0
    %9085 = vmatpush1.msra.mxu0 %v8982
    %9086 = vmatprep.subr.mxu0 0.0
    %9087 = vmatpush1.msra.mxu0 %v8983
    %9088 = vmatprep.subr.mxu0 0.0
    %9089 = vmatpush1.msra.mxu0 %v8984
    %9090 = vmatprep.subr.mxu0 0.0
    %9091 = vmatpush1.msra.mxu0 %v8985
    %9092 = vmatprep.subr.mxu0 0.0
    %9093 = vmatpush1.msra.mxu0 %v8986
    %9094 = vmatprep.subr.mxu0 0.0
    %9095 = vmatpush1.msra.mxu0 %v8987
    %9096 = vmatprep.subr.mxu0 0.0
    %9097 = vmatpush1.msra.mxu0 %v8988
    %9098 = vmatprep.subr.mxu0 0.0
    %9099 = vmatpush1.msra.mxu0 %v8989
    %9100 = vmatprep.subr.mxu0 0.0
    %9101 = vmatpush1.msra.mxu0 %v8990
    %9102 = vmatprep.subr.mxu0 0.0
    %9103 = vmatpush1.msra.mxu0 %v8991
    %9104 = vmatprep.subr.mxu0 0.0
    %9105 = vmatpush1.msra.mxu0 %v8992
    %9106 = vmatprep.subr.mxu0 0.0
    %9107 = vmatpush1.msra.mxu0 %v8993
    %9108 = vmatprep.subr.mxu0 0.0
    %9109 = vmatpush1.msra.mxu0 %v8994
    %9110 = vmatprep.subr.mxu0 0.0
    %9111 = vmatpush1.msra.mxu0 %v8995
    %9112 = vmatprep.subr.mxu0 0.0
    %9113 = vmatpush1.msra.mxu0 %v8996
    %9114 = vmatprep.subr.mxu0 0.0
    %9115 = vmatpush1.msra.mxu0 %v8997
    %9116 = vmatprep.mubr.f32.mxu0 %v9046
    %9117 = vmatmul.mubr.f32.gmra.mrb[0].mxu0 %v9038
    %v9118 = vpop.f32.mrb[0].mxu0
    %v9119 = vadd.f32 0.0, %v9118
    %v9120 = vpop.f32.mrb[0].mxu0
    %9121 = vdwg.mxu0
    %9122 = vmatprep.subr.mxu0 0.0
    %9123 = vmatpush1.msra.mxu0 %v8998
    %9124 = vmatprep.subr.mxu0 0.0
    %9125 = vmatpush1.msra.mxu0 %v8999
    %9126 = vmatprep.subr.mxu0 0.0
    %9127 = vmatpush1.msra.mxu0 %v9000
    %9128 = vmatprep.subr.mxu0 0.0
    %9129 = vmatpush1.msra.mxu0 %v9001
    %9130 = vmatprep.subr.mxu0 0.0
    %9131 = vmatpush1.msra.mxu0 %v9002
    %9132 = vmatprep.subr.mxu0 0.0
    %9133 = vmatpush1.msra.mxu0 %v9003
    %9134 = vmatprep.subr.mxu0 0.0
    %9135 = vmatpush1.msra.mxu0 %v9004
    %9136 = vmatprep.subr.mxu0 0.0
    %9137 = vmatpush1.msra.mxu0 %v9005
    %9138 = vmatprep.subr.mxu0 0.0
    %9139 = vmatpush1.msra.mxu0 %v9006
    %9140 = vmatprep.subr.mxu0 0.0
    %9141 = vmatpush1.msra.mxu0 %v9007
    %9142 = vmatprep.subr.mxu0 0.0
    %9143 = vmatpush1.msra.mxu0 %v9008
    %9144 = vmatprep.subr.mxu0 0.0
    %9145 = vmatpush1.msra.mxu0 %v9009
    %9146 = vmatprep.subr.mxu0 0.0
    %9147 = vmatpush1.msra.mxu0 %v9010
    %9148 = vmatprep.subr.mxu0 0.0
    %9149 = vmatpush1.msra.mxu0 %v9011
    %9150 = vmatprep.subr.mxu0 0.0
    %9151 = vmatpush1.msra.mxu0 %v9012
    %9152 = vmatprep.subr.mxu0 0.0
    %9153 = vmatpush1.msra.mxu0 %v9013
    %9154 = vmatprep.subr.mxu0 0.0
    %9155 = vmatpush1.msra.mxu0 %v9014
    %9156 = vmatprep.subr.mxu0 0.0
    %9157 = vmatpush1.msra.mxu0 %v9015
    %9158 = vmatprep.subr.mxu0 0.0
    %9159 = vmatpush1.msra.mxu0 %v9016
    %9160 = vmatprep.subr.mxu0 0.0
    %9161 = vmatpush1.msra.mxu0 %v9017
    %9162 = vmatprep.subr.mxu0 0.0
    %9163 = vmatpush1.msra.mxu0 %v9018
    %9164 = vmatprep.subr.mxu0 0.0
    %9165 = vmatpush1.msra.mxu0 %v9019
    %9166 = vmatprep.subr.mxu0 0.0
    %9167 = vmatpush1.msra.mxu0 %v9020
    %9168 = vmatprep.subr.mxu0 0.0
    %9169 = vmatpush1.msra.mxu0 %v9021
    %9170 = vmatprep.subr.mxu0 0.0
    %9171 = vmatpush1.msra.mxu0 %v9022
    %9172 = vmatprep.subr.mxu0 0.0
    %9173 = vmatpush1.msra.mxu0 %v9023
    %9174 = vmatprep.subr.mxu0 0.0
    %9175 = vmatpush1.msra.mxu0 %v9024
    %9176 = vmatprep.subr.mxu0 0.0
    %9177 = vmatpush1.msra.mxu0 %v9025
    %9178 = vmatprep.subr.mxu0 0.0
    %9179 = vmatpush1.msra.mxu0 %v9026
    %9180 = vmatprep.subr.mxu0 0.0
    %9181 = vmatpush1.msra.mxu0 %v9027
    %9182 = vmatprep.subr.mxu0 0.0
    %9183 = vmatpush1.msra.mxu0 %v9028
    %9184 = vmatprep.subr.mxu0 0.0
    %9185 = vmatpush1.msra.mxu0 %v9029
    %9186 = vmatprep.mubr.f32.mxu0 %v9047
    %9187 = vmatmul.mubr.f32.gmra.mrb[0].mxu0 %v9045
    %v9188 = vpop.f32.mrb[0].mxu0
    %v9189 = vadd.f32 %v9119, %v9188
    %v9190 = vpop.f32.mrb[0].mxu0
    %9191 = vdwg.mxu0
    %v9192 = vmul.f32 %v8901, %v8711
    %v9193 = vmul.f32 %v8902, %v8714
    %v9194 = vmul.f32 %v8903, %v8717
    %v9195 = vmul.f32 %v8904, %v8720
    %v9196 = vmul.f32 %v8905, %v8723
    %v9197 = vmul.f32 %v8906, %v8726
    %v9198 = vmul.f32 %v8907, %v8729
    %v9199 = vmul.f32 %v8908, %v8732
    %v9200 = vmul.f32 %v8909, %v8735
    %v9201 = vmul.f32 %v8910, %v8738
    %v9202 = vmul.f32 %v8911, %v8741
    %v9203 = vmul.f32 %v8912, %v8744
    %v9204 = vmul.f32 %v8913, %v8747
    %v9205 = vmul.f32 %v8914, %v8750
    %v9206 = vmul.f32 %v8915, %v8753
    %v9207 = vmul.f32 %v8916, %v8756
    %v9208 = vmul.f32 %v8917, %v8759
    %v9209 = vmul.f32 %v8918, %v8762
    %v9210 = vmul.f32 %v8919, %v8765
    %v9211 = vmul.f32 %v8920, %v8768
    %v9212 = vmul.f32 %v8921, %v8771
    %v9213 = vmul.f32 %v8922, %v8774
    %v9214 = vmul.f32 %v8923, %v8777
    %v9215 = vmul.f32 %v8924, %v8780
    %v9216 = vmul.f32 %v8925, %v8783
    %v9217 = vmul.f32 %v8926, %v8786
    %v9218 = vmul.f32 %v8927, %v8789
    %v9219 = vmul.f32 %v8928, %v8792
    %v9220 = vmul.f32 %v8929, %v8795
    %v9221 = vmul.f32 %v8930, %v8798
    %v9222 = vmul.f32 %v8931, %v8801
    %v9223 = vmul.f32 %v8932, %v8804
    %v9224 = vmul.f32 %v8933, %v8807
    %v9225 = vmul.f32 %v8934, %v8810
    %v9226 = vmul.f32 %v8935, %v8813
    %v9227 = vmul.f32 %v8936, %v8816
    %v9228 = vmul.f32 %v8937, %v8819
    %v9229 = vmul.f32 %v8938, %v8822
    %v9230 = vmul.f32 %v8939, %v8825
    %v9231 = vmul.f32 %v8940, %v8828
    %v9232 = vmul.f32 %v8941, %v8831
    %v9233 = vmul.f32 %v8942, %v8834
    %v9234 = vmul.f32 %v8943, %v8837
    %v9235 = vmul.f32 %v8944, %v8840
    %v9236 = vmul.f32 %v8945, %v8843
    %v9237 = vmul.f32 %v8946, %v8846
    %v9238 = vmul.f32 %v8947, %v8849
    %v9239 = vmul.f32 %v8948, %v8852
    %v9240 = vmul.f32 %v8949, %v8855
    %v9241 = vmul.f32 %v8950, %v8858
    %v9242 = vmul.f32 %v8951, %v8861
    %v9243 = vmul.f32 %v8952, %v8864
    %v9244 = vmul.f32 %v8953, %v8867
    %v9245 = vmul.f32 %v8954, %v8870
    %v9246 = vmul.f32 %v8955, %v8873
    %v9247 = vmul.f32 %v8956, %v8876
    %v9248 = vmul.f32 %v8957, %v8879
    %v9249 = vmul.f32 %v8958, %v8882
    %v9250 = vmul.f32 %v8959, %v8885
    %v9251 = vmul.f32 %v8960, %v8888
    %v9252 = vmul.f32 %v8961, %v8891
    %v9253 = vmul.f32 %v8962, %v8894
    %v9254 = vmul.f32 %v8963, %v8897
    %v9255 = vmul.f32 %v8964, %v8900
    %9256 = vmatprep.subr.mxu0 0.0
    %9257 = vmatpush1.msra.mxu0 %v9192
    %9258 = vmatprep.subr.mxu0 0.0
    %9259 = vmatpush1.msra.mxu0 %v9193
    %9260 = vmatprep.subr.mxu0 0.0
    %9261 = vmatpush1.msra.mxu0 %v9194
    %9262 = vmatprep.subr.mxu0 0.0
    %9263 = vmatpush1.msra.mxu0 %v9195
    %9264 = vmatprep.subr.mxu0 0.0
    %9265 = vmatpush1.msra.mxu0 %v9196
    %9266 = vmatprep.subr.mxu0 0.0
    %9267 = vmatpush1.msra.mxu0 %v9197
    %9268 = vmatprep.subr.mxu0 0.0
    %9269 = vmatpush1.msra.mxu0 %v9198
    %9270 = vmatprep.subr.mxu0 0.0
    %9271 = vmatpush1.msra.mxu0 %v9199
    %9272 = vmatprep.subr.mxu0 0.0
    %9273 = vmatpush1.msra.mxu0 %v9200
    %9274 = vmatprep.subr.mxu0 0.0
    %9275 = vmatpush1.msra.mxu0 %v9201
    %9276 = vmatprep.subr.mxu0 0.0
    %9277 = vmatpush1.msra.mxu0 %v9202
    %9278 = vmatprep.subr.mxu0 0.0
    %9279 = vmatpush1.msra.mxu0 %v9203
    %9280 = vmatprep.subr.mxu0 0.0
    %9281 = vmatpush1.msra.mxu0 %v9204
    %9282 = vmatprep.subr.mxu0 0.0
    %9283 = vmatpush1.msra.mxu0 %v9205
    %9284 = vmatprep.subr.mxu0 0.0
    %9285 = vmatpush1.msra.mxu0 %v9206
    %9286 = vmatprep.subr.mxu0 0.0
    %9287 = vmatpush1.msra.mxu0 %v9207
    %9288 = vmatprep.subr.mxu0 0.0
    %9289 = vmatpush1.msra.mxu0 %v9208
    %9290 = vmatprep.subr.mxu0 0.0
    %9291 = vmatpush1.msra.mxu0 %v9209
    %9292 = vmatprep.subr.mxu0 0.0
    %9293 = vmatpush1.msra.mxu0 %v9210
    %9294 = vmatprep.subr.mxu0 0.0
    %9295 = vmatpush1.msra.mxu0 %v9211
    %9296 = vmatprep.subr.mxu0 0.0
    %9297 = vmatpush1.msra.mxu0 %v9212
    %9298 = vmatprep.subr.mxu0 0.0
    %9299 = vmatpush1.msra.mxu0 %v9213
    %9300 = vmatprep.subr.mxu0 0.0
    %9301 = vmatpush1.msra.mxu0 %v9214
    %9302 = vmatprep.subr.mxu0 0.0
    %9303 = vmatpush1.msra.mxu0 %v9215
    %9304 = vmatprep.subr.mxu0 0.0
    %9305 = vmatpush1.msra.mxu0 %v9216
    %9306 = vmatprep.subr.mxu0 0.0
    %9307 = vmatpush1.msra.mxu0 %v9217
    %9308 = vmatprep.subr.mxu0 0.0
    %9309 = vmatpush1.msra.mxu0 %v9218
    %9310 = vmatprep.subr.mxu0 0.0
    %9311 = vmatpush1.msra.mxu0 %v9219
    %9312 = vmatprep.subr.mxu0 0.0
    %9313 = vmatpush1.msra.mxu0 %v9220
    %9314 = vmatprep.subr.mxu0 0.0
    %9315 = vmatpush1.msra.mxu0 %v9221
    %9316 = vmatprep.subr.mxu0 0.0
    %9317 = vmatpush1.msra.mxu0 %v9222
    %9318 = vmatprep.subr.mxu0 0.0
    %9319 = vmatpush1.msra.mxu0 %v9223
    %9320 = vmatprep.mubr.f32.mxu0 %v9046
    %9321 = vmatmul.mubr.f32.gmra.mrb[0].mxu0 %v9038
    %v9322 = vpop.f32.mrb[0].mxu0
    %v9323 = vadd.f32 0.0, %v9322
    %v9324 = vpop.f32.mrb[0].mxu0
    %9325 = vdwg.mxu0
    %9326 = vmatprep.subr.mxu0 0.0
    %9327 = vmatpush1.msra.mxu0 %v9224
    %9328 = vmatprep.subr.mxu0 0.0
    %9329 = vmatpush1.msra.mxu0 %v9225
    %9330 = vmatprep.subr.mxu0 0.0
    %9331 = vmatpush1.msra.mxu0 %v9226
    %9332 = vmatprep.subr.mxu0 0.0
    %9333 = vmatpush1.msra.mxu0 %v9227
    %9334 = vmatprep.subr.mxu0 0.0
    %9335 = vmatpush1.msra.mxu0 %v9228
    %9336 = vmatprep.subr.mxu0 0.0
    %9337 = vmatpush1.msra.mxu0 %v9229
    %9338 = vmatprep.subr.mxu0 0.0
    %9339 = vmatpush1.msra.mxu0 %v9230
    %9340 = vmatprep.subr.mxu0 0.0
    %9341 = vmatpush1.msra.mxu0 %v9231
    %9342 = vmatprep.subr.mxu0 0.0
    %9343 = vmatpush1.msra.mxu0 %v9232
    %9344 = vmatprep.subr.mxu0 0.0
    %9345 = vmatpush1.msra.mxu0 %v9233
    %9346 = vmatprep.subr.mxu0 0.0
    %9347 = vmatpush1.msra.mxu0 %v9234
    %9348 = vmatprep.subr.mxu0 0.0
    %9349 = vmatpush1.msra.mxu0 %v9235
    %9350 = vmatprep.subr.mxu0 0.0
    %9351 = vmatpush1.msra.mxu0 %v9236
    %9352 = vmatprep.subr.mxu0 0.0
    %9353 = vmatpush1.msra.mxu0 %v9237
    %9354 = vmatprep.subr.mxu0 0.0
    %9355 = vmatpush1.msra.mxu0 %v9238
    %9356 = vmatprep.subr.mxu0 0.0
    %9357 = vmatpush1.msra.mxu0 %v9239
    %9358 = vmatprep.subr.mxu0 0.0
    %9359 = vmatpush1.msra.mxu0 %v9240
    %9360 = vmatprep.subr.mxu0 0.0
    %9361 = vmatpush1.msra.mxu0 %v9241
    %9362 = vmatprep.subr.mxu0 0.0
    %9363 = vmatpush1.msra.mxu0 %v9242
    %9364 = vmatprep.subr.mxu0 0.0
    %9365 = vmatpush1.msra.mxu0 %v9243
    %9366 = vmatprep.subr.mxu0 0.0
    %9367 = vmatpush1.msra.mxu0 %v9244
    %9368 = vmatprep.subr.mxu0 0.0
    %9369 = vmatpush1.msra.mxu0 %v9245
    %9370 = vmatprep.subr.mxu0 0.0
    %9371 = vmatpush1.msra.mxu0 %v9246
    %9372 = vmatprep.subr.mxu0 0.0
    %9373 = vmatpush1.msra.mxu0 %v9247
    %9374 = vmatprep.subr.mxu0 0.0
    %9375 = vmatpush1.msra.mxu0 %v9248
    %9376 = vmatprep.subr.mxu0 0.0
    %9377 = vmatpush1.msra.mxu0 %v9249
    %9378 = vmatprep.subr.mxu0 0.0
    %9379 = vmatpush1.msra.mxu0 %v9250
    %9380 = vmatprep.subr.mxu0 0.0
    %9381 = vmatpush1.msra.mxu0 %v9251
    %9382 = vmatprep.subr.mxu0 0.0
    %9383 = vmatpush1.msra.mxu0 %v9252
    %9384 = vmatprep.subr.mxu0 0.0
    %9385 = vmatpush1.msra.mxu0 %v9253
    %9386 = vmatprep.subr.mxu0 0.0
    %9387 = vmatpush1.msra.mxu0 %v9254
    %9388 = vmatprep.subr.mxu0 0.0
    %9389 = vmatpush1.msra.mxu0 %v9255
    %9390 = vmatprep.mubr.f32.mxu0 %v9047
    %9391 = vmatmul.mubr.f32.gmra.mrb[0].mxu0 %v9045
    %v9392 = vpop.f32.mrb[0].mxu0
    %v9393 = vadd.f32 %v9323, %v9392
    %v9394 = vpop.f32.mrb[0].mxu0
    %9395 = vdwg.mxu0
    %vm9396 = vcmask 1041408
    %v9397 = vsel %vm9396, %v9189, 0.0
    %v9398 = vrot.slane %v9397, 4
    %v9399 = vadd.f32 %v9397, %v9398
    %v9400 = vrot.slane %v9399, 2
    %v9401 = vadd.f32 %v9399, %v9400
    %v9402 = vrot.slane %v9401, 1
    %v9403 = vadd.f32 %v9401, %v9402
    %v9404 = vrcp.pop 2.0
    %v9405 = vmul.f32 %v9403, %v9404
    %v9406 = vmul.f32 %v9189, %v9189
    %v9407 = vsel %vm9396, %v9406, 0.0
    %v9408 = vrot.slane %v9407, 4
    %v9409 = vadd.f32 %v9407, %v9408
    %v9410 = vrot.slane %v9409, 2
    %v9411 = vadd.f32 %v9409, %v9410
    %v9412 = vrot.slane %v9411, 1
    %v9413 = vadd.f32 %v9411, %v9412
    %v9414 = vmul.f32 %v9413, %v9404
    %v9415 = vmul.f32 %v9405, %v9405
    %v9416 = vsub.f32 %v9414, %v9415
    %v9417 = vmax.f32 %v9416, 0.0
    %v9418 = vld [vmem:[%s18] sm:$0x1]
    %v9419 = vadd.f32 %v9417, 1e-05
    %v9420 = vrsqrt.pop %v9419
    %v9421 = vmul.f32 %v9418, %v9420
    %v9422 = vsub.f32 %v9189, %v9405
    %v9424 = vlaneseq
    %v9425 = vshrl.u32 %v9424, 7
    %v9426 = vsub.s32 0, %v9425
    %v9427 = vrot.slane %v9421, %v9426
    %v9429 = vmul.f32 %v9422, %v9427
    %v9430 = vld [vmem:[%s19] sm:$0x1]
    %v9432 = vlaneseq
    %v9433 = vshrl.u32 %v9432, 7
    %v9434 = vsub.s32 0, %v9433
    %v9435 = vrot.slane %v9430, %v9434
    %v9437 = vadd.f32 %v9429, %v9435
    %v9438 = vmax.f32 %v9437, 0.0
    %v9439 = vmul.f32 %v9438, 0.11111111
    %v9440 = vsel %vm9396, %v9393, 0.0
    %v9441 = vrot.slane %v9440, 4
    %v9442 = vadd.f32 %v9440, %v9441
    %v9443 = vrot.slane %v9442, 2
    %v9444 = vadd.f32 %v9442, %v9443
    %v9445 = vrot.slane %v9444, 1
    %v9446 = vadd.f32 %v9444, %v9445
    %v9447 = vmul.f32 %v9446, %v9404
    %v9448 = vmul.f32 %v9393, %v9393
    %v9449 = vsel %vm9396, %v9448, 0.0
    %v9450 = vrot.slane %v9449, 4
    %v9451 = vadd.f32 %v9449, %v9450
    %v9452 = vrot.slane %v9451, 2
    %v9453 = vadd.f32 %v9451, %v9452
    %v9454 = vrot.slane %v9453, 1
    %v9455 = vadd.f32 %v9453, %v9454
    %v9456 = vmul.f32 %v9455, %v9404
    %v9457 = vmul.f32 %v9447, %v9447
    %v9458 = vsub.f32 %v9456, %v9457
    %v9459 = vmax.f32 %v9458, 0.0
    %v9460 = vadd.f32 %v9459, 1e-05
    %v9461 = vrsqrt.pop %v9460
    %v9462 = vmul.f32 %v9418, %v9461
    %v9463 = vsub.f32 %v9393, %v9447
    %v9465 = vlaneseq
    %v9466 = vshrl.u32 %v9465, 7
    %v9467 = vsub.s32 0, %v9466
    %v9468 = vrot.slane %v9462, %v9467
    %v9470 = vmul.f32 %v9463, %v9468
    %v9471 = vadd.f32 %v9470, %v9435
    %v9472 = vmax.f32 %v9471, 0.0
    %v9473 = vmul.f32 %v9472, 0.11111111
    %v9474 = vmul.f32 %v9439, %v9439
    %v9475 = vsel %vm9396, %v9474, 0.0
    %9476 = vadd.xlane.f32.xlu0 %v9475
    %v9477 = vpop.xlane.xlu0 %9476
    %v9478 = vmax.f32 %v9477, 1e-24
    %v9479 = vrsqrt.pop %v9478
    %v9480 = vmul.f32 %v9473, %v9473
    %v9481 = vsel %vm9396, %v9480, 0.0
    %9482 = vadd.xlane.f32.xlu0 %v9481
    %v9483 = vpop.xlane.xlu0 %9482
    %v9484 = vmax.f32 %v9483, 1e-24
    %v9485 = vrsqrt.pop %v9484
    %v9486 = vmul.f32 %v9473, %v9439
    %v9487 = vsel %vm9396, %v9486, 0.0
    %9488 = vadd.xlane.f32.xlu0 %v9487
    %v9489 = vpop.xlane.xlu0 %9488
    %v9490 = vmul.f32 %v9489, %v9485
    %v9491 = vmul.f32 %v9490, %v9479
    %vm9492 = vcmask 1024
    %9493 = vst.msk [vmem:[%s23] sm:$0x3] %vm9492, %v9491
    %v9494 = vld [vmem:[#allocation7] sm:$0xff]
    %v9495 = vld [vmem:[#allocation7 + $0x8] sm:$0xff]
    %v9496 = vld [vmem:[#allocation7 + $0x10] sm:$0xff]
    %v9497 = vld [vmem:[#allocation7 + $0x18] sm:$0xff]
    %v9498 = vld [vmem:[#allocation7 + $0x20] sm:$0xff]
    %v9499 = vld [vmem:[#allocation7 + $0x28] sm:$0xff]
    %v9500 = vld [vmem:[#allocation7 + $0x30] sm:$0xff]
    %v9501 = vld [vmem:[#allocation7 + $0x38] sm:$0xff]
    %v9502 = vld [vmem:[#allocation7 + $0x40] sm:$0xff]
    %v9503 = vld [vmem:[#allocation7 + $0x48] sm:$0xff]
    %v9504 = vld [vmem:[#allocation7 + $0x50] sm:$0xff]
    %v9505 = vld [vmem:[#allocation7 + $0x58] sm:$0xff]
    %v9506 = vld [vmem:[#allocation7 + $0x60] sm:$0xff]
    %v9507 = vld [vmem:[#allocation7 + $0x68] sm:$0xff]
    %v9508 = vld [vmem:[#allocation7 + $0x70] sm:$0xff]
    %v9509 = vld [vmem:[#allocation7 + $0x78] sm:$0xff]
    %v9510 = vld [vmem:[#allocation7 + $0x80] sm:$0xff]
    %v9511 = vld [vmem:[#allocation7 + $0x88] sm:$0xff]
    %v9512 = vld [vmem:[#allocation7 + $0x90] sm:$0xff]
    %v9513 = vld [vmem:[#allocation7 + $0x98] sm:$0xff]
    %v9514 = vld [vmem:[#allocation7 + $0xa0] sm:$0xff]
    %v9515 = vld [vmem:[#allocation7 + $0xa8] sm:$0xff]
    %v9516 = vld [vmem:[#allocation7 + $0xb0] sm:$0xff]
    %v9517 = vld [vmem:[#allocation7 + $0xb8] sm:$0xff]
    %v9518 = vld [vmem:[#allocation7 + $0xc0] sm:$0xff]
    %v9519 = vld [vmem:[#allocation7 + $0xc8] sm:$0xff]
    %v9520 = vld [vmem:[#allocation7 + $0xd0] sm:$0xff]
    %v9521 = vld [vmem:[#allocation7 + $0xd8] sm:$0xff]
    %v9522 = vld [vmem:[#allocation7 + $0xe0] sm:$0xff]
    %v9523 = vld [vmem:[#allocation7 + $0xe8] sm:$0xff]
    %v9524 = vld [vmem:[#allocation7 + $0xf0] sm:$0xff]
    %v9525 = vld [vmem:[#allocation7 + $0xf8] sm:$0xff]
    %9526 = vmatprep.subr.mxu0 %v9495
    %9527 = vmatpush1.msra.mxu0 %v9494
    %9528 = vmatprep.subr.mxu0 %v9497
    %9529 = vmatpush1.msra.mxu0 %v9496
    %9530 = vmatprep.subr.mxu0 %v9499
    %9531 = vmatpush1.msra.mxu0 %v9498
    %9532 = vmatprep.subr.mxu0 %v9501
    %9533 = vmatpush1.msra.mxu0 %v9500
    %9534 = vmatprep.subr.mxu0 %v9503
    %9535 = vmatpush1.msra.mxu0 %v9502
    %9536 = vmatprep.subr.mxu0 %v9505
    %9537 = vmatpush1.msra.mxu0 %v9504
    %9538 = vmatprep.subr.mxu0 %v9507
    %9539 = vmatpush1.msra.mxu0 %v9506
    %9540 = vmatprep.subr.mxu0 %v9509
    %9541 = vmatpush1.msra.mxu0 %v9508
    %9542 = vmatprep.subr.mxu0 %v9511
    %9543 = vmatpush1.msra.mxu0 %v9510
    %9544 = vmatprep.subr.mxu0 %v9513
    %9545 = vmatpush1.msra.mxu0 %v9512
    %9546 = vmatprep.subr.mxu0 %v9515
    %9547 = vmatpush1.msra.mxu0 %v9514
    %9548 = vmatprep.subr.mxu0 %v9517
    %9549 = vmatpush1.msra.mxu0 %v9516
    %9550 = vmatprep.subr.mxu0 %v9519
    %9551 = vmatpush1.msra.mxu0 %v9518
    %9552 = vmatprep.subr.mxu0 %v9521
    %9553 = vmatpush1.msra.mxu0 %v9520
    %9554 = vmatprep.subr.mxu0 %v9523
    %9555 = vmatpush1.msra.mxu0 %v9522
    %9556 = vmatprep.subr.mxu0 %v9525
    %9557 = vmatpush1.msra.mxu0 %v9524
    %9558 = vmatprep.subr.mxu0 0.0
    %9559 = vmatpush1.msra.mxu0 0.0
    %9560 = vmatprep.subr.mxu0 0.0
    %9561 = vmatpush1.msra.mxu0 0.0
    %9562 = vmatprep.subr.mxu0 0.0
    %9563 = vmatpush1.msra.mxu0 0.0
    %9564 = vmatprep.subr.mxu0 0.0
    %9565 = vmatpush1.msra.mxu0 0.0
    %9566 = vmatprep.subr.mxu0 0.0
    %9567 = vmatpush1.msra.mxu0 0.0
    %9568 = vmatprep.subr.mxu0 0.0
    %9569 = vmatpush1.msra.mxu0 0.0
    %9570 = vmatprep.subr.mxu0 0.0
    %9571 = vmatpush1.msra.mxu0 0.0
    %9572 = vmatprep.subr.mxu0 0.0
    %9573 = vmatpush1.msra.mxu0 0.0
    %9574 = vmatprep.subr.mxu0 0.0
    %9575 = vmatpush1.msra.mxu0 0.0
    %9576 = vmatprep.subr.mxu0 0.0
    %9577 = vmatpush1.msra.mxu0 0.0
    %9578 = vmatprep.subr.mxu0 0.0
    %9579 = vmatpush1.msra.mxu0 0.0
    %9580 = vmatprep.subr.mxu0 0.0
    %9581 = vmatpush1.msra.mxu0 0.0
    %9582 = vmatprep.subr.mxu0 0.0
    %9583 = vmatpush1.msra.mxu0 0.0
    %9584 = vmatprep.subr.mxu0 0.0
    %9585 = vmatpush1.msra.mxu0 0.0
    %9586 = vmatprep.subr.mxu0 0.0
    %9587 = vmatpush1.msra.mxu0 0.0
    %9588 = vmatprep.subr.mxu0 0.0
    %9589 = vmatpush1.msra.mxu0 0.0
    %9590 = vmatprep.mubr.f32.mxu0 0.0
    %9591 = vmatmul.mubr.f32.gmra.mrb[0].mxu0 %v9473
    %v9592 = vpop.f32.mrb[0].mxu0
    %v9593 = vadd.f32 0.0, %v9592
    %v9594 = vpop.f32.mrb[0].mxu0
    %v9595 = vadd.f32 0.0, %v9594
    %9596 = vdwg.mxu0
    %v9597 = vmul.f32 %v9593, %v9485
    %v9598 = vmul.f32 %v9595, %v9485
    %v9601 = vcombine.low %v9597, %v9598
    %v9603 = vunpack.c.l.s4 1983009808
    %v9604 = vunpack.c.0.s8 %v9603
    %v9605 = vlaneseq
    %v9606 = vshrl.u32 %v9605, 7
    %v9607 = vsub.s32 %v9604, %v9606
    %v9608 = vrot.slane %v9601, %v9607
    %9610 = vst [vmem:[%s24] sm:$0xf] %v9608
    %v9611 = vld [vmem:[%s21] sm:$0x3]
    %9612 = vset.pattern.permute.xlu0 0
    %9613 = vperm.xlu0 %9612, %v9611
    %v9614 = vpop.permute.xlu0 %9613
    %v9615 = vld [vmem:[%s22] sm:$0x3]
    %v9616 = vlaneseq
    %v9617 = vshrl.u32 %v9616, 7
    %v9618 = vsub.s32 0, %v9617
    %v9619 = vrot.slane %v9615, %v9618
    %v9620 = vlaneseq
    %v9621 = vshrl.u32 %v9620, 7
    %v9622 = vsub.s32 1, %v9621
    %v9623 = vrot.slane %v9615, %v9622
    %vm9624 = vcmp.eq.s32.totalorder %v9614, %v9619
    %vm9625 = vcmp.eq.s32.totalorder %v9614, %v9623
    %v9626 = vsel %vm9624, 1, 0
    %v9627 = vsel %vm9625, 1, 0
    %v9628 = vcvt.s32.f32 %v9626
    %v9629 = vcvt.s32.f32 %v9627
    %v9632 = vcombine.low %v9628, %v9629
    %v9634 = vunpack.c.l.s4 1983009808
    %v9635 = vunpack.c.0.s8 %v9634
    %v9636 = vlaneseq
    %v9637 = vshrl.u32 %v9636, 7
    %v9638 = vsub.s32 %v9635, %v9637
    %v9639 = vrot.slane %v9632, %v9638
    %9641 = vst [vmem:[%s25] sm:$0xf] %v9639
    // Predicated region
    $region110: #{cossl_forward.1} parent=1 // pred_check
      _
    $region111: #{cossl_forward.1} parent=1 // pred_check_branch
      %9643 = sbr.rel (0) target = $region113
    $region112: #{cossl_forward.1} parent=1 // pred_region
      _
    $region113: #{cossl_forward.1} parent=1 // pred_fallthru
      _
    // Predicated region
    $region114: #{cossl_forward.1} parent=1 // pred_check
      _
    $region115: #{cossl_forward.1} parent=1 // pred_check_branch
      %9645 = sbr.rel (0) target = $region117
    $region116: #{cossl_forward.1} parent=1 // pred_region
      _
    $region117: #{cossl_forward.1} parent=1 // pred_fallthru
      _
    // Predicated region
    $region118: #{cossl_forward.1} parent=1 // pred_check
      _
    $region119: #{cossl_forward.1} parent=1 // pred_check_branch
      %9647 = sbr.rel (0) target = $region121
    $region120: #{cossl_forward.1} parent=1 // pred_region
      _
    $region121: #{cossl_forward.1} parent=1 // pred_fallthru
      _
    // Predicated region
    $region122: #{cossl_forward.1} parent=1 // pred_check
      _
    $region123: #{cossl_forward.1} parent=1 // pred_check_branch
      %9649 = sbr.rel (0) target = $region125
    $region124: #{cossl_forward.1} parent=1 // pred_region
      _
    $region125: #{cossl_forward.1} parent=1 // pred_fallthru
      _
    // Predicated region
    $region126: #{cossl_forward.1} parent=1 // pred_check
      _
    $region127: #{cossl_forward.1} parent=1 // pred_check_branch
      %9651 = sbr.rel (0) target = $region129
    $region128: #{cossl_forward.1} parent=1 // pred_region
      _
    $region129: #{cossl_forward.1} parent=1 // pred_fallthru
      _
    // Predicated region
    $region130: #{cossl_forward.1} parent=1 // pred_check
      _
    $region131: #{cossl_forward.1} parent=1 // pred_check_branch
      %9653 = sbr.rel (0) target = $region133
    $region132: #{cossl_forward.1} parent=1 // pred_region
      _
    $region133: #{cossl_forward.1} parent=1 // pred_fallthru
      _
    %9654 = vsyncpa [#allocation3], 1
    %9655 = vsyncpa [#allocation5], 1
    %9656 = vsyncpa [#allocation8], 1

</llo_original>
